<compile_context>
chip_gen: v5e
topology: v5e:2x2
jax: 0.10.0
libtpu: 0.0.40
codegen_flags: <defaults>
</compile_context>

<pallas_src>
import functools

import jax
import jax.numpy as jnp
from jax import lax
from jax.experimental import pallas as pl
from jax.experimental.pallas import tpu as pltpu

FC_DIM = 2048
BN_EPS = 1e-5


# ----------------------------------------------------------------------------
# Kernel A: fused  Linear1 + BN1 + LeakyReLU + Linear2(tile) + BN2 + LeakyReLU
# ----------------------------------------------------------------------------
def _fused_l1_l2_kernel(z_ref, w1_ref, s1_ref, t1_ref,
                        w2_ref, s2_ref, t2_ref, o_ref):
    # layer 1 (tiny; recomputed per layer-2 N-tile so the grid stays "parallel")
    h1 = jnp.dot(z_ref[...], w1_ref[...], preferred_element_type=jnp.float32)
    h1 = h1 * s1_ref[...] + t1_ref[...]          # folded bias + eval-mode BN
    h1 = jnp.where(h1 >= 0, h1, 0.02 * h1)       # LeakyReLU(0.02)

    # layer 2, one lane-dense N-tile of the (2048, 2048) weight
    y = jnp.dot(h1, w2_ref[...], preferred_element_type=jnp.float32)
    y = y * s2_ref[...] + t2_ref[...]
    y = jnp.where(y >= 0, y, 0.02 * y)
    o_ref[...] = y.astype(o_ref.dtype)


def fused_l1_l2(z, w1, s1, t1, w2, s2, t2, *, tn=512):
    B, nz = z.shape
    F = w2.shape[1]
    assert F % tn == 0 and tn % 128 == 0
    return pl.pallas_call(
        _fused_l1_l2_kernel,
        out_shape=jax.ShapeDtypeStruct((B, F), jnp.float32),
        grid=(F // tn,),
        in_specs=[
            pl.BlockSpec((B, nz), lambda j: (0, 0)),
            pl.BlockSpec((nz, FC_DIM), lambda j: (0, 0)),
            pl.BlockSpec((1, FC_DIM), lambda j: (0, 0)),
            pl.BlockSpec((1, FC_DIM), lambda j: (0, 0)),
            pl.BlockSpec((FC_DIM, tn), lambda j: (0, j)),
            pl.BlockSpec((1, tn), lambda j: (0, j)),
            pl.BlockSpec((1, tn), lambda j: (0, j)),
        ],
        out_specs=pl.BlockSpec((B, tn), lambda j: (0, j)),
        compiler_params=pltpu.CompilerParams(dimension_semantics=("parallel",)),
    )(z, w1, s1.reshape(1, -1), t1.reshape(1, -1),
      w2, s2.reshape(1, -1), t2.reshape(1, -1))


# ----------------------------------------------------------------------------
# Kernel B: final Linear(FC_DIM, no), N-tiled, lane-dense output
# ----------------------------------------------------------------------------
def _linear_kernel(x_ref, w_ref, b_ref, o_ref):
    y = jnp.dot(x_ref[...], w_ref[...], preferred_element_type=jnp.float32)
    o_ref[...] = (y + b_ref[...]).astype(o_ref.dtype)


def linear_out(x, w, b, *, tn=512):
    B, K = x.shape
    N = w.shape[1]
    assert N % tn == 0 and tn % 128 == 0
    return pl.pallas_call(
        _linear_kernel,
        out_shape=jax.ShapeDtypeStruct((B, N), jnp.float32),
        grid=(N // tn,),
        in_specs=[
            pl.BlockSpec((B, K), lambda j: (0, 0)),
            pl.BlockSpec((K, tn), lambda j: (0, j)),
            pl.BlockSpec((1, tn), lambda j: (0, j)),
        ],
        out_specs=pl.BlockSpec((B, tn), lambda j: (0, j)),
        compiler_params=pltpu.CompilerParams(dimension_semantics=("parallel",)),
    )(x, w, b.reshape(1, N))


# ----------------------------------------------------------------------------
# BatchNorm (eval) + Linear-bias folding:  y = (x @ W) * scale + shift
# ----------------------------------------------------------------------------
def fold_bn(lin_b, gamma, beta, mean, var, eps=BN_EPS):
    scale = gamma / jnp.sqrt(var + eps)
    shift = beta + (lin_b - mean) * scale
    return scale.astype(jnp.float32), shift.astype(jnp.float32)


# ----------------------------------------------------------------------------
# Parameters (deterministic synthetic init; shapes follow the torch module)
# ----------------------------------------------------------------------------
def init_params(key, nz, no):
    ks = jax.random.split(key, 12)

    def nrm(k, shape, scale=0.05):
        return (scale * jax.random.normal(k, shape)).astype(jnp.float32)

    return dict(
        l1_w=nrm(ks[0], (nz, FC_DIM)),
        l1_b=nrm(ks[1], (FC_DIM,)),
        bn1_g=(1.0 + nrm(ks[2], (FC_DIM,))),
        bn1_b=nrm(ks[3], (FC_DIM,)),
        bn1_m=nrm(ks[4], (FC_DIM,)),
        bn1_v=(1.0 + 0.1 * jnp.abs(nrm(ks[5], (FC_DIM,)))).astype(jnp.float32),
        l2_w=nrm(ks[6], (FC_DIM, FC_DIM)),
        l2_b=nrm(ks[7], (FC_DIM,)),
        bn2_g=(1.0 + nrm(ks[8], (FC_DIM,))),
        bn2_b=nrm(ks[9], (FC_DIM,)),
        bn2_m=nrm(ks[10], (FC_DIM,)),
        bn2_v=(1.0 + 0.1 * jnp.abs(nrm(ks[11], (FC_DIM,)))).astype(jnp.float32),
        l3_w=nrm(jax.random.fold_in(key, 100), (FC_DIM, no)),
        l3_b=nrm(jax.random.fold_in(key, 101), (no,)),
    )


# ----------------------------------------------------------------------------
# Gen_High_fc forward (Pallas path)
# ----------------------------------------------------------------------------
def gen_high_fc_forward(z, params, *, batch_size):
    z = z.reshape(batch_size, -1)                                   # torch .view
    s1, t1 = fold_bn(params["l1_b"], params["bn1_g"], params["bn1_b"],
                     params["bn1_m"], params["bn1_v"])
    s2, t2 = fold_bn(params["l2_b"], params["bn2_g"], params["bn2_b"],
                     params["bn2_m"], params["bn2_v"])
    h2 = fused_l1_l2(z, params["l1_w"], s1, t1, params["l2_w"], s2, t2)  # (B, 2048)
    out = linear_out(h2, params["l3_w"], params["l3_b"])                 # (B, no)
    return out


# ----------------------------------------------------------------------------
# Pure-JAX reference (same math) for a correctness check
# ----------------------------------------------------------------------------
def reference_forward(z, p, *, batch_size):
    hp = jax.lax.Precision.HIGHEST
    z = z.reshape(batch_size, -1)
    h = jnp.dot(z, p["l1_w"], precision=hp) + p["l1_b"]
    h = p["bn1_g"] * (h - p["bn1_m"]) / jnp.sqrt(p["bn1_v"] + BN_EPS) + p["bn1_b"]
    h = jnp.where(h >= 0, h, 0.02 * h)
    h = jnp.dot(h, p["l2_w"], precision=hp) + p["l2_b"]
    h = p["bn2_g"] * (h - p["bn2_m"]) / jnp.sqrt(p["bn2_v"] + BN_EPS) + p["bn2_b"]
    h = jnp.where(h >= 0, h, 0.02 * h)
    return jnp.dot(h, p["l3_w"], precision=hp) + p["l3_b"]


if __name__ == "__main__":
    batch_size, nz, no = 8, 64, 3072   # no = 3*32*32, multiple of 128 (lane dense)

    key = jax.random.PRNGKey(0)
    kz, kp = jax.random.split(key)
    z = jax.random.normal(kz, (batch_size, nz), dtype=jnp.float32)
    params = init_params(kp, nz, no)

    fwd = jax.jit(functools.partial(gen_high_fc_forward, batch_size=batch_size))
    out = jax.block_until_ready(fwd(z, params))
    assert out.shape == (batch_size, no), out.shape

    ref = reference_forward(z, params, batch_size=batch_size)
    max_err = float(jnp.max(jnp.abs(out - ref)))
    assert jnp.allclose(out, ref, atol=3e-2, rtol=3e-2), f"max_err={max_err}"

    print("KERNEL_OK")
</pallas_src>

<mosaic_0001>
module attributes {stable_mosaic.version = 11 : i64} {
  func.func @_linear_kernel(%arg0: i32, %arg1: memref<8x2048xf32, #tpu.memory_space<vmem>>, %arg2: memref<2048x512xf32, #tpu.memory_space<vmem>>, %arg3: memref<1x512xf32, #tpu.memory_space<vmem>>, %arg4: memref<8x512xf32, #tpu.memory_space<vmem>>) attributes {dimension_semantics = [#tpu.dimension_semantics<parallel>], iteration_bounds = array<i64: 6>, scalar_prefetch = 0 : i64, scratch_operands = 0 : i64, tpu.core_type = #tpu.core_type<tc>, window_params = [{pipeline_mode = #tpu.pipeline_mode<synchronous>, transform_indices = @transform_0, window_bounds = array<i64: 8, 2048>}, {transform_indices = @transform_1, window_bounds = array<i64: 2048, 512>}, {transform_indices = @transform_2, window_bounds = array<i64: 1, 512>}, {transform_indices = @transform_3, window_bounds = array<i64: 8, 512>}]} {
    %c0 = arith.constant 0 : index
    %c0_0 = arith.constant 0 : index
    %0 = vector.load %arg1[%c0, %c0_0] : memref<8x2048xf32, #tpu.memory_space<vmem>>, vector<8x2048xf32>
    %c0_1 = arith.constant 0 : index
    %c0_2 = arith.constant 0 : index
    %1 = vector.load %arg2[%c0_1, %c0_2] : memref<2048x512xf32, #tpu.memory_space<vmem>>, vector<2048x512xf32>
    %cst = arith.constant dense<0.000000e+00> : vector<8x512xf32>
    %2 = tpu.matmul %0, %1, %cst {dimension_numbers = #tpu.dot_dimension_numbers<[1], [0], [0], [1], [0, 0, 1, 1], [], []>} : vector<8x2048xf32>, vector<2048x512xf32>, vector<8x512xf32> -> vector<8x512xf32>
    %c0_3 = arith.constant 0 : index
    %c0_4 = arith.constant 0 : index
    %3 = vector.load %arg3[%c0_3, %c0_4] : memref<1x512xf32, #tpu.memory_space<vmem>>, vector<1x512xf32>
    %4 = vector.broadcast %3 : vector<1x512xf32> to vector<8x512xf32>
    %5 = arith.addf %2, %4 : vector<8x512xf32>
    %c0_5 = arith.constant 0 : index
    %c0_6 = arith.constant 0 : index
    %6 = vector.load %arg4[%c0_5, %c0_6] : memref<8x512xf32, #tpu.memory_space<vmem>>, vector<8x512xf32>
    tpu.vector_store %arg4[%c0_5, %c0_6], %5 {strides = array<i32>} : memref<8x512xf32, #tpu.memory_space<vmem>>, vector<8x512xf32>,
    return
  }
  func.func @transform_0(%arg0: i32) -> (i32, i32) {
    %c0_i32 = arith.constant 0 : i32
    %c0_i32_0 = arith.constant 0 : i32
    %c0_i32_1 = arith.constant 0 : i32
    return %c0_i32, %c0_i32_0 : i32, i32
  }
  func.func @transform_1(%arg0: i32) -> (i32, i32) {
    %c0_i32 = arith.constant 0 : i32
    %c0_i32_0 = arith.constant 0 : i32
    return %c0_i32, %arg0 : i32, i32
  }
  func.func @transform_2(%arg0: i32) -> (i32, i32) {
    %c0_i32 = arith.constant 0 : i32
    %c0_i32_0 = arith.constant 0 : i32
    return %c0_i32, %arg0 : i32, i32
  }
  func.func @transform_3(%arg0: i32) -> (i32, i32) {
    %c0_i32 = arith.constant 0 : i32
    %c0_i32_0 = arith.constant 0 : i32
    return %c0_i32, %arg0 : i32, i32
  }
}

module attributes {stable_mosaic.version = 11 : i64} {
  func.func @_fused_l1_l2_kernel(%arg0: i32, %arg1: memref<8x64xf32, #tpu.memory_space<vmem>>, %arg2: memref<64x2048xf32, #tpu.memory_space<vmem>>, %arg3: memref<1x2048xf32, #tpu.memory_space<vmem>>, %arg4: memref<1x2048xf32, #tpu.memory_space<vmem>>, %arg5: memref<2048x512xf32, #tpu.memory_space<vmem>>, %arg6: memref<1x512xf32, #tpu.memory_space<vmem>>, %arg7: memref<1x512xf32, #tpu.memory_space<vmem>>, %arg8: memref<8x512xf32, #tpu.memory_space<vmem>>) attributes {dimension_semantics = [#tpu.dimension_semantics<parallel>], iteration_bounds = array<i64: 4>, scalar_prefetch = 0 : i64, scratch_operands = 0 : i64, tpu.core_type = #tpu.core_type<tc>, window_params = [{pipeline_mode = #tpu.pipeline_mode<synchronous>, transform_indices = @transform_0, window_bounds = array<i64: 8, 64>}, {pipeline_mode = #tpu.pipeline_mode<synchronous>, transform_indices = @transform_1, window_bounds = array<i64: 64, 2048>}, {pipeline_mode = #tpu.pipeline_mode<synchronous>, transform_indices = @transform_2, window_bounds = array<i64: 1, 2048>}, {pipeline_mode = #tpu.pipeline_mode<synchronous>, transform_indices = @transform_3, window_bounds = array<i64: 1, 2048>}, {transform_indices = @transform_4, window_bounds = array<i64: 2048, 512>}, {transform_indices = @transform_5, window_bounds = array<i64: 1, 512>}, {transform_indices = @transform_6, window_bounds = array<i64: 1, 512>}, {transform_indices = @transform_7, window_bounds = array<i64: 8, 512>}]} {
    %c0 = arith.constant 0 : index
    %c0_0 = arith.constant 0 : index
    %0 = vector.load %arg1[%c0, %c0_0] : memref<8x64xf32, #tpu.memory_space<vmem>>, vector<8x64xf32>
    %c0_1 = arith.constant 0 : index
    %c0_2 = arith.constant 0 : index
    %1 = vector.load %arg2[%c0_1, %c0_2] : memref<64x2048xf32, #tpu.memory_space<vmem>>, vector<64x2048xf32>
    %cst = arith.constant dense<0.000000e+00> : vector<8x2048xf32>
    %2 = tpu.matmul %0, %1, %cst {dimension_numbers = #tpu.dot_dimension_numbers<[1], [0], [0], [1], [0, 0, 1, 1], [], []>} : vector<8x64xf32>, vector<64x2048xf32>, vector<8x2048xf32> -> vector<8x2048xf32>
    %c0_3 = arith.constant 0 : index
    %c0_4 = arith.constant 0 : index
    %3 = vector.load %arg3[%c0_3, %c0_4] : memref<1x2048xf32, #tpu.memory_space<vmem>>, vector<1x2048xf32>
    %4 = vector.broadcast %3 : vector<1x2048xf32> to vector<8x2048xf32>
    %5 = arith.mulf %2, %4 : vector<8x2048xf32>
    %c0_5 = arith.constant 0 : index
    %c0_6 = arith.constant 0 : index
    %6 = vector.load %arg4[%c0_5, %c0_6] : memref<1x2048xf32, #tpu.memory_space<vmem>>, vector<1x2048xf32>
    %7 = vector.broadcast %6 : vector<1x2048xf32> to vector<8x2048xf32>
    %8 = arith.addf %5, %7 : vector<8x2048xf32>
    %cst_7 = arith.constant 0.000000e+00 : f32
    %9 = vector.broadcast %cst_7 : f32 to vector<8x2048xf32>
    %10 = arith.cmpf oge, %8, %9 : vector<8x2048xf32>
    %cst_8 = arith.constant 2.000000e-02 : f32
    %11 = vector.broadcast %cst_8 : f32 to vector<8x2048xf32>
    %12 = arith.mulf %11, %8 : vector<8x2048xf32>
    %13 = arith.select %10, %8, %12 : vector<8x2048xi1>, vector<8x2048xf32>
    %c0_9 = arith.constant 0 : index
    %c0_10 = arith.constant 0 : index
    %14 = vector.load %arg5[%c0_9, %c0_10] : memref<2048x512xf32, #tpu.memory_space<vmem>>, vector<2048x512xf32>
    %cst_11 = arith.constant dense<0.000000e+00> : vector<8x512xf32>
    %15 = tpu.matmul %13, %14, %cst_11 {dimension_numbers = #tpu.dot_dimension_numbers<[1], [0], [0], [1], [0, 0, 1, 1], [], []>} : vector<8x2048xf32>, vector<2048x512xf32>, vector<8x512xf32> -> vector<8x512xf32>
    %c0_12 = arith.constant 0 : index
    %c0_13 = arith.constant 0 : index
    %16 = vector.load %arg6[%c0_12, %c0_13] : memref<1x512xf32, #tpu.memory_space<vmem>>, vector<1x512xf32>
    %17 = vector.broadcast %16 : vector<1x512xf32> to vector<8x512xf32>
    %18 = arith.mulf %15, %17 : vector<8x512xf32>
    %c0_14 = arith.constant 0 : index
    %c0_15 = arith.constant 0 : index
    %19 = vector.load %arg7[%c0_14, %c0_15] : memref<1x512xf32, #tpu.memory_space<vmem>>, vector<1x512xf32>
    %20 = vector.broadcast %19 : vector<1x512xf32> to vector<8x512xf32>
    %21 = arith.addf %18, %20 : vector<8x512xf32>
    %cst_16 = arith.constant 0.000000e+00 : f32
    %22 = vector.broadcast %cst_16 : f32 to vector<8x512xf32>
    %23 = arith.cmpf oge, %21, %22 : vector<8x512xf32>
    %cst_17 = arith.constant 2.000000e-02 : f32
    %24 = vector.broadcast %cst_17 : f32 to vector<8x512xf32>
    %25 = arith.mulf %24, %21 : vector<8x512xf32>
    %26 = arith.select %23, %21, %25 : vector<8x512xi1>, vector<8x512xf32>
    %c0_18 = arith.constant 0 : index
    %c0_19 = arith.constant 0 : index
    %27 = vector.load %arg8[%c0_18, %c0_19] : memref<8x512xf32, #tpu.memory_space<vmem>>, vector<8x512xf32>
    tpu.vector_store %arg8[%c0_18, %c0_19], %26 {strides = array<i32>} : memref<8x512xf32, #tpu.memory_space<vmem>>, vector<8x512xf32>,
    return
  }
  func.func @transform_0(%arg0: i32) -> (i32, i32) {
    %c0_i32 = arith.constant 0 : i32
    %c0_i32_0 = arith.constant 0 : i32
    %c0_i32_1 = arith.constant 0 : i32
    return %c0_i32, %c0_i32_0 : i32, i32
  }
  func.func @transform_1(%arg0: i32) -> (i32, i32) {
    %c0_i32 = arith.constant 0 : i32
    %c0_i32_0 = arith.constant 0 : i32
    %c0_i32_1 = arith.constant 0 : i32
    return %c0_i32, %c0_i32_0 : i32, i32
  }
  func.func @transform_2(%arg0: i32) -> (i32, i32) {
    %c0_i32 = arith.constant 0 : i32
    %c0_i32_0 = arith.constant 0 : i32
    %c0_i32_1 = arith.constant 0 : i32
    return %c0_i32, %c0_i32_0 : i32, i32
  }
  func.func @transform_3(%arg0: i32) -> (i32, i32) {
    %c0_i32 = arith.constant 0 : i32
    %c0_i32_0 = arith.constant 0 : i32
    %c0_i32_1 = arith.constant 0 : i32
    return %c0_i32, %c0_i32_0 : i32, i32
  }
  func.func @transform_4(%arg0: i32) -> (i32, i32) {
    %c0_i32 = arith.constant 0 : i32
    %c0_i32_0 = arith.constant 0 : i32
    return %c0_i32, %arg0 : i32, i32
  }
  func.func @transform_5(%arg0: i32) -> (i32, i32) {
    %c0_i32 = arith.constant 0 : i32
    %c0_i32_0 = arith.constant 0 : i32
    return %c0_i32, %arg0 : i32, i32
  }
  func.func @transform_6(%arg0: i32) -> (i32, i32) {
    %c0_i32 = arith.constant 0 : i32
    %c0_i32_0 = arith.constant 0 : i32
    return %c0_i32, %arg0 : i32, i32
  }
  func.func @transform_7(%arg0: i32) -> (i32, i32) {
    %c0_i32 = arith.constant 0 : i32
    %c0_i32_0 = arith.constant 0 : i32
    return %c0_i32, %arg0 : i32, i32
  }
}

</mosaic_0001>

<llo_original>
// kernel: gen_high_fc_forward.2
$region0: #{gen_high_fc_forward.2}
  #allocation0 [shape = 'u32[]', space=smem, size = 0x4, offset = 0x4, fixed_abs, tag = 'smem constant byte address 0x4 - core index']
  #allocation1 [shape = 'u32[72,128]{1,0:T(1,128)}', space=vmem, size = 0x9000, scoped, tag = 'internal scratch']
  %s0 = inlined_call_operand.hbm [shape: f32[8,64], index: 0, kind: input, shape index: {}]
  %s1 = inlined_call_operand.hbm [shape: f32[64,2048], index: 1, kind: input, shape index: {}]
  %s2 = inlined_call_operand.vmem [shape: f32[1,2048], index: 2, kind: input, shape index: {}]
  %s3 = inlined_call_operand.vmem [shape: f32[1,2048], index: 3, kind: input, shape index: {}]
  %s4 = inlined_call_operand.hbm [shape: f32[2048,2048], index: 4, kind: input, shape index: {}]
  %s5 = inlined_call_operand.vmem [shape: f32[1,2048], index: 5, kind: input, shape index: {}]
  %s6 = inlined_call_operand.vmem [shape: f32[1,2048], index: 6, kind: input, shape index: {}]
  %s7 = inlined_call_operand.vmem [shape: f32[8,2048], index: 7, kind: output, shape index: {}]
  %s8 = sld [smem:[#allocation0]]
  $region73: #{gen_high_fc_forward.2} parent=0
    _
  %s10 = ssub.s32 1, %s8
  %s11 = scalar_select 0, %s10, %s8
  $region1: #{gen_high_fc_forward.2} parent=0
    #allocation2 [shape = 'u8[4096]{0}', space=vmem, size = 0x1000, scoped, tag = 'input window, operand 0, single buffered']
    #allocation3 [shape = 's32[2]{0}', space=sflag, size = 0x8, scoped, tag = 'scoped memory for gen_high_fc_forward.2']
    #allocation4 [shape = 'u8[524288]{0}', space=vmem, size = 0x80000, scoped, tag = 'input window, operand 1, single buffered']
    #allocation5 [shape = 's32[1]{0}', space=sflag, size = 0x4, scoped, tag = 'scoped memory for gen_high_fc_forward.2']
    #allocation6 [shape = 'u8[8388608]{0}', space=vmem, size = 0x800000, scoped, tag = 'input window, operand 4']
    %12 = vsyncpa [#allocation3], 0
    %13 = vsyncpa [#allocation5], 0
    loop: start=0, step=1, limit=6
    $region2: #{gen_high_fc_forward.2} parent=1 // loop_pre_header
      _
    $region3: #{gen_high_fc_forward.2} parent=1 // loop_header
      %s15 = sphi 0, %s19
      %p16 = scmp.ge.s32.totalorder %s15, 6
      %s23 = sphi 0, %s23
      %s25 = sphi 0, %s23
      %s26 = sphi 0, %s25
      %s40 = sphi 0, %s26
      %s44 = sphi 0, %s44
      %s46 = sphi 0, %s44
      %s47 = sphi 0, %s46
      %s61 = sphi 0, %s47
      %s65 = sphi 0, %s65
      %s67 = sphi 0, %s65
      %s68 = sphi 0, %s67
      %s82 = sphi 0, %s68
      %s86 = sphi 0, %s86
      %s88 = sphi 0, %s86
      %s89 = sphi 0, %s88
      %s103 = sphi 0, %s89
      %s109 = sphi 0, %s111
      %s112 = sphi 0, %s109
      %s113 = sphi 0, %s112
      %s129 = sphi 0, %s113
      %s135 = sphi 0, %s137
      %s138 = sphi 0, %s135
      %s139 = sphi 0, %s138
      %s155 = sphi 0, %s139
      %s161 = sphi 0, %s163
      %s164 = sphi 0, %s161
      %s165 = sphi 0, %s164
      %s181 = sphi 0, %s165
      %s187 = sphi 0, %s189
      %s190 = sphi 0, %s187
      %s191 = sphi 0, %s190
      %s207 = sphi 0, %s191
    $region4: #{gen_high_fc_forward.2} parent=1 // loop_header_branch
      %18 = sbr.rel (%p16) target = $region8
    $region5: #{gen_high_fc_forward.2} parent=1 // loop_body
      %s20 = ssub.s32 %s15, 1
      %s21 = ssub.s32 %s15, 2
      %s22 = sadd.s32 %s15, 1
      %s24 = sadd.s32 %s23, 1
      %p27 = scmp.eq.s32.totalorder %s15, 3
      %p28 = scmp.ne.s32.totalorder %s23, %s25
      %p29 = scmp.eq.s32.totalorder %s15, 0
      %p30 = por %p28, %p29
      %p31 = scmp.ne.s32.totalorder %s23, %s25
      %p32 = scmp.eq.s32.totalorder %s20, 3
      %p33 = por %p31, %p32
      %p34 = scmp.ne.s32.totalorder %s25, %s26
      %p35 = scmp.eq.s32.totalorder %s20, 0
      %p36 = por %p34, %p35
      %p37 = scmp.ne.s32.totalorder %s25, %s26
      %p38 = scmp.eq.s32.totalorder %s21, 3
      %p39 = por %p37, %p38
      %p41 = scmp.ne.s32.totalorder %s26, %s40
      %p42 = scmp.eq.s32.totalorder %s21, 0
      %p43 = por %p41, %p42
      %s45 = sadd.s32 %s44, 1
      %p48 = scmp.eq.s32.totalorder %s15, 3
      %p49 = scmp.ne.s32.totalorder %s44, %s46
      %p50 = scmp.eq.s32.totalorder %s15, 0
      %p51 = por %p49, %p50
      %p52 = scmp.ne.s32.totalorder %s44, %s46
      %p53 = scmp.eq.s32.totalorder %s20, 3
      %p54 = por %p52, %p53
      %p55 = scmp.ne.s32.totalorder %s46, %s47
      %p56 = scmp.eq.s32.totalorder %s20, 0
      %p57 = por %p55, %p56
      %p58 = scmp.ne.s32.totalorder %s46, %s47
      %p59 = scmp.eq.s32.totalorder %s21, 3
      %p60 = por %p58, %p59
      %p62 = scmp.ne.s32.totalorder %s47, %s61
      %p63 = scmp.eq.s32.totalorder %s21, 0
      %p64 = por %p62, %p63
      %s66 = sadd.s32 %s65, 1
      %p69 = scmp.eq.s32.totalorder %s15, 3
      %p70 = scmp.ne.s32.totalorder %s65, %s67
      %p71 = scmp.eq.s32.totalorder %s15, 0
      %p72 = por %p70, %p71
      %p73 = scmp.ne.s32.totalorder %s65, %s67
      %p74 = scmp.eq.s32.totalorder %s20, 3
      %p75 = por %p73, %p74
      %p76 = scmp.ne.s32.totalorder %s67, %s68
      %p77 = scmp.eq.s32.totalorder %s20, 0
      %p78 = por %p76, %p77
      %p79 = scmp.ne.s32.totalorder %s67, %s68
      %p80 = scmp.eq.s32.totalorder %s21, 3
      %p81 = por %p79, %p80
      %p83 = scmp.ne.s32.totalorder %s68, %s82
      %p84 = scmp.eq.s32.totalorder %s21, 0
      %p85 = por %p83, %p84
      %s87 = sadd.s32 %s86, 1
      %p90 = scmp.eq.s32.totalorder %s15, 3
      %p91 = scmp.ne.s32.totalorder %s86, %s88
      %p92 = scmp.eq.s32.totalorder %s15, 0
      %p93 = por %p91, %p92
      %p94 = scmp.ne.s32.totalorder %s86, %s88
      %p95 = scmp.eq.s32.totalorder %s20, 3
      %p96 = por %p94, %p95
      %p97 = scmp.ne.s32.totalorder %s88, %s89
      %p98 = scmp.eq.s32.totalorder %s20, 0
      %p99 = por %p97, %p98
      %p100 = scmp.ne.s32.totalorder %s88, %s89
      %p101 = scmp.eq.s32.totalorder %s21, 3
      %p102 = por %p100, %p101
      %p104 = scmp.ne.s32.totalorder %s89, %s103
      %p105 = scmp.eq.s32.totalorder %s21, 0
      %p106 = por %p104, %p105
      %s107 = ssub.s32 %s15, %s22
      %p108 = scmp.eq.s32.totalorder %s107, 0
      %s110 = sadd.s32 %s109, 1
      %s111 = scalar_select %p108, %s109, %s110
      %p114 = pneg %p108
      %p115 = scmp.eq.s32.totalorder %s15, 3
      %p116 = por %p114, %p115
      %p117 = scmp.ne.s32.totalorder %s109, %s112
      %p118 = scmp.eq.s32.totalorder %s15, 0
      %p119 = por %p117, %p118
      %p120 = scmp.ne.s32.totalorder %s109, %s112
      %p121 = scmp.eq.s32.totalorder %s20, 3
      %p122 = por %p120, %p121
      %p123 = scmp.ne.s32.totalorder %s112, %s113
      %p124 = scmp.eq.s32.totalorder %s20, 0
      %p125 = por %p123, %p124
      %p126 = scmp.ne.s32.totalorder %s112, %s113
      %p127 = scmp.eq.s32.totalorder %s21, 3
      %p128 = por %p126, %p127
      %p130 = scmp.ne.s32.totalorder %s113, %s129
      %p131 = scmp.eq.s32.totalorder %s21, 0
      %p132 = por %p130, %p131
      %s133 = ssub.s32 %s15, %s22
      %p134 = scmp.eq.s32.totalorder %s133, 0
      %s136 = sadd.s32 %s135, 1
      %s137 = scalar_select %p134, %s135, %s136
      %p140 = pneg %p134
      %p141 = scmp.eq.s32.totalorder %s15, 3
      %p142 = por %p140, %p141
      %p143 = scmp.ne.s32.totalorder %s135, %s138
      %p144 = scmp.eq.s32.totalorder %s15, 0
      %p145 = por %p143, %p144
      %p146 = scmp.ne.s32.totalorder %s135, %s138
      %p147 = scmp.eq.s32.totalorder %s20, 3
      %p148 = por %p146, %p147
      %p149 = scmp.ne.s32.totalorder %s138, %s139
      %p150 = scmp.eq.s32.totalorder %s20, 0
      %p151 = por %p149, %p150
      %p152 = scmp.ne.s32.totalorder %s138, %s139
      %p153 = scmp.eq.s32.totalorder %s21, 3
      %p154 = por %p152, %p153
      %p156 = scmp.ne.s32.totalorder %s139, %s155
      %p157 = scmp.eq.s32.totalorder %s21, 0
      %p158 = por %p156, %p157
      %s159 = ssub.s32 %s15, %s22
      %p160 = scmp.eq.s32.totalorder %s159, 0
      %s162 = sadd.s32 %s161, 1
      %s163 = scalar_select %p160, %s161, %s162
      %p166 = pneg %p160
      %p167 = scmp.eq.s32.totalorder %s15, 3
      %p168 = por %p166, %p167
      %p169 = scmp.ne.s32.totalorder %s161, %s164
      %p170 = scmp.eq.s32.totalorder %s15, 0
      %p171 = por %p169, %p170
      %p172 = scmp.ne.s32.totalorder %s161, %s164
      %p173 = scmp.eq.s32.totalorder %s20, 3
      %p174 = por %p172, %p173
      %p175 = scmp.ne.s32.totalorder %s164, %s165
      %p176 = scmp.eq.s32.totalorder %s20, 0
      %p177 = por %p175, %p176
      %p178 = scmp.ne.s32.totalorder %s164, %s165
      %p179 = scmp.eq.s32.totalorder %s21, 3
      %p180 = por %p178, %p179
      %p182 = scmp.ne.s32.totalorder %s165, %s181
      %p183 = scmp.eq.s32.totalorder %s21, 0
      %p184 = por %p182, %p183
      %s185 = ssub.s32 %s15, %s22
      %p186 = scmp.eq.s32.totalorder %s185, 0
      %s188 = sadd.s32 %s187, 1
      %s189 = scalar_select %p186, %s187, %s188
      %p192 = pneg %p186
      %p193 = scmp.eq.s32.totalorder %s15, 3
      %p194 = por %p192, %p193
      %p195 = scmp.ne.s32.totalorder %s187, %s190
      %p196 = scmp.eq.s32.totalorder %s15, 0
      %p197 = por %p195, %p196
      %p198 = scmp.ne.s32.totalorder %s187, %s190
      %p199 = scmp.eq.s32.totalorder %s20, 3
      %p200 = por %p198, %p199
      %p201 = scmp.ne.s32.totalorder %s190, %s191
      %p202 = scmp.eq.s32.totalorder %s20, 0
      %p203 = por %p201, %p202
      %p204 = scmp.ne.s32.totalorder %s190, %s191
      %p205 = scmp.eq.s32.totalorder %s21, 3
      %p206 = por %p204, %p205
      %p208 = scmp.ne.s32.totalorder %s191, %s207
      %p209 = scmp.eq.s32.totalorder %s21, 0
      %p210 = por %p208, %p209
      %p211 = scmp.le.s32.totalorder 1, %s15
      %p212 = scmp.lt.s32.totalorder %s15, 5
      %p213 = pnand %p211, %p212
      %p214 = pneg %p213
      // Predicated region
      $region9: #{gen_high_fc_forward.2} parent=5 // pred_check
        _
      $region10: #{gen_high_fc_forward.2} parent=5 // pred_check_branch
        %216 = sbr.rel (%p213) target = $region12
      $region11: #{gen_high_fc_forward.2} parent=5 // pred_region
        %s217 = ssub.s32 %s15, 1
        // Predicated region
        $region13: #{gen_high_fc_forward.2} parent=11 // pred_check
          %p218 = pneg %p36
        $region14: #{gen_high_fc_forward.2} parent=11 // pred_check_branch
          %220 = sbr.rel (%p218) target = $region16
        $region15: #{gen_high_fc_forward.2} parent=11 // pred_region
          %222 = vsyncadd [#allocation3], 0
          %s224 = sshll.u32 %s0, 4
          %s225 = int_to_ptr.hbm [resolvable:$true] %s224
          %s226 = sshll.u32 [#allocation2], 4
          %s227 = int_to_ptr.vmem [resolvable:$true] %s226
          %229 = dma.hbm_to_vmem [thread:$0]  %s225, 128, %s227, [#allocation3]
        $region16: #{gen_high_fc_forward.2} parent=11 // pred_fallthru
          _
        // Predicated region
        $region17: #{gen_high_fc_forward.2} parent=11 // pred_check
          %p230 = pneg %p57
        $region18: #{gen_high_fc_forward.2} parent=11 // pred_check_branch
          %232 = sbr.rel (%p230) target = $region20
        $region19: #{gen_high_fc_forward.2} parent=11 // pred_region
          %234 = vsyncadd [#allocation5], 0
          %s235 = sshll.u32 %s1, 4
          %s236 = int_to_ptr.hbm [resolvable:$true] %s235
          %s237 = sshll.u32 [#allocation4], 4
          %s238 = int_to_ptr.vmem [resolvable:$true] %s237
          %243 = dma.hbm_to_vmem [thread:$0]  %s236, 16384, %s238, [#allocation5], 2048, 2048, 128
        $region20: #{gen_high_fc_forward.2} parent=11 // pred_fallthru
          _
        // Predicated region
        $region21: #{gen_high_fc_forward.2} parent=11 // pred_check
          %p244 = pneg %p78
        $region22: #{gen_high_fc_forward.2} parent=11 // pred_check_branch
          %246 = sbr.rel (%p244) target = $region24
        $region23: #{gen_high_fc_forward.2} parent=11 // pred_region
          _
        $region24: #{gen_high_fc_forward.2} parent=11 // pred_fallthru
          _
        // Predicated region
        $region25: #{gen_high_fc_forward.2} parent=11 // pred_check
          %p247 = pneg %p99
        $region26: #{gen_high_fc_forward.2} parent=11 // pred_check_branch
          %249 = sbr.rel (%p247) target = $region28
        $region27: #{gen_high_fc_forward.2} parent=11 // pred_region
          _
        $region28: #{gen_high_fc_forward.2} parent=11 // pred_fallthru
          _
      $region12: #{gen_high_fc_forward.2} parent=5 // pred_fallthru
        _
      %p250 = scmp.lt.s32.totalorder %s15, 4
      // Predicated region
      $region29: #{gen_high_fc_forward.2} parent=5 // pred_check
        %p251 = pneg %p250
      $region30: #{gen_high_fc_forward.2} parent=5 // pred_check_branch
        %253 = sbr.rel (%p251) target = $region32
      $region31: #{gen_high_fc_forward.2} parent=5 // pred_region
        // Predicated region
        $region33: #{gen_high_fc_forward.2} parent=31 // pred_check
          %p254 = pneg %p119
        $region34: #{gen_high_fc_forward.2} parent=31 // pred_check_branch
          %256 = sbr.rel (%p254) target = $region36
        $region35: #{gen_high_fc_forward.2} parent=31 // pred_region
          %s257 = sand.u32 %s15, 1
          %s258 = scalar_lea.sflag [#allocation3], %s257
          %s259 = sand.u32 %s109, 1
          %s260 = smul.addr %s259, 8192
          %s261 = scalar_lea.vmem [#allocation6], %s260
          %s262 = smul.u32 4, %s15
          %264 = vsyncadd %s258, 0
          %s265 = smul.addr %s262, 8
          %s266 = scalar_lea.hbm %s4, %s265
          %s267 = sshll.u32 %s266, 4
          %s268 = int_to_ptr.hbm [resolvable:$true] %s267
          %s269 = sshll.u32 %s261, 4
          %s270 = int_to_ptr.vmem [resolvable:$true] %s269
          %275 = dma.hbm_to_vmem [thread:$0]  %s268, 131072, %s270, %s258, 2048, 512, 32
        $region36: #{gen_high_fc_forward.2} parent=31 // pred_fallthru
          _
        // Predicated region
        $region37: #{gen_high_fc_forward.2} parent=31 // pred_check
          %p276 = pneg %p145
        $region38: #{gen_high_fc_forward.2} parent=31 // pred_check_branch
          %278 = sbr.rel (%p276) target = $region40
        $region39: #{gen_high_fc_forward.2} parent=31 // pred_region
          %s279 = smul.u32 4, %s15
          %p280 = scmp.lt.s32.totalorder %s279, 15
          %s281 = scalar_select %p280, %s279, 15
          %s282 = scalar_lea.vmem %s5, %s281
          %s283 = smul.u32 4, %s15
        $region40: #{gen_high_fc_forward.2} parent=31 // pred_fallthru
          _
        // Predicated region
        $region41: #{gen_high_fc_forward.2} parent=31 // pred_check
          %p284 = pneg %p171
        $region42: #{gen_high_fc_forward.2} parent=31 // pred_check_branch
          %286 = sbr.rel (%p284) target = $region44
        $region43: #{gen_high_fc_forward.2} parent=31 // pred_region
          %s287 = smul.u32 4, %s15
          %p288 = scmp.lt.s32.totalorder %s287, 15
          %s289 = scalar_select %p288, %s287, 15
          %s290 = scalar_lea.vmem %s6, %s289
          %s291 = smul.u32 4, %s15
        $region44: #{gen_high_fc_forward.2} parent=31 // pred_fallthru
          _
      $region32: #{gen_high_fc_forward.2} parent=5 // pred_fallthru
        _
      %p292 = scmp.le.s32.totalorder 1, %s15
      %p293 = scmp.lt.s32.totalorder %s15, 5
      %p294 = pnand %p292, %p293
      %p295 = pneg %p294
      // Predicated region
      $region45: #{gen_high_fc_forward.2} parent=5 // pred_check
        _
      $region46: #{gen_high_fc_forward.2} parent=5 // pred_check_branch
        %297 = sbr.rel (%p294) target = $region48
      $region47: #{gen_high_fc_forward.2} parent=5 // pred_region
        %s298 = ssub.s32 %s15, 1
        // Predicated region
        $region49: #{gen_high_fc_forward.2} parent=47 // pred_check
          %p299 = pneg %p36
        $region50: #{gen_high_fc_forward.2} parent=47 // pred_check_branch
          %301 = sbr.rel (%p299) target = $region52
        $region51: #{gen_high_fc_forward.2} parent=47 // pred_region
          %303 = dma.done [#allocation3], 128
        $region52: #{gen_high_fc_forward.2} parent=47 // pred_fallthru
          _
        // Predicated region
        $region53: #{gen_high_fc_forward.2} parent=47 // pred_check
          %p304 = pneg %p57
        $region54: #{gen_high_fc_forward.2} parent=47 // pred_check_branch
          %306 = sbr.rel (%p304) target = $region56
        $region55: #{gen_high_fc_forward.2} parent=47 // pred_region
          %308 = dma.done [#allocation5], 16384
        $region56: #{gen_high_fc_forward.2} parent=47 // pred_fallthru
          _
        %s309 = sand.u32 %s20, 1
        %s310 = scalar_lea.sflag [#allocation3], %s309
        %s311 = sand.u32 %s112, 1
        %s312 = smul.addr %s311, 8192
        %s313 = scalar_lea.vmem [#allocation6], %s312
        // Predicated region
        $region57: #{gen_high_fc_forward.2} parent=47 // pred_check
          %p314 = pneg %p125
        $region58: #{gen_high_fc_forward.2} parent=47 // pred_check_branch
          %316 = sbr.rel (%p314) target = $region60
        $region59: #{gen_high_fc_forward.2} parent=47 // pred_region
          %318 = dma.done %s310, 131072
        $region60: #{gen_high_fc_forward.2} parent=47 // pred_fallthru
          _
        %p319 = pneg %p36
        %p320 = pneg %p33
        %p321 = pneg %p57
        %p322 = pneg %p54
        %p323 = pneg %p78
        %p324 = pneg %p75
        %p325 = pneg %p99
        %p326 = pneg %p96
        %s327 = sand.u32 %s20, 1
        %s328 = scalar_lea.sflag [#allocation3], %s327
        %s329 = sand.u32 %s112, 1
        %s330 = smul.addr %s329, 8192
        %s331 = scalar_lea.vmem [#allocation6], %s330
        %p332 = pneg %p125
        %p333 = pneg %p122
        %s334 = smul.u32 4, %s20
        %p335 = scmp.lt.s32.totalorder %s334, 15
        %s336 = scalar_select %p335, %s334, 15
        %s337 = scalar_lea.vmem %s5, %s336
        %p338 = pneg %p151
        %p339 = pneg %p148
        %s340 = smul.u32 4, %s20
        %p341 = scmp.lt.s32.totalorder %s340, 15
        %s342 = scalar_select %p341, %s340, 15
        %s343 = scalar_lea.vmem %s6, %s342
        %p344 = pneg %p177
        %p345 = pneg %p174
        %p346 = pneg %p203
        %p347 = pneg %p200
        %s348 = smul.u32 4, %s20
        %p349 = scmp.lt.s32.totalorder %s348, 15
        %s350 = scalar_select %p349, %s348, 15
        %s351 = smul.addr %s350, 8
        %s352 = scalar_lea.vmem %s7, %s351
        %s353 = smul.u32 4, %s20
        %s354 = smul.u32 4, %s20
        %p355 = scmp.lt.s32.totalorder %s354, 15
        %s356 = scalar_select %p355, %s354, 15
        %s357 = scalar_lea.vmem %s5, %s356
        %s358 = smul.u32 4, %s20
        %s359 = smul.u32 4, %s20
        %p360 = scmp.lt.s32.totalorder %s359, 15
        %s361 = scalar_select %p360, %s359, 15
        %s362 = scalar_lea.vmem %s6, %s361
        %s363 = smul.u32 4, %s20
        %s364 = smul.u32 4, %s20
        %p365 = scmp.lt.s32.totalorder %s364, 15
        %s366 = scalar_select %p365, %s364, 15
        %s367 = smul.addr %s366, 8
        %s368 = scalar_lea.vmem %s7, %s367
        %s369 = smul.u32 4, %s20
        %v370 = vld [vmem:[#allocation2] sm:$0xff]
        %v371 = vld [vmem:[#allocation4] sm:$0xff]
        %v372 = vld [vmem:[#allocation4 + $0x8] sm:$0xff]
        %v373 = vld [vmem:[#allocation4 + $0x10] sm:$0xff]
        %v374 = vld [vmem:[#allocation4 + $0x18] sm:$0xff]
        %v375 = vld [vmem:[#allocation4 + $0x20] sm:$0xff]
        %v376 = vld [vmem:[#allocation4 + $0x28] sm:$0xff]
        %v377 = vld [vmem:[#allocation4 + $0x30] sm:$0xff]
        %v378 = vld [vmem:[#allocation4 + $0x38] sm:$0xff]
        %v379 = vld [vmem:[#allocation4 + $0x40] sm:$0xff]
        %v380 = vld [vmem:[#allocation4 + $0x48] sm:$0xff]
        %v381 = vld [vmem:[#allocation4 + $0x50] sm:$0xff]
        %v382 = vld [vmem:[#allocation4 + $0x58] sm:$0xff]
        %v383 = vld [vmem:[#allocation4 + $0x60] sm:$0xff]
        %v384 = vld [vmem:[#allocation4 + $0x68] sm:$0xff]
        %v385 = vld [vmem:[#allocation4 + $0x70] sm:$0xff]
        %v386 = vld [vmem:[#allocation4 + $0x78] sm:$0xff]
        %v387 = vld [vmem:[#allocation4 + $0x80] sm:$0xff]
        %v388 = vld [vmem:[#allocation4 + $0x88] sm:$0xff]
        %v389 = vld [vmem:[#allocation4 + $0x90] sm:$0xff]
        %v390 = vld [vmem:[#allocation4 + $0x98] sm:$0xff]
        %v391 = vld [vmem:[#allocation4 + $0xa0] sm:$0xff]
        %v392 = vld [vmem:[#allocation4 + $0xa8] sm:$0xff]
        %v393 = vld [vmem:[#allocation4 + $0xb0] sm:$0xff]
        %v394 = vld [vmem:[#allocation4 + $0xb8] sm:$0xff]
        %v395 = vld [vmem:[#allocation4 + $0xc0] sm:$0xff]
        %v396 = vld [vmem:[#allocation4 + $0xc8] sm:$0xff]
        %v397 = vld [vmem:[#allocation4 + $0xd0] sm:$0xff]
        %v398 = vld [vmem:[#allocation4 + $0xd8] sm:$0xff]
        %v399 = vld [vmem:[#allocation4 + $0xe0] sm:$0xff]
        %v400 = vld [vmem:[#allocation4 + $0xe8] sm:$0xff]
        %v401 = vld [vmem:[#allocation4 + $0xf0] sm:$0xff]
        %v402 = vld [vmem:[#allocation4 + $0xf8] sm:$0xff]
        %v403 = vld [vmem:[#allocation4 + $0x100] sm:$0xff]
        %v404 = vld [vmem:[#allocation4 + $0x108] sm:$0xff]
        %v405 = vld [vmem:[#allocation4 + $0x110] sm:$0xff]
        %v406 = vld [vmem:[#allocation4 + $0x118] sm:$0xff]
        %v407 = vld [vmem:[#allocation4 + $0x120] sm:$0xff]
        %v408 = vld [vmem:[#allocation4 + $0x128] sm:$0xff]
        %v409 = vld [vmem:[#allocation4 + $0x130] sm:$0xff]
        %v410 = vld [vmem:[#allocation4 + $0x138] sm:$0xff]
        %v411 = vld [vmem:[#allocation4 + $0x140] sm:$0xff]
        %v412 = vld [vmem:[#allocation4 + $0x148] sm:$0xff]
        %v413 = vld [vmem:[#allocation4 + $0x150] sm:$0xff]
        %v414 = vld [vmem:[#allocation4 + $0x158] sm:$0xff]
        %v415 = vld [vmem:[#allocation4 + $0x160] sm:$0xff]
        %v416 = vld [vmem:[#allocation4 + $0x168] sm:$0xff]
        %v417 = vld [vmem:[#allocation4 + $0x170] sm:$0xff]
        %v418 = vld [vmem:[#allocation4 + $0x178] sm:$0xff]
        %v419 = vld [vmem:[#allocation4 + $0x180] sm:$0xff]
        %v420 = vld [vmem:[#allocation4 + $0x188] sm:$0xff]
        %v421 = vld [vmem:[#allocation4 + $0x190] sm:$0xff]
        %v422 = vld [vmem:[#allocation4 + $0x198] sm:$0xff]
        %v423 = vld [vmem:[#allocation4 + $0x1a0] sm:$0xff]
        %v424 = vld [vmem:[#allocation4 + $0x1a8] sm:$0xff]
        %v425 = vld [vmem:[#allocation4 + $0x1b0] sm:$0xff]
        %v426 = vld [vmem:[#allocation4 + $0x1b8] sm:$0xff]
        %v427 = vld [vmem:[#allocation4 + $0x1c0] sm:$0xff]
        %v428 = vld [vmem:[#allocation4 + $0x1c8] sm:$0xff]
        %v429 = vld [vmem:[#allocation4 + $0x1d0] sm:$0xff]
        %v430 = vld [vmem:[#allocation4 + $0x1d8] sm:$0xff]
        %v431 = vld [vmem:[#allocation4 + $0x1e0] sm:$0xff]
        %v432 = vld [vmem:[#allocation4 + $0x1e8] sm:$0xff]
        %v433 = vld [vmem:[#allocation4 + $0x1f0] sm:$0xff]
        %v434 = vld [vmem:[#allocation4 + $0x1f8] sm:$0xff]
        %v435 = vld [vmem:[#allocation4 + $0x200] sm:$0xff]
        %v436 = vld [vmem:[#allocation4 + $0x208] sm:$0xff]
        %v437 = vld [vmem:[#allocation4 + $0x210] sm:$0xff]
        %v438 = vld [vmem:[#allocation4 + $0x218] sm:$0xff]
        %v439 = vld [vmem:[#allocation4 + $0x220] sm:$0xff]
        %v440 = vld [vmem:[#allocation4 + $0x228] sm:$0xff]
        %v441 = vld [vmem:[#allocation4 + $0x230] sm:$0xff]
        %v442 = vld [vmem:[#allocation4 + $0x238] sm:$0xff]
        %v443 = vld [vmem:[#allocation4 + $0x240] sm:$0xff]
        %v444 = vld [vmem:[#allocation4 + $0x248] sm:$0xff]
        %v445 = vld [vmem:[#allocation4 + $0x250] sm:$0xff]
        %v446 = vld [vmem:[#allocation4 + $0x258] sm:$0xff]
        %v447 = vld [vmem:[#allocation4 + $0x260] sm:$0xff]
        %v448 = vld [vmem:[#allocation4 + $0x268] sm:$0xff]
        %v449 = vld [vmem:[#allocation4 + $0x270] sm:$0xff]
        %v450 = vld [vmem:[#allocation4 + $0x278] sm:$0xff]
        %v451 = vld [vmem:[#allocation4 + $0x280] sm:$0xff]
        %v452 = vld [vmem:[#allocation4 + $0x288] sm:$0xff]
        %v453 = vld [vmem:[#allocation4 + $0x290] sm:$0xff]
        %v454 = vld [vmem:[#allocation4 + $0x298] sm:$0xff]
        %v455 = vld [vmem:[#allocation4 + $0x2a0] sm:$0xff]
        %v456 = vld [vmem:[#allocation4 + $0x2a8] sm:$0xff]
        %v457 = vld [vmem:[#allocation4 + $0x2b0] sm:$0xff]
        %v458 = vld [vmem:[#allocation4 + $0x2b8] sm:$0xff]
        %v459 = vld [vmem:[#allocation4 + $0x2c0] sm:$0xff]
        %v460 = vld [vmem:[#allocation4 + $0x2c8] sm:$0xff]
        %v461 = vld [vmem:[#allocation4 + $0x2d0] sm:$0xff]
        %v462 = vld [vmem:[#allocation4 + $0x2d8] sm:$0xff]
        %v463 = vld [vmem:[#allocation4 + $0x2e0] sm:$0xff]
        %v464 = vld [vmem:[#allocation4 + $0x2e8] sm:$0xff]
        %v465 = vld [vmem:[#allocation4 + $0x2f0] sm:$0xff]
        %v466 = vld [vmem:[#allocation4 + $0x2f8] sm:$0xff]
        %v467 = vld [vmem:[#allocation4 + $0x300] sm:$0xff]
        %v468 = vld [vmem:[#allocation4 + $0x308] sm:$0xff]
        %v469 = vld [vmem:[#allocation4 + $0x310] sm:$0xff]
        %v470 = vld [vmem:[#allocation4 + $0x318] sm:$0xff]
        %v471 = vld [vmem:[#allocation4 + $0x320] sm:$0xff]
        %v472 = vld [vmem:[#allocation4 + $0x328] sm:$0xff]
        %v473 = vld [vmem:[#allocation4 + $0x330] sm:$0xff]
        %v474 = vld [vmem:[#allocation4 + $0x338] sm:$0xff]
        %v475 = vld [vmem:[#allocation4 + $0x340] sm:$0xff]
        %v476 = vld [vmem:[#allocation4 + $0x348] sm:$0xff]
        %v477 = vld [vmem:[#allocation4 + $0x350] sm:$0xff]
        %v478 = vld [vmem:[#allocation4 + $0x358] sm:$0xff]
        %v479 = vld [vmem:[#allocation4 + $0x360] sm:$0xff]
        %v480 = vld [vmem:[#allocation4 + $0x368] sm:$0xff]
        %v481 = vld [vmem:[#allocation4 + $0x370] sm:$0xff]
        %v482 = vld [vmem:[#allocation4 + $0x378] sm:$0xff]
        %v483 = vld [vmem:[#allocation4 + $0x380] sm:$0xff]
        %v484 = vld [vmem:[#allocation4 + $0x388] sm:$0xff]
        %v485 = vld [vmem:[#allocation4 + $0x390] sm:$0xff]
        %v486 = vld [vmem:[#allocation4 + $0x398] sm:$0xff]
        %v487 = vld [vmem:[#allocation4 + $0x3a0] sm:$0xff]
        %v488 = vld [vmem:[#allocation4 + $0x3a8] sm:$0xff]
        %v489 = vld [vmem:[#allocation4 + $0x3b0] sm:$0xff]
        %v490 = vld [vmem:[#allocation4 + $0x3b8] sm:$0xff]
        %v491 = vld [vmem:[#allocation4 + $0x3c0] sm:$0xff]
        %v492 = vld [vmem:[#allocation4 + $0x3c8] sm:$0xff]
        %v493 = vld [vmem:[#allocation4 + $0x3d0] sm:$0xff]
        %v494 = vld [vmem:[#allocation4 + $0x3d8] sm:$0xff]
        %v495 = vld [vmem:[#allocation4 + $0x3e0] sm:$0xff]
        %v496 = vld [vmem:[#allocation4 + $0x3e8] sm:$0xff]
        %v497 = vld [vmem:[#allocation4 + $0x3f0] sm:$0xff]
        %v498 = vld [vmem:[#allocation4 + $0x3f8] sm:$0xff]
        %vm499 = vcmask 523264
        %v501 = vsel %vm499, %v370, 0
        %503 = vmatpush.msra.mxu0 0.0
        %504 = vmatpush.msra.mxu0 0.0
        %505 = vmatpush.msra.mxu0 0.0
        %506 = vmatpush.msra.mxu0 0.0
        %507 = vmatpush.msra.mxu0 0.0
        %508 = vmatpush.msra.mxu0 0.0
        %509 = vmatpush.msra.mxu0 0.0
        %510 = vmatpush.msra.mxu0 0.0
        %511 = vmatpush.msra.mxu0 %v483
        %512 = vmatpush.msra.mxu0 %v467
        %513 = vmatpush.msra.mxu0 %v451
        %514 = vmatpush.msra.mxu0 %v435
        %515 = vmatpush.msra.mxu0 %v419
        %516 = vmatpush.msra.mxu0 %v403
        %517 = vmatpush.msra.mxu0 %v387
        %518 = vmatpush.msra.mxu0 %v371
        %519 = vmatmul.f32.gmra.mxu0 %v501
        %v520 = vpop.f32.mrf.mxu0
        %v521 = vadd.f32 0.0, %v520
        %522 = vdwg.mxu0
        %523 = vmatpush.msra.mxu0 0.0
        %524 = vmatpush.msra.mxu0 0.0
        %525 = vmatpush.msra.mxu0 0.0
        %526 = vmatpush.msra.mxu0 0.0
        %527 = vmatpush.msra.mxu0 0.0
        %528 = vmatpush.msra.mxu0 0.0
        %529 = vmatpush.msra.mxu0 0.0
        %530 = vmatpush.msra.mxu0 0.0
        %531 = vmatpush.msra.mxu0 %v484
        %532 = vmatpush.msra.mxu0 %v468
        %533 = vmatpush.msra.mxu0 %v452
        %534 = vmatpush.msra.mxu0 %v436
        %535 = vmatpush.msra.mxu0 %v420
        %536 = vmatpush.msra.mxu0 %v404
        %537 = vmatpush.msra.mxu0 %v388
        %538 = vmatpush.msra.mxu0 %v372
        %539 = vmatmul.f32.gmra.mxu0 %v501
        %v540 = vpop.f32.mrf.mxu0
        %v541 = vadd.f32 0.0, %v540
        %542 = vdwg.mxu0
        %543 = vmatpush.msra.mxu0 0.0
        %544 = vmatpush.msra.mxu0 0.0
        %545 = vmatpush.msra.mxu0 0.0
        %546 = vmatpush.msra.mxu0 0.0
        %547 = vmatpush.msra.mxu0 0.0
        %548 = vmatpush.msra.mxu0 0.0
        %549 = vmatpush.msra.mxu0 0.0
        %550 = vmatpush.msra.mxu0 0.0
        %551 = vmatpush.msra.mxu0 %v485
        %552 = vmatpush.msra.mxu0 %v469
        %553 = vmatpush.msra.mxu0 %v453
        %554 = vmatpush.msra.mxu0 %v437
        %555 = vmatpush.msra.mxu0 %v421
        %556 = vmatpush.msra.mxu0 %v405
        %557 = vmatpush.msra.mxu0 %v389
        %558 = vmatpush.msra.mxu0 %v373
        %559 = vmatmul.f32.gmra.mxu0 %v501
        %v560 = vpop.f32.mrf.mxu0
        %v561 = vadd.f32 0.0, %v560
        %562 = vdwg.mxu0
        %563 = vmatpush.msra.mxu0 0.0
        %564 = vmatpush.msra.mxu0 0.0
        %565 = vmatpush.msra.mxu0 0.0
        %566 = vmatpush.msra.mxu0 0.0
        %567 = vmatpush.msra.mxu0 0.0
        %568 = vmatpush.msra.mxu0 0.0
        %569 = vmatpush.msra.mxu0 0.0
        %570 = vmatpush.msra.mxu0 0.0
        %571 = vmatpush.msra.mxu0 %v486
        %572 = vmatpush.msra.mxu0 %v470
        %573 = vmatpush.msra.mxu0 %v454
        %574 = vmatpush.msra.mxu0 %v438
        %575 = vmatpush.msra.mxu0 %v422
        %576 = vmatpush.msra.mxu0 %v406
        %577 = vmatpush.msra.mxu0 %v390
        %578 = vmatpush.msra.mxu0 %v374
        %579 = vmatmul.f32.gmra.mxu0 %v501
        %v580 = vpop.f32.mrf.mxu0
        %v581 = vadd.f32 0.0, %v580
        %582 = vdwg.mxu0
        %583 = vmatpush.msra.mxu0 0.0
        %584 = vmatpush.msra.mxu0 0.0
        %585 = vmatpush.msra.mxu0 0.0
        %586 = vmatpush.msra.mxu0 0.0
        %587 = vmatpush.msra.mxu0 0.0
        %588 = vmatpush.msra.mxu0 0.0
        %589 = vmatpush.msra.mxu0 0.0
        %590 = vmatpush.msra.mxu0 0.0
        %591 = vmatpush.msra.mxu0 %v487
        %592 = vmatpush.msra.mxu0 %v471
        %593 = vmatpush.msra.mxu0 %v455
        %594 = vmatpush.msra.mxu0 %v439
        %595 = vmatpush.msra.mxu0 %v423
        %596 = vmatpush.msra.mxu0 %v407
        %597 = vmatpush.msra.mxu0 %v391
        %598 = vmatpush.msra.mxu0 %v375
        %599 = vmatmul.f32.gmra.mxu0 %v501
        %v600 = vpop.f32.mrf.mxu0
        %v601 = vadd.f32 0.0, %v600
        %602 = vdwg.mxu0
        %603 = vmatpush.msra.mxu0 0.0
        %604 = vmatpush.msra.mxu0 0.0
        %605 = vmatpush.msra.mxu0 0.0
        %606 = vmatpush.msra.mxu0 0.0
        %607 = vmatpush.msra.mxu0 0.0
        %608 = vmatpush.msra.mxu0 0.0
        %609 = vmatpush.msra.mxu0 0.0
        %610 = vmatpush.msra.mxu0 0.0
        %611 = vmatpush.msra.mxu0 %v488
        %612 = vmatpush.msra.mxu0 %v472
        %613 = vmatpush.msra.mxu0 %v456
        %614 = vmatpush.msra.mxu0 %v440
        %615 = vmatpush.msra.mxu0 %v424
        %616 = vmatpush.msra.mxu0 %v408
        %617 = vmatpush.msra.mxu0 %v392
        %618 = vmatpush.msra.mxu0 %v376
        %619 = vmatmul.f32.gmra.mxu0 %v501
        %v620 = vpop.f32.mrf.mxu0
        %v621 = vadd.f32 0.0, %v620
        %622 = vdwg.mxu0
        %623 = vmatpush.msra.mxu0 0.0
        %624 = vmatpush.msra.mxu0 0.0
        %625 = vmatpush.msra.mxu0 0.0
        %626 = vmatpush.msra.mxu0 0.0
        %627 = vmatpush.msra.mxu0 0.0
        %628 = vmatpush.msra.mxu0 0.0
        %629 = vmatpush.msra.mxu0 0.0
        %630 = vmatpush.msra.mxu0 0.0
        %631 = vmatpush.msra.mxu0 %v489
        %632 = vmatpush.msra.mxu0 %v473
        %633 = vmatpush.msra.mxu0 %v457
        %634 = vmatpush.msra.mxu0 %v441
        %635 = vmatpush.msra.mxu0 %v425
        %636 = vmatpush.msra.mxu0 %v409
        %637 = vmatpush.msra.mxu0 %v393
        %638 = vmatpush.msra.mxu0 %v377
        %639 = vmatmul.f32.gmra.mxu0 %v501
        %v640 = vpop.f32.mrf.mxu0
        %v641 = vadd.f32 0.0, %v640
        %642 = vdwg.mxu0
        %643 = vmatpush.msra.mxu0 0.0
        %644 = vmatpush.msra.mxu0 0.0
        %645 = vmatpush.msra.mxu0 0.0
        %646 = vmatpush.msra.mxu0 0.0
        %647 = vmatpush.msra.mxu0 0.0
        %648 = vmatpush.msra.mxu0 0.0
        %649 = vmatpush.msra.mxu0 0.0
        %650 = vmatpush.msra.mxu0 0.0
        %651 = vmatpush.msra.mxu0 %v490
        %652 = vmatpush.msra.mxu0 %v474
        %653 = vmatpush.msra.mxu0 %v458
        %654 = vmatpush.msra.mxu0 %v442
        %655 = vmatpush.msra.mxu0 %v426
        %656 = vmatpush.msra.mxu0 %v410
        %657 = vmatpush.msra.mxu0 %v394
        %658 = vmatpush.msra.mxu0 %v378
        %659 = vmatmul.f32.gmra.mxu0 %v501
        %v660 = vpop.f32.mrf.mxu0
        %v661 = vadd.f32 0.0, %v660
        %662 = vdwg.mxu0
        %663 = vmatpush.msra.mxu0 0.0
        %664 = vmatpush.msra.mxu0 0.0
        %665 = vmatpush.msra.mxu0 0.0
        %666 = vmatpush.msra.mxu0 0.0
        %667 = vmatpush.msra.mxu0 0.0
        %668 = vmatpush.msra.mxu0 0.0
        %669 = vmatpush.msra.mxu0 0.0
        %670 = vmatpush.msra.mxu0 0.0
        %671 = vmatpush.msra.mxu0 %v491
        %672 = vmatpush.msra.mxu0 %v475
        %673 = vmatpush.msra.mxu0 %v459
        %674 = vmatpush.msra.mxu0 %v443
        %675 = vmatpush.msra.mxu0 %v427
        %676 = vmatpush.msra.mxu0 %v411
        %677 = vmatpush.msra.mxu0 %v395
        %678 = vmatpush.msra.mxu0 %v379
        %679 = vmatmul.f32.gmra.mxu0 %v501
        %v680 = vpop.f32.mrf.mxu0
        %v681 = vadd.f32 0.0, %v680
        %682 = vdwg.mxu0
        %683 = vmatpush.msra.mxu0 0.0
        %684 = vmatpush.msra.mxu0 0.0
        %685 = vmatpush.msra.mxu0 0.0
        %686 = vmatpush.msra.mxu0 0.0
        %687 = vmatpush.msra.mxu0 0.0
        %688 = vmatpush.msra.mxu0 0.0
        %689 = vmatpush.msra.mxu0 0.0
        %690 = vmatpush.msra.mxu0 0.0
        %691 = vmatpush.msra.mxu0 %v492
        %692 = vmatpush.msra.mxu0 %v476
        %693 = vmatpush.msra.mxu0 %v460
        %694 = vmatpush.msra.mxu0 %v444
        %695 = vmatpush.msra.mxu0 %v428
        %696 = vmatpush.msra.mxu0 %v412
        %697 = vmatpush.msra.mxu0 %v396
        %698 = vmatpush.msra.mxu0 %v380
        %699 = vmatmul.f32.gmra.mxu0 %v501
        %v700 = vpop.f32.mrf.mxu0
        %v701 = vadd.f32 0.0, %v700
        %702 = vdwg.mxu0
        %703 = vmatpush.msra.mxu0 0.0
        %704 = vmatpush.msra.mxu0 0.0
        %705 = vmatpush.msra.mxu0 0.0
        %706 = vmatpush.msra.mxu0 0.0
        %707 = vmatpush.msra.mxu0 0.0
        %708 = vmatpush.msra.mxu0 0.0
        %709 = vmatpush.msra.mxu0 0.0
        %710 = vmatpush.msra.mxu0 0.0
        %711 = vmatpush.msra.mxu0 %v493
        %712 = vmatpush.msra.mxu0 %v477
        %713 = vmatpush.msra.mxu0 %v461
        %714 = vmatpush.msra.mxu0 %v445
        %715 = vmatpush.msra.mxu0 %v429
        %716 = vmatpush.msra.mxu0 %v413
        %717 = vmatpush.msra.mxu0 %v397
        %718 = vmatpush.msra.mxu0 %v381
        %719 = vmatmul.f32.gmra.mxu0 %v501
        %v720 = vpop.f32.mrf.mxu0
        %v721 = vadd.f32 0.0, %v720
        %722 = vdwg.mxu0
        %723 = vmatpush.msra.mxu0 0.0
        %724 = vmatpush.msra.mxu0 0.0
        %725 = vmatpush.msra.mxu0 0.0
        %726 = vmatpush.msra.mxu0 0.0
        %727 = vmatpush.msra.mxu0 0.0
        %728 = vmatpush.msra.mxu0 0.0
        %729 = vmatpush.msra.mxu0 0.0
        %730 = vmatpush.msra.mxu0 0.0
        %731 = vmatpush.msra.mxu0 %v494
        %732 = vmatpush.msra.mxu0 %v478
        %733 = vmatpush.msra.mxu0 %v462
        %734 = vmatpush.msra.mxu0 %v446
        %735 = vmatpush.msra.mxu0 %v430
        %736 = vmatpush.msra.mxu0 %v414
        %737 = vmatpush.msra.mxu0 %v398
        %738 = vmatpush.msra.mxu0 %v382
        %739 = vmatmul.f32.gmra.mxu0 %v501
        %v740 = vpop.f32.mrf.mxu0
        %v741 = vadd.f32 0.0, %v740
        %742 = vdwg.mxu0
        %743 = vmatpush.msra.mxu0 0.0
        %744 = vmatpush.msra.mxu0 0.0
        %745 = vmatpush.msra.mxu0 0.0
        %746 = vmatpush.msra.mxu0 0.0
        %747 = vmatpush.msra.mxu0 0.0
        %748 = vmatpush.msra.mxu0 0.0
        %749 = vmatpush.msra.mxu0 0.0
        %750 = vmatpush.msra.mxu0 0.0
        %751 = vmatpush.msra.mxu0 %v495
        %752 = vmatpush.msra.mxu0 %v479
        %753 = vmatpush.msra.mxu0 %v463
        %754 = vmatpush.msra.mxu0 %v447
        %755 = vmatpush.msra.mxu0 %v431
        %756 = vmatpush.msra.mxu0 %v415
        %757 = vmatpush.msra.mxu0 %v399
        %758 = vmatpush.msra.mxu0 %v383
        %759 = vmatmul.f32.gmra.mxu0 %v501
        %v760 = vpop.f32.mrf.mxu0
        %v761 = vadd.f32 0.0, %v760
        %762 = vdwg.mxu0
        %763 = vmatpush.msra.mxu0 0.0
        %764 = vmatpush.msra.mxu0 0.0
        %765 = vmatpush.msra.mxu0 0.0
        %766 = vmatpush.msra.mxu0 0.0
        %767 = vmatpush.msra.mxu0 0.0
        %768 = vmatpush.msra.mxu0 0.0
        %769 = vmatpush.msra.mxu0 0.0
        %770 = vmatpush.msra.mxu0 0.0
        %771 = vmatpush.msra.mxu0 %v496
        %772 = vmatpush.msra.mxu0 %v480
        %773 = vmatpush.msra.mxu0 %v464
        %774 = vmatpush.msra.mxu0 %v448
        %775 = vmatpush.msra.mxu0 %v432
        %776 = vmatpush.msra.mxu0 %v416
        %777 = vmatpush.msra.mxu0 %v400
        %778 = vmatpush.msra.mxu0 %v384
        %779 = vmatmul.f32.gmra.mxu0 %v501
        %v780 = vpop.f32.mrf.mxu0
        %v781 = vadd.f32 0.0, %v780
        %782 = vdwg.mxu0
        %783 = vmatpush.msra.mxu0 0.0
        %784 = vmatpush.msra.mxu0 0.0
        %785 = vmatpush.msra.mxu0 0.0
        %786 = vmatpush.msra.mxu0 0.0
        %787 = vmatpush.msra.mxu0 0.0
        %788 = vmatpush.msra.mxu0 0.0
        %789 = vmatpush.msra.mxu0 0.0
        %790 = vmatpush.msra.mxu0 0.0
        %791 = vmatpush.msra.mxu0 %v497
        %792 = vmatpush.msra.mxu0 %v481
        %793 = vmatpush.msra.mxu0 %v465
        %794 = vmatpush.msra.mxu0 %v449
        %795 = vmatpush.msra.mxu0 %v433
        %796 = vmatpush.msra.mxu0 %v417
        %797 = vmatpush.msra.mxu0 %v401
        %798 = vmatpush.msra.mxu0 %v385
        %799 = vmatmul.f32.gmra.mxu0 %v501
        %v800 = vpop.f32.mrf.mxu0
        %v801 = vadd.f32 0.0, %v800
        %802 = vdwg.mxu0
        %803 = vmatpush.msra.mxu0 0.0
        %804 = vmatpush.msra.mxu0 0.0
        %805 = vmatpush.msra.mxu0 0.0
        %806 = vmatpush.msra.mxu0 0.0
        %807 = vmatpush.msra.mxu0 0.0
        %808 = vmatpush.msra.mxu0 0.0
        %809 = vmatpush.msra.mxu0 0.0
        %810 = vmatpush.msra.mxu0 0.0
        %811 = vmatpush.msra.mxu0 %v498
        %812 = vmatpush.msra.mxu0 %v482
        %813 = vmatpush.msra.mxu0 %v466
        %814 = vmatpush.msra.mxu0 %v450
        %815 = vmatpush.msra.mxu0 %v434
        %816 = vmatpush.msra.mxu0 %v418
        %817 = vmatpush.msra.mxu0 %v402
        %818 = vmatpush.msra.mxu0 %v386
        %819 = vmatmul.f32.gmra.mxu0 %v501
        %v820 = vpop.f32.mrf.mxu0
        %v821 = vadd.f32 0.0, %v820
        %822 = vdwg.mxu0
        %v823 = vld [vmem:[%s2] sm:$0xff]
        %v824 = vld [vmem:[%s2 + $0x8] sm:$0xff]
        %v827 = vperm.slane %v823, 0
        %v828 = vperm.slane %v823, 1
        %v829 = vperm.slane %v823, 2
        %v830 = vperm.slane %v823, 3
        %v831 = vperm.slane %v823, 4
        %v832 = vperm.slane %v823, 5
        %v833 = vperm.slane %v823, 6
        %v834 = vperm.slane %v823, 7
        %v835 = vperm.slane %v824, 0
        %v836 = vperm.slane %v824, 1
        %v837 = vperm.slane %v824, 2
        %v838 = vperm.slane %v824, 3
        %v839 = vperm.slane %v824, 4
        %v840 = vperm.slane %v824, 5
        %v841 = vperm.slane %v824, 6
        %v842 = vperm.slane %v824, 7
        %v859 = vmul.f32 %v521, %v827
        %v860 = vmul.f32 %v541, %v828
        %v861 = vmul.f32 %v561, %v829
        %v862 = vmul.f32 %v581, %v830
        %v863 = vmul.f32 %v601, %v831
        %v864 = vmul.f32 %v621, %v832
        %v865 = vmul.f32 %v641, %v833
        %v866 = vmul.f32 %v661, %v834
        %v867 = vmul.f32 %v681, %v835
        %v868 = vmul.f32 %v701, %v836
        %v869 = vmul.f32 %v721, %v837
        %v870 = vmul.f32 %v741, %v838
        %v871 = vmul.f32 %v761, %v839
        %v872 = vmul.f32 %v781, %v840
        %v873 = vmul.f32 %v801, %v841
        %v874 = vmul.f32 %v821, %v842
        %v875 = vld [vmem:[%s3] sm:$0xff]
        %v876 = vld [vmem:[%s3 + $0x8] sm:$0xff]
        %v879 = vperm.slane %v875, 0
        %v880 = vperm.slane %v875, 1
        %v881 = vperm.slane %v875, 2
        %v882 = vperm.slane %v875, 3
        %v883 = vperm.slane %v875, 4
        %v884 = vperm.slane %v875, 5
        %v885 = vperm.slane %v875, 6
        %v886 = vperm.slane %v875, 7
        %v887 = vperm.slane %v876, 0
        %v888 = vperm.slane %v876, 1
        %v889 = vperm.slane %v876, 2
        %v890 = vperm.slane %v876, 3
        %v891 = vperm.slane %v876, 4
        %v892 = vperm.slane %v876, 5
        %v893 = vperm.slane %v876, 6
        %v894 = vperm.slane %v876, 7
        %v911 = vadd.f32 %v859, %v879
        %v912 = vadd.f32 %v860, %v880
        %v913 = vadd.f32 %v861, %v881
        %v914 = vadd.f32 %v862, %v882
        %v915 = vadd.f32 %v863, %v883
        %v916 = vadd.f32 %v864, %v884
        %v917 = vadd.f32 %v865, %v885
        %v918 = vadd.f32 %v866, %v886
        %v919 = vadd.f32 %v867, %v887
        %v920 = vadd.f32 %v868, %v888
        %v921 = vadd.f32 %v869, %v889
        %v922 = vadd.f32 %v870, %v890
        %v923 = vadd.f32 %v871, %v891
        %v924 = vadd.f32 %v872, %v892
        %v925 = vadd.f32 %v873, %v893
        %v926 = vadd.f32 %v874, %v894
        %vm927 = vcmp.ge.f32.partialorder %v911, 0.0
        %vm928 = vcmp.ge.f32.partialorder %v912, 0.0
        %vm929 = vcmp.ge.f32.partialorder %v913, 0.0
        %vm930 = vcmp.ge.f32.partialorder %v914, 0.0
        %vm931 = vcmp.ge.f32.partialorder %v915, 0.0
        %vm932 = vcmp.ge.f32.partialorder %v916, 0.0
        %vm933 = vcmp.ge.f32.partialorder %v917, 0.0
        %vm934 = vcmp.ge.f32.partialorder %v918, 0.0
        %vm935 = vcmp.ge.f32.partialorder %v919, 0.0
        %vm936 = vcmp.ge.f32.partialorder %v920, 0.0
        %vm937 = vcmp.ge.f32.partialorder %v921, 0.0
        %vm938 = vcmp.ge.f32.partialorder %v922, 0.0
        %vm939 = vcmp.ge.f32.partialorder %v923, 0.0
        %vm940 = vcmp.ge.f32.partialorder %v924, 0.0
        %vm941 = vcmp.ge.f32.partialorder %v925, 0.0
        %vm942 = vcmp.ge.f32.partialorder %v926, 0.0
        %v943 = vmul.f32 %v911, 0.02
        %v944 = vmul.f32 %v912, 0.02
        %v945 = vmul.f32 %v913, 0.02
        %v946 = vmul.f32 %v914, 0.02
        %v947 = vmul.f32 %v915, 0.02
        %v948 = vmul.f32 %v916, 0.02
        %v949 = vmul.f32 %v917, 0.02
        %v950 = vmul.f32 %v918, 0.02
        %v951 = vmul.f32 %v919, 0.02
        %v952 = vmul.f32 %v920, 0.02
        %v953 = vmul.f32 %v921, 0.02
        %v954 = vmul.f32 %v922, 0.02
        %v955 = vmul.f32 %v923, 0.02
        %v956 = vmul.f32 %v924, 0.02
        %v957 = vmul.f32 %v925, 0.02
        %v958 = vmul.f32 %v926, 0.02
        %v959 = vsel %vm927, %v911, %v943
        %v960 = vsel %vm928, %v912, %v944
        %v961 = vsel %vm929, %v913, %v945
        %v962 = vsel %vm930, %v914, %v946
        %v963 = vsel %vm931, %v915, %v947
        %v964 = vsel %vm932, %v916, %v948
        %v965 = vsel %vm933, %v917, %v949
        %v966 = vsel %vm934, %v918, %v950
        %v967 = vsel %vm935, %v919, %v951
        %v968 = vsel %vm936, %v920, %v952
        %v969 = vsel %vm937, %v921, %v953
        %v970 = vsel %vm938, %v922, %v954
        %v971 = vsel %vm939, %v923, %v955
        %v972 = vsel %vm940, %v924, %v956
        %v973 = vsel %vm941, %v925, %v957
        %v974 = vsel %vm942, %v926, %v958
        %v975 = vld [vmem:[%s313] sm:$0xff]
        %v976 = vld [vmem:[%s313 + $0x8] sm:$0xff]
        %v977 = vld [vmem:[%s313 + $0x10] sm:$0xff]
        %v978 = vld [vmem:[%s313 + $0x18] sm:$0xff]
        %v979 = vld [vmem:[%s313 + $0x20] sm:$0xff]
        %v980 = vld [vmem:[%s313 + $0x28] sm:$0xff]
        %v981 = vld [vmem:[%s313 + $0x30] sm:$0xff]
        %v982 = vld [vmem:[%s313 + $0x38] sm:$0xff]
        %v983 = vld [vmem:[%s313 + $0x40] sm:$0xff]
        %v984 = vld [vmem:[%s313 + $0x48] sm:$0xff]
        %v985 = vld [vmem:[%s313 + $0x50] sm:$0xff]
        %v986 = vld [vmem:[%s313 + $0x58] sm:$0xff]
        %v987 = vld [vmem:[%s313 + $0x60] sm:$0xff]
        %v988 = vld [vmem:[%s313 + $0x68] sm:$0xff]
        %v989 = vld [vmem:[%s313 + $0x70] sm:$0xff]
        %v990 = vld [vmem:[%s313 + $0x78] sm:$0xff]
        %v991 = vld [vmem:[%s313 + $0x80] sm:$0xff]
        %v992 = vld [vmem:[%s313 + $0x88] sm:$0xff]
        %v993 = vld [vmem:[%s313 + $0x90] sm:$0xff]
        %v994 = vld [vmem:[%s313 + $0x98] sm:$0xff]
        %v995 = vld [vmem:[%s313 + $0xa0] sm:$0xff]
        %v996 = vld [vmem:[%s313 + $0xa8] sm:$0xff]
        %v997 = vld [vmem:[%s313 + $0xb0] sm:$0xff]
        %v998 = vld [vmem:[%s313 + $0xb8] sm:$0xff]
        %v999 = vld [vmem:[%s313 + $0xc0] sm:$0xff]
        %v1000 = vld [vmem:[%s313 + $0xc8] sm:$0xff]
        %v1001 = vld [vmem:[%s313 + $0xd0] sm:$0xff]
        %v1002 = vld [vmem:[%s313 + $0xd8] sm:$0xff]
        %v1003 = vld [vmem:[%s313 + $0xe0] sm:$0xff]
        %v1004 = vld [vmem:[%s313 + $0xe8] sm:$0xff]
        %v1005 = vld [vmem:[%s313 + $0xf0] sm:$0xff]
        %v1006 = vld [vmem:[%s313 + $0xf8] sm:$0xff]
        %v1007 = vld [vmem:[%s313 + $0x100] sm:$0xff]
        %v1008 = vld [vmem:[%s313 + $0x108] sm:$0xff]
        %v1009 = vld [vmem:[%s313 + $0x110] sm:$0xff]
        %v1010 = vld [vmem:[%s313 + $0x118] sm:$0xff]
        %v1011 = vld [vmem:[%s313 + $0x120] sm:$0xff]
        %v1012 = vld [vmem:[%s313 + $0x128] sm:$0xff]
        %v1013 = vld [vmem:[%s313 + $0x130] sm:$0xff]
        %v1014 = vld [vmem:[%s313 + $0x138] sm:$0xff]
        %v1015 = vld [vmem:[%s313 + $0x140] sm:$0xff]
        %v1016 = vld [vmem:[%s313 + $0x148] sm:$0xff]
        %v1017 = vld [vmem:[%s313 + $0x150] sm:$0xff]
        %v1018 = vld [vmem:[%s313 + $0x158] sm:$0xff]
        %v1019 = vld [vmem:[%s313 + $0x160] sm:$0xff]
        %v1020 = vld [vmem:[%s313 + $0x168] sm:$0xff]
        %v1021 = vld [vmem:[%s313 + $0x170] sm:$0xff]
        %v1022 = vld [vmem:[%s313 + $0x178] sm:$0xff]
        %v1023 = vld [vmem:[%s313 + $0x180] sm:$0xff]
        %v1024 = vld [vmem:[%s313 + $0x188] sm:$0xff]
        %v1025 = vld [vmem:[%s313 + $0x190] sm:$0xff]
        %v1026 = vld [vmem:[%s313 + $0x198] sm:$0xff]
        %v1027 = vld [vmem:[%s313 + $0x1a0] sm:$0xff]
        %v1028 = vld [vmem:[%s313 + $0x1a8] sm:$0xff]
        %v1029 = vld [vmem:[%s313 + $0x1b0] sm:$0xff]
        %v1030 = vld [vmem:[%s313 + $0x1b8] sm:$0xff]
        %v1031 = vld [vmem:[%s313 + $0x1c0] sm:$0xff]
        %v1032 = vld [vmem:[%s313 + $0x1c8] sm:$0xff]
        %v1033 = vld [vmem:[%s313 + $0x1d0] sm:$0xff]
        %v1034 = vld [vmem:[%s313 + $0x1d8] sm:$0xff]
        %v1035 = vld [vmem:[%s313 + $0x1e0] sm:$0xff]
        %v1036 = vld [vmem:[%s313 + $0x1e8] sm:$0xff]
        %v1037 = vld [vmem:[%s313 + $0x1f0] sm:$0xff]
        %v1038 = vld [vmem:[%s313 + $0x1f8] sm:$0xff]
        %v1039 = vld [vmem:[%s313 + $0x200] sm:$0xff]
        %v1040 = vld [vmem:[%s313 + $0x208] sm:$0xff]
        %v1041 = vld [vmem:[%s313 + $0x210] sm:$0xff]
        %v1042 = vld [vmem:[%s313 + $0x218] sm:$0xff]
        %v1043 = vld [vmem:[%s313 + $0x220] sm:$0xff]
        %v1044 = vld [vmem:[%s313 + $0x228] sm:$0xff]
        %v1045 = vld [vmem:[%s313 + $0x230] sm:$0xff]
        %v1046 = vld [vmem:[%s313 + $0x238] sm:$0xff]
        %v1047 = vld [vmem:[%s313 + $0x240] sm:$0xff]
        %v1048 = vld [vmem:[%s313 + $0x248] sm:$0xff]
        %v1049 = vld [vmem:[%s313 + $0x250] sm:$0xff]
        %v1050 = vld [vmem:[%s313 + $0x258] sm:$0xff]
        %v1051 = vld [vmem:[%s313 + $0x260] sm:$0xff]
        %v1052 = vld [vmem:[%s313 + $0x268] sm:$0xff]
        %v1053 = vld [vmem:[%s313 + $0x270] sm:$0xff]
        %v1054 = vld [vmem:[%s313 + $0x278] sm:$0xff]
        %v1055 = vld [vmem:[%s313 + $0x280] sm:$0xff]
        %v1056 = vld [vmem:[%s313 + $0x288] sm:$0xff]
        %v1057 = vld [vmem:[%s313 + $0x290] sm:$0xff]
        %v1058 = vld [vmem:[%s313 + $0x298] sm:$0xff]
        %v1059 = vld [vmem:[%s313 + $0x2a0] sm:$0xff]
        %v1060 = vld [vmem:[%s313 + $0x2a8] sm:$0xff]
        %v1061 = vld [vmem:[%s313 + $0x2b0] sm:$0xff]
        %v1062 = vld [vmem:[%s313 + $0x2b8] sm:$0xff]
        %v1063 = vld [vmem:[%s313 + $0x2c0] sm:$0xff]
        %v1064 = vld [vmem:[%s313 + $0x2c8] sm:$0xff]
        %v1065 = vld [vmem:[%s313 + $0x2d0] sm:$0xff]
        %v1066 = vld [vmem:[%s313 + $0x2d8] sm:$0xff]
        %v1067 = vld [vmem:[%s313 + $0x2e0] sm:$0xff]
        %v1068 = vld [vmem:[%s313 + $0x2e8] sm:$0xff]
        %v1069 = vld [vmem:[%s313 + $0x2f0] sm:$0xff]
        %v1070 = vld [vmem:[%s313 + $0x2f8] sm:$0xff]
        %v1071 = vld [vmem:[%s313 + $0x300] sm:$0xff]
        %v1072 = vld [vmem:[%s313 + $0x308] sm:$0xff]
        %v1073 = vld [vmem:[%s313 + $0x310] sm:$0xff]
        %v1074 = vld [vmem:[%s313 + $0x318] sm:$0xff]
        %v1075 = vld [vmem:[%s313 + $0x320] sm:$0xff]
        %v1076 = vld [vmem:[%s313 + $0x328] sm:$0xff]
        %v1077 = vld [vmem:[%s313 + $0x330] sm:$0xff]
        %v1078 = vld [vmem:[%s313 + $0x338] sm:$0xff]
        %v1079 = vld [vmem:[%s313 + $0x340] sm:$0xff]
        %v1080 = vld [vmem:[%s313 + $0x348] sm:$0xff]
        %v1081 = vld [vmem:[%s313 + $0x350] sm:$0xff]
        %v1082 = vld [vmem:[%s313 + $0x358] sm:$0xff]
        %v1083 = vld [vmem:[%s313 + $0x360] sm:$0xff]
        %v1084 = vld [vmem:[%s313 + $0x368] sm:$0xff]
        %v1085 = vld [vmem:[%s313 + $0x370] sm:$0xff]
        %v1086 = vld [vmem:[%s313 + $0x378] sm:$0xff]
        %v1087 = vld [vmem:[%s313 + $0x380] sm:$0xff]
        %v1088 = vld [vmem:[%s313 + $0x388] sm:$0xff]
        %v1089 = vld [vmem:[%s313 + $0x390] sm:$0xff]
        %v1090 = vld [vmem:[%s313 + $0x398] sm:$0xff]
        %v1091 = vld [vmem:[%s313 + $0x3a0] sm:$0xff]
        %v1092 = vld [vmem:[%s313 + $0x3a8] sm:$0xff]
        %v1093 = vld [vmem:[%s313 + $0x3b0] sm:$0xff]
        %v1094 = vld [vmem:[%s313 + $0x3b8] sm:$0xff]
        %v1095 = vld [vmem:[%s313 + $0x3c0] sm:$0xff]
        %v1096 = vld [vmem:[%s313 + $0x3c8] sm:$0xff]
        %v1097 = vld [vmem:[%s313 + $0x3d0] sm:$0xff]
        %v1098 = vld [vmem:[%s313 + $0x3d8] sm:$0xff]
        %v1099 = vld [vmem:[%s313 + $0x3e0] sm:$0xff]
        %v1100 = vld [vmem:[%s313 + $0x3e8] sm:$0xff]
        %v1101 = vld [vmem:[%s313 + $0x3f0] sm:$0xff]
        %v1102 = vld [vmem:[%s313 + $0x3f8] sm:$0xff]
        %v1103 = vld [vmem:[%s313 + $0x400] sm:$0xff]
        %v1104 = vld [vmem:[%s313 + $0x408] sm:$0xff]
        %v1105 = vld [vmem:[%s313 + $0x410] sm:$0xff]
        %v1106 = vld [vmem:[%s313 + $0x418] sm:$0xff]
        %v1107 = vld [vmem:[%s313 + $0x420] sm:$0xff]
        %v1108 = vld [vmem:[%s313 + $0x428] sm:$0xff]
        %v1109 = vld [vmem:[%s313 + $0x430] sm:$0xff]
        %v1110 = vld [vmem:[%s313 + $0x438] sm:$0xff]
        %v1111 = vld [vmem:[%s313 + $0x440] sm:$0xff]
        %v1112 = vld [vmem:[%s313 + $0x448] sm:$0xff]
        %v1113 = vld [vmem:[%s313 + $0x450] sm:$0xff]
        %v1114 = vld [vmem:[%s313 + $0x458] sm:$0xff]
        %v1115 = vld [vmem:[%s313 + $0x460] sm:$0xff]
        %v1116 = vld [vmem:[%s313 + $0x468] sm:$0xff]
        %v1117 = vld [vmem:[%s313 + $0x470] sm:$0xff]
        %v1118 = vld [vmem:[%s313 + $0x478] sm:$0xff]
        %v1119 = vld [vmem:[%s313 + $0x480] sm:$0xff]
        %v1120 = vld [vmem:[%s313 + $0x488] sm:$0xff]
        %v1121 = vld [vmem:[%s313 + $0x490] sm:$0xff]
        %v1122 = vld [vmem:[%s313 + $0x498] sm:$0xff]
        %v1123 = vld [vmem:[%s313 + $0x4a0] sm:$0xff]
        %v1124 = vld [vmem:[%s313 + $0x4a8] sm:$0xff]
        %v1125 = vld [vmem:[%s313 + $0x4b0] sm:$0xff]
        %v1126 = vld [vmem:[%s313 + $0x4b8] sm:$0xff]
        %v1127 = vld [vmem:[%s313 + $0x4c0] sm:$0xff]
        %v1128 = vld [vmem:[%s313 + $0x4c8] sm:$0xff]
        %v1129 = vld [vmem:[%s313 + $0x4d0] sm:$0xff]
        %v1130 = vld [vmem:[%s313 + $0x4d8] sm:$0xff]
        %v1131 = vld [vmem:[%s313 + $0x4e0] sm:$0xff]
        %v1132 = vld [vmem:[%s313 + $0x4e8] sm:$0xff]
        %v1133 = vld [vmem:[%s313 + $0x4f0] sm:$0xff]
        %v1134 = vld [vmem:[%s313 + $0x4f8] sm:$0xff]
        %v1135 = vld [vmem:[%s313 + $0x500] sm:$0xff]
        %v1136 = vld [vmem:[%s313 + $0x508] sm:$0xff]
        %v1137 = vld [vmem:[%s313 + $0x510] sm:$0xff]
        %v1138 = vld [vmem:[%s313 + $0x518] sm:$0xff]
        %v1139 = vld [vmem:[%s313 + $0x520] sm:$0xff]
        %v1140 = vld [vmem:[%s313 + $0x528] sm:$0xff]
        %v1141 = vld [vmem:[%s313 + $0x530] sm:$0xff]
        %v1142 = vld [vmem:[%s313 + $0x538] sm:$0xff]
        %v1143 = vld [vmem:[%s313 + $0x540] sm:$0xff]
        %v1144 = vld [vmem:[%s313 + $0x548] sm:$0xff]
        %v1145 = vld [vmem:[%s313 + $0x550] sm:$0xff]
        %v1146 = vld [vmem:[%s313 + $0x558] sm:$0xff]
        %v1147 = vld [vmem:[%s313 + $0x560] sm:$0xff]
        %v1148 = vld [vmem:[%s313 + $0x568] sm:$0xff]
        %v1149 = vld [vmem:[%s313 + $0x570] sm:$0xff]
        %v1150 = vld [vmem:[%s313 + $0x578] sm:$0xff]
        %v1151 = vld [vmem:[%s313 + $0x580] sm:$0xff]
        %v1152 = vld [vmem:[%s313 + $0x588] sm:$0xff]
        %v1153 = vld [vmem:[%s313 + $0x590] sm:$0xff]
        %v1154 = vld [vmem:[%s313 + $0x598] sm:$0xff]
        %v1155 = vld [vmem:[%s313 + $0x5a0] sm:$0xff]
        %v1156 = vld [vmem:[%s313 + $0x5a8] sm:$0xff]
        %v1157 = vld [vmem:[%s313 + $0x5b0] sm:$0xff]
        %v1158 = vld [vmem:[%s313 + $0x5b8] sm:$0xff]
        %v1159 = vld [vmem:[%s313 + $0x5c0] sm:$0xff]
        %v1160 = vld [vmem:[%s313 + $0x5c8] sm:$0xff]
        %v1161 = vld [vmem:[%s313 + $0x5d0] sm:$0xff]
        %v1162 = vld [vmem:[%s313 + $0x5d8] sm:$0xff]
        %v1163 = vld [vmem:[%s313 + $0x5e0] sm:$0xff]
        %v1164 = vld [vmem:[%s313 + $0x5e8] sm:$0xff]
        %v1165 = vld [vmem:[%s313 + $0x5f0] sm:$0xff]
        %v1166 = vld [vmem:[%s313 + $0x5f8] sm:$0xff]
        %v1167 = vld [vmem:[%s313 + $0x600] sm:$0xff]
        %v1168 = vld [vmem:[%s313 + $0x608] sm:$0xff]
        %v1169 = vld [vmem:[%s313 + $0x610] sm:$0xff]
        %v1170 = vld [vmem:[%s313 + $0x618] sm:$0xff]
        %v1171 = vld [vmem:[%s313 + $0x620] sm:$0xff]
        %v1172 = vld [vmem:[%s313 + $0x628] sm:$0xff]
        %v1173 = vld [vmem:[%s313 + $0x630] sm:$0xff]
        %v1174 = vld [vmem:[%s313 + $0x638] sm:$0xff]
        %v1175 = vld [vmem:[%s313 + $0x640] sm:$0xff]
        %v1176 = vld [vmem:[%s313 + $0x648] sm:$0xff]
        %v1177 = vld [vmem:[%s313 + $0x650] sm:$0xff]
        %v1178 = vld [vmem:[%s313 + $0x658] sm:$0xff]
        %v1179 = vld [vmem:[%s313 + $0x660] sm:$0xff]
        %v1180 = vld [vmem:[%s313 + $0x668] sm:$0xff]
        %v1181 = vld [vmem:[%s313 + $0x670] sm:$0xff]
        %v1182 = vld [vmem:[%s313 + $0x678] sm:$0xff]
        %v1183 = vld [vmem:[%s313 + $0x680] sm:$0xff]
        %v1184 = vld [vmem:[%s313 + $0x688] sm:$0xff]
        %v1185 = vld [vmem:[%s313 + $0x690] sm:$0xff]
        %v1186 = vld [vmem:[%s313 + $0x698] sm:$0xff]
        %v1187 = vld [vmem:[%s313 + $0x6a0] sm:$0xff]
        %v1188 = vld [vmem:[%s313 + $0x6a8] sm:$0xff]
        %v1189 = vld [vmem:[%s313 + $0x6b0] sm:$0xff]
        %v1190 = vld [vmem:[%s313 + $0x6b8] sm:$0xff]
        %v1191 = vld [vmem:[%s313 + $0x6c0] sm:$0xff]
        %v1192 = vld [vmem:[%s313 + $0x6c8] sm:$0xff]
        %v1193 = vld [vmem:[%s313 + $0x6d0] sm:$0xff]
        %v1194 = vld [vmem:[%s313 + $0x6d8] sm:$0xff]
        %v1195 = vld [vmem:[%s313 + $0x6e0] sm:$0xff]
        %v1196 = vld [vmem:[%s313 + $0x6e8] sm:$0xff]
        %v1197 = vld [vmem:[%s313 + $0x6f0] sm:$0xff]
        %v1198 = vld [vmem:[%s313 + $0x6f8] sm:$0xff]
        %v1199 = vld [vmem:[%s313 + $0x700] sm:$0xff]
        %v1200 = vld [vmem:[%s313 + $0x708] sm:$0xff]
        %v1201 = vld [vmem:[%s313 + $0x710] sm:$0xff]
        %v1202 = vld [vmem:[%s313 + $0x718] sm:$0xff]
        %v1203 = vld [vmem:[%s313 + $0x720] sm:$0xff]
        %v1204 = vld [vmem:[%s313 + $0x728] sm:$0xff]
        %v1205 = vld [vmem:[%s313 + $0x730] sm:$0xff]
        %v1206 = vld [vmem:[%s313 + $0x738] sm:$0xff]
        %v1207 = vld [vmem:[%s313 + $0x740] sm:$0xff]
        %v1208 = vld [vmem:[%s313 + $0x748] sm:$0xff]
        %v1209 = vld [vmem:[%s313 + $0x750] sm:$0xff]
        %v1210 = vld [vmem:[%s313 + $0x758] sm:$0xff]
        %v1211 = vld [vmem:[%s313 + $0x760] sm:$0xff]
        %v1212 = vld [vmem:[%s313 + $0x768] sm:$0xff]
        %v1213 = vld [vmem:[%s313 + $0x770] sm:$0xff]
        %v1214 = vld [vmem:[%s313 + $0x778] sm:$0xff]
        %v1215 = vld [vmem:[%s313 + $0x780] sm:$0xff]
        %v1216 = vld [vmem:[%s313 + $0x788] sm:$0xff]
        %v1217 = vld [vmem:[%s313 + $0x790] sm:$0xff]
        %v1218 = vld [vmem:[%s313 + $0x798] sm:$0xff]
        %v1219 = vld [vmem:[%s313 + $0x7a0] sm:$0xff]
        %v1220 = vld [vmem:[%s313 + $0x7a8] sm:$0xff]
        %v1221 = vld [vmem:[%s313 + $0x7b0] sm:$0xff]
        %v1222 = vld [vmem:[%s313 + $0x7b8] sm:$0xff]
        %v1223 = vld [vmem:[%s313 + $0x7c0] sm:$0xff]
        %v1224 = vld [vmem:[%s313 + $0x7c8] sm:$0xff]
        %v1225 = vld [vmem:[%s313 + $0x7d0] sm:$0xff]
        %v1226 = vld [vmem:[%s313 + $0x7d8] sm:$0xff]
        %v1227 = vld [vmem:[%s313 + $0x7e0] sm:$0xff]
        %v1228 = vld [vmem:[%s313 + $0x7e8] sm:$0xff]
        %v1229 = vld [vmem:[%s313 + $0x7f0] sm:$0xff]
        %v1230 = vld [vmem:[%s313 + $0x7f8] sm:$0xff]
        %v1231 = vld [vmem:[%s313 + $0x800] sm:$0xff]
        %v1232 = vld [vmem:[%s313 + $0x808] sm:$0xff]
        %v1233 = vld [vmem:[%s313 + $0x810] sm:$0xff]
        %v1234 = vld [vmem:[%s313 + $0x818] sm:$0xff]
        %v1235 = vld [vmem:[%s313 + $0x820] sm:$0xff]
        %v1236 = vld [vmem:[%s313 + $0x828] sm:$0xff]
        %v1237 = vld [vmem:[%s313 + $0x830] sm:$0xff]
        %v1238 = vld [vmem:[%s313 + $0x838] sm:$0xff]
        %v1239 = vld [vmem:[%s313 + $0x840] sm:$0xff]
        %v1240 = vld [vmem:[%s313 + $0x848] sm:$0xff]
        %v1241 = vld [vmem:[%s313 + $0x850] sm:$0xff]
        %v1242 = vld [vmem:[%s313 + $0x858] sm:$0xff]
        %v1243 = vld [vmem:[%s313 + $0x860] sm:$0xff]
        %v1244 = vld [vmem:[%s313 + $0x868] sm:$0xff]
        %v1245 = vld [vmem:[%s313 + $0x870] sm:$0xff]
        %v1246 = vld [vmem:[%s313 + $0x878] sm:$0xff]
        %v1247 = vld [vmem:[%s313 + $0x880] sm:$0xff]
        %v1248 = vld [vmem:[%s313 + $0x888] sm:$0xff]
        %v1249 = vld [vmem:[%s313 + $0x890] sm:$0xff]
        %v1250 = vld [vmem:[%s313 + $0x898] sm:$0xff]
        %v1251 = vld [vmem:[%s313 + $0x8a0] sm:$0xff]
        %v1252 = vld [vmem:[%s313 + $0x8a8] sm:$0xff]
        %v1253 = vld [vmem:[%s313 + $0x8b0] sm:$0xff]
        %v1254 = vld [vmem:[%s313 + $0x8b8] sm:$0xff]
        %v1255 = vld [vmem:[%s313 + $0x8c0] sm:$0xff]
        %v1256 = vld [vmem:[%s313 + $0x8c8] sm:$0xff]
        %v1257 = vld [vmem:[%s313 + $0x8d0] sm:$0xff]
        %v1258 = vld [vmem:[%s313 + $0x8d8] sm:$0xff]
        %v1259 = vld [vmem:[%s313 + $0x8e0] sm:$0xff]
        %v1260 = vld [vmem:[%s313 + $0x8e8] sm:$0xff]
        %v1261 = vld [vmem:[%s313 + $0x8f0] sm:$0xff]
        %v1262 = vld [vmem:[%s313 + $0x8f8] sm:$0xff]
        %v1263 = vld [vmem:[%s313 + $0x900] sm:$0xff]
        %v1264 = vld [vmem:[%s313 + $0x908] sm:$0xff]
        %v1265 = vld [vmem:[%s313 + $0x910] sm:$0xff]
        %v1266 = vld [vmem:[%s313 + $0x918] sm:$0xff]
        %v1267 = vld [vmem:[%s313 + $0x920] sm:$0xff]
        %v1268 = vld [vmem:[%s313 + $0x928] sm:$0xff]
        %v1269 = vld [vmem:[%s313 + $0x930] sm:$0xff]
        %v1270 = vld [vmem:[%s313 + $0x938] sm:$0xff]
        %v1271 = vld [vmem:[%s313 + $0x940] sm:$0xff]
        %v1272 = vld [vmem:[%s313 + $0x948] sm:$0xff]
        %v1273 = vld [vmem:[%s313 + $0x950] sm:$0xff]
        %v1274 = vld [vmem:[%s313 + $0x958] sm:$0xff]
        %v1275 = vld [vmem:[%s313 + $0x960] sm:$0xff]
        %v1276 = vld [vmem:[%s313 + $0x968] sm:$0xff]
        %v1277 = vld [vmem:[%s313 + $0x970] sm:$0xff]
        %v1278 = vld [vmem:[%s313 + $0x978] sm:$0xff]
        %v1279 = vld [vmem:[%s313 + $0x980] sm:$0xff]
        %v1280 = vld [vmem:[%s313 + $0x988] sm:$0xff]
        %v1281 = vld [vmem:[%s313 + $0x990] sm:$0xff]
        %v1282 = vld [vmem:[%s313 + $0x998] sm:$0xff]
        %v1283 = vld [vmem:[%s313 + $0x9a0] sm:$0xff]
        %v1284 = vld [vmem:[%s313 + $0x9a8] sm:$0xff]
        %v1285 = vld [vmem:[%s313 + $0x9b0] sm:$0xff]
        %v1286 = vld [vmem:[%s313 + $0x9b8] sm:$0xff]
        %v1287 = vld [vmem:[%s313 + $0x9c0] sm:$0xff]
        %v1288 = vld [vmem:[%s313 + $0x9c8] sm:$0xff]
        %v1289 = vld [vmem:[%s313 + $0x9d0] sm:$0xff]
        %v1290 = vld [vmem:[%s313 + $0x9d8] sm:$0xff]
        %v1291 = vld [vmem:[%s313 + $0x9e0] sm:$0xff]
        %v1292 = vld [vmem:[%s313 + $0x9e8] sm:$0xff]
        %v1293 = vld [vmem:[%s313 + $0x9f0] sm:$0xff]
        %v1294 = vld [vmem:[%s313 + $0x9f8] sm:$0xff]
        %v1295 = vld [vmem:[%s313 + $0xa00] sm:$0xff]
        %v1296 = vld [vmem:[%s313 + $0xa08] sm:$0xff]
        %v1297 = vld [vmem:[%s313 + $0xa10] sm:$0xff]
        %v1298 = vld [vmem:[%s313 + $0xa18] sm:$0xff]
        %v1299 = vld [vmem:[%s313 + $0xa20] sm:$0xff]
        %v1300 = vld [vmem:[%s313 + $0xa28] sm:$0xff]
        %v1301 = vld [vmem:[%s313 + $0xa30] sm:$0xff]
        %v1302 = vld [vmem:[%s313 + $0xa38] sm:$0xff]
        %v1303 = vld [vmem:[%s313 + $0xa40] sm:$0xff]
        %v1304 = vld [vmem:[%s313 + $0xa48] sm:$0xff]
        %v1305 = vld [vmem:[%s313 + $0xa50] sm:$0xff]
        %v1306 = vld [vmem:[%s313 + $0xa58] sm:$0xff]
        %v1307 = vld [vmem:[%s313 + $0xa60] sm:$0xff]
        %v1308 = vld [vmem:[%s313 + $0xa68] sm:$0xff]
        %v1309 = vld [vmem:[%s313 + $0xa70] sm:$0xff]
        %v1310 = vld [vmem:[%s313 + $0xa78] sm:$0xff]
        %v1311 = vld [vmem:[%s313 + $0xa80] sm:$0xff]
        %v1312 = vld [vmem:[%s313 + $0xa88] sm:$0xff]
        %v1313 = vld [vmem:[%s313 + $0xa90] sm:$0xff]
        %v1314 = vld [vmem:[%s313 + $0xa98] sm:$0xff]
        %v1315 = vld [vmem:[%s313 + $0xaa0] sm:$0xff]
        %v1316 = vld [vmem:[%s313 + $0xaa8] sm:$0xff]
        %v1317 = vld [vmem:[%s313 + $0xab0] sm:$0xff]
        %v1318 = vld [vmem:[%s313 + $0xab8] sm:$0xff]
        %v1319 = vld [vmem:[%s313 + $0xac0] sm:$0xff]
        %v1320 = vld [vmem:[%s313 + $0xac8] sm:$0xff]
        %v1321 = vld [vmem:[%s313 + $0xad0] sm:$0xff]
        %v1322 = vld [vmem:[%s313 + $0xad8] sm:$0xff]
        %v1323 = vld [vmem:[%s313 + $0xae0] sm:$0xff]
        %v1324 = vld [vmem:[%s313 + $0xae8] sm:$0xff]
        %v1325 = vld [vmem:[%s313 + $0xaf0] sm:$0xff]
        %v1326 = vld [vmem:[%s313 + $0xaf8] sm:$0xff]
        %v1327 = vld [vmem:[%s313 + $0xb00] sm:$0xff]
        %v1328 = vld [vmem:[%s313 + $0xb08] sm:$0xff]
        %v1329 = vld [vmem:[%s313 + $0xb10] sm:$0xff]
        %v1330 = vld [vmem:[%s313 + $0xb18] sm:$0xff]
        %v1331 = vld [vmem:[%s313 + $0xb20] sm:$0xff]
        %v1332 = vld [vmem:[%s313 + $0xb28] sm:$0xff]
        %v1333 = vld [vmem:[%s313 + $0xb30] sm:$0xff]
        %v1334 = vld [vmem:[%s313 + $0xb38] sm:$0xff]
        %v1335 = vld [vmem:[%s313 + $0xb40] sm:$0xff]
        %v1336 = vld [vmem:[%s313 + $0xb48] sm:$0xff]
        %v1337 = vld [vmem:[%s313 + $0xb50] sm:$0xff]
        %v1338 = vld [vmem:[%s313 + $0xb58] sm:$0xff]
        %v1339 = vld [vmem:[%s313 + $0xb60] sm:$0xff]
        %v1340 = vld [vmem:[%s313 + $0xb68] sm:$0xff]
        %v1341 = vld [vmem:[%s313 + $0xb70] sm:$0xff]
        %v1342 = vld [vmem:[%s313 + $0xb78] sm:$0xff]
        %v1343 = vld [vmem:[%s313 + $0xb80] sm:$0xff]
        %v1344 = vld [vmem:[%s313 + $0xb88] sm:$0xff]
        %v1345 = vld [vmem:[%s313 + $0xb90] sm:$0xff]
        %v1346 = vld [vmem:[%s313 + $0xb98] sm:$0xff]
        %v1347 = vld [vmem:[%s313 + $0xba0] sm:$0xff]
        %v1348 = vld [vmem:[%s313 + $0xba8] sm:$0xff]
        %v1349 = vld [vmem:[%s313 + $0xbb0] sm:$0xff]
        %v1350 = vld [vmem:[%s313 + $0xbb8] sm:$0xff]
        %v1351 = vld [vmem:[%s313 + $0xbc0] sm:$0xff]
        %v1352 = vld [vmem:[%s313 + $0xbc8] sm:$0xff]
        %v1353 = vld [vmem:[%s313 + $0xbd0] sm:$0xff]
        %v1354 = vld [vmem:[%s313 + $0xbd8] sm:$0xff]
        %v1355 = vld [vmem:[%s313 + $0xbe0] sm:$0xff]
        %v1356 = vld [vmem:[%s313 + $0xbe8] sm:$0xff]
        %v1357 = vld [vmem:[%s313 + $0xbf0] sm:$0xff]
        %v1358 = vld [vmem:[%s313 + $0xbf8] sm:$0xff]
        %v1359 = vld [vmem:[%s313 + $0xc00] sm:$0xff]
        %v1360 = vld [vmem:[%s313 + $0xc08] sm:$0xff]
        %v1361 = vld [vmem:[%s313 + $0xc10] sm:$0xff]
        %v1362 = vld [vmem:[%s313 + $0xc18] sm:$0xff]
        %v1363 = vld [vmem:[%s313 + $0xc20] sm:$0xff]
        %v1364 = vld [vmem:[%s313 + $0xc28] sm:$0xff]
        %v1365 = vld [vmem:[%s313 + $0xc30] sm:$0xff]
        %v1366 = vld [vmem:[%s313 + $0xc38] sm:$0xff]
        %v1367 = vld [vmem:[%s313 + $0xc40] sm:$0xff]
        %v1368 = vld [vmem:[%s313 + $0xc48] sm:$0xff]
        %v1369 = vld [vmem:[%s313 + $0xc50] sm:$0xff]
        %v1370 = vld [vmem:[%s313 + $0xc58] sm:$0xff]
        %v1371 = vld [vmem:[%s313 + $0xc60] sm:$0xff]
        %v1372 = vld [vmem:[%s313 + $0xc68] sm:$0xff]
        %v1373 = vld [vmem:[%s313 + $0xc70] sm:$0xff]
        %v1374 = vld [vmem:[%s313 + $0xc78] sm:$0xff]
        %v1375 = vld [vmem:[%s313 + $0xc80] sm:$0xff]
        %v1376 = vld [vmem:[%s313 + $0xc88] sm:$0xff]
        %v1377 = vld [vmem:[%s313 + $0xc90] sm:$0xff]
        %v1378 = vld [vmem:[%s313 + $0xc98] sm:$0xff]
        %v1379 = vld [vmem:[%s313 + $0xca0] sm:$0xff]
        %v1380 = vld [vmem:[%s313 + $0xca8] sm:$0xff]
        %v1381 = vld [vmem:[%s313 + $0xcb0] sm:$0xff]
        %v1382 = vld [vmem:[%s313 + $0xcb8] sm:$0xff]
        %v1383 = vld [vmem:[%s313 + $0xcc0] sm:$0xff]
        %v1384 = vld [vmem:[%s313 + $0xcc8] sm:$0xff]
        %v1385 = vld [vmem:[%s313 + $0xcd0] sm:$0xff]
        %v1386 = vld [vmem:[%s313 + $0xcd8] sm:$0xff]
        %v1387 = vld [vmem:[%s313 + $0xce0] sm:$0xff]
        %v1388 = vld [vmem:[%s313 + $0xce8] sm:$0xff]
        %v1389 = vld [vmem:[%s313 + $0xcf0] sm:$0xff]
        %v1390 = vld [vmem:[%s313 + $0xcf8] sm:$0xff]
        %v1391 = vld [vmem:[%s313 + $0xd00] sm:$0xff]
        %v1392 = vld [vmem:[%s313 + $0xd08] sm:$0xff]
        %v1393 = vld [vmem:[%s313 + $0xd10] sm:$0xff]
        %v1394 = vld [vmem:[%s313 + $0xd18] sm:$0xff]
        %v1395 = vld [vmem:[%s313 + $0xd20] sm:$0xff]
        %v1396 = vld [vmem:[%s313 + $0xd28] sm:$0xff]
        %v1397 = vld [vmem:[%s313 + $0xd30] sm:$0xff]
        %v1398 = vld [vmem:[%s313 + $0xd38] sm:$0xff]
        %v1399 = vld [vmem:[%s313 + $0xd40] sm:$0xff]
        %v1400 = vld [vmem:[%s313 + $0xd48] sm:$0xff]
        %v1401 = vld [vmem:[%s313 + $0xd50] sm:$0xff]
        %v1402 = vld [vmem:[%s313 + $0xd58] sm:$0xff]
        %v1403 = vld [vmem:[%s313 + $0xd60] sm:$0xff]
        %v1404 = vld [vmem:[%s313 + $0xd68] sm:$0xff]
        %v1405 = vld [vmem:[%s313 + $0xd70] sm:$0xff]
        %v1406 = vld [vmem:[%s313 + $0xd78] sm:$0xff]
        %v1407 = vld [vmem:[%s313 + $0xd80] sm:$0xff]
        %v1408 = vld [vmem:[%s313 + $0xd88] sm:$0xff]
        %v1409 = vld [vmem:[%s313 + $0xd90] sm:$0xff]
        %v1410 = vld [vmem:[%s313 + $0xd98] sm:$0xff]
        %v1411 = vld [vmem:[%s313 + $0xda0] sm:$0xff]
        %v1412 = vld [vmem:[%s313 + $0xda8] sm:$0xff]
        %v1413 = vld [vmem:[%s313 + $0xdb0] sm:$0xff]
        %v1414 = vld [vmem:[%s313 + $0xdb8] sm:$0xff]
        %v1415 = vld [vmem:[%s313 + $0xdc0] sm:$0xff]
        %v1416 = vld [vmem:[%s313 + $0xdc8] sm:$0xff]
        %v1417 = vld [vmem:[%s313 + $0xdd0] sm:$0xff]
        %v1418 = vld [vmem:[%s313 + $0xdd8] sm:$0xff]
        %v1419 = vld [vmem:[%s313 + $0xde0] sm:$0xff]
        %v1420 = vld [vmem:[%s313 + $0xde8] sm:$0xff]
        %v1421 = vld [vmem:[%s313 + $0xdf0] sm:$0xff]
        %v1422 = vld [vmem:[%s313 + $0xdf8] sm:$0xff]
        %v1423 = vld [vmem:[%s313 + $0xe00] sm:$0xff]
        %v1424 = vld [vmem:[%s313 + $0xe08] sm:$0xff]
        %v1425 = vld [vmem:[%s313 + $0xe10] sm:$0xff]
        %v1426 = vld [vmem:[%s313 + $0xe18] sm:$0xff]
        %v1427 = vld [vmem:[%s313 + $0xe20] sm:$0xff]
        %v1428 = vld [vmem:[%s313 + $0xe28] sm:$0xff]
        %v1429 = vld [vmem:[%s313 + $0xe30] sm:$0xff]
        %v1430 = vld [vmem:[%s313 + $0xe38] sm:$0xff]
        %v1431 = vld [vmem:[%s313 + $0xe40] sm:$0xff]
        %v1432 = vld [vmem:[%s313 + $0xe48] sm:$0xff]
        %v1433 = vld [vmem:[%s313 + $0xe50] sm:$0xff]
        %v1434 = vld [vmem:[%s313 + $0xe58] sm:$0xff]
        %v1435 = vld [vmem:[%s313 + $0xe60] sm:$0xff]
        %v1436 = vld [vmem:[%s313 + $0xe68] sm:$0xff]
        %v1437 = vld [vmem:[%s313 + $0xe70] sm:$0xff]
        %v1438 = vld [vmem:[%s313 + $0xe78] sm:$0xff]
        %v1439 = vld [vmem:[%s313 + $0xe80] sm:$0xff]
        %v1440 = vld [vmem:[%s313 + $0xe88] sm:$0xff]
        %v1441 = vld [vmem:[%s313 + $0xe90] sm:$0xff]
        %v1442 = vld [vmem:[%s313 + $0xe98] sm:$0xff]
        %v1443 = vld [vmem:[%s313 + $0xea0] sm:$0xff]
        %v1444 = vld [vmem:[%s313 + $0xea8] sm:$0xff]
        %v1445 = vld [vmem:[%s313 + $0xeb0] sm:$0xff]
        %v1446 = vld [vmem:[%s313 + $0xeb8] sm:$0xff]
        %v1447 = vld [vmem:[%s313 + $0xec0] sm:$0xff]
        %v1448 = vld [vmem:[%s313 + $0xec8] sm:$0xff]
        %v1449 = vld [vmem:[%s313 + $0xed0] sm:$0xff]
        %v1450 = vld [vmem:[%s313 + $0xed8] sm:$0xff]
        %v1451 = vld [vmem:[%s313 + $0xee0] sm:$0xff]
        %v1452 = vld [vmem:[%s313 + $0xee8] sm:$0xff]
        %v1453 = vld [vmem:[%s313 + $0xef0] sm:$0xff]
        %v1454 = vld [vmem:[%s313 + $0xef8] sm:$0xff]
        %v1455 = vld [vmem:[%s313 + $0xf00] sm:$0xff]
        %v1456 = vld [vmem:[%s313 + $0xf08] sm:$0xff]
        %v1457 = vld [vmem:[%s313 + $0xf10] sm:$0xff]
        %v1458 = vld [vmem:[%s313 + $0xf18] sm:$0xff]
        %v1459 = vld [vmem:[%s313 + $0xf20] sm:$0xff]
        %v1460 = vld [vmem:[%s313 + $0xf28] sm:$0xff]
        %v1461 = vld [vmem:[%s313 + $0xf30] sm:$0xff]
        %v1462 = vld [vmem:[%s313 + $0xf38] sm:$0xff]
        %v1463 = vld [vmem:[%s313 + $0xf40] sm:$0xff]
        %v1464 = vld [vmem:[%s313 + $0xf48] sm:$0xff]
        %v1465 = vld [vmem:[%s313 + $0xf50] sm:$0xff]
        %v1466 = vld [vmem:[%s313 + $0xf58] sm:$0xff]
        %v1467 = vld [vmem:[%s313 + $0xf60] sm:$0xff]
        %v1468 = vld [vmem:[%s313 + $0xf68] sm:$0xff]
        %v1469 = vld [vmem:[%s313 + $0xf70] sm:$0xff]
        %v1470 = vld [vmem:[%s313 + $0xf78] sm:$0xff]
        %v1471 = vld [vmem:[%s313 + $0xf80] sm:$0xff]
        %v1472 = vld [vmem:[%s313 + $0xf88] sm:$0xff]
        %v1473 = vld [vmem:[%s313 + $0xf90] sm:$0xff]
        %v1474 = vld [vmem:[%s313 + $0xf98] sm:$0xff]
        %v1475 = vld [vmem:[%s313 + $0xfa0] sm:$0xff]
        %v1476 = vld [vmem:[%s313 + $0xfa8] sm:$0xff]
        %v1477 = vld [vmem:[%s313 + $0xfb0] sm:$0xff]
        %v1478 = vld [vmem:[%s313 + $0xfb8] sm:$0xff]
        %v1479 = vld [vmem:[%s313 + $0xfc0] sm:$0xff]
        %v1480 = vld [vmem:[%s313 + $0xfc8] sm:$0xff]
        %v1481 = vld [vmem:[%s313 + $0xfd0] sm:$0xff]
        %v1482 = vld [vmem:[%s313 + $0xfd8] sm:$0xff]
        %v1483 = vld [vmem:[%s313 + $0xfe0] sm:$0xff]
        %v1484 = vld [vmem:[%s313 + $0xfe8] sm:$0xff]
        %v1485 = vld [vmem:[%s313 + $0xff0] sm:$0xff]
        %v1486 = vld [vmem:[%s313 + $0xff8] sm:$0xff]
        %v1487 = vld [vmem:[%s313 + $0x1000] sm:$0xff]
        %v1488 = vld [vmem:[%s313 + $0x1008] sm:$0xff]
        %v1489 = vld [vmem:[%s313 + $0x1010] sm:$0xff]
        %v1490 = vld [vmem:[%s313 + $0x1018] sm:$0xff]
        %v1491 = vld [vmem:[%s313 + $0x1020] sm:$0xff]
        %v1492 = vld [vmem:[%s313 + $0x1028] sm:$0xff]
        %v1493 = vld [vmem:[%s313 + $0x1030] sm:$0xff]
        %v1494 = vld [vmem:[%s313 + $0x1038] sm:$0xff]
        %v1495 = vld [vmem:[%s313 + $0x1040] sm:$0xff]
        %v1496 = vld [vmem:[%s313 + $0x1048] sm:$0xff]
        %v1497 = vld [vmem:[%s313 + $0x1050] sm:$0xff]
        %v1498 = vld [vmem:[%s313 + $0x1058] sm:$0xff]
        %v1499 = vld [vmem:[%s313 + $0x1060] sm:$0xff]
        %v1500 = vld [vmem:[%s313 + $0x1068] sm:$0xff]
        %v1501 = vld [vmem:[%s313 + $0x1070] sm:$0xff]
        %v1502 = vld [vmem:[%s313 + $0x1078] sm:$0xff]
        %v1503 = vld [vmem:[%s313 + $0x1080] sm:$0xff]
        %v1504 = vld [vmem:[%s313 + $0x1088] sm:$0xff]
        %v1505 = vld [vmem:[%s313 + $0x1090] sm:$0xff]
        %v1506 = vld [vmem:[%s313 + $0x1098] sm:$0xff]
        %v1507 = vld [vmem:[%s313 + $0x10a0] sm:$0xff]
        %v1508 = vld [vmem:[%s313 + $0x10a8] sm:$0xff]
        %v1509 = vld [vmem:[%s313 + $0x10b0] sm:$0xff]
        %v1510 = vld [vmem:[%s313 + $0x10b8] sm:$0xff]
        %v1511 = vld [vmem:[%s313 + $0x10c0] sm:$0xff]
        %v1512 = vld [vmem:[%s313 + $0x10c8] sm:$0xff]
        %v1513 = vld [vmem:[%s313 + $0x10d0] sm:$0xff]
        %v1514 = vld [vmem:[%s313 + $0x10d8] sm:$0xff]
        %v1515 = vld [vmem:[%s313 + $0x10e0] sm:$0xff]
        %v1516 = vld [vmem:[%s313 + $0x10e8] sm:$0xff]
        %v1517 = vld [vmem:[%s313 + $0x10f0] sm:$0xff]
        %v1518 = vld [vmem:[%s313 + $0x10f8] sm:$0xff]
        %v1519 = vld [vmem:[%s313 + $0x1100] sm:$0xff]
        %v1520 = vld [vmem:[%s313 + $0x1108] sm:$0xff]
        %v1521 = vld [vmem:[%s313 + $0x1110] sm:$0xff]
        %v1522 = vld [vmem:[%s313 + $0x1118] sm:$0xff]
        %v1523 = vld [vmem:[%s313 + $0x1120] sm:$0xff]
        %v1524 = vld [vmem:[%s313 + $0x1128] sm:$0xff]
        %v1525 = vld [vmem:[%s313 + $0x1130] sm:$0xff]
        %v1526 = vld [vmem:[%s313 + $0x1138] sm:$0xff]
        %v1527 = vld [vmem:[%s313 + $0x1140] sm:$0xff]
        %v1528 = vld [vmem:[%s313 + $0x1148] sm:$0xff]
        %v1529 = vld [vmem:[%s313 + $0x1150] sm:$0xff]
        %v1530 = vld [vmem:[%s313 + $0x1158] sm:$0xff]
        %v1531 = vld [vmem:[%s313 + $0x1160] sm:$0xff]
        %v1532 = vld [vmem:[%s313 + $0x1168] sm:$0xff]
        %v1533 = vld [vmem:[%s313 + $0x1170] sm:$0xff]
        %v1534 = vld [vmem:[%s313 + $0x1178] sm:$0xff]
        %v1535 = vld [vmem:[%s313 + $0x1180] sm:$0xff]
        %v1536 = vld [vmem:[%s313 + $0x1188] sm:$0xff]
        %v1537 = vld [vmem:[%s313 + $0x1190] sm:$0xff]
        %v1538 = vld [vmem:[%s313 + $0x1198] sm:$0xff]
        %v1539 = vld [vmem:[%s313 + $0x11a0] sm:$0xff]
        %v1540 = vld [vmem:[%s313 + $0x11a8] sm:$0xff]
        %v1541 = vld [vmem:[%s313 + $0x11b0] sm:$0xff]
        %v1542 = vld [vmem:[%s313 + $0x11b8] sm:$0xff]
        %v1543 = vld [vmem:[%s313 + $0x11c0] sm:$0xff]
        %v1544 = vld [vmem:[%s313 + $0x11c8] sm:$0xff]
        %v1545 = vld [vmem:[%s313 + $0x11d0] sm:$0xff]
        %v1546 = vld [vmem:[%s313 + $0x11d8] sm:$0xff]
        %v1547 = vld [vmem:[%s313 + $0x11e0] sm:$0xff]
        %v1548 = vld [vmem:[%s313 + $0x11e8] sm:$0xff]
        %v1549 = vld [vmem:[%s313 + $0x11f0] sm:$0xff]
        %v1550 = vld [vmem:[%s313 + $0x11f8] sm:$0xff]
        %v1551 = vld [vmem:[%s313 + $0x1200] sm:$0xff]
        %v1552 = vld [vmem:[%s313 + $0x1208] sm:$0xff]
        %v1553 = vld [vmem:[%s313 + $0x1210] sm:$0xff]
        %v1554 = vld [vmem:[%s313 + $0x1218] sm:$0xff]
        %v1555 = vld [vmem:[%s313 + $0x1220] sm:$0xff]
        %v1556 = vld [vmem:[%s313 + $0x1228] sm:$0xff]
        %v1557 = vld [vmem:[%s313 + $0x1230] sm:$0xff]
        %v1558 = vld [vmem:[%s313 + $0x1238] sm:$0xff]
        %v1559 = vld [vmem:[%s313 + $0x1240] sm:$0xff]
        %v1560 = vld [vmem:[%s313 + $0x1248] sm:$0xff]
        %v1561 = vld [vmem:[%s313 + $0x1250] sm:$0xff]
        %v1562 = vld [vmem:[%s313 + $0x1258] sm:$0xff]
        %v1563 = vld [vmem:[%s313 + $0x1260] sm:$0xff]
        %v1564 = vld [vmem:[%s313 + $0x1268] sm:$0xff]
        %v1565 = vld [vmem:[%s313 + $0x1270] sm:$0xff]
        %v1566 = vld [vmem:[%s313 + $0x1278] sm:$0xff]
        %v1567 = vld [vmem:[%s313 + $0x1280] sm:$0xff]
        %v1568 = vld [vmem:[%s313 + $0x1288] sm:$0xff]
        %v1569 = vld [vmem:[%s313 + $0x1290] sm:$0xff]
        %v1570 = vld [vmem:[%s313 + $0x1298] sm:$0xff]
        %v1571 = vld [vmem:[%s313 + $0x12a0] sm:$0xff]
        %v1572 = vld [vmem:[%s313 + $0x12a8] sm:$0xff]
        %v1573 = vld [vmem:[%s313 + $0x12b0] sm:$0xff]
        %v1574 = vld [vmem:[%s313 + $0x12b8] sm:$0xff]
        %v1575 = vld [vmem:[%s313 + $0x12c0] sm:$0xff]
        %v1576 = vld [vmem:[%s313 + $0x12c8] sm:$0xff]
        %v1577 = vld [vmem:[%s313 + $0x12d0] sm:$0xff]
        %v1578 = vld [vmem:[%s313 + $0x12d8] sm:$0xff]
        %v1579 = vld [vmem:[%s313 + $0x12e0] sm:$0xff]
        %v1580 = vld [vmem:[%s313 + $0x12e8] sm:$0xff]
        %v1581 = vld [vmem:[%s313 + $0x12f0] sm:$0xff]
        %v1582 = vld [vmem:[%s313 + $0x12f8] sm:$0xff]
        %v1583 = vld [vmem:[%s313 + $0x1300] sm:$0xff]
        %v1584 = vld [vmem:[%s313 + $0x1308] sm:$0xff]
        %v1585 = vld [vmem:[%s313 + $0x1310] sm:$0xff]
        %v1586 = vld [vmem:[%s313 + $0x1318] sm:$0xff]
        %v1587 = vld [vmem:[%s313 + $0x1320] sm:$0xff]
        %v1588 = vld [vmem:[%s313 + $0x1328] sm:$0xff]
        %v1589 = vld [vmem:[%s313 + $0x1330] sm:$0xff]
        %v1590 = vld [vmem:[%s313 + $0x1338] sm:$0xff]
        %v1591 = vld [vmem:[%s313 + $0x1340] sm:$0xff]
        %v1592 = vld [vmem:[%s313 + $0x1348] sm:$0xff]
        %v1593 = vld [vmem:[%s313 + $0x1350] sm:$0xff]
        %v1594 = vld [vmem:[%s313 + $0x1358] sm:$0xff]
        %v1595 = vld [vmem:[%s313 + $0x1360] sm:$0xff]
        %v1596 = vld [vmem:[%s313 + $0x1368] sm:$0xff]
        %v1597 = vld [vmem:[%s313 + $0x1370] sm:$0xff]
        %v1598 = vld [vmem:[%s313 + $0x1378] sm:$0xff]
        %v1599 = vld [vmem:[%s313 + $0x1380] sm:$0xff]
        %v1600 = vld [vmem:[%s313 + $0x1388] sm:$0xff]
        %v1601 = vld [vmem:[%s313 + $0x1390] sm:$0xff]
        %v1602 = vld [vmem:[%s313 + $0x1398] sm:$0xff]
        %v1603 = vld [vmem:[%s313 + $0x13a0] sm:$0xff]
        %v1604 = vld [vmem:[%s313 + $0x13a8] sm:$0xff]
        %v1605 = vld [vmem:[%s313 + $0x13b0] sm:$0xff]
        %v1606 = vld [vmem:[%s313 + $0x13b8] sm:$0xff]
        %v1607 = vld [vmem:[%s313 + $0x13c0] sm:$0xff]
        %v1608 = vld [vmem:[%s313 + $0x13c8] sm:$0xff]
        %v1609 = vld [vmem:[%s313 + $0x13d0] sm:$0xff]
        %v1610 = vld [vmem:[%s313 + $0x13d8] sm:$0xff]
        %v1611 = vld [vmem:[%s313 + $0x13e0] sm:$0xff]
        %v1612 = vld [vmem:[%s313 + $0x13e8] sm:$0xff]
        %v1613 = vld [vmem:[%s313 + $0x13f0] sm:$0xff]
        %v1614 = vld [vmem:[%s313 + $0x13f8] sm:$0xff]
        %v1615 = vld [vmem:[%s313 + $0x1400] sm:$0xff]
        %v1616 = vld [vmem:[%s313 + $0x1408] sm:$0xff]
        %v1617 = vld [vmem:[%s313 + $0x1410] sm:$0xff]
        %v1618 = vld [vmem:[%s313 + $0x1418] sm:$0xff]
        %v1619 = vld [vmem:[%s313 + $0x1420] sm:$0xff]
        %v1620 = vld [vmem:[%s313 + $0x1428] sm:$0xff]
        %v1621 = vld [vmem:[%s313 + $0x1430] sm:$0xff]
        %v1622 = vld [vmem:[%s313 + $0x1438] sm:$0xff]
        %v1623 = vld [vmem:[%s313 + $0x1440] sm:$0xff]
        %v1624 = vld [vmem:[%s313 + $0x1448] sm:$0xff]
        %v1625 = vld [vmem:[%s313 + $0x1450] sm:$0xff]
        %v1626 = vld [vmem:[%s313 + $0x1458] sm:$0xff]
        %v1627 = vld [vmem:[%s313 + $0x1460] sm:$0xff]
        %v1628 = vld [vmem:[%s313 + $0x1468] sm:$0xff]
        %v1629 = vld [vmem:[%s313 + $0x1470] sm:$0xff]
        %v1630 = vld [vmem:[%s313 + $0x1478] sm:$0xff]
        %v1631 = vld [vmem:[%s313 + $0x1480] sm:$0xff]
        %v1632 = vld [vmem:[%s313 + $0x1488] sm:$0xff]
        %v1633 = vld [vmem:[%s313 + $0x1490] sm:$0xff]
        %v1634 = vld [vmem:[%s313 + $0x1498] sm:$0xff]
        %v1635 = vld [vmem:[%s313 + $0x14a0] sm:$0xff]
        %v1636 = vld [vmem:[%s313 + $0x14a8] sm:$0xff]
        %v1637 = vld [vmem:[%s313 + $0x14b0] sm:$0xff]
        %v1638 = vld [vmem:[%s313 + $0x14b8] sm:$0xff]
        %v1639 = vld [vmem:[%s313 + $0x14c0] sm:$0xff]
        %v1640 = vld [vmem:[%s313 + $0x14c8] sm:$0xff]
        %v1641 = vld [vmem:[%s313 + $0x14d0] sm:$0xff]
        %v1642 = vld [vmem:[%s313 + $0x14d8] sm:$0xff]
        %v1643 = vld [vmem:[%s313 + $0x14e0] sm:$0xff]
        %v1644 = vld [vmem:[%s313 + $0x14e8] sm:$0xff]
        %v1645 = vld [vmem:[%s313 + $0x14f0] sm:$0xff]
        %v1646 = vld [vmem:[%s313 + $0x14f8] sm:$0xff]
        %v1647 = vld [vmem:[%s313 + $0x1500] sm:$0xff]
        %v1648 = vld [vmem:[%s313 + $0x1508] sm:$0xff]
        %v1649 = vld [vmem:[%s313 + $0x1510] sm:$0xff]
        %v1650 = vld [vmem:[%s313 + $0x1518] sm:$0xff]
        %v1651 = vld [vmem:[%s313 + $0x1520] sm:$0xff]
        %v1652 = vld [vmem:[%s313 + $0x1528] sm:$0xff]
        %v1653 = vld [vmem:[%s313 + $0x1530] sm:$0xff]
        %v1654 = vld [vmem:[%s313 + $0x1538] sm:$0xff]
        %v1655 = vld [vmem:[%s313 + $0x1540] sm:$0xff]
        %v1656 = vld [vmem:[%s313 + $0x1548] sm:$0xff]
        %v1657 = vld [vmem:[%s313 + $0x1550] sm:$0xff]
        %v1658 = vld [vmem:[%s313 + $0x1558] sm:$0xff]
        %v1659 = vld [vmem:[%s313 + $0x1560] sm:$0xff]
        %v1660 = vld [vmem:[%s313 + $0x1568] sm:$0xff]
        %v1661 = vld [vmem:[%s313 + $0x1570] sm:$0xff]
        %v1662 = vld [vmem:[%s313 + $0x1578] sm:$0xff]
        %v1663 = vld [vmem:[%s313 + $0x1580] sm:$0xff]
        %v1664 = vld [vmem:[%s313 + $0x1588] sm:$0xff]
        %v1665 = vld [vmem:[%s313 + $0x1590] sm:$0xff]
        %v1666 = vld [vmem:[%s313 + $0x1598] sm:$0xff]
        %v1667 = vld [vmem:[%s313 + $0x15a0] sm:$0xff]
        %v1668 = vld [vmem:[%s313 + $0x15a8] sm:$0xff]
        %v1669 = vld [vmem:[%s313 + $0x15b0] sm:$0xff]
        %v1670 = vld [vmem:[%s313 + $0x15b8] sm:$0xff]
        %v1671 = vld [vmem:[%s313 + $0x15c0] sm:$0xff]
        %v1672 = vld [vmem:[%s313 + $0x15c8] sm:$0xff]
        %v1673 = vld [vmem:[%s313 + $0x15d0] sm:$0xff]
        %v1674 = vld [vmem:[%s313 + $0x15d8] sm:$0xff]
        %v1675 = vld [vmem:[%s313 + $0x15e0] sm:$0xff]
        %v1676 = vld [vmem:[%s313 + $0x15e8] sm:$0xff]
        %v1677 = vld [vmem:[%s313 + $0x15f0] sm:$0xff]
        %v1678 = vld [vmem:[%s313 + $0x15f8] sm:$0xff]
        %v1679 = vld [vmem:[%s313 + $0x1600] sm:$0xff]
        %v1680 = vld [vmem:[%s313 + $0x1608] sm:$0xff]
        %v1681 = vld [vmem:[%s313 + $0x1610] sm:$0xff]
        %v1682 = vld [vmem:[%s313 + $0x1618] sm:$0xff]
        %v1683 = vld [vmem:[%s313 + $0x1620] sm:$0xff]
        %v1684 = vld [vmem:[%s313 + $0x1628] sm:$0xff]
        %v1685 = vld [vmem:[%s313 + $0x1630] sm:$0xff]
        %v1686 = vld [vmem:[%s313 + $0x1638] sm:$0xff]
        %v1687 = vld [vmem:[%s313 + $0x1640] sm:$0xff]
        %v1688 = vld [vmem:[%s313 + $0x1648] sm:$0xff]
        %v1689 = vld [vmem:[%s313 + $0x1650] sm:$0xff]
        %v1690 = vld [vmem:[%s313 + $0x1658] sm:$0xff]
        %v1691 = vld [vmem:[%s313 + $0x1660] sm:$0xff]
        %v1692 = vld [vmem:[%s313 + $0x1668] sm:$0xff]
        %v1693 = vld [vmem:[%s313 + $0x1670] sm:$0xff]
        %v1694 = vld [vmem:[%s313 + $0x1678] sm:$0xff]
        %v1695 = vld [vmem:[%s313 + $0x1680] sm:$0xff]
        %v1696 = vld [vmem:[%s313 + $0x1688] sm:$0xff]
        %v1697 = vld [vmem:[%s313 + $0x1690] sm:$0xff]
        %v1698 = vld [vmem:[%s313 + $0x1698] sm:$0xff]
        %v1699 = vld [vmem:[%s313 + $0x16a0] sm:$0xff]
        %v1700 = vld [vmem:[%s313 + $0x16a8] sm:$0xff]
        %v1701 = vld [vmem:[%s313 + $0x16b0] sm:$0xff]
        %v1702 = vld [vmem:[%s313 + $0x16b8] sm:$0xff]
        %v1703 = vld [vmem:[%s313 + $0x16c0] sm:$0xff]
        %v1704 = vld [vmem:[%s313 + $0x16c8] sm:$0xff]
        %v1705 = vld [vmem:[%s313 + $0x16d0] sm:$0xff]
        %v1706 = vld [vmem:[%s313 + $0x16d8] sm:$0xff]
        %v1707 = vld [vmem:[%s313 + $0x16e0] sm:$0xff]
        %v1708 = vld [vmem:[%s313 + $0x16e8] sm:$0xff]
        %v1709 = vld [vmem:[%s313 + $0x16f0] sm:$0xff]
        %v1710 = vld [vmem:[%s313 + $0x16f8] sm:$0xff]
        %v1711 = vld [vmem:[%s313 + $0x1700] sm:$0xff]
        %v1712 = vld [vmem:[%s313 + $0x1708] sm:$0xff]
        %v1713 = vld [vmem:[%s313 + $0x1710] sm:$0xff]
        %v1714 = vld [vmem:[%s313 + $0x1718] sm:$0xff]
        %v1715 = vld [vmem:[%s313 + $0x1720] sm:$0xff]
        %v1716 = vld [vmem:[%s313 + $0x1728] sm:$0xff]
        %v1717 = vld [vmem:[%s313 + $0x1730] sm:$0xff]
        %v1718 = vld [vmem:[%s313 + $0x1738] sm:$0xff]
        %v1719 = vld [vmem:[%s313 + $0x1740] sm:$0xff]
        %v1720 = vld [vmem:[%s313 + $0x1748] sm:$0xff]
        %v1721 = vld [vmem:[%s313 + $0x1750] sm:$0xff]
        %v1722 = vld [vmem:[%s313 + $0x1758] sm:$0xff]
        %v1723 = vld [vmem:[%s313 + $0x1760] sm:$0xff]
        %v1724 = vld [vmem:[%s313 + $0x1768] sm:$0xff]
        %v1725 = vld [vmem:[%s313 + $0x1770] sm:$0xff]
        %v1726 = vld [vmem:[%s313 + $0x1778] sm:$0xff]
        %v1727 = vld [vmem:[%s313 + $0x1780] sm:$0xff]
        %v1728 = vld [vmem:[%s313 + $0x1788] sm:$0xff]
        %v1729 = vld [vmem:[%s313 + $0x1790] sm:$0xff]
        %v1730 = vld [vmem:[%s313 + $0x1798] sm:$0xff]
        %v1731 = vld [vmem:[%s313 + $0x17a0] sm:$0xff]
        %v1732 = vld [vmem:[%s313 + $0x17a8] sm:$0xff]
        %v1733 = vld [vmem:[%s313 + $0x17b0] sm:$0xff]
        %v1734 = vld [vmem:[%s313 + $0x17b8] sm:$0xff]
        %v1735 = vld [vmem:[%s313 + $0x17c0] sm:$0xff]
        %v1736 = vld [vmem:[%s313 + $0x17c8] sm:$0xff]
        %v1737 = vld [vmem:[%s313 + $0x17d0] sm:$0xff]
        %v1738 = vld [vmem:[%s313 + $0x17d8] sm:$0xff]
        %v1739 = vld [vmem:[%s313 + $0x17e0] sm:$0xff]
        %v1740 = vld [vmem:[%s313 + $0x17e8] sm:$0xff]
        %v1741 = vld [vmem:[%s313 + $0x17f0] sm:$0xff]
        %v1742 = vld [vmem:[%s313 + $0x17f8] sm:$0xff]
        %v1743 = vld [vmem:[%s313 + $0x1800] sm:$0xff]
        %v1744 = vld [vmem:[%s313 + $0x1808] sm:$0xff]
        %v1745 = vld [vmem:[%s313 + $0x1810] sm:$0xff]
        %v1746 = vld [vmem:[%s313 + $0x1818] sm:$0xff]
        %v1747 = vld [vmem:[%s313 + $0x1820] sm:$0xff]
        %v1748 = vld [vmem:[%s313 + $0x1828] sm:$0xff]
        %v1749 = vld [vmem:[%s313 + $0x1830] sm:$0xff]
        %v1750 = vld [vmem:[%s313 + $0x1838] sm:$0xff]
        %v1751 = vld [vmem:[%s313 + $0x1840] sm:$0xff]
        %v1752 = vld [vmem:[%s313 + $0x1848] sm:$0xff]
        %v1753 = vld [vmem:[%s313 + $0x1850] sm:$0xff]
        %v1754 = vld [vmem:[%s313 + $0x1858] sm:$0xff]
        %v1755 = vld [vmem:[%s313 + $0x1860] sm:$0xff]
        %v1756 = vld [vmem:[%s313 + $0x1868] sm:$0xff]
        %v1757 = vld [vmem:[%s313 + $0x1870] sm:$0xff]
        %v1758 = vld [vmem:[%s313 + $0x1878] sm:$0xff]
        %v1759 = vld [vmem:[%s313 + $0x1880] sm:$0xff]
        %v1760 = vld [vmem:[%s313 + $0x1888] sm:$0xff]
        %v1761 = vld [vmem:[%s313 + $0x1890] sm:$0xff]
        %v1762 = vld [vmem:[%s313 + $0x1898] sm:$0xff]
        %v1763 = vld [vmem:[%s313 + $0x18a0] sm:$0xff]
        %v1764 = vld [vmem:[%s313 + $0x18a8] sm:$0xff]
        %v1765 = vld [vmem:[%s313 + $0x18b0] sm:$0xff]
        %v1766 = vld [vmem:[%s313 + $0x18b8] sm:$0xff]
        %v1767 = vld [vmem:[%s313 + $0x18c0] sm:$0xff]
        %v1768 = vld [vmem:[%s313 + $0x18c8] sm:$0xff]
        %v1769 = vld [vmem:[%s313 + $0x18d0] sm:$0xff]
        %v1770 = vld [vmem:[%s313 + $0x18d8] sm:$0xff]
        %v1771 = vld [vmem:[%s313 + $0x18e0] sm:$0xff]
        %v1772 = vld [vmem:[%s313 + $0x18e8] sm:$0xff]
        %v1773 = vld [vmem:[%s313 + $0x18f0] sm:$0xff]
        %v1774 = vld [vmem:[%s313 + $0x18f8] sm:$0xff]
        %v1775 = vld [vmem:[%s313 + $0x1900] sm:$0xff]
        %v1776 = vld [vmem:[%s313 + $0x1908] sm:$0xff]
        %v1777 = vld [vmem:[%s313 + $0x1910] sm:$0xff]
        %v1778 = vld [vmem:[%s313 + $0x1918] sm:$0xff]
        %v1779 = vld [vmem:[%s313 + $0x1920] sm:$0xff]
        %v1780 = vld [vmem:[%s313 + $0x1928] sm:$0xff]
        %v1781 = vld [vmem:[%s313 + $0x1930] sm:$0xff]
        %v1782 = vld [vmem:[%s313 + $0x1938] sm:$0xff]
        %v1783 = vld [vmem:[%s313 + $0x1940] sm:$0xff]
        %v1784 = vld [vmem:[%s313 + $0x1948] sm:$0xff]
        %v1785 = vld [vmem:[%s313 + $0x1950] sm:$0xff]
        %v1786 = vld [vmem:[%s313 + $0x1958] sm:$0xff]
        %v1787 = vld [vmem:[%s313 + $0x1960] sm:$0xff]
        %v1788 = vld [vmem:[%s313 + $0x1968] sm:$0xff]
        %v1789 = vld [vmem:[%s313 + $0x1970] sm:$0xff]
        %v1790 = vld [vmem:[%s313 + $0x1978] sm:$0xff]
        %v1791 = vld [vmem:[%s313 + $0x1980] sm:$0xff]
        %v1792 = vld [vmem:[%s313 + $0x1988] sm:$0xff]
        %v1793 = vld [vmem:[%s313 + $0x1990] sm:$0xff]
        %v1794 = vld [vmem:[%s313 + $0x1998] sm:$0xff]
        %v1795 = vld [vmem:[%s313 + $0x19a0] sm:$0xff]
        %v1796 = vld [vmem:[%s313 + $0x19a8] sm:$0xff]
        %v1797 = vld [vmem:[%s313 + $0x19b0] sm:$0xff]
        %v1798 = vld [vmem:[%s313 + $0x19b8] sm:$0xff]
        %v1799 = vld [vmem:[%s313 + $0x19c0] sm:$0xff]
        %v1800 = vld [vmem:[%s313 + $0x19c8] sm:$0xff]
        %v1801 = vld [vmem:[%s313 + $0x19d0] sm:$0xff]
        %v1802 = vld [vmem:[%s313 + $0x19d8] sm:$0xff]
        %v1803 = vld [vmem:[%s313 + $0x19e0] sm:$0xff]
        %v1804 = vld [vmem:[%s313 + $0x19e8] sm:$0xff]
        %v1805 = vld [vmem:[%s313 + $0x19f0] sm:$0xff]
        %v1806 = vld [vmem:[%s313 + $0x19f8] sm:$0xff]
        %v1807 = vld [vmem:[%s313 + $0x1a00] sm:$0xff]
        %v1808 = vld [vmem:[%s313 + $0x1a08] sm:$0xff]
        %v1809 = vld [vmem:[%s313 + $0x1a10] sm:$0xff]
        %v1810 = vld [vmem:[%s313 + $0x1a18] sm:$0xff]
        %v1811 = vld [vmem:[%s313 + $0x1a20] sm:$0xff]
        %v1812 = vld [vmem:[%s313 + $0x1a28] sm:$0xff]
        %v1813 = vld [vmem:[%s313 + $0x1a30] sm:$0xff]
        %v1814 = vld [vmem:[%s313 + $0x1a38] sm:$0xff]
        %v1815 = vld [vmem:[%s313 + $0x1a40] sm:$0xff]
        %v1816 = vld [vmem:[%s313 + $0x1a48] sm:$0xff]
        %v1817 = vld [vmem:[%s313 + $0x1a50] sm:$0xff]
        %v1818 = vld [vmem:[%s313 + $0x1a58] sm:$0xff]
        %v1819 = vld [vmem:[%s313 + $0x1a60] sm:$0xff]
        %v1820 = vld [vmem:[%s313 + $0x1a68] sm:$0xff]
        %v1821 = vld [vmem:[%s313 + $0x1a70] sm:$0xff]
        %v1822 = vld [vmem:[%s313 + $0x1a78] sm:$0xff]
        %v1823 = vld [vmem:[%s313 + $0x1a80] sm:$0xff]
        %v1824 = vld [vmem:[%s313 + $0x1a88] sm:$0xff]
        %v1825 = vld [vmem:[%s313 + $0x1a90] sm:$0xff]
        %v1826 = vld [vmem:[%s313 + $0x1a98] sm:$0xff]
        %v1827 = vld [vmem:[%s313 + $0x1aa0] sm:$0xff]
        %v1828 = vld [vmem:[%s313 + $0x1aa8] sm:$0xff]
        %v1829 = vld [vmem:[%s313 + $0x1ab0] sm:$0xff]
        %v1830 = vld [vmem:[%s313 + $0x1ab8] sm:$0xff]
        %v1831 = vld [vmem:[%s313 + $0x1ac0] sm:$0xff]
        %v1832 = vld [vmem:[%s313 + $0x1ac8] sm:$0xff]
        %v1833 = vld [vmem:[%s313 + $0x1ad0] sm:$0xff]
        %v1834 = vld [vmem:[%s313 + $0x1ad8] sm:$0xff]
        %v1835 = vld [vmem:[%s313 + $0x1ae0] sm:$0xff]
        %v1836 = vld [vmem:[%s313 + $0x1ae8] sm:$0xff]
        %v1837 = vld [vmem:[%s313 + $0x1af0] sm:$0xff]
        %v1838 = vld [vmem:[%s313 + $0x1af8] sm:$0xff]
        %v1839 = vld [vmem:[%s313 + $0x1b00] sm:$0xff]
        %v1840 = vld [vmem:[%s313 + $0x1b08] sm:$0xff]
        %v1841 = vld [vmem:[%s313 + $0x1b10] sm:$0xff]
        %v1842 = vld [vmem:[%s313 + $0x1b18] sm:$0xff]
        %v1843 = vld [vmem:[%s313 + $0x1b20] sm:$0xff]
        %v1844 = vld [vmem:[%s313 + $0x1b28] sm:$0xff]
        %v1845 = vld [vmem:[%s313 + $0x1b30] sm:$0xff]
        %v1846 = vld [vmem:[%s313 + $0x1b38] sm:$0xff]
        %v1847 = vld [vmem:[%s313 + $0x1b40] sm:$0xff]
        %v1848 = vld [vmem:[%s313 + $0x1b48] sm:$0xff]
        %v1849 = vld [vmem:[%s313 + $0x1b50] sm:$0xff]
        %v1850 = vld [vmem:[%s313 + $0x1b58] sm:$0xff]
        %v1851 = vld [vmem:[%s313 + $0x1b60] sm:$0xff]
        %v1852 = vld [vmem:[%s313 + $0x1b68] sm:$0xff]
        %v1853 = vld [vmem:[%s313 + $0x1b70] sm:$0xff]
        %v1854 = vld [vmem:[%s313 + $0x1b78] sm:$0xff]
        %v1855 = vld [vmem:[%s313 + $0x1b80] sm:$0xff]
        %v1856 = vld [vmem:[%s313 + $0x1b88] sm:$0xff]
        %v1857 = vld [vmem:[%s313 + $0x1b90] sm:$0xff]
        %v1858 = vld [vmem:[%s313 + $0x1b98] sm:$0xff]
        %v1859 = vld [vmem:[%s313 + $0x1ba0] sm:$0xff]
        %v1860 = vld [vmem:[%s313 + $0x1ba8] sm:$0xff]
        %v1861 = vld [vmem:[%s313 + $0x1bb0] sm:$0xff]
        %v1862 = vld [vmem:[%s313 + $0x1bb8] sm:$0xff]
        %v1863 = vld [vmem:[%s313 + $0x1bc0] sm:$0xff]
        %v1864 = vld [vmem:[%s313 + $0x1bc8] sm:$0xff]
        %v1865 = vld [vmem:[%s313 + $0x1bd0] sm:$0xff]
        %v1866 = vld [vmem:[%s313 + $0x1bd8] sm:$0xff]
        %v1867 = vld [vmem:[%s313 + $0x1be0] sm:$0xff]
        %v1868 = vld [vmem:[%s313 + $0x1be8] sm:$0xff]
        %v1869 = vld [vmem:[%s313 + $0x1bf0] sm:$0xff]
        %v1870 = vld [vmem:[%s313 + $0x1bf8] sm:$0xff]
        %v1871 = vld [vmem:[%s313 + $0x1c00] sm:$0xff]
        %v1872 = vld [vmem:[%s313 + $0x1c08] sm:$0xff]
        %v1873 = vld [vmem:[%s313 + $0x1c10] sm:$0xff]
        %v1874 = vld [vmem:[%s313 + $0x1c18] sm:$0xff]
        %v1875 = vld [vmem:[%s313 + $0x1c20] sm:$0xff]
        %v1876 = vld [vmem:[%s313 + $0x1c28] sm:$0xff]
        %v1877 = vld [vmem:[%s313 + $0x1c30] sm:$0xff]
        %v1878 = vld [vmem:[%s313 + $0x1c38] sm:$0xff]
        %v1879 = vld [vmem:[%s313 + $0x1c40] sm:$0xff]
        %v1880 = vld [vmem:[%s313 + $0x1c48] sm:$0xff]
        %v1881 = vld [vmem:[%s313 + $0x1c50] sm:$0xff]
        %v1882 = vld [vmem:[%s313 + $0x1c58] sm:$0xff]
        %v1883 = vld [vmem:[%s313 + $0x1c60] sm:$0xff]
        %v1884 = vld [vmem:[%s313 + $0x1c68] sm:$0xff]
        %v1885 = vld [vmem:[%s313 + $0x1c70] sm:$0xff]
        %v1886 = vld [vmem:[%s313 + $0x1c78] sm:$0xff]
        %v1887 = vld [vmem:[%s313 + $0x1c80] sm:$0xff]
        %v1888 = vld [vmem:[%s313 + $0x1c88] sm:$0xff]
        %v1889 = vld [vmem:[%s313 + $0x1c90] sm:$0xff]
        %v1890 = vld [vmem:[%s313 + $0x1c98] sm:$0xff]
        %v1891 = vld [vmem:[%s313 + $0x1ca0] sm:$0xff]
        %v1892 = vld [vmem:[%s313 + $0x1ca8] sm:$0xff]
        %v1893 = vld [vmem:[%s313 + $0x1cb0] sm:$0xff]
        %v1894 = vld [vmem:[%s313 + $0x1cb8] sm:$0xff]
        %v1895 = vld [vmem:[%s313 + $0x1cc0] sm:$0xff]
        %v1896 = vld [vmem:[%s313 + $0x1cc8] sm:$0xff]
        %v1897 = vld [vmem:[%s313 + $0x1cd0] sm:$0xff]
        %v1898 = vld [vmem:[%s313 + $0x1cd8] sm:$0xff]
        %v1899 = vld [vmem:[%s313 + $0x1ce0] sm:$0xff]
        %v1900 = vld [vmem:[%s313 + $0x1ce8] sm:$0xff]
        %v1901 = vld [vmem:[%s313 + $0x1cf0] sm:$0xff]
        %v1902 = vld [vmem:[%s313 + $0x1cf8] sm:$0xff]
        %v1903 = vld [vmem:[%s313 + $0x1d00] sm:$0xff]
        %v1904 = vld [vmem:[%s313 + $0x1d08] sm:$0xff]
        %v1905 = vld [vmem:[%s313 + $0x1d10] sm:$0xff]
        %v1906 = vld [vmem:[%s313 + $0x1d18] sm:$0xff]
        %v1907 = vld [vmem:[%s313 + $0x1d20] sm:$0xff]
        %v1908 = vld [vmem:[%s313 + $0x1d28] sm:$0xff]
        %v1909 = vld [vmem:[%s313 + $0x1d30] sm:$0xff]
        %v1910 = vld [vmem:[%s313 + $0x1d38] sm:$0xff]
        %v1911 = vld [vmem:[%s313 + $0x1d40] sm:$0xff]
        %v1912 = vld [vmem:[%s313 + $0x1d48] sm:$0xff]
        %v1913 = vld [vmem:[%s313 + $0x1d50] sm:$0xff]
        %v1914 = vld [vmem:[%s313 + $0x1d58] sm:$0xff]
        %v1915 = vld [vmem:[%s313 + $0x1d60] sm:$0xff]
        %v1916 = vld [vmem:[%s313 + $0x1d68] sm:$0xff]
        %v1917 = vld [vmem:[%s313 + $0x1d70] sm:$0xff]
        %v1918 = vld [vmem:[%s313 + $0x1d78] sm:$0xff]
        %v1919 = vld [vmem:[%s313 + $0x1d80] sm:$0xff]
        %v1920 = vld [vmem:[%s313 + $0x1d88] sm:$0xff]
        %v1921 = vld [vmem:[%s313 + $0x1d90] sm:$0xff]
        %v1922 = vld [vmem:[%s313 + $0x1d98] sm:$0xff]
        %v1923 = vld [vmem:[%s313 + $0x1da0] sm:$0xff]
        %v1924 = vld [vmem:[%s313 + $0x1da8] sm:$0xff]
        %v1925 = vld [vmem:[%s313 + $0x1db0] sm:$0xff]
        %v1926 = vld [vmem:[%s313 + $0x1db8] sm:$0xff]
        %v1927 = vld [vmem:[%s313 + $0x1dc0] sm:$0xff]
        %v1928 = vld [vmem:[%s313 + $0x1dc8] sm:$0xff]
        %v1929 = vld [vmem:[%s313 + $0x1dd0] sm:$0xff]
        %v1930 = vld [vmem:[%s313 + $0x1dd8] sm:$0xff]
        %v1931 = vld [vmem:[%s313 + $0x1de0] sm:$0xff]
        %v1932 = vld [vmem:[%s313 + $0x1de8] sm:$0xff]
        %v1933 = vld [vmem:[%s313 + $0x1df0] sm:$0xff]
        %v1934 = vld [vmem:[%s313 + $0x1df8] sm:$0xff]
        %v1935 = vld [vmem:[%s313 + $0x1e00] sm:$0xff]
        %v1936 = vld [vmem:[%s313 + $0x1e08] sm:$0xff]
        %v1937 = vld [vmem:[%s313 + $0x1e10] sm:$0xff]
        %v1938 = vld [vmem:[%s313 + $0x1e18] sm:$0xff]
        %v1939 = vld [vmem:[%s313 + $0x1e20] sm:$0xff]
        %v1940 = vld [vmem:[%s313 + $0x1e28] sm:$0xff]
        %v1941 = vld [vmem:[%s313 + $0x1e30] sm:$0xff]
        %v1942 = vld [vmem:[%s313 + $0x1e38] sm:$0xff]
        %v1943 = vld [vmem:[%s313 + $0x1e40] sm:$0xff]
        %v1944 = vld [vmem:[%s313 + $0x1e48] sm:$0xff]
        %v1945 = vld [vmem:[%s313 + $0x1e50] sm:$0xff]
        %v1946 = vld [vmem:[%s313 + $0x1e58] sm:$0xff]
        %v1947 = vld [vmem:[%s313 + $0x1e60] sm:$0xff]
        %v1948 = vld [vmem:[%s313 + $0x1e68] sm:$0xff]
        %v1949 = vld [vmem:[%s313 + $0x1e70] sm:$0xff]
        %v1950 = vld [vmem:[%s313 + $0x1e78] sm:$0xff]
        %v1951 = vld [vmem:[%s313 + $0x1e80] sm:$0xff]
        %v1952 = vld [vmem:[%s313 + $0x1e88] sm:$0xff]
        %v1953 = vld [vmem:[%s313 + $0x1e90] sm:$0xff]
        %v1954 = vld [vmem:[%s313 + $0x1e98] sm:$0xff]
        %v1955 = vld [vmem:[%s313 + $0x1ea0] sm:$0xff]
        %v1956 = vld [vmem:[%s313 + $0x1ea8] sm:$0xff]
        %v1957 = vld [vmem:[%s313 + $0x1eb0] sm:$0xff]
        %v1958 = vld [vmem:[%s313 + $0x1eb8] sm:$0xff]
        %v1959 = vld [vmem:[%s313 + $0x1ec0] sm:$0xff]
        %v1960 = vld [vmem:[%s313 + $0x1ec8] sm:$0xff]
        %v1961 = vld [vmem:[%s313 + $0x1ed0] sm:$0xff]
        %v1962 = vld [vmem:[%s313 + $0x1ed8] sm:$0xff]
        %v1963 = vld [vmem:[%s313 + $0x1ee0] sm:$0xff]
        %v1964 = vld [vmem:[%s313 + $0x1ee8] sm:$0xff]
        %v1965 = vld [vmem:[%s313 + $0x1ef0] sm:$0xff]
        %v1966 = vld [vmem:[%s313 + $0x1ef8] sm:$0xff]
        %v1967 = vld [vmem:[%s313 + $0x1f00] sm:$0xff]
        %v1968 = vld [vmem:[%s313 + $0x1f08] sm:$0xff]
        %v1969 = vld [vmem:[%s313 + $0x1f10] sm:$0xff]
        %v1970 = vld [vmem:[%s313 + $0x1f18] sm:$0xff]
        %v1971 = vld [vmem:[%s313 + $0x1f20] sm:$0xff]
        %v1972 = vld [vmem:[%s313 + $0x1f28] sm:$0xff]
        %v1973 = vld [vmem:[%s313 + $0x1f30] sm:$0xff]
        %v1974 = vld [vmem:[%s313 + $0x1f38] sm:$0xff]
        %v1975 = vld [vmem:[%s313 + $0x1f40] sm:$0xff]
        %v1976 = vld [vmem:[%s313 + $0x1f48] sm:$0xff]
        %v1977 = vld [vmem:[%s313 + $0x1f50] sm:$0xff]
        %v1978 = vld [vmem:[%s313 + $0x1f58] sm:$0xff]
        %v1979 = vld [vmem:[%s313 + $0x1f60] sm:$0xff]
        %v1980 = vld [vmem:[%s313 + $0x1f68] sm:$0xff]
        %v1981 = vld [vmem:[%s313 + $0x1f70] sm:$0xff]
        %v1982 = vld [vmem:[%s313 + $0x1f78] sm:$0xff]
        %v1983 = vld [vmem:[%s313 + $0x1f80] sm:$0xff]
        %v1984 = vld [vmem:[%s313 + $0x1f88] sm:$0xff]
        %v1985 = vld [vmem:[%s313 + $0x1f90] sm:$0xff]
        %v1986 = vld [vmem:[%s313 + $0x1f98] sm:$0xff]
        %v1987 = vld [vmem:[%s313 + $0x1fa0] sm:$0xff]
        %v1988 = vld [vmem:[%s313 + $0x1fa8] sm:$0xff]
        %v1989 = vld [vmem:[%s313 + $0x1fb0] sm:$0xff]
        %v1990 = vld [vmem:[%s313 + $0x1fb8] sm:$0xff]
        %v1991 = vld [vmem:[%s313 + $0x1fc0] sm:$0xff]
        %v1992 = vld [vmem:[%s313 + $0x1fc8] sm:$0xff]
        %v1993 = vld [vmem:[%s313 + $0x1fd0] sm:$0xff]
        %v1994 = vld [vmem:[%s313 + $0x1fd8] sm:$0xff]
        %v1995 = vld [vmem:[%s313 + $0x1fe0] sm:$0xff]
        %v1996 = vld [vmem:[%s313 + $0x1fe8] sm:$0xff]
        %v1997 = vld [vmem:[%s313 + $0x1ff0] sm:$0xff]
        %v1998 = vld [vmem:[%s313 + $0x1ff8] sm:$0xff]
        %1999 = vmatpush.msra.mxu0 %v1035
        %2000 = vmatpush.msra.mxu0 %v1031
        %2001 = vmatpush.msra.mxu0 %v1027
        %2002 = vmatpush.msra.mxu0 %v1023
        %2003 = vmatpush.msra.mxu0 %v1019
        %2004 = vmatpush.msra.mxu0 %v1015
        %2005 = vmatpush.msra.mxu0 %v1011
        %2006 = vmatpush.msra.mxu0 %v1007
        %2007 = vmatpush.msra.mxu0 %v1003
        %2008 = vmatpush.msra.mxu0 %v999
        %2009 = vmatpush.msra.mxu0 %v995
        %2010 = vmatpush.msra.mxu0 %v991
        %2011 = vmatpush.msra.mxu0 %v987
        %2012 = vmatpush.msra.mxu0 %v983
        %2013 = vmatpush.msra.mxu0 %v979
        %2014 = vmatpush.msra.mxu0 %v975
        %2015 = vmatmul.f32.gmra.mxu0 %v959
        %v2016 = vpop.f32.mrf.mxu0
        %v2017 = vadd.f32 0.0, %v2016
        %2018 = vdwg.mxu0
        %2019 = vmatpush.msra.mxu0 %v1099
        %2020 = vmatpush.msra.mxu0 %v1095
        %2021 = vmatpush.msra.mxu0 %v1091
        %2022 = vmatpush.msra.mxu0 %v1087
        %2023 = vmatpush.msra.mxu0 %v1083
        %2024 = vmatpush.msra.mxu0 %v1079
        %2025 = vmatpush.msra.mxu0 %v1075
        %2026 = vmatpush.msra.mxu0 %v1071
        %2027 = vmatpush.msra.mxu0 %v1067
        %2028 = vmatpush.msra.mxu0 %v1063
        %2029 = vmatpush.msra.mxu0 %v1059
        %2030 = vmatpush.msra.mxu0 %v1055
        %2031 = vmatpush.msra.mxu0 %v1051
        %2032 = vmatpush.msra.mxu0 %v1047
        %2033 = vmatpush.msra.mxu0 %v1043
        %2034 = vmatpush.msra.mxu0 %v1039
        %2035 = vmatmul.f32.gmra.mxu0 %v960
        %v2036 = vpop.f32.mrf.mxu0
        %v2037 = vadd.f32 %v2017, %v2036
        %2038 = vdwg.mxu0
        %2039 = vmatpush.msra.mxu0 %v1163
        %2040 = vmatpush.msra.mxu0 %v1159
        %2041 = vmatpush.msra.mxu0 %v1155
        %2042 = vmatpush.msra.mxu0 %v1151
        %2043 = vmatpush.msra.mxu0 %v1147
        %2044 = vmatpush.msra.mxu0 %v1143
        %2045 = vmatpush.msra.mxu0 %v1139
        %2046 = vmatpush.msra.mxu0 %v1135
        %2047 = vmatpush.msra.mxu0 %v1131
        %2048 = vmatpush.msra.mxu0 %v1127
        %2049 = vmatpush.msra.mxu0 %v1123
        %2050 = vmatpush.msra.mxu0 %v1119
        %2051 = vmatpush.msra.mxu0 %v1115
        %2052 = vmatpush.msra.mxu0 %v1111
        %2053 = vmatpush.msra.mxu0 %v1107
        %2054 = vmatpush.msra.mxu0 %v1103
        %2055 = vmatmul.f32.gmra.mxu0 %v961
        %v2056 = vpop.f32.mrf.mxu0
        %v2057 = vadd.f32 %v2037, %v2056
        %2058 = vdwg.mxu0
        %2059 = vmatpush.msra.mxu0 %v1227
        %2060 = vmatpush.msra.mxu0 %v1223
        %2061 = vmatpush.msra.mxu0 %v1219
        %2062 = vmatpush.msra.mxu0 %v1215
        %2063 = vmatpush.msra.mxu0 %v1211
        %2064 = vmatpush.msra.mxu0 %v1207
        %2065 = vmatpush.msra.mxu0 %v1203
        %2066 = vmatpush.msra.mxu0 %v1199
        %2067 = vmatpush.msra.mxu0 %v1195
        %2068 = vmatpush.msra.mxu0 %v1191
        %2069 = vmatpush.msra.mxu0 %v1187
        %2070 = vmatpush.msra.mxu0 %v1183
        %2071 = vmatpush.msra.mxu0 %v1179
        %2072 = vmatpush.msra.mxu0 %v1175
        %2073 = vmatpush.msra.mxu0 %v1171
        %2074 = vmatpush.msra.mxu0 %v1167
        %2075 = vmatmul.f32.gmra.mxu0 %v962
        %v2076 = vpop.f32.mrf.mxu0
        %v2077 = vadd.f32 %v2057, %v2076
        %2078 = vdwg.mxu0
        %2079 = vmatpush.msra.mxu0 %v1291
        %2080 = vmatpush.msra.mxu0 %v1287
        %2081 = vmatpush.msra.mxu0 %v1283
        %2082 = vmatpush.msra.mxu0 %v1279
        %2083 = vmatpush.msra.mxu0 %v1275
        %2084 = vmatpush.msra.mxu0 %v1271
        %2085 = vmatpush.msra.mxu0 %v1267
        %2086 = vmatpush.msra.mxu0 %v1263
        %2087 = vmatpush.msra.mxu0 %v1259
        %2088 = vmatpush.msra.mxu0 %v1255
        %2089 = vmatpush.msra.mxu0 %v1251
        %2090 = vmatpush.msra.mxu0 %v1247
        %2091 = vmatpush.msra.mxu0 %v1243
        %2092 = vmatpush.msra.mxu0 %v1239
        %2093 = vmatpush.msra.mxu0 %v1235
        %2094 = vmatpush.msra.mxu0 %v1231
        %2095 = vmatmul.f32.gmra.mxu0 %v963
        %v2096 = vpop.f32.mrf.mxu0
        %v2097 = vadd.f32 %v2077, %v2096
        %2098 = vdwg.mxu0
        %2099 = vmatpush.msra.mxu0 %v1355
        %2100 = vmatpush.msra.mxu0 %v1351
        %2101 = vmatpush.msra.mxu0 %v1347
        %2102 = vmatpush.msra.mxu0 %v1343
        %2103 = vmatpush.msra.mxu0 %v1339
        %2104 = vmatpush.msra.mxu0 %v1335
        %2105 = vmatpush.msra.mxu0 %v1331
        %2106 = vmatpush.msra.mxu0 %v1327
        %2107 = vmatpush.msra.mxu0 %v1323
        %2108 = vmatpush.msra.mxu0 %v1319
        %2109 = vmatpush.msra.mxu0 %v1315
        %2110 = vmatpush.msra.mxu0 %v1311
        %2111 = vmatpush.msra.mxu0 %v1307
        %2112 = vmatpush.msra.mxu0 %v1303
        %2113 = vmatpush.msra.mxu0 %v1299
        %2114 = vmatpush.msra.mxu0 %v1295
        %2115 = vmatmul.f32.gmra.mxu0 %v964
        %v2116 = vpop.f32.mrf.mxu0
        %v2117 = vadd.f32 %v2097, %v2116
        %2118 = vdwg.mxu0
        %2119 = vmatpush.msra.mxu0 %v1419
        %2120 = vmatpush.msra.mxu0 %v1415
        %2121 = vmatpush.msra.mxu0 %v1411
        %2122 = vmatpush.msra.mxu0 %v1407
        %2123 = vmatpush.msra.mxu0 %v1403
        %2124 = vmatpush.msra.mxu0 %v1399
        %2125 = vmatpush.msra.mxu0 %v1395
        %2126 = vmatpush.msra.mxu0 %v1391
        %2127 = vmatpush.msra.mxu0 %v1387
        %2128 = vmatpush.msra.mxu0 %v1383
        %2129 = vmatpush.msra.mxu0 %v1379
        %2130 = vmatpush.msra.mxu0 %v1375
        %2131 = vmatpush.msra.mxu0 %v1371
        %2132 = vmatpush.msra.mxu0 %v1367
        %2133 = vmatpush.msra.mxu0 %v1363
        %2134 = vmatpush.msra.mxu0 %v1359
        %2135 = vmatmul.f32.gmra.mxu0 %v965
        %v2136 = vpop.f32.mrf.mxu0
        %v2137 = vadd.f32 %v2117, %v2136
        %2138 = vdwg.mxu0
        %2139 = vmatpush.msra.mxu0 %v1483
        %2140 = vmatpush.msra.mxu0 %v1479
        %2141 = vmatpush.msra.mxu0 %v1475
        %2142 = vmatpush.msra.mxu0 %v1471
        %2143 = vmatpush.msra.mxu0 %v1467
        %2144 = vmatpush.msra.mxu0 %v1463
        %2145 = vmatpush.msra.mxu0 %v1459
        %2146 = vmatpush.msra.mxu0 %v1455
        %2147 = vmatpush.msra.mxu0 %v1451
        %2148 = vmatpush.msra.mxu0 %v1447
        %2149 = vmatpush.msra.mxu0 %v1443
        %2150 = vmatpush.msra.mxu0 %v1439
        %2151 = vmatpush.msra.mxu0 %v1435
        %2152 = vmatpush.msra.mxu0 %v1431
        %2153 = vmatpush.msra.mxu0 %v1427
        %2154 = vmatpush.msra.mxu0 %v1423
        %2155 = vmatmul.f32.gmra.mxu0 %v966
        %v2156 = vpop.f32.mrf.mxu0
        %v2157 = vadd.f32 %v2137, %v2156
        %2158 = vdwg.mxu0
        %2159 = vmatpush.msra.mxu0 %v1547
        %2160 = vmatpush.msra.mxu0 %v1543
        %2161 = vmatpush.msra.mxu0 %v1539
        %2162 = vmatpush.msra.mxu0 %v1535
        %2163 = vmatpush.msra.mxu0 %v1531
        %2164 = vmatpush.msra.mxu0 %v1527
        %2165 = vmatpush.msra.mxu0 %v1523
        %2166 = vmatpush.msra.mxu0 %v1519
        %2167 = vmatpush.msra.mxu0 %v1515
        %2168 = vmatpush.msra.mxu0 %v1511
        %2169 = vmatpush.msra.mxu0 %v1507
        %2170 = vmatpush.msra.mxu0 %v1503
        %2171 = vmatpush.msra.mxu0 %v1499
        %2172 = vmatpush.msra.mxu0 %v1495
        %2173 = vmatpush.msra.mxu0 %v1491
        %2174 = vmatpush.msra.mxu0 %v1487
        %2175 = vmatmul.f32.gmra.mxu0 %v967
        %v2176 = vpop.f32.mrf.mxu0
        %v2177 = vadd.f32 %v2157, %v2176
        %2178 = vdwg.mxu0
        %2179 = vmatpush.msra.mxu0 %v1611
        %2180 = vmatpush.msra.mxu0 %v1607
        %2181 = vmatpush.msra.mxu0 %v1603
        %2182 = vmatpush.msra.mxu0 %v1599
        %2183 = vmatpush.msra.mxu0 %v1595
        %2184 = vmatpush.msra.mxu0 %v1591
        %2185 = vmatpush.msra.mxu0 %v1587
        %2186 = vmatpush.msra.mxu0 %v1583
        %2187 = vmatpush.msra.mxu0 %v1579
        %2188 = vmatpush.msra.mxu0 %v1575
        %2189 = vmatpush.msra.mxu0 %v1571
        %2190 = vmatpush.msra.mxu0 %v1567
        %2191 = vmatpush.msra.mxu0 %v1563
        %2192 = vmatpush.msra.mxu0 %v1559
        %2193 = vmatpush.msra.mxu0 %v1555
        %2194 = vmatpush.msra.mxu0 %v1551
        %2195 = vmatmul.f32.gmra.mxu0 %v968
        %v2196 = vpop.f32.mrf.mxu0
        %v2197 = vadd.f32 %v2177, %v2196
        %2198 = vdwg.mxu0
        %2199 = vmatpush.msra.mxu0 %v1675
        %2200 = vmatpush.msra.mxu0 %v1671
        %2201 = vmatpush.msra.mxu0 %v1667
        %2202 = vmatpush.msra.mxu0 %v1663
        %2203 = vmatpush.msra.mxu0 %v1659
        %2204 = vmatpush.msra.mxu0 %v1655
        %2205 = vmatpush.msra.mxu0 %v1651
        %2206 = vmatpush.msra.mxu0 %v1647
        %2207 = vmatpush.msra.mxu0 %v1643
        %2208 = vmatpush.msra.mxu0 %v1639
        %2209 = vmatpush.msra.mxu0 %v1635
        %2210 = vmatpush.msra.mxu0 %v1631
        %2211 = vmatpush.msra.mxu0 %v1627
        %2212 = vmatpush.msra.mxu0 %v1623
        %2213 = vmatpush.msra.mxu0 %v1619
        %2214 = vmatpush.msra.mxu0 %v1615
        %2215 = vmatmul.f32.gmra.mxu0 %v969
        %v2216 = vpop.f32.mrf.mxu0
        %v2217 = vadd.f32 %v2197, %v2216
        %2218 = vdwg.mxu0
        %2219 = vmatpush.msra.mxu0 %v1739
        %2220 = vmatpush.msra.mxu0 %v1735
        %2221 = vmatpush.msra.mxu0 %v1731
        %2222 = vmatpush.msra.mxu0 %v1727
        %2223 = vmatpush.msra.mxu0 %v1723
        %2224 = vmatpush.msra.mxu0 %v1719
        %2225 = vmatpush.msra.mxu0 %v1715
        %2226 = vmatpush.msra.mxu0 %v1711
        %2227 = vmatpush.msra.mxu0 %v1707
        %2228 = vmatpush.msra.mxu0 %v1703
        %2229 = vmatpush.msra.mxu0 %v1699
        %2230 = vmatpush.msra.mxu0 %v1695
        %2231 = vmatpush.msra.mxu0 %v1691
        %2232 = vmatpush.msra.mxu0 %v1687
        %2233 = vmatpush.msra.mxu0 %v1683
        %2234 = vmatpush.msra.mxu0 %v1679
        %2235 = vmatmul.f32.gmra.mxu0 %v970
        %v2236 = vpop.f32.mrf.mxu0
        %v2237 = vadd.f32 %v2217, %v2236
        %2238 = vdwg.mxu0
        %2239 = vmatpush.msra.mxu0 %v1803
        %2240 = vmatpush.msra.mxu0 %v1799
        %2241 = vmatpush.msra.mxu0 %v1795
        %2242 = vmatpush.msra.mxu0 %v1791
        %2243 = vmatpush.msra.mxu0 %v1787
        %2244 = vmatpush.msra.mxu0 %v1783
        %2245 = vmatpush.msra.mxu0 %v1779
        %2246 = vmatpush.msra.mxu0 %v1775
        %2247 = vmatpush.msra.mxu0 %v1771
        %2248 = vmatpush.msra.mxu0 %v1767
        %2249 = vmatpush.msra.mxu0 %v1763
        %2250 = vmatpush.msra.mxu0 %v1759
        %2251 = vmatpush.msra.mxu0 %v1755
        %2252 = vmatpush.msra.mxu0 %v1751
        %2253 = vmatpush.msra.mxu0 %v1747
        %2254 = vmatpush.msra.mxu0 %v1743
        %2255 = vmatmul.f32.gmra.mxu0 %v971
        %v2256 = vpop.f32.mrf.mxu0
        %v2257 = vadd.f32 %v2237, %v2256
        %2258 = vdwg.mxu0
        %2259 = vmatpush.msra.mxu0 %v1867
        %2260 = vmatpush.msra.mxu0 %v1863
        %2261 = vmatpush.msra.mxu0 %v1859
        %2262 = vmatpush.msra.mxu0 %v1855
        %2263 = vmatpush.msra.mxu0 %v1851
        %2264 = vmatpush.msra.mxu0 %v1847
        %2265 = vmatpush.msra.mxu0 %v1843
        %2266 = vmatpush.msra.mxu0 %v1839
        %2267 = vmatpush.msra.mxu0 %v1835
        %2268 = vmatpush.msra.mxu0 %v1831
        %2269 = vmatpush.msra.mxu0 %v1827
        %2270 = vmatpush.msra.mxu0 %v1823
        %2271 = vmatpush.msra.mxu0 %v1819
        %2272 = vmatpush.msra.mxu0 %v1815
        %2273 = vmatpush.msra.mxu0 %v1811
        %2274 = vmatpush.msra.mxu0 %v1807
        %2275 = vmatmul.f32.gmra.mxu0 %v972
        %v2276 = vpop.f32.mrf.mxu0
        %v2277 = vadd.f32 %v2257, %v2276
        %2278 = vdwg.mxu0
        %2279 = vmatpush.msra.mxu0 %v1931
        %2280 = vmatpush.msra.mxu0 %v1927
        %2281 = vmatpush.msra.mxu0 %v1923
        %2282 = vmatpush.msra.mxu0 %v1919
        %2283 = vmatpush.msra.mxu0 %v1915
        %2284 = vmatpush.msra.mxu0 %v1911
        %2285 = vmatpush.msra.mxu0 %v1907
        %2286 = vmatpush.msra.mxu0 %v1903
        %2287 = vmatpush.msra.mxu0 %v1899
        %2288 = vmatpush.msra.mxu0 %v1895
        %2289 = vmatpush.msra.mxu0 %v1891
        %2290 = vmatpush.msra.mxu0 %v1887
        %2291 = vmatpush.msra.mxu0 %v1883
        %2292 = vmatpush.msra.mxu0 %v1879
        %2293 = vmatpush.msra.mxu0 %v1875
        %2294 = vmatpush.msra.mxu0 %v1871
        %2295 = vmatmul.f32.gmra.mxu0 %v973
        %v2296 = vpop.f32.mrf.mxu0
        %v2297 = vadd.f32 %v2277, %v2296
        %2298 = vdwg.mxu0
        %2299 = vmatpush.msra.mxu0 %v1995
        %2300 = vmatpush.msra.mxu0 %v1991
        %2301 = vmatpush.msra.mxu0 %v1987
        %2302 = vmatpush.msra.mxu0 %v1983
        %2303 = vmatpush.msra.mxu0 %v1979
        %2304 = vmatpush.msra.mxu0 %v1975
        %2305 = vmatpush.msra.mxu0 %v1971
        %2306 = vmatpush.msra.mxu0 %v1967
        %2307 = vmatpush.msra.mxu0 %v1963
        %2308 = vmatpush.msra.mxu0 %v1959
        %2309 = vmatpush.msra.mxu0 %v1955
        %2310 = vmatpush.msra.mxu0 %v1951
        %2311 = vmatpush.msra.mxu0 %v1947
        %2312 = vmatpush.msra.mxu0 %v1943
        %2313 = vmatpush.msra.mxu0 %v1939
        %2314 = vmatpush.msra.mxu0 %v1935
        %2315 = vmatmul.f32.gmra.mxu0 %v974
        %v2316 = vpop.f32.mrf.mxu0
        %v2317 = vadd.f32 %v2297, %v2316
        %2318 = vdwg.mxu0
        %2319 = vmatpush.msra.mxu0 %v1036
        %2320 = vmatpush.msra.mxu0 %v1032
        %2321 = vmatpush.msra.mxu0 %v1028
        %2322 = vmatpush.msra.mxu0 %v1024
        %2323 = vmatpush.msra.mxu0 %v1020
        %2324 = vmatpush.msra.mxu0 %v1016
        %2325 = vmatpush.msra.mxu0 %v1012
        %2326 = vmatpush.msra.mxu0 %v1008
        %2327 = vmatpush.msra.mxu0 %v1004
        %2328 = vmatpush.msra.mxu0 %v1000
        %2329 = vmatpush.msra.mxu0 %v996
        %2330 = vmatpush.msra.mxu0 %v992
        %2331 = vmatpush.msra.mxu0 %v988
        %2332 = vmatpush.msra.mxu0 %v984
        %2333 = vmatpush.msra.mxu0 %v980
        %2334 = vmatpush.msra.mxu0 %v976
        %2335 = vmatmul.f32.gmra.mxu0 %v959
        %v2336 = vpop.f32.mrf.mxu0
        %v2337 = vadd.f32 0.0, %v2336
        %2338 = vdwg.mxu0
        %2339 = vmatpush.msra.mxu0 %v1100
        %2340 = vmatpush.msra.mxu0 %v1096
        %2341 = vmatpush.msra.mxu0 %v1092
        %2342 = vmatpush.msra.mxu0 %v1088
        %2343 = vmatpush.msra.mxu0 %v1084
        %2344 = vmatpush.msra.mxu0 %v1080
        %2345 = vmatpush.msra.mxu0 %v1076
        %2346 = vmatpush.msra.mxu0 %v1072
        %2347 = vmatpush.msra.mxu0 %v1068
        %2348 = vmatpush.msra.mxu0 %v1064
        %2349 = vmatpush.msra.mxu0 %v1060
        %2350 = vmatpush.msra.mxu0 %v1056
        %2351 = vmatpush.msra.mxu0 %v1052
        %2352 = vmatpush.msra.mxu0 %v1048
        %2353 = vmatpush.msra.mxu0 %v1044
        %2354 = vmatpush.msra.mxu0 %v1040
        %2355 = vmatmul.f32.gmra.mxu0 %v960
        %v2356 = vpop.f32.mrf.mxu0
        %v2357 = vadd.f32 %v2337, %v2356
        %2358 = vdwg.mxu0
        %2359 = vmatpush.msra.mxu0 %v1164
        %2360 = vmatpush.msra.mxu0 %v1160
        %2361 = vmatpush.msra.mxu0 %v1156
        %2362 = vmatpush.msra.mxu0 %v1152
        %2363 = vmatpush.msra.mxu0 %v1148
        %2364 = vmatpush.msra.mxu0 %v1144
        %2365 = vmatpush.msra.mxu0 %v1140
        %2366 = vmatpush.msra.mxu0 %v1136
        %2367 = vmatpush.msra.mxu0 %v1132
        %2368 = vmatpush.msra.mxu0 %v1128
        %2369 = vmatpush.msra.mxu0 %v1124
        %2370 = vmatpush.msra.mxu0 %v1120
        %2371 = vmatpush.msra.mxu0 %v1116
        %2372 = vmatpush.msra.mxu0 %v1112
        %2373 = vmatpush.msra.mxu0 %v1108
        %2374 = vmatpush.msra.mxu0 %v1104
        %2375 = vmatmul.f32.gmra.mxu0 %v961
        %v2376 = vpop.f32.mrf.mxu0
        %v2377 = vadd.f32 %v2357, %v2376
        %2378 = vdwg.mxu0
        %2379 = vmatpush.msra.mxu0 %v1228
        %2380 = vmatpush.msra.mxu0 %v1224
        %2381 = vmatpush.msra.mxu0 %v1220
        %2382 = vmatpush.msra.mxu0 %v1216
        %2383 = vmatpush.msra.mxu0 %v1212
        %2384 = vmatpush.msra.mxu0 %v1208
        %2385 = vmatpush.msra.mxu0 %v1204
        %2386 = vmatpush.msra.mxu0 %v1200
        %2387 = vmatpush.msra.mxu0 %v1196
        %2388 = vmatpush.msra.mxu0 %v1192
        %2389 = vmatpush.msra.mxu0 %v1188
        %2390 = vmatpush.msra.mxu0 %v1184
        %2391 = vmatpush.msra.mxu0 %v1180
        %2392 = vmatpush.msra.mxu0 %v1176
        %2393 = vmatpush.msra.mxu0 %v1172
        %2394 = vmatpush.msra.mxu0 %v1168
        %2395 = vmatmul.f32.gmra.mxu0 %v962
        %v2396 = vpop.f32.mrf.mxu0
        %v2397 = vadd.f32 %v2377, %v2396
        %2398 = vdwg.mxu0
        %2399 = vmatpush.msra.mxu0 %v1292
        %2400 = vmatpush.msra.mxu0 %v1288
        %2401 = vmatpush.msra.mxu0 %v1284
        %2402 = vmatpush.msra.mxu0 %v1280
        %2403 = vmatpush.msra.mxu0 %v1276
        %2404 = vmatpush.msra.mxu0 %v1272
        %2405 = vmatpush.msra.mxu0 %v1268
        %2406 = vmatpush.msra.mxu0 %v1264
        %2407 = vmatpush.msra.mxu0 %v1260
        %2408 = vmatpush.msra.mxu0 %v1256
        %2409 = vmatpush.msra.mxu0 %v1252
        %2410 = vmatpush.msra.mxu0 %v1248
        %2411 = vmatpush.msra.mxu0 %v1244
        %2412 = vmatpush.msra.mxu0 %v1240
        %2413 = vmatpush.msra.mxu0 %v1236
        %2414 = vmatpush.msra.mxu0 %v1232
        %2415 = vmatmul.f32.gmra.mxu0 %v963
        %v2416 = vpop.f32.mrf.mxu0
        %v2417 = vadd.f32 %v2397, %v2416
        %2418 = vdwg.mxu0
        %2419 = vmatpush.msra.mxu0 %v1356
        %2420 = vmatpush.msra.mxu0 %v1352
        %2421 = vmatpush.msra.mxu0 %v1348
        %2422 = vmatpush.msra.mxu0 %v1344
        %2423 = vmatpush.msra.mxu0 %v1340
        %2424 = vmatpush.msra.mxu0 %v1336
        %2425 = vmatpush.msra.mxu0 %v1332
        %2426 = vmatpush.msra.mxu0 %v1328
        %2427 = vmatpush.msra.mxu0 %v1324
        %2428 = vmatpush.msra.mxu0 %v1320
        %2429 = vmatpush.msra.mxu0 %v1316
        %2430 = vmatpush.msra.mxu0 %v1312
        %2431 = vmatpush.msra.mxu0 %v1308
        %2432 = vmatpush.msra.mxu0 %v1304
        %2433 = vmatpush.msra.mxu0 %v1300
        %2434 = vmatpush.msra.mxu0 %v1296
        %2435 = vmatmul.f32.gmra.mxu0 %v964
        %v2436 = vpop.f32.mrf.mxu0
        %v2437 = vadd.f32 %v2417, %v2436
        %2438 = vdwg.mxu0
        %2439 = vmatpush.msra.mxu0 %v1420
        %2440 = vmatpush.msra.mxu0 %v1416
        %2441 = vmatpush.msra.mxu0 %v1412
        %2442 = vmatpush.msra.mxu0 %v1408
        %2443 = vmatpush.msra.mxu0 %v1404
        %2444 = vmatpush.msra.mxu0 %v1400
        %2445 = vmatpush.msra.mxu0 %v1396
        %2446 = vmatpush.msra.mxu0 %v1392
        %2447 = vmatpush.msra.mxu0 %v1388
        %2448 = vmatpush.msra.mxu0 %v1384
        %2449 = vmatpush.msra.mxu0 %v1380
        %2450 = vmatpush.msra.mxu0 %v1376
        %2451 = vmatpush.msra.mxu0 %v1372
        %2452 = vmatpush.msra.mxu0 %v1368
        %2453 = vmatpush.msra.mxu0 %v1364
        %2454 = vmatpush.msra.mxu0 %v1360
        %2455 = vmatmul.f32.gmra.mxu0 %v965
        %v2456 = vpop.f32.mrf.mxu0
        %v2457 = vadd.f32 %v2437, %v2456
        %2458 = vdwg.mxu0
        %2459 = vmatpush.msra.mxu0 %v1484
        %2460 = vmatpush.msra.mxu0 %v1480
        %2461 = vmatpush.msra.mxu0 %v1476
        %2462 = vmatpush.msra.mxu0 %v1472
        %2463 = vmatpush.msra.mxu0 %v1468
        %2464 = vmatpush.msra.mxu0 %v1464
        %2465 = vmatpush.msra.mxu0 %v1460
        %2466 = vmatpush.msra.mxu0 %v1456
        %2467 = vmatpush.msra.mxu0 %v1452
        %2468 = vmatpush.msra.mxu0 %v1448
        %2469 = vmatpush.msra.mxu0 %v1444
        %2470 = vmatpush.msra.mxu0 %v1440
        %2471 = vmatpush.msra.mxu0 %v1436
        %2472 = vmatpush.msra.mxu0 %v1432
        %2473 = vmatpush.msra.mxu0 %v1428
        %2474 = vmatpush.msra.mxu0 %v1424
        %2475 = vmatmul.f32.gmra.mxu0 %v966
        %v2476 = vpop.f32.mrf.mxu0
        %v2477 = vadd.f32 %v2457, %v2476
        %2478 = vdwg.mxu0
        %2479 = vmatpush.msra.mxu0 %v1548
        %2480 = vmatpush.msra.mxu0 %v1544
        %2481 = vmatpush.msra.mxu0 %v1540
        %2482 = vmatpush.msra.mxu0 %v1536
        %2483 = vmatpush.msra.mxu0 %v1532
        %2484 = vmatpush.msra.mxu0 %v1528
        %2485 = vmatpush.msra.mxu0 %v1524
        %2486 = vmatpush.msra.mxu0 %v1520
        %2487 = vmatpush.msra.mxu0 %v1516
        %2488 = vmatpush.msra.mxu0 %v1512
        %2489 = vmatpush.msra.mxu0 %v1508
        %2490 = vmatpush.msra.mxu0 %v1504
        %2491 = vmatpush.msra.mxu0 %v1500
        %2492 = vmatpush.msra.mxu0 %v1496
        %2493 = vmatpush.msra.mxu0 %v1492
        %2494 = vmatpush.msra.mxu0 %v1488
        %2495 = vmatmul.f32.gmra.mxu0 %v967
        %v2496 = vpop.f32.mrf.mxu0
        %v2497 = vadd.f32 %v2477, %v2496
        %2498 = vdwg.mxu0
        %2499 = vmatpush.msra.mxu0 %v1612
        %2500 = vmatpush.msra.mxu0 %v1608
        %2501 = vmatpush.msra.mxu0 %v1604
        %2502 = vmatpush.msra.mxu0 %v1600
        %2503 = vmatpush.msra.mxu0 %v1596
        %2504 = vmatpush.msra.mxu0 %v1592
        %2505 = vmatpush.msra.mxu0 %v1588
        %2506 = vmatpush.msra.mxu0 %v1584
        %2507 = vmatpush.msra.mxu0 %v1580
        %2508 = vmatpush.msra.mxu0 %v1576
        %2509 = vmatpush.msra.mxu0 %v1572
        %2510 = vmatpush.msra.mxu0 %v1568
        %2511 = vmatpush.msra.mxu0 %v1564
        %2512 = vmatpush.msra.mxu0 %v1560
        %2513 = vmatpush.msra.mxu0 %v1556
        %2514 = vmatpush.msra.mxu0 %v1552
        %2515 = vmatmul.f32.gmra.mxu0 %v968
        %v2516 = vpop.f32.mrf.mxu0
        %v2517 = vadd.f32 %v2497, %v2516
        %2518 = vdwg.mxu0
        %2519 = vmatpush.msra.mxu0 %v1676
        %2520 = vmatpush.msra.mxu0 %v1672
        %2521 = vmatpush.msra.mxu0 %v1668
        %2522 = vmatpush.msra.mxu0 %v1664
        %2523 = vmatpush.msra.mxu0 %v1660
        %2524 = vmatpush.msra.mxu0 %v1656
        %2525 = vmatpush.msra.mxu0 %v1652
        %2526 = vmatpush.msra.mxu0 %v1648
        %2527 = vmatpush.msra.mxu0 %v1644
        %2528 = vmatpush.msra.mxu0 %v1640
        %2529 = vmatpush.msra.mxu0 %v1636
        %2530 = vmatpush.msra.mxu0 %v1632
        %2531 = vmatpush.msra.mxu0 %v1628
        %2532 = vmatpush.msra.mxu0 %v1624
        %2533 = vmatpush.msra.mxu0 %v1620
        %2534 = vmatpush.msra.mxu0 %v1616
        %2535 = vmatmul.f32.gmra.mxu0 %v969
        %v2536 = vpop.f32.mrf.mxu0
        %v2537 = vadd.f32 %v2517, %v2536
        %2538 = vdwg.mxu0
        %2539 = vmatpush.msra.mxu0 %v1740
        %2540 = vmatpush.msra.mxu0 %v1736
        %2541 = vmatpush.msra.mxu0 %v1732
        %2542 = vmatpush.msra.mxu0 %v1728
        %2543 = vmatpush.msra.mxu0 %v1724
        %2544 = vmatpush.msra.mxu0 %v1720
        %2545 = vmatpush.msra.mxu0 %v1716
        %2546 = vmatpush.msra.mxu0 %v1712
        %2547 = vmatpush.msra.mxu0 %v1708
        %2548 = vmatpush.msra.mxu0 %v1704
        %2549 = vmatpush.msra.mxu0 %v1700
        %2550 = vmatpush.msra.mxu0 %v1696
        %2551 = vmatpush.msra.mxu0 %v1692
        %2552 = vmatpush.msra.mxu0 %v1688
        %2553 = vmatpush.msra.mxu0 %v1684
        %2554 = vmatpush.msra.mxu0 %v1680
        %2555 = vmatmul.f32.gmra.mxu0 %v970
        %v2556 = vpop.f32.mrf.mxu0
        %v2557 = vadd.f32 %v2537, %v2556
        %2558 = vdwg.mxu0
        %2559 = vmatpush.msra.mxu0 %v1804
        %2560 = vmatpush.msra.mxu0 %v1800
        %2561 = vmatpush.msra.mxu0 %v1796
        %2562 = vmatpush.msra.mxu0 %v1792
        %2563 = vmatpush.msra.mxu0 %v1788
        %2564 = vmatpush.msra.mxu0 %v1784
        %2565 = vmatpush.msra.mxu0 %v1780
        %2566 = vmatpush.msra.mxu0 %v1776
        %2567 = vmatpush.msra.mxu0 %v1772
        %2568 = vmatpush.msra.mxu0 %v1768
        %2569 = vmatpush.msra.mxu0 %v1764
        %2570 = vmatpush.msra.mxu0 %v1760
        %2571 = vmatpush.msra.mxu0 %v1756
        %2572 = vmatpush.msra.mxu0 %v1752
        %2573 = vmatpush.msra.mxu0 %v1748
        %2574 = vmatpush.msra.mxu0 %v1744
        %2575 = vmatmul.f32.gmra.mxu0 %v971
        %v2576 = vpop.f32.mrf.mxu0
        %v2577 = vadd.f32 %v2557, %v2576
        %2578 = vdwg.mxu0
        %2579 = vmatpush.msra.mxu0 %v1868
        %2580 = vmatpush.msra.mxu0 %v1864
        %2581 = vmatpush.msra.mxu0 %v1860
        %2582 = vmatpush.msra.mxu0 %v1856
        %2583 = vmatpush.msra.mxu0 %v1852
        %2584 = vmatpush.msra.mxu0 %v1848
        %2585 = vmatpush.msra.mxu0 %v1844
        %2586 = vmatpush.msra.mxu0 %v1840
        %2587 = vmatpush.msra.mxu0 %v1836
        %2588 = vmatpush.msra.mxu0 %v1832
        %2589 = vmatpush.msra.mxu0 %v1828
        %2590 = vmatpush.msra.mxu0 %v1824
        %2591 = vmatpush.msra.mxu0 %v1820
        %2592 = vmatpush.msra.mxu0 %v1816
        %2593 = vmatpush.msra.mxu0 %v1812
        %2594 = vmatpush.msra.mxu0 %v1808
        %2595 = vmatmul.f32.gmra.mxu0 %v972
        %v2596 = vpop.f32.mrf.mxu0
        %v2597 = vadd.f32 %v2577, %v2596
        %2598 = vdwg.mxu0
        %2599 = vmatpush.msra.mxu0 %v1932
        %2600 = vmatpush.msra.mxu0 %v1928
        %2601 = vmatpush.msra.mxu0 %v1924
        %2602 = vmatpush.msra.mxu0 %v1920
        %2603 = vmatpush.msra.mxu0 %v1916
        %2604 = vmatpush.msra.mxu0 %v1912
        %2605 = vmatpush.msra.mxu0 %v1908
        %2606 = vmatpush.msra.mxu0 %v1904
        %2607 = vmatpush.msra.mxu0 %v1900
        %2608 = vmatpush.msra.mxu0 %v1896
        %2609 = vmatpush.msra.mxu0 %v1892
        %2610 = vmatpush.msra.mxu0 %v1888
        %2611 = vmatpush.msra.mxu0 %v1884
        %2612 = vmatpush.msra.mxu0 %v1880
        %2613 = vmatpush.msra.mxu0 %v1876
        %2614 = vmatpush.msra.mxu0 %v1872
        %2615 = vmatmul.f32.gmra.mxu0 %v973
        %v2616 = vpop.f32.mrf.mxu0
        %v2617 = vadd.f32 %v2597, %v2616
        %2618 = vdwg.mxu0
        %2619 = vmatpush.msra.mxu0 %v1996
        %2620 = vmatpush.msra.mxu0 %v1992
        %2621 = vmatpush.msra.mxu0 %v1988
        %2622 = vmatpush.msra.mxu0 %v1984
        %2623 = vmatpush.msra.mxu0 %v1980
        %2624 = vmatpush.msra.mxu0 %v1976
        %2625 = vmatpush.msra.mxu0 %v1972
        %2626 = vmatpush.msra.mxu0 %v1968
        %2627 = vmatpush.msra.mxu0 %v1964
        %2628 = vmatpush.msra.mxu0 %v1960
        %2629 = vmatpush.msra.mxu0 %v1956
        %2630 = vmatpush.msra.mxu0 %v1952
        %2631 = vmatpush.msra.mxu0 %v1948
        %2632 = vmatpush.msra.mxu0 %v1944
        %2633 = vmatpush.msra.mxu0 %v1940
        %2634 = vmatpush.msra.mxu0 %v1936
        %2635 = vmatmul.f32.gmra.mxu0 %v974
        %v2636 = vpop.f32.mrf.mxu0
        %v2637 = vadd.f32 %v2617, %v2636
        %2638 = vdwg.mxu0
        %2639 = vmatpush.msra.mxu0 %v1037
        %2640 = vmatpush.msra.mxu0 %v1033
        %2641 = vmatpush.msra.mxu0 %v1029
        %2642 = vmatpush.msra.mxu0 %v1025
        %2643 = vmatpush.msra.mxu0 %v1021
        %2644 = vmatpush.msra.mxu0 %v1017
        %2645 = vmatpush.msra.mxu0 %v1013
        %2646 = vmatpush.msra.mxu0 %v1009
        %2647 = vmatpush.msra.mxu0 %v1005
        %2648 = vmatpush.msra.mxu0 %v1001
        %2649 = vmatpush.msra.mxu0 %v997
        %2650 = vmatpush.msra.mxu0 %v993
        %2651 = vmatpush.msra.mxu0 %v989
        %2652 = vmatpush.msra.mxu0 %v985
        %2653 = vmatpush.msra.mxu0 %v981
        %2654 = vmatpush.msra.mxu0 %v977
        %2655 = vmatmul.f32.gmra.mxu0 %v959
        %v2656 = vpop.f32.mrf.mxu0
        %v2657 = vadd.f32 0.0, %v2656
        %2658 = vdwg.mxu0
        %2659 = vmatpush.msra.mxu0 %v1101
        %2660 = vmatpush.msra.mxu0 %v1097
        %2661 = vmatpush.msra.mxu0 %v1093
        %2662 = vmatpush.msra.mxu0 %v1089
        %2663 = vmatpush.msra.mxu0 %v1085
        %2664 = vmatpush.msra.mxu0 %v1081
        %2665 = vmatpush.msra.mxu0 %v1077
        %2666 = vmatpush.msra.mxu0 %v1073
        %2667 = vmatpush.msra.mxu0 %v1069
        %2668 = vmatpush.msra.mxu0 %v1065
        %2669 = vmatpush.msra.mxu0 %v1061
        %2670 = vmatpush.msra.mxu0 %v1057
        %2671 = vmatpush.msra.mxu0 %v1053
        %2672 = vmatpush.msra.mxu0 %v1049
        %2673 = vmatpush.msra.mxu0 %v1045
        %2674 = vmatpush.msra.mxu0 %v1041
        %2675 = vmatmul.f32.gmra.mxu0 %v960
        %v2676 = vpop.f32.mrf.mxu0
        %v2677 = vadd.f32 %v2657, %v2676
        %2678 = vdwg.mxu0
        %2679 = vmatpush.msra.mxu0 %v1165
        %2680 = vmatpush.msra.mxu0 %v1161
        %2681 = vmatpush.msra.mxu0 %v1157
        %2682 = vmatpush.msra.mxu0 %v1153
        %2683 = vmatpush.msra.mxu0 %v1149
        %2684 = vmatpush.msra.mxu0 %v1145
        %2685 = vmatpush.msra.mxu0 %v1141
        %2686 = vmatpush.msra.mxu0 %v1137
        %2687 = vmatpush.msra.mxu0 %v1133
        %2688 = vmatpush.msra.mxu0 %v1129
        %2689 = vmatpush.msra.mxu0 %v1125
        %2690 = vmatpush.msra.mxu0 %v1121
        %2691 = vmatpush.msra.mxu0 %v1117
        %2692 = vmatpush.msra.mxu0 %v1113
        %2693 = vmatpush.msra.mxu0 %v1109
        %2694 = vmatpush.msra.mxu0 %v1105
        %2695 = vmatmul.f32.gmra.mxu0 %v961
        %v2696 = vpop.f32.mrf.mxu0
        %v2697 = vadd.f32 %v2677, %v2696
        %2698 = vdwg.mxu0
        %2699 = vmatpush.msra.mxu0 %v1229
        %2700 = vmatpush.msra.mxu0 %v1225
        %2701 = vmatpush.msra.mxu0 %v1221
        %2702 = vmatpush.msra.mxu0 %v1217
        %2703 = vmatpush.msra.mxu0 %v1213
        %2704 = vmatpush.msra.mxu0 %v1209
        %2705 = vmatpush.msra.mxu0 %v1205
        %2706 = vmatpush.msra.mxu0 %v1201
        %2707 = vmatpush.msra.mxu0 %v1197
        %2708 = vmatpush.msra.mxu0 %v1193
        %2709 = vmatpush.msra.mxu0 %v1189
        %2710 = vmatpush.msra.mxu0 %v1185
        %2711 = vmatpush.msra.mxu0 %v1181
        %2712 = vmatpush.msra.mxu0 %v1177
        %2713 = vmatpush.msra.mxu0 %v1173
        %2714 = vmatpush.msra.mxu0 %v1169
        %2715 = vmatmul.f32.gmra.mxu0 %v962
        %v2716 = vpop.f32.mrf.mxu0
        %v2717 = vadd.f32 %v2697, %v2716
        %2718 = vdwg.mxu0
        %2719 = vmatpush.msra.mxu0 %v1293
        %2720 = vmatpush.msra.mxu0 %v1289
        %2721 = vmatpush.msra.mxu0 %v1285
        %2722 = vmatpush.msra.mxu0 %v1281
        %2723 = vmatpush.msra.mxu0 %v1277
        %2724 = vmatpush.msra.mxu0 %v1273
        %2725 = vmatpush.msra.mxu0 %v1269
        %2726 = vmatpush.msra.mxu0 %v1265
        %2727 = vmatpush.msra.mxu0 %v1261
        %2728 = vmatpush.msra.mxu0 %v1257
        %2729 = vmatpush.msra.mxu0 %v1253
        %2730 = vmatpush.msra.mxu0 %v1249
        %2731 = vmatpush.msra.mxu0 %v1245
        %2732 = vmatpush.msra.mxu0 %v1241
        %2733 = vmatpush.msra.mxu0 %v1237
        %2734 = vmatpush.msra.mxu0 %v1233
        %2735 = vmatmul.f32.gmra.mxu0 %v963
        %v2736 = vpop.f32.mrf.mxu0
        %v2737 = vadd.f32 %v2717, %v2736
        %2738 = vdwg.mxu0
        %2739 = vmatpush.msra.mxu0 %v1357
        %2740 = vmatpush.msra.mxu0 %v1353
        %2741 = vmatpush.msra.mxu0 %v1349
        %2742 = vmatpush.msra.mxu0 %v1345
        %2743 = vmatpush.msra.mxu0 %v1341
        %2744 = vmatpush.msra.mxu0 %v1337
        %2745 = vmatpush.msra.mxu0 %v1333
        %2746 = vmatpush.msra.mxu0 %v1329
        %2747 = vmatpush.msra.mxu0 %v1325
        %2748 = vmatpush.msra.mxu0 %v1321
        %2749 = vmatpush.msra.mxu0 %v1317
        %2750 = vmatpush.msra.mxu0 %v1313
        %2751 = vmatpush.msra.mxu0 %v1309
        %2752 = vmatpush.msra.mxu0 %v1305
        %2753 = vmatpush.msra.mxu0 %v1301
        %2754 = vmatpush.msra.mxu0 %v1297
        %2755 = vmatmul.f32.gmra.mxu0 %v964
        %v2756 = vpop.f32.mrf.mxu0
        %v2757 = vadd.f32 %v2737, %v2756
        %2758 = vdwg.mxu0
        %2759 = vmatpush.msra.mxu0 %v1421
        %2760 = vmatpush.msra.mxu0 %v1417
        %2761 = vmatpush.msra.mxu0 %v1413
        %2762 = vmatpush.msra.mxu0 %v1409
        %2763 = vmatpush.msra.mxu0 %v1405
        %2764 = vmatpush.msra.mxu0 %v1401
        %2765 = vmatpush.msra.mxu0 %v1397
        %2766 = vmatpush.msra.mxu0 %v1393
        %2767 = vmatpush.msra.mxu0 %v1389
        %2768 = vmatpush.msra.mxu0 %v1385
        %2769 = vmatpush.msra.mxu0 %v1381
        %2770 = vmatpush.msra.mxu0 %v1377
        %2771 = vmatpush.msra.mxu0 %v1373
        %2772 = vmatpush.msra.mxu0 %v1369
        %2773 = vmatpush.msra.mxu0 %v1365
        %2774 = vmatpush.msra.mxu0 %v1361
        %2775 = vmatmul.f32.gmra.mxu0 %v965
        %v2776 = vpop.f32.mrf.mxu0
        %v2777 = vadd.f32 %v2757, %v2776
        %2778 = vdwg.mxu0
        %2779 = vmatpush.msra.mxu0 %v1485
        %2780 = vmatpush.msra.mxu0 %v1481
        %2781 = vmatpush.msra.mxu0 %v1477
        %2782 = vmatpush.msra.mxu0 %v1473
        %2783 = vmatpush.msra.mxu0 %v1469
        %2784 = vmatpush.msra.mxu0 %v1465
        %2785 = vmatpush.msra.mxu0 %v1461
        %2786 = vmatpush.msra.mxu0 %v1457
        %2787 = vmatpush.msra.mxu0 %v1453
        %2788 = vmatpush.msra.mxu0 %v1449
        %2789 = vmatpush.msra.mxu0 %v1445
        %2790 = vmatpush.msra.mxu0 %v1441
        %2791 = vmatpush.msra.mxu0 %v1437
        %2792 = vmatpush.msra.mxu0 %v1433
        %2793 = vmatpush.msra.mxu0 %v1429
        %2794 = vmatpush.msra.mxu0 %v1425
        %2795 = vmatmul.f32.gmra.mxu0 %v966
        %v2796 = vpop.f32.mrf.mxu0
        %v2797 = vadd.f32 %v2777, %v2796
        %2798 = vdwg.mxu0
        %2799 = vmatpush.msra.mxu0 %v1549
        %2800 = vmatpush.msra.mxu0 %v1545
        %2801 = vmatpush.msra.mxu0 %v1541
        %2802 = vmatpush.msra.mxu0 %v1537
        %2803 = vmatpush.msra.mxu0 %v1533
        %2804 = vmatpush.msra.mxu0 %v1529
        %2805 = vmatpush.msra.mxu0 %v1525
        %2806 = vmatpush.msra.mxu0 %v1521
        %2807 = vmatpush.msra.mxu0 %v1517
        %2808 = vmatpush.msra.mxu0 %v1513
        %2809 = vmatpush.msra.mxu0 %v1509
        %2810 = vmatpush.msra.mxu0 %v1505
        %2811 = vmatpush.msra.mxu0 %v1501
        %2812 = vmatpush.msra.mxu0 %v1497
        %2813 = vmatpush.msra.mxu0 %v1493
        %2814 = vmatpush.msra.mxu0 %v1489
        %2815 = vmatmul.f32.gmra.mxu0 %v967
        %v2816 = vpop.f32.mrf.mxu0
        %v2817 = vadd.f32 %v2797, %v2816
        %2818 = vdwg.mxu0
        %2819 = vmatpush.msra.mxu0 %v1613
        %2820 = vmatpush.msra.mxu0 %v1609
        %2821 = vmatpush.msra.mxu0 %v1605
        %2822 = vmatpush.msra.mxu0 %v1601
        %2823 = vmatpush.msra.mxu0 %v1597
        %2824 = vmatpush.msra.mxu0 %v1593
        %2825 = vmatpush.msra.mxu0 %v1589
        %2826 = vmatpush.msra.mxu0 %v1585
        %2827 = vmatpush.msra.mxu0 %v1581
        %2828 = vmatpush.msra.mxu0 %v1577
        %2829 = vmatpush.msra.mxu0 %v1573
        %2830 = vmatpush.msra.mxu0 %v1569
        %2831 = vmatpush.msra.mxu0 %v1565
        %2832 = vmatpush.msra.mxu0 %v1561
        %2833 = vmatpush.msra.mxu0 %v1557
        %2834 = vmatpush.msra.mxu0 %v1553
        %2835 = vmatmul.f32.gmra.mxu0 %v968
        %v2836 = vpop.f32.mrf.mxu0
        %v2837 = vadd.f32 %v2817, %v2836
        %2838 = vdwg.mxu0
        %2839 = vmatpush.msra.mxu0 %v1677
        %2840 = vmatpush.msra.mxu0 %v1673
        %2841 = vmatpush.msra.mxu0 %v1669
        %2842 = vmatpush.msra.mxu0 %v1665
        %2843 = vmatpush.msra.mxu0 %v1661
        %2844 = vmatpush.msra.mxu0 %v1657
        %2845 = vmatpush.msra.mxu0 %v1653
        %2846 = vmatpush.msra.mxu0 %v1649
        %2847 = vmatpush.msra.mxu0 %v1645
        %2848 = vmatpush.msra.mxu0 %v1641
        %2849 = vmatpush.msra.mxu0 %v1637
        %2850 = vmatpush.msra.mxu0 %v1633
        %2851 = vmatpush.msra.mxu0 %v1629
        %2852 = vmatpush.msra.mxu0 %v1625
        %2853 = vmatpush.msra.mxu0 %v1621
        %2854 = vmatpush.msra.mxu0 %v1617
        %2855 = vmatmul.f32.gmra.mxu0 %v969
        %v2856 = vpop.f32.mrf.mxu0
        %v2857 = vadd.f32 %v2837, %v2856
        %2858 = vdwg.mxu0
        %2859 = vmatpush.msra.mxu0 %v1741
        %2860 = vmatpush.msra.mxu0 %v1737
        %2861 = vmatpush.msra.mxu0 %v1733
        %2862 = vmatpush.msra.mxu0 %v1729
        %2863 = vmatpush.msra.mxu0 %v1725
        %2864 = vmatpush.msra.mxu0 %v1721
        %2865 = vmatpush.msra.mxu0 %v1717
        %2866 = vmatpush.msra.mxu0 %v1713
        %2867 = vmatpush.msra.mxu0 %v1709
        %2868 = vmatpush.msra.mxu0 %v1705
        %2869 = vmatpush.msra.mxu0 %v1701
        %2870 = vmatpush.msra.mxu0 %v1697
        %2871 = vmatpush.msra.mxu0 %v1693
        %2872 = vmatpush.msra.mxu0 %v1689
        %2873 = vmatpush.msra.mxu0 %v1685
        %2874 = vmatpush.msra.mxu0 %v1681
        %2875 = vmatmul.f32.gmra.mxu0 %v970
        %v2876 = vpop.f32.mrf.mxu0
        %v2877 = vadd.f32 %v2857, %v2876
        %2878 = vdwg.mxu0
        %2879 = vmatpush.msra.mxu0 %v1805
        %2880 = vmatpush.msra.mxu0 %v1801
        %2881 = vmatpush.msra.mxu0 %v1797
        %2882 = vmatpush.msra.mxu0 %v1793
        %2883 = vmatpush.msra.mxu0 %v1789
        %2884 = vmatpush.msra.mxu0 %v1785
        %2885 = vmatpush.msra.mxu0 %v1781
        %2886 = vmatpush.msra.mxu0 %v1777
        %2887 = vmatpush.msra.mxu0 %v1773
        %2888 = vmatpush.msra.mxu0 %v1769
        %2889 = vmatpush.msra.mxu0 %v1765
        %2890 = vmatpush.msra.mxu0 %v1761
        %2891 = vmatpush.msra.mxu0 %v1757
        %2892 = vmatpush.msra.mxu0 %v1753
        %2893 = vmatpush.msra.mxu0 %v1749
        %2894 = vmatpush.msra.mxu0 %v1745
        %2895 = vmatmul.f32.gmra.mxu0 %v971
        %v2896 = vpop.f32.mrf.mxu0
        %v2897 = vadd.f32 %v2877, %v2896
        %2898 = vdwg.mxu0
        %2899 = vmatpush.msra.mxu0 %v1869
        %2900 = vmatpush.msra.mxu0 %v1865
        %2901 = vmatpush.msra.mxu0 %v1861
        %2902 = vmatpush.msra.mxu0 %v1857
        %2903 = vmatpush.msra.mxu0 %v1853
        %2904 = vmatpush.msra.mxu0 %v1849
        %2905 = vmatpush.msra.mxu0 %v1845
        %2906 = vmatpush.msra.mxu0 %v1841
        %2907 = vmatpush.msra.mxu0 %v1837
        %2908 = vmatpush.msra.mxu0 %v1833
        %2909 = vmatpush.msra.mxu0 %v1829
        %2910 = vmatpush.msra.mxu0 %v1825
        %2911 = vmatpush.msra.mxu0 %v1821
        %2912 = vmatpush.msra.mxu0 %v1817
        %2913 = vmatpush.msra.mxu0 %v1813
        %2914 = vmatpush.msra.mxu0 %v1809
        %2915 = vmatmul.f32.gmra.mxu0 %v972
        %v2916 = vpop.f32.mrf.mxu0
        %v2917 = vadd.f32 %v2897, %v2916
        %2918 = vdwg.mxu0
        %2919 = vmatpush.msra.mxu0 %v1933
        %2920 = vmatpush.msra.mxu0 %v1929
        %2921 = vmatpush.msra.mxu0 %v1925
        %2922 = vmatpush.msra.mxu0 %v1921
        %2923 = vmatpush.msra.mxu0 %v1917
        %2924 = vmatpush.msra.mxu0 %v1913
        %2925 = vmatpush.msra.mxu0 %v1909
        %2926 = vmatpush.msra.mxu0 %v1905
        %2927 = vmatpush.msra.mxu0 %v1901
        %2928 = vmatpush.msra.mxu0 %v1897
        %2929 = vmatpush.msra.mxu0 %v1893
        %2930 = vmatpush.msra.mxu0 %v1889
        %2931 = vmatpush.msra.mxu0 %v1885
        %2932 = vmatpush.msra.mxu0 %v1881
        %2933 = vmatpush.msra.mxu0 %v1877
        %2934 = vmatpush.msra.mxu0 %v1873
        %2935 = vmatmul.f32.gmra.mxu0 %v973
        %v2936 = vpop.f32.mrf.mxu0
        %v2937 = vadd.f32 %v2917, %v2936
        %2938 = vdwg.mxu0
        %2939 = vmatpush.msra.mxu0 %v1997
        %2940 = vmatpush.msra.mxu0 %v1993
        %2941 = vmatpush.msra.mxu0 %v1989
        %2942 = vmatpush.msra.mxu0 %v1985
        %2943 = vmatpush.msra.mxu0 %v1981
        %2944 = vmatpush.msra.mxu0 %v1977
        %2945 = vmatpush.msra.mxu0 %v1973
        %2946 = vmatpush.msra.mxu0 %v1969
        %2947 = vmatpush.msra.mxu0 %v1965
        %2948 = vmatpush.msra.mxu0 %v1961
        %2949 = vmatpush.msra.mxu0 %v1957
        %2950 = vmatpush.msra.mxu0 %v1953
        %2951 = vmatpush.msra.mxu0 %v1949
        %2952 = vmatpush.msra.mxu0 %v1945
        %2953 = vmatpush.msra.mxu0 %v1941
        %2954 = vmatpush.msra.mxu0 %v1937
        %2955 = vmatmul.f32.gmra.mxu0 %v974
        %v2956 = vpop.f32.mrf.mxu0
        %v2957 = vadd.f32 %v2937, %v2956
        %2958 = vdwg.mxu0
        %2959 = vmatpush.msra.mxu0 %v1038
        %2960 = vmatpush.msra.mxu0 %v1034
        %2961 = vmatpush.msra.mxu0 %v1030
        %2962 = vmatpush.msra.mxu0 %v1026
        %2963 = vmatpush.msra.mxu0 %v1022
        %2964 = vmatpush.msra.mxu0 %v1018
        %2965 = vmatpush.msra.mxu0 %v1014
        %2966 = vmatpush.msra.mxu0 %v1010
        %2967 = vmatpush.msra.mxu0 %v1006
        %2968 = vmatpush.msra.mxu0 %v1002
        %2969 = vmatpush.msra.mxu0 %v998
        %2970 = vmatpush.msra.mxu0 %v994
        %2971 = vmatpush.msra.mxu0 %v990
        %2972 = vmatpush.msra.mxu0 %v986
        %2973 = vmatpush.msra.mxu0 %v982
        %2974 = vmatpush.msra.mxu0 %v978
        %2975 = vmatmul.f32.gmra.mxu0 %v959
        %v2976 = vpop.f32.mrf.mxu0
        %v2977 = vadd.f32 0.0, %v2976
        %2978 = vdwg.mxu0
        %2979 = vmatpush.msra.mxu0 %v1102
        %2980 = vmatpush.msra.mxu0 %v1098
        %2981 = vmatpush.msra.mxu0 %v1094
        %2982 = vmatpush.msra.mxu0 %v1090
        %2983 = vmatpush.msra.mxu0 %v1086
        %2984 = vmatpush.msra.mxu0 %v1082
        %2985 = vmatpush.msra.mxu0 %v1078
        %2986 = vmatpush.msra.mxu0 %v1074
        %2987 = vmatpush.msra.mxu0 %v1070
        %2988 = vmatpush.msra.mxu0 %v1066
        %2989 = vmatpush.msra.mxu0 %v1062
        %2990 = vmatpush.msra.mxu0 %v1058
        %2991 = vmatpush.msra.mxu0 %v1054
        %2992 = vmatpush.msra.mxu0 %v1050
        %2993 = vmatpush.msra.mxu0 %v1046
        %2994 = vmatpush.msra.mxu0 %v1042
        %2995 = vmatmul.f32.gmra.mxu0 %v960
        %v2996 = vpop.f32.mrf.mxu0
        %v2997 = vadd.f32 %v2977, %v2996
        %2998 = vdwg.mxu0
        %2999 = vmatpush.msra.mxu0 %v1166
        %3000 = vmatpush.msra.mxu0 %v1162
        %3001 = vmatpush.msra.mxu0 %v1158
        %3002 = vmatpush.msra.mxu0 %v1154
        %3003 = vmatpush.msra.mxu0 %v1150
        %3004 = vmatpush.msra.mxu0 %v1146
        %3005 = vmatpush.msra.mxu0 %v1142
        %3006 = vmatpush.msra.mxu0 %v1138
        %3007 = vmatpush.msra.mxu0 %v1134
        %3008 = vmatpush.msra.mxu0 %v1130
        %3009 = vmatpush.msra.mxu0 %v1126
        %3010 = vmatpush.msra.mxu0 %v1122
        %3011 = vmatpush.msra.mxu0 %v1118
        %3012 = vmatpush.msra.mxu0 %v1114
        %3013 = vmatpush.msra.mxu0 %v1110
        %3014 = vmatpush.msra.mxu0 %v1106
        %3015 = vmatmul.f32.gmra.mxu0 %v961
        %v3016 = vpop.f32.mrf.mxu0
        %v3017 = vadd.f32 %v2997, %v3016
        %3018 = vdwg.mxu0
        %3019 = vmatpush.msra.mxu0 %v1230
        %3020 = vmatpush.msra.mxu0 %v1226
        %3021 = vmatpush.msra.mxu0 %v1222
        %3022 = vmatpush.msra.mxu0 %v1218
        %3023 = vmatpush.msra.mxu0 %v1214
        %3024 = vmatpush.msra.mxu0 %v1210
        %3025 = vmatpush.msra.mxu0 %v1206
        %3026 = vmatpush.msra.mxu0 %v1202
        %3027 = vmatpush.msra.mxu0 %v1198
        %3028 = vmatpush.msra.mxu0 %v1194
        %3029 = vmatpush.msra.mxu0 %v1190
        %3030 = vmatpush.msra.mxu0 %v1186
        %3031 = vmatpush.msra.mxu0 %v1182
        %3032 = vmatpush.msra.mxu0 %v1178
        %3033 = vmatpush.msra.mxu0 %v1174
        %3034 = vmatpush.msra.mxu0 %v1170
        %3035 = vmatmul.f32.gmra.mxu0 %v962
        %v3036 = vpop.f32.mrf.mxu0
        %v3037 = vadd.f32 %v3017, %v3036
        %3038 = vdwg.mxu0
        %3039 = vmatpush.msra.mxu0 %v1294
        %3040 = vmatpush.msra.mxu0 %v1290
        %3041 = vmatpush.msra.mxu0 %v1286
        %3042 = vmatpush.msra.mxu0 %v1282
        %3043 = vmatpush.msra.mxu0 %v1278
        %3044 = vmatpush.msra.mxu0 %v1274
        %3045 = vmatpush.msra.mxu0 %v1270
        %3046 = vmatpush.msra.mxu0 %v1266
        %3047 = vmatpush.msra.mxu0 %v1262
        %3048 = vmatpush.msra.mxu0 %v1258
        %3049 = vmatpush.msra.mxu0 %v1254
        %3050 = vmatpush.msra.mxu0 %v1250
        %3051 = vmatpush.msra.mxu0 %v1246
        %3052 = vmatpush.msra.mxu0 %v1242
        %3053 = vmatpush.msra.mxu0 %v1238
        %3054 = vmatpush.msra.mxu0 %v1234
        %3055 = vmatmul.f32.gmra.mxu0 %v963
        %v3056 = vpop.f32.mrf.mxu0
        %v3057 = vadd.f32 %v3037, %v3056
        %3058 = vdwg.mxu0
        %3059 = vmatpush.msra.mxu0 %v1358
        %3060 = vmatpush.msra.mxu0 %v1354
        %3061 = vmatpush.msra.mxu0 %v1350
        %3062 = vmatpush.msra.mxu0 %v1346
        %3063 = vmatpush.msra.mxu0 %v1342
        %3064 = vmatpush.msra.mxu0 %v1338
        %3065 = vmatpush.msra.mxu0 %v1334
        %3066 = vmatpush.msra.mxu0 %v1330
        %3067 = vmatpush.msra.mxu0 %v1326
        %3068 = vmatpush.msra.mxu0 %v1322
        %3069 = vmatpush.msra.mxu0 %v1318
        %3070 = vmatpush.msra.mxu0 %v1314
        %3071 = vmatpush.msra.mxu0 %v1310
        %3072 = vmatpush.msra.mxu0 %v1306
        %3073 = vmatpush.msra.mxu0 %v1302
        %3074 = vmatpush.msra.mxu0 %v1298
        %3075 = vmatmul.f32.gmra.mxu0 %v964
        %v3076 = vpop.f32.mrf.mxu0
        %v3077 = vadd.f32 %v3057, %v3076
        %3078 = vdwg.mxu0
        %3079 = vmatpush.msra.mxu0 %v1422
        %3080 = vmatpush.msra.mxu0 %v1418
        %3081 = vmatpush.msra.mxu0 %v1414
        %3082 = vmatpush.msra.mxu0 %v1410
        %3083 = vmatpush.msra.mxu0 %v1406
        %3084 = vmatpush.msra.mxu0 %v1402
        %3085 = vmatpush.msra.mxu0 %v1398
        %3086 = vmatpush.msra.mxu0 %v1394
        %3087 = vmatpush.msra.mxu0 %v1390
        %3088 = vmatpush.msra.mxu0 %v1386
        %3089 = vmatpush.msra.mxu0 %v1382
        %3090 = vmatpush.msra.mxu0 %v1378
        %3091 = vmatpush.msra.mxu0 %v1374
        %3092 = vmatpush.msra.mxu0 %v1370
        %3093 = vmatpush.msra.mxu0 %v1366
        %3094 = vmatpush.msra.mxu0 %v1362
        %3095 = vmatmul.f32.gmra.mxu0 %v965
        %v3096 = vpop.f32.mrf.mxu0
        %v3097 = vadd.f32 %v3077, %v3096
        %3098 = vdwg.mxu0
        %3099 = vmatpush.msra.mxu0 %v1486
        %3100 = vmatpush.msra.mxu0 %v1482
        %3101 = vmatpush.msra.mxu0 %v1478
        %3102 = vmatpush.msra.mxu0 %v1474
        %3103 = vmatpush.msra.mxu0 %v1470
        %3104 = vmatpush.msra.mxu0 %v1466
        %3105 = vmatpush.msra.mxu0 %v1462
        %3106 = vmatpush.msra.mxu0 %v1458
        %3107 = vmatpush.msra.mxu0 %v1454
        %3108 = vmatpush.msra.mxu0 %v1450
        %3109 = vmatpush.msra.mxu0 %v1446
        %3110 = vmatpush.msra.mxu0 %v1442
        %3111 = vmatpush.msra.mxu0 %v1438
        %3112 = vmatpush.msra.mxu0 %v1434
        %3113 = vmatpush.msra.mxu0 %v1430
        %3114 = vmatpush.msra.mxu0 %v1426
        %3115 = vmatmul.f32.gmra.mxu0 %v966
        %v3116 = vpop.f32.mrf.mxu0
        %v3117 = vadd.f32 %v3097, %v3116
        %3118 = vdwg.mxu0
        %3119 = vmatpush.msra.mxu0 %v1550
        %3120 = vmatpush.msra.mxu0 %v1546
        %3121 = vmatpush.msra.mxu0 %v1542
        %3122 = vmatpush.msra.mxu0 %v1538
        %3123 = vmatpush.msra.mxu0 %v1534
        %3124 = vmatpush.msra.mxu0 %v1530
        %3125 = vmatpush.msra.mxu0 %v1526
        %3126 = vmatpush.msra.mxu0 %v1522
        %3127 = vmatpush.msra.mxu0 %v1518
        %3128 = vmatpush.msra.mxu0 %v1514
        %3129 = vmatpush.msra.mxu0 %v1510
        %3130 = vmatpush.msra.mxu0 %v1506
        %3131 = vmatpush.msra.mxu0 %v1502
        %3132 = vmatpush.msra.mxu0 %v1498
        %3133 = vmatpush.msra.mxu0 %v1494
        %3134 = vmatpush.msra.mxu0 %v1490
        %3135 = vmatmul.f32.gmra.mxu0 %v967
        %v3136 = vpop.f32.mrf.mxu0
        %v3137 = vadd.f32 %v3117, %v3136
        %3138 = vdwg.mxu0
        %3139 = vmatpush.msra.mxu0 %v1614
        %3140 = vmatpush.msra.mxu0 %v1610
        %3141 = vmatpush.msra.mxu0 %v1606
        %3142 = vmatpush.msra.mxu0 %v1602
        %3143 = vmatpush.msra.mxu0 %v1598
        %3144 = vmatpush.msra.mxu0 %v1594
        %3145 = vmatpush.msra.mxu0 %v1590
        %3146 = vmatpush.msra.mxu0 %v1586
        %3147 = vmatpush.msra.mxu0 %v1582
        %3148 = vmatpush.msra.mxu0 %v1578
        %3149 = vmatpush.msra.mxu0 %v1574
        %3150 = vmatpush.msra.mxu0 %v1570
        %3151 = vmatpush.msra.mxu0 %v1566
        %3152 = vmatpush.msra.mxu0 %v1562
        %3153 = vmatpush.msra.mxu0 %v1558
        %3154 = vmatpush.msra.mxu0 %v1554
        %3155 = vmatmul.f32.gmra.mxu0 %v968
        %v3156 = vpop.f32.mrf.mxu0
        %v3157 = vadd.f32 %v3137, %v3156
        %3158 = vdwg.mxu0
        %3159 = vmatpush.msra.mxu0 %v1678
        %3160 = vmatpush.msra.mxu0 %v1674
        %3161 = vmatpush.msra.mxu0 %v1670
        %3162 = vmatpush.msra.mxu0 %v1666
        %3163 = vmatpush.msra.mxu0 %v1662
        %3164 = vmatpush.msra.mxu0 %v1658
        %3165 = vmatpush.msra.mxu0 %v1654
        %3166 = vmatpush.msra.mxu0 %v1650
        %3167 = vmatpush.msra.mxu0 %v1646
        %3168 = vmatpush.msra.mxu0 %v1642
        %3169 = vmatpush.msra.mxu0 %v1638
        %3170 = vmatpush.msra.mxu0 %v1634
        %3171 = vmatpush.msra.mxu0 %v1630
        %3172 = vmatpush.msra.mxu0 %v1626
        %3173 = vmatpush.msra.mxu0 %v1622
        %3174 = vmatpush.msra.mxu0 %v1618
        %3175 = vmatmul.f32.gmra.mxu0 %v969
        %v3176 = vpop.f32.mrf.mxu0
        %v3177 = vadd.f32 %v3157, %v3176
        %3178 = vdwg.mxu0
        %3179 = vmatpush.msra.mxu0 %v1742
        %3180 = vmatpush.msra.mxu0 %v1738
        %3181 = vmatpush.msra.mxu0 %v1734
        %3182 = vmatpush.msra.mxu0 %v1730
        %3183 = vmatpush.msra.mxu0 %v1726
        %3184 = vmatpush.msra.mxu0 %v1722
        %3185 = vmatpush.msra.mxu0 %v1718
        %3186 = vmatpush.msra.mxu0 %v1714
        %3187 = vmatpush.msra.mxu0 %v1710
        %3188 = vmatpush.msra.mxu0 %v1706
        %3189 = vmatpush.msra.mxu0 %v1702
        %3190 = vmatpush.msra.mxu0 %v1698
        %3191 = vmatpush.msra.mxu0 %v1694
        %3192 = vmatpush.msra.mxu0 %v1690
        %3193 = vmatpush.msra.mxu0 %v1686
        %3194 = vmatpush.msra.mxu0 %v1682
        %3195 = vmatmul.f32.gmra.mxu0 %v970
        %v3196 = vpop.f32.mrf.mxu0
        %v3197 = vadd.f32 %v3177, %v3196
        %3198 = vdwg.mxu0
        %3199 = vmatpush.msra.mxu0 %v1806
        %3200 = vmatpush.msra.mxu0 %v1802
        %3201 = vmatpush.msra.mxu0 %v1798
        %3202 = vmatpush.msra.mxu0 %v1794
        %3203 = vmatpush.msra.mxu0 %v1790
        %3204 = vmatpush.msra.mxu0 %v1786
        %3205 = vmatpush.msra.mxu0 %v1782
        %3206 = vmatpush.msra.mxu0 %v1778
        %3207 = vmatpush.msra.mxu0 %v1774
        %3208 = vmatpush.msra.mxu0 %v1770
        %3209 = vmatpush.msra.mxu0 %v1766
        %3210 = vmatpush.msra.mxu0 %v1762
        %3211 = vmatpush.msra.mxu0 %v1758
        %3212 = vmatpush.msra.mxu0 %v1754
        %3213 = vmatpush.msra.mxu0 %v1750
        %3214 = vmatpush.msra.mxu0 %v1746
        %3215 = vmatmul.f32.gmra.mxu0 %v971
        %v3216 = vpop.f32.mrf.mxu0
        %v3217 = vadd.f32 %v3197, %v3216
        %3218 = vdwg.mxu0
        %3219 = vmatpush.msra.mxu0 %v1870
        %3220 = vmatpush.msra.mxu0 %v1866
        %3221 = vmatpush.msra.mxu0 %v1862
        %3222 = vmatpush.msra.mxu0 %v1858
        %3223 = vmatpush.msra.mxu0 %v1854
        %3224 = vmatpush.msra.mxu0 %v1850
        %3225 = vmatpush.msra.mxu0 %v1846
        %3226 = vmatpush.msra.mxu0 %v1842
        %3227 = vmatpush.msra.mxu0 %v1838
        %3228 = vmatpush.msra.mxu0 %v1834
        %3229 = vmatpush.msra.mxu0 %v1830
        %3230 = vmatpush.msra.mxu0 %v1826
        %3231 = vmatpush.msra.mxu0 %v1822
        %3232 = vmatpush.msra.mxu0 %v1818
        %3233 = vmatpush.msra.mxu0 %v1814
        %3234 = vmatpush.msra.mxu0 %v1810
        %3235 = vmatmul.f32.gmra.mxu0 %v972
        %v3236 = vpop.f32.mrf.mxu0
        %v3237 = vadd.f32 %v3217, %v3236
        %3238 = vdwg.mxu0
        %3239 = vmatpush.msra.mxu0 %v1934
        %3240 = vmatpush.msra.mxu0 %v1930
        %3241 = vmatpush.msra.mxu0 %v1926
        %3242 = vmatpush.msra.mxu0 %v1922
        %3243 = vmatpush.msra.mxu0 %v1918
        %3244 = vmatpush.msra.mxu0 %v1914
        %3245 = vmatpush.msra.mxu0 %v1910
        %3246 = vmatpush.msra.mxu0 %v1906
        %3247 = vmatpush.msra.mxu0 %v1902
        %3248 = vmatpush.msra.mxu0 %v1898
        %3249 = vmatpush.msra.mxu0 %v1894
        %3250 = vmatpush.msra.mxu0 %v1890
        %3251 = vmatpush.msra.mxu0 %v1886
        %3252 = vmatpush.msra.mxu0 %v1882
        %3253 = vmatpush.msra.mxu0 %v1878
        %3254 = vmatpush.msra.mxu0 %v1874
        %3255 = vmatmul.f32.gmra.mxu0 %v973
        %v3256 = vpop.f32.mrf.mxu0
        %v3257 = vadd.f32 %v3237, %v3256
        %3258 = vdwg.mxu0
        %3259 = vmatpush.msra.mxu0 %v1998
        %3260 = vmatpush.msra.mxu0 %v1994
        %3261 = vmatpush.msra.mxu0 %v1990
        %3262 = vmatpush.msra.mxu0 %v1986
        %3263 = vmatpush.msra.mxu0 %v1982
        %3264 = vmatpush.msra.mxu0 %v1978
        %3265 = vmatpush.msra.mxu0 %v1974
        %3266 = vmatpush.msra.mxu0 %v1970
        %3267 = vmatpush.msra.mxu0 %v1966
        %3268 = vmatpush.msra.mxu0 %v1962
        %3269 = vmatpush.msra.mxu0 %v1958
        %3270 = vmatpush.msra.mxu0 %v1954
        %3271 = vmatpush.msra.mxu0 %v1950
        %3272 = vmatpush.msra.mxu0 %v1946
        %3273 = vmatpush.msra.mxu0 %v1942
        %3274 = vmatpush.msra.mxu0 %v1938
        %3275 = vmatmul.f32.gmra.mxu0 %v974
        %v3276 = vpop.f32.mrf.mxu0
        %v3277 = vadd.f32 %v3257, %v3276
        %3278 = vdwg.mxu0
        %v3279 = vld [vmem:[%s357] sm:$0xf]
        %v3281 = vperm.slane %v3279, 0
        %v3282 = vperm.slane %v3279, 1
        %v3283 = vperm.slane %v3279, 2
        %v3284 = vperm.slane %v3279, 3
        %v3289 = vmul.f32 %v2317, %v3281
        %v3290 = vmul.f32 %v2637, %v3282
        %v3291 = vmul.f32 %v2957, %v3283
        %v3292 = vmul.f32 %v3277, %v3284
        %v3293 = vld [vmem:[%s362] sm:$0xf]
        %v3295 = vperm.slane %v3293, 0
        %v3296 = vperm.slane %v3293, 1
        %v3297 = vperm.slane %v3293, 2
        %v3298 = vperm.slane %v3293, 3
        %v3303 = vadd.f32 %v3289, %v3295
        %v3304 = vadd.f32 %v3290, %v3296
        %v3305 = vadd.f32 %v3291, %v3297
        %v3306 = vadd.f32 %v3292, %v3298
        %vm3307 = vcmp.ge.f32.partialorder %v3303, 0.0
        %vm3308 = vcmp.ge.f32.partialorder %v3304, 0.0
        %vm3309 = vcmp.ge.f32.partialorder %v3305, 0.0
        %vm3310 = vcmp.ge.f32.partialorder %v3306, 0.0
        %v3311 = vmul.f32 %v3303, 0.02
        %v3312 = vmul.f32 %v3304, 0.02
        %v3313 = vmul.f32 %v3305, 0.02
        %v3314 = vmul.f32 %v3306, 0.02
        %v3315 = vsel %vm3307, %v3303, %v3311
        %v3316 = vsel %vm3308, %v3304, %v3312
        %v3317 = vsel %vm3309, %v3305, %v3313
        %v3318 = vsel %vm3310, %v3306, %v3314
        %3319 = vst [vmem:[%s368] sm:$0xff] %v3315
        %3320 = vst [vmem:[%s368 + $0x8] sm:$0xff] %v3316
        %3321 = vst [vmem:[%s368 + $0x10] sm:$0xff] %v3317
        %3322 = vst [vmem:[%s368 + $0x18] sm:$0xff] %v3318
        %s3323 = smul.u32 4, %s20
        %p3324 = scmp.lt.s32.totalorder %s3323, 15
        %s3325 = scalar_select %p3324, %s3323, 15
        %s3326 = smul.addr %s3325, 8
        %s3327 = scalar_lea.vmem %s7, %s3326
        // Predicated region
        $region61: #{gen_high_fc_forward.2} parent=47 // pred_check
          %p3328 = pneg %p200
        $region62: #{gen_high_fc_forward.2} parent=47 // pred_check_branch
          %3330 = sbr.rel (%p3328) target = $region64
        $region63: #{gen_high_fc_forward.2} parent=47 // pred_region
          %s3331 = smul.u32 4, %s20
        $region64: #{gen_high_fc_forward.2} parent=47 // pred_fallthru
          _
      $region48: #{gen_high_fc_forward.2} parent=5 // pred_fallthru
        _
      %p3332 = scmp.le.s32.totalorder 2, %s15
      // Predicated region
      $region65: #{gen_high_fc_forward.2} parent=5 // pred_check
        %p3333 = pneg %p3332
      $region66: #{gen_high_fc_forward.2} parent=5 // pred_check_branch
        %3335 = sbr.rel (%p3333) target = $region68
      $region67: #{gen_high_fc_forward.2} parent=5 // pred_region
        %s3336 = ssub.s32 %s15, 2
        // Predicated region
        $region69: #{gen_high_fc_forward.2} parent=67 // pred_check
          %p3337 = pneg %p206
        $region70: #{gen_high_fc_forward.2} parent=67 // pred_check_branch
          %3339 = sbr.rel (%p3337) target = $region72
        $region71: #{gen_high_fc_forward.2} parent=67 // pred_region
          %s3340 = smul.u32 4, %s21
          %p3341 = scmp.lt.s32.totalorder %s3340, 15
          %s3342 = scalar_select %p3341, %s3340, 15
          %s3343 = smul.addr %s3342, 8
          %s3344 = scalar_lea.vmem %s7, %s3343
        $region72: #{gen_high_fc_forward.2} parent=67 // pred_fallthru
          _
      $region68: #{gen_high_fc_forward.2} parent=5 // pred_fallthru
        _
    $region6: #{gen_high_fc_forward.2} parent=1 // loop_footer
      %s19 = sadd.s32 1, %s15
    $region7: #{gen_high_fc_forward.2} parent=1 // loop_footer_branch
      %14 = sbr.rel target = $region3
    $region8: #{gen_high_fc_forward.2} parent=1 // loop_exit
      _
    %3345 = vsyncpa [#allocation3], 1
    %s3346 = scalar_lea.sflag [#allocation3], 1
    %3347 = vsyncpa %s3346, 1
    %3348 = vsyncpa [#allocation5], 1

// kernel: gen_high_fc_forward.3
$region0: #{gen_high_fc_forward.3}
  #allocation0 [shape = 'u32[]', space=smem, size = 0x4, offset = 0x4, fixed_abs, tag = 'smem constant byte address 0x4 - core index']
  #allocation1 [shape = 'u32[72,128]{1,0:T(1,128)}', space=vmem, size = 0x9000, scoped, tag = 'internal scratch']
  %s0 = inlined_call_operand.vmem [shape: f32[8,2048], index: 0, kind: input, shape index: {}]
  %s1 = inlined_call_operand.hbm [shape: f32[2048,3072], index: 1, kind: input, shape index: {}]
  %s2 = inlined_call_operand.hbm [shape: f32[1,3072], index: 2, kind: input, shape index: {}]
  %s3 = inlined_call_operand.hbm [shape: f32[8,3072], index: 3, kind: output, shape index: {}]
  %s4 = sld [smem:[#allocation0]]
  $region53: #{gen_high_fc_forward.3} parent=0
    _
  %s6 = ssub.s32 1, %s4
  %s7 = scalar_select 0, %s6, %s4
  $region1: #{gen_high_fc_forward.3} parent=0
    #allocation2 [shape = 'u8[8388608]{0}', space=vmem, size = 0x800000, scoped, tag = 'input window, operand 1']
    #allocation3 [shape = 's32[2]{0}', space=sflag, size = 0x8, scoped, tag = 'scoped memory for gen_high_fc_forward.3']
    #allocation4 [shape = 's32[2]{0}', space=sflag, size = 0x8, scoped, tag = 'scoped memory for gen_high_fc_forward.3']
    #allocation5 [shape = 'u8[4096]{0}', space=vmem, size = 0x1000, scoped, tag = 'input window, operand 2']
    #allocation6 [shape = 's32[2]{0}', space=sflag, size = 0x8, scoped, tag = 'scoped memory for gen_high_fc_forward.3']
    #allocation7 [shape = 'u8[32768]{0}', space=vmem, size = 0x8000, scoped, tag = 'output window, operand 0']
    %8 = vsyncpa [#allocation3], 0
    %s9 = scalar_lea.sflag [#allocation3], 1
    %10 = vsyncpa %s9, 0
    %11 = vsyncpa [#allocation6], 0
    %s12 = scalar_lea.sflag [#allocation6], 1
    %13 = vsyncpa %s12, 0
    %14 = vsyncpa [#allocation4], 0
    %s15 = scalar_lea.sflag [#allocation4], 1
    %16 = vsyncpa %s15, 0
    loop: start=0, step=1, limit=8
    $region2: #{gen_high_fc_forward.3} parent=1 // loop_pre_header
      _
    $region3: #{gen_high_fc_forward.3} parent=1 // loop_header
      %s18 = sphi 0, %s22
      %p19 = scmp.ge.s32.totalorder %s18, 8
      %s26 = sphi 0, %s26
      %s28 = sphi 0, %s26
      %s29 = sphi 0, %s28
      %s43 = sphi 0, %s29
      %s49 = sphi 0, %s51
      %s52 = sphi 0, %s49
      %s53 = sphi 0, %s52
      %s69 = sphi 0, %s53
      %s75 = sphi 0, %s77
      %s78 = sphi 0, %s75
      %s79 = sphi 0, %s78
      %s95 = sphi 0, %s79
      %s101 = sphi 0, %s103
      %s104 = sphi 0, %s101
      %s105 = sphi 0, %s104
      %s121 = sphi 0, %s105
    $region4: #{gen_high_fc_forward.3} parent=1 // loop_header_branch
      %21 = sbr.rel (%p19) target = $region8
    $region5: #{gen_high_fc_forward.3} parent=1 // loop_body
      %s23 = ssub.s32 %s18, 1
      %s24 = ssub.s32 %s18, 2
      %s25 = sadd.s32 %s18, 1
      %s27 = sadd.s32 %s26, 1
      %p30 = scmp.eq.s32.totalorder %s18, 5
      %p31 = scmp.ne.s32.totalorder %s26, %s28
      %p32 = scmp.eq.s32.totalorder %s18, 0
      %p33 = por %p31, %p32
      %p34 = scmp.ne.s32.totalorder %s26, %s28
      %p35 = scmp.eq.s32.totalorder %s23, 5
      %p36 = por %p34, %p35
      %p37 = scmp.ne.s32.totalorder %s28, %s29
      %p38 = scmp.eq.s32.totalorder %s23, 0
      %p39 = por %p37, %p38
      %p40 = scmp.ne.s32.totalorder %s28, %s29
      %p41 = scmp.eq.s32.totalorder %s24, 5
      %p42 = por %p40, %p41
      %p44 = scmp.ne.s32.totalorder %s29, %s43
      %p45 = scmp.eq.s32.totalorder %s24, 0
      %p46 = por %p44, %p45
      %s47 = ssub.s32 %s18, %s25
      %p48 = scmp.eq.s32.totalorder %s47, 0
      %s50 = sadd.s32 %s49, 1
      %s51 = scalar_select %p48, %s49, %s50
      %p54 = pneg %p48
      %p55 = scmp.eq.s32.totalorder %s18, 5
      %p56 = por %p54, %p55
      %p57 = scmp.ne.s32.totalorder %s49, %s52
      %p58 = scmp.eq.s32.totalorder %s18, 0
      %p59 = por %p57, %p58
      %p60 = scmp.ne.s32.totalorder %s49, %s52
      %p61 = scmp.eq.s32.totalorder %s23, 5
      %p62 = por %p60, %p61
      %p63 = scmp.ne.s32.totalorder %s52, %s53
      %p64 = scmp.eq.s32.totalorder %s23, 0
      %p65 = por %p63, %p64
      %p66 = scmp.ne.s32.totalorder %s52, %s53
      %p67 = scmp.eq.s32.totalorder %s24, 5
      %p68 = por %p66, %p67
      %p70 = scmp.ne.s32.totalorder %s53, %s69
      %p71 = scmp.eq.s32.totalorder %s24, 0
      %p72 = por %p70, %p71
      %s73 = ssub.s32 %s18, %s25
      %p74 = scmp.eq.s32.totalorder %s73, 0
      %s76 = sadd.s32 %s75, 1
      %s77 = scalar_select %p74, %s75, %s76
      %p80 = pneg %p74
      %p81 = scmp.eq.s32.totalorder %s18, 5
      %p82 = por %p80, %p81
      %p83 = scmp.ne.s32.totalorder %s75, %s78
      %p84 = scmp.eq.s32.totalorder %s18, 0
      %p85 = por %p83, %p84
      %p86 = scmp.ne.s32.totalorder %s75, %s78
      %p87 = scmp.eq.s32.totalorder %s23, 5
      %p88 = por %p86, %p87
      %p89 = scmp.ne.s32.totalorder %s78, %s79
      %p90 = scmp.eq.s32.totalorder %s23, 0
      %p91 = por %p89, %p90
      %p92 = scmp.ne.s32.totalorder %s78, %s79
      %p93 = scmp.eq.s32.totalorder %s24, 5
      %p94 = por %p92, %p93
      %p96 = scmp.ne.s32.totalorder %s79, %s95
      %p97 = scmp.eq.s32.totalorder %s24, 0
      %p98 = por %p96, %p97
      %s99 = ssub.s32 %s18, %s25
      %p100 = scmp.eq.s32.totalorder %s99, 0
      %s102 = sadd.s32 %s101, 1
      %s103 = scalar_select %p100, %s101, %s102
      %p106 = pneg %p100
      %p107 = scmp.eq.s32.totalorder %s18, 5
      %p108 = por %p106, %p107
      %p109 = scmp.ne.s32.totalorder %s101, %s104
      %p110 = scmp.eq.s32.totalorder %s18, 0
      %p111 = por %p109, %p110
      %p112 = scmp.ne.s32.totalorder %s101, %s104
      %p113 = scmp.eq.s32.totalorder %s23, 5
      %p114 = por %p112, %p113
      %p115 = scmp.ne.s32.totalorder %s104, %s105
      %p116 = scmp.eq.s32.totalorder %s23, 0
      %p117 = por %p115, %p116
      %p118 = scmp.ne.s32.totalorder %s104, %s105
      %p119 = scmp.eq.s32.totalorder %s24, 5
      %p120 = por %p118, %p119
      %p122 = scmp.ne.s32.totalorder %s105, %s121
      %p123 = scmp.eq.s32.totalorder %s24, 0
      %p124 = por %p122, %p123
      %p125 = scmp.le.s32.totalorder 1, %s18
      %p126 = scmp.lt.s32.totalorder %s18, 7
      %p127 = pnand %p125, %p126
      %p128 = pneg %p127
      // Predicated region
      $region9: #{gen_high_fc_forward.3} parent=5 // pred_check
        _
      $region10: #{gen_high_fc_forward.3} parent=5 // pred_check_branch
        %130 = sbr.rel (%p127) target = $region12
      $region11: #{gen_high_fc_forward.3} parent=5 // pred_region
        %s131 = ssub.s32 %s18, 1
        // Predicated region
        $region13: #{gen_high_fc_forward.3} parent=11 // pred_check
          %p132 = pneg %p39
        $region14: #{gen_high_fc_forward.3} parent=11 // pred_check_branch
          %134 = sbr.rel (%p132) target = $region16
        $region15: #{gen_high_fc_forward.3} parent=11 // pred_region
          _
        $region16: #{gen_high_fc_forward.3} parent=11 // pred_fallthru
          _
      $region12: #{gen_high_fc_forward.3} parent=5 // pred_fallthru
        _
      %p135 = scmp.lt.s32.totalorder %s18, 6
      // Predicated region
      $region17: #{gen_high_fc_forward.3} parent=5 // pred_check
        %p136 = pneg %p135
      $region18: #{gen_high_fc_forward.3} parent=5 // pred_check_branch
        %138 = sbr.rel (%p136) target = $region20
      $region19: #{gen_high_fc_forward.3} parent=5 // pred_region
        // Predicated region
        $region21: #{gen_high_fc_forward.3} parent=19 // pred_check
          %p139 = pneg %p59
        $region22: #{gen_high_fc_forward.3} parent=19 // pred_check_branch
          %141 = sbr.rel (%p139) target = $region24
        $region23: #{gen_high_fc_forward.3} parent=19 // pred_region
          %s142 = sand.u32 %s49, 1
          %s143 = scalar_lea.sflag [#allocation3], %s142
          %s144 = sand.u32 %s49, 1
          %s145 = smul.addr %s144, 8192
          %s146 = scalar_lea.vmem [#allocation2], %s145
          %s147 = smul.u32 4, %s18
          %149 = vsyncadd %s143, 0
          %s150 = smul.addr %s147, 8
          %s151 = scalar_lea.hbm %s1, %s150
          %s152 = sshll.u32 %s151, 4
          %s153 = int_to_ptr.hbm [resolvable:$true] %s152
          %s154 = sshll.u32 %s146, 4
          %s155 = int_to_ptr.vmem [resolvable:$true] %s154
          %160 = dma.hbm_to_vmem [thread:$0]  %s153, 131072, %s155, %s143, 3072, 512, 32
        $region24: #{gen_high_fc_forward.3} parent=19 // pred_fallthru
          _
        // Predicated region
        $region25: #{gen_high_fc_forward.3} parent=19 // pred_check
          %p161 = pneg %p85
        $region26: #{gen_high_fc_forward.3} parent=19 // pred_check_branch
          %163 = sbr.rel (%p161) target = $region28
        $region27: #{gen_high_fc_forward.3} parent=19 // pred_region
          %s164 = sand.u32 %s75, 1
          %s165 = scalar_lea.sflag [#allocation6], %s164
          %s166 = sand.u32 %s75, 1
          %s167 = smul.addr %s166, 4
          %s168 = scalar_lea.vmem [#allocation5], %s167
          %s169 = smul.u32 4, %s18
          %171 = vsyncadd %s165, 0
          %s172 = scalar_lea.hbm %s2, %s169
          %s174 = sshll.u32 %s172, 4
          %s175 = int_to_ptr.hbm [resolvable:$true] %s174
          %s176 = sshll.u32 %s168, 4
          %s177 = int_to_ptr.vmem [resolvable:$true] %s176
          %179 = dma.hbm_to_vmem [thread:$0]  %s175, 64, %s177, %s165
        $region28: #{gen_high_fc_forward.3} parent=19 // pred_fallthru
          _
      $region20: #{gen_high_fc_forward.3} parent=5 // pred_fallthru
        _
      %p180 = scmp.le.s32.totalorder 1, %s18
      %p181 = scmp.lt.s32.totalorder %s18, 7
      %p182 = pnand %p180, %p181
      %p183 = pneg %p182
      // Predicated region
      $region29: #{gen_high_fc_forward.3} parent=5 // pred_check
        _
      $region30: #{gen_high_fc_forward.3} parent=5 // pred_check_branch
        %185 = sbr.rel (%p182) target = $region32
      $region31: #{gen_high_fc_forward.3} parent=5 // pred_region
        %s186 = ssub.s32 %s18, 1
        %s187 = sand.u32 %s52, 1
        %s188 = scalar_lea.sflag [#allocation3], %s187
        %s189 = sand.u32 %s52, 1
        %s190 = smul.addr %s189, 8192
        %s191 = scalar_lea.vmem [#allocation2], %s190
        // Predicated region
        $region33: #{gen_high_fc_forward.3} parent=31 // pred_check
          %p192 = pneg %p65
        $region34: #{gen_high_fc_forward.3} parent=31 // pred_check_branch
          %194 = sbr.rel (%p192) target = $region36
        $region35: #{gen_high_fc_forward.3} parent=31 // pred_region
          %196 = dma.done %s188, 131072
        $region36: #{gen_high_fc_forward.3} parent=31 // pred_fallthru
          _
        %s197 = sand.u32 %s78, 1
        %s198 = scalar_lea.sflag [#allocation6], %s197
        %s199 = sand.u32 %s78, 1
        %s200 = smul.addr %s199, 4
        %s201 = scalar_lea.vmem [#allocation5], %s200
        // Predicated region
        $region37: #{gen_high_fc_forward.3} parent=31 // pred_check
          %p202 = pneg %p91
        $region38: #{gen_high_fc_forward.3} parent=31 // pred_check_branch
          %204 = sbr.rel (%p202) target = $region40
        $region39: #{gen_high_fc_forward.3} parent=31 // pred_region
          %206 = dma.done %s198, 64
        $region40: #{gen_high_fc_forward.3} parent=31 // pred_fallthru
          _
        %p207 = pneg %p39
        %p208 = pneg %p36
        %s209 = sand.u32 %s52, 1
        %s210 = scalar_lea.sflag [#allocation3], %s209
        %s211 = sand.u32 %s52, 1
        %s212 = smul.addr %s211, 8192
        %s213 = scalar_lea.vmem [#allocation2], %s212
        %p214 = pneg %p65
        %p215 = pneg %p62
        %s216 = sand.u32 %s78, 1
        %s217 = scalar_lea.sflag [#allocation6], %s216
        %s218 = sand.u32 %s78, 1
        %s219 = smul.addr %s218, 4
        %s220 = scalar_lea.vmem [#allocation5], %s219
        %p221 = pneg %p91
        %p222 = pneg %p88
        %p223 = pneg %p117
        %p224 = pneg %p114
        %s225 = sand.u32 %s104, 1
        %s226 = scalar_lea.sflag [#allocation4], %s225
        %s227 = sand.u32 %s104, 1
        %s228 = smul.addr %s227, 32
        %s229 = scalar_lea.vmem [#allocation7], %s228
        %s230 = smul.u32 4, %s23
        %s231 = smul.u32 4, %s23
        %s232 = smul.u32 4, %s23
        %v233 = vld [vmem:[%s0] sm:$0xff]
        %v234 = vld [vmem:[%s0 + $0x8] sm:$0xff]
        %v235 = vld [vmem:[%s0 + $0x10] sm:$0xff]
        %v236 = vld [vmem:[%s0 + $0x18] sm:$0xff]
        %v237 = vld [vmem:[%s0 + $0x20] sm:$0xff]
        %v238 = vld [vmem:[%s0 + $0x28] sm:$0xff]
        %v239 = vld [vmem:[%s0 + $0x30] sm:$0xff]
        %v240 = vld [vmem:[%s0 + $0x38] sm:$0xff]
        %v241 = vld [vmem:[%s0 + $0x40] sm:$0xff]
        %v242 = vld [vmem:[%s0 + $0x48] sm:$0xff]
        %v243 = vld [vmem:[%s0 + $0x50] sm:$0xff]
        %v244 = vld [vmem:[%s0 + $0x58] sm:$0xff]
        %v245 = vld [vmem:[%s0 + $0x60] sm:$0xff]
        %v246 = vld [vmem:[%s0 + $0x68] sm:$0xff]
        %v247 = vld [vmem:[%s0 + $0x70] sm:$0xff]
        %v248 = vld [vmem:[%s0 + $0x78] sm:$0xff]
        %v249 = vld [vmem:[%s191] sm:$0xff]
        %v250 = vld [vmem:[%s191 + $0x8] sm:$0xff]
        %v251 = vld [vmem:[%s191 + $0x10] sm:$0xff]
        %v252 = vld [vmem:[%s191 + $0x18] sm:$0xff]
        %v253 = vld [vmem:[%s191 + $0x20] sm:$0xff]
        %v254 = vld [vmem:[%s191 + $0x28] sm:$0xff]
        %v255 = vld [vmem:[%s191 + $0x30] sm:$0xff]
        %v256 = vld [vmem:[%s191 + $0x38] sm:$0xff]
        %v257 = vld [vmem:[%s191 + $0x40] sm:$0xff]
        %v258 = vld [vmem:[%s191 + $0x48] sm:$0xff]
        %v259 = vld [vmem:[%s191 + $0x50] sm:$0xff]
        %v260 = vld [vmem:[%s191 + $0x58] sm:$0xff]
        %v261 = vld [vmem:[%s191 + $0x60] sm:$0xff]
        %v262 = vld [vmem:[%s191 + $0x68] sm:$0xff]
        %v263 = vld [vmem:[%s191 + $0x70] sm:$0xff]
        %v264 = vld [vmem:[%s191 + $0x78] sm:$0xff]
        %v265 = vld [vmem:[%s191 + $0x80] sm:$0xff]
        %v266 = vld [vmem:[%s191 + $0x88] sm:$0xff]
        %v267 = vld [vmem:[%s191 + $0x90] sm:$0xff]
        %v268 = vld [vmem:[%s191 + $0x98] sm:$0xff]
        %v269 = vld [vmem:[%s191 + $0xa0] sm:$0xff]
        %v270 = vld [vmem:[%s191 + $0xa8] sm:$0xff]
        %v271 = vld [vmem:[%s191 + $0xb0] sm:$0xff]
        %v272 = vld [vmem:[%s191 + $0xb8] sm:$0xff]
        %v273 = vld [vmem:[%s191 + $0xc0] sm:$0xff]
        %v274 = vld [vmem:[%s191 + $0xc8] sm:$0xff]
        %v275 = vld [vmem:[%s191 + $0xd0] sm:$0xff]
        %v276 = vld [vmem:[%s191 + $0xd8] sm:$0xff]
        %v277 = vld [vmem:[%s191 + $0xe0] sm:$0xff]
        %v278 = vld [vmem:[%s191 + $0xe8] sm:$0xff]
        %v279 = vld [vmem:[%s191 + $0xf0] sm:$0xff]
        %v280 = vld [vmem:[%s191 + $0xf8] sm:$0xff]
        %v281 = vld [vmem:[%s191 + $0x100] sm:$0xff]
        %v282 = vld [vmem:[%s191 + $0x108] sm:$0xff]
        %v283 = vld [vmem:[%s191 + $0x110] sm:$0xff]
        %v284 = vld [vmem:[%s191 + $0x118] sm:$0xff]
        %v285 = vld [vmem:[%s191 + $0x120] sm:$0xff]
        %v286 = vld [vmem:[%s191 + $0x128] sm:$0xff]
        %v287 = vld [vmem:[%s191 + $0x130] sm:$0xff]
        %v288 = vld [vmem:[%s191 + $0x138] sm:$0xff]
        %v289 = vld [vmem:[%s191 + $0x140] sm:$0xff]
        %v290 = vld [vmem:[%s191 + $0x148] sm:$0xff]
        %v291 = vld [vmem:[%s191 + $0x150] sm:$0xff]
        %v292 = vld [vmem:[%s191 + $0x158] sm:$0xff]
        %v293 = vld [vmem:[%s191 + $0x160] sm:$0xff]
        %v294 = vld [vmem:[%s191 + $0x168] sm:$0xff]
        %v295 = vld [vmem:[%s191 + $0x170] sm:$0xff]
        %v296 = vld [vmem:[%s191 + $0x178] sm:$0xff]
        %v297 = vld [vmem:[%s191 + $0x180] sm:$0xff]
        %v298 = vld [vmem:[%s191 + $0x188] sm:$0xff]
        %v299 = vld [vmem:[%s191 + $0x190] sm:$0xff]
        %v300 = vld [vmem:[%s191 + $0x198] sm:$0xff]
        %v301 = vld [vmem:[%s191 + $0x1a0] sm:$0xff]
        %v302 = vld [vmem:[%s191 + $0x1a8] sm:$0xff]
        %v303 = vld [vmem:[%s191 + $0x1b0] sm:$0xff]
        %v304 = vld [vmem:[%s191 + $0x1b8] sm:$0xff]
        %v305 = vld [vmem:[%s191 + $0x1c0] sm:$0xff]
        %v306 = vld [vmem:[%s191 + $0x1c8] sm:$0xff]
        %v307 = vld [vmem:[%s191 + $0x1d0] sm:$0xff]
        %v308 = vld [vmem:[%s191 + $0x1d8] sm:$0xff]
        %v309 = vld [vmem:[%s191 + $0x1e0] sm:$0xff]
        %v310 = vld [vmem:[%s191 + $0x1e8] sm:$0xff]
        %v311 = vld [vmem:[%s191 + $0x1f0] sm:$0xff]
        %v312 = vld [vmem:[%s191 + $0x1f8] sm:$0xff]
        %v313 = vld [vmem:[%s191 + $0x200] sm:$0xff]
        %v314 = vld [vmem:[%s191 + $0x208] sm:$0xff]
        %v315 = vld [vmem:[%s191 + $0x210] sm:$0xff]
        %v316 = vld [vmem:[%s191 + $0x218] sm:$0xff]
        %v317 = vld [vmem:[%s191 + $0x220] sm:$0xff]
        %v318 = vld [vmem:[%s191 + $0x228] sm:$0xff]
        %v319 = vld [vmem:[%s191 + $0x230] sm:$0xff]
        %v320 = vld [vmem:[%s191 + $0x238] sm:$0xff]
        %v321 = vld [vmem:[%s191 + $0x240] sm:$0xff]
        %v322 = vld [vmem:[%s191 + $0x248] sm:$0xff]
        %v323 = vld [vmem:[%s191 + $0x250] sm:$0xff]
        %v324 = vld [vmem:[%s191 + $0x258] sm:$0xff]
        %v325 = vld [vmem:[%s191 + $0x260] sm:$0xff]
        %v326 = vld [vmem:[%s191 + $0x268] sm:$0xff]
        %v327 = vld [vmem:[%s191 + $0x270] sm:$0xff]
        %v328 = vld [vmem:[%s191 + $0x278] sm:$0xff]
        %v329 = vld [vmem:[%s191 + $0x280] sm:$0xff]
        %v330 = vld [vmem:[%s191 + $0x288] sm:$0xff]
        %v331 = vld [vmem:[%s191 + $0x290] sm:$0xff]
        %v332 = vld [vmem:[%s191 + $0x298] sm:$0xff]
        %v333 = vld [vmem:[%s191 + $0x2a0] sm:$0xff]
        %v334 = vld [vmem:[%s191 + $0x2a8] sm:$0xff]
        %v335 = vld [vmem:[%s191 + $0x2b0] sm:$0xff]
        %v336 = vld [vmem:[%s191 + $0x2b8] sm:$0xff]
        %v337 = vld [vmem:[%s191 + $0x2c0] sm:$0xff]
        %v338 = vld [vmem:[%s191 + $0x2c8] sm:$0xff]
        %v339 = vld [vmem:[%s191 + $0x2d0] sm:$0xff]
        %v340 = vld [vmem:[%s191 + $0x2d8] sm:$0xff]
        %v341 = vld [vmem:[%s191 + $0x2e0] sm:$0xff]
        %v342 = vld [vmem:[%s191 + $0x2e8] sm:$0xff]
        %v343 = vld [vmem:[%s191 + $0x2f0] sm:$0xff]
        %v344 = vld [vmem:[%s191 + $0x2f8] sm:$0xff]
        %v345 = vld [vmem:[%s191 + $0x300] sm:$0xff]
        %v346 = vld [vmem:[%s191 + $0x308] sm:$0xff]
        %v347 = vld [vmem:[%s191 + $0x310] sm:$0xff]
        %v348 = vld [vmem:[%s191 + $0x318] sm:$0xff]
        %v349 = vld [vmem:[%s191 + $0x320] sm:$0xff]
        %v350 = vld [vmem:[%s191 + $0x328] sm:$0xff]
        %v351 = vld [vmem:[%s191 + $0x330] sm:$0xff]
        %v352 = vld [vmem:[%s191 + $0x338] sm:$0xff]
        %v353 = vld [vmem:[%s191 + $0x340] sm:$0xff]
        %v354 = vld [vmem:[%s191 + $0x348] sm:$0xff]
        %v355 = vld [vmem:[%s191 + $0x350] sm:$0xff]
        %v356 = vld [vmem:[%s191 + $0x358] sm:$0xff]
        %v357 = vld [vmem:[%s191 + $0x360] sm:$0xff]
        %v358 = vld [vmem:[%s191 + $0x368] sm:$0xff]
        %v359 = vld [vmem:[%s191 + $0x370] sm:$0xff]
        %v360 = vld [vmem:[%s191 + $0x378] sm:$0xff]
        %v361 = vld [vmem:[%s191 + $0x380] sm:$0xff]
        %v362 = vld [vmem:[%s191 + $0x388] sm:$0xff]
        %v363 = vld [vmem:[%s191 + $0x390] sm:$0xff]
        %v364 = vld [vmem:[%s191 + $0x398] sm:$0xff]
        %v365 = vld [vmem:[%s191 + $0x3a0] sm:$0xff]
        %v366 = vld [vmem:[%s191 + $0x3a8] sm:$0xff]
        %v367 = vld [vmem:[%s191 + $0x3b0] sm:$0xff]
        %v368 = vld [vmem:[%s191 + $0x3b8] sm:$0xff]
        %v369 = vld [vmem:[%s191 + $0x3c0] sm:$0xff]
        %v370 = vld [vmem:[%s191 + $0x3c8] sm:$0xff]
        %v371 = vld [vmem:[%s191 + $0x3d0] sm:$0xff]
        %v372 = vld [vmem:[%s191 + $0x3d8] sm:$0xff]
        %v373 = vld [vmem:[%s191 + $0x3e0] sm:$0xff]
        %v374 = vld [vmem:[%s191 + $0x3e8] sm:$0xff]
        %v375 = vld [vmem:[%s191 + $0x3f0] sm:$0xff]
        %v376 = vld [vmem:[%s191 + $0x3f8] sm:$0xff]
        %v377 = vld [vmem:[%s191 + $0x400] sm:$0xff]
        %v378 = vld [vmem:[%s191 + $0x408] sm:$0xff]
        %v379 = vld [vmem:[%s191 + $0x410] sm:$0xff]
        %v380 = vld [vmem:[%s191 + $0x418] sm:$0xff]
        %v381 = vld [vmem:[%s191 + $0x420] sm:$0xff]
        %v382 = vld [vmem:[%s191 + $0x428] sm:$0xff]
        %v383 = vld [vmem:[%s191 + $0x430] sm:$0xff]
        %v384 = vld [vmem:[%s191 + $0x438] sm:$0xff]
        %v385 = vld [vmem:[%s191 + $0x440] sm:$0xff]
        %v386 = vld [vmem:[%s191 + $0x448] sm:$0xff]
        %v387 = vld [vmem:[%s191 + $0x450] sm:$0xff]
        %v388 = vld [vmem:[%s191 + $0x458] sm:$0xff]
        %v389 = vld [vmem:[%s191 + $0x460] sm:$0xff]
        %v390 = vld [vmem:[%s191 + $0x468] sm:$0xff]
        %v391 = vld [vmem:[%s191 + $0x470] sm:$0xff]
        %v392 = vld [vmem:[%s191 + $0x478] sm:$0xff]
        %v393 = vld [vmem:[%s191 + $0x480] sm:$0xff]
        %v394 = vld [vmem:[%s191 + $0x488] sm:$0xff]
        %v395 = vld [vmem:[%s191 + $0x490] sm:$0xff]
        %v396 = vld [vmem:[%s191 + $0x498] sm:$0xff]
        %v397 = vld [vmem:[%s191 + $0x4a0] sm:$0xff]
        %v398 = vld [vmem:[%s191 + $0x4a8] sm:$0xff]
        %v399 = vld [vmem:[%s191 + $0x4b0] sm:$0xff]
        %v400 = vld [vmem:[%s191 + $0x4b8] sm:$0xff]
        %v401 = vld [vmem:[%s191 + $0x4c0] sm:$0xff]
        %v402 = vld [vmem:[%s191 + $0x4c8] sm:$0xff]
        %v403 = vld [vmem:[%s191 + $0x4d0] sm:$0xff]
        %v404 = vld [vmem:[%s191 + $0x4d8] sm:$0xff]
        %v405 = vld [vmem:[%s191 + $0x4e0] sm:$0xff]
        %v406 = vld [vmem:[%s191 + $0x4e8] sm:$0xff]
        %v407 = vld [vmem:[%s191 + $0x4f0] sm:$0xff]
        %v408 = vld [vmem:[%s191 + $0x4f8] sm:$0xff]
        %v409 = vld [vmem:[%s191 + $0x500] sm:$0xff]
        %v410 = vld [vmem:[%s191 + $0x508] sm:$0xff]
        %v411 = vld [vmem:[%s191 + $0x510] sm:$0xff]
        %v412 = vld [vmem:[%s191 + $0x518] sm:$0xff]
        %v413 = vld [vmem:[%s191 + $0x520] sm:$0xff]
        %v414 = vld [vmem:[%s191 + $0x528] sm:$0xff]
        %v415 = vld [vmem:[%s191 + $0x530] sm:$0xff]
        %v416 = vld [vmem:[%s191 + $0x538] sm:$0xff]
        %v417 = vld [vmem:[%s191 + $0x540] sm:$0xff]
        %v418 = vld [vmem:[%s191 + $0x548] sm:$0xff]
        %v419 = vld [vmem:[%s191 + $0x550] sm:$0xff]
        %v420 = vld [vmem:[%s191 + $0x558] sm:$0xff]
        %v421 = vld [vmem:[%s191 + $0x560] sm:$0xff]
        %v422 = vld [vmem:[%s191 + $0x568] sm:$0xff]
        %v423 = vld [vmem:[%s191 + $0x570] sm:$0xff]
        %v424 = vld [vmem:[%s191 + $0x578] sm:$0xff]
        %v425 = vld [vmem:[%s191 + $0x580] sm:$0xff]
        %v426 = vld [vmem:[%s191 + $0x588] sm:$0xff]
        %v427 = vld [vmem:[%s191 + $0x590] sm:$0xff]
        %v428 = vld [vmem:[%s191 + $0x598] sm:$0xff]
        %v429 = vld [vmem:[%s191 + $0x5a0] sm:$0xff]
        %v430 = vld [vmem:[%s191 + $0x5a8] sm:$0xff]
        %v431 = vld [vmem:[%s191 + $0x5b0] sm:$0xff]
        %v432 = vld [vmem:[%s191 + $0x5b8] sm:$0xff]
        %v433 = vld [vmem:[%s191 + $0x5c0] sm:$0xff]
        %v434 = vld [vmem:[%s191 + $0x5c8] sm:$0xff]
        %v435 = vld [vmem:[%s191 + $0x5d0] sm:$0xff]
        %v436 = vld [vmem:[%s191 + $0x5d8] sm:$0xff]
        %v437 = vld [vmem:[%s191 + $0x5e0] sm:$0xff]
        %v438 = vld [vmem:[%s191 + $0x5e8] sm:$0xff]
        %v439 = vld [vmem:[%s191 + $0x5f0] sm:$0xff]
        %v440 = vld [vmem:[%s191 + $0x5f8] sm:$0xff]
        %v441 = vld [vmem:[%s191 + $0x600] sm:$0xff]
        %v442 = vld [vmem:[%s191 + $0x608] sm:$0xff]
        %v443 = vld [vmem:[%s191 + $0x610] sm:$0xff]
        %v444 = vld [vmem:[%s191 + $0x618] sm:$0xff]
        %v445 = vld [vmem:[%s191 + $0x620] sm:$0xff]
        %v446 = vld [vmem:[%s191 + $0x628] sm:$0xff]
        %v447 = vld [vmem:[%s191 + $0x630] sm:$0xff]
        %v448 = vld [vmem:[%s191 + $0x638] sm:$0xff]
        %v449 = vld [vmem:[%s191 + $0x640] sm:$0xff]
        %v450 = vld [vmem:[%s191 + $0x648] sm:$0xff]
        %v451 = vld [vmem:[%s191 + $0x650] sm:$0xff]
        %v452 = vld [vmem:[%s191 + $0x658] sm:$0xff]
        %v453 = vld [vmem:[%s191 + $0x660] sm:$0xff]
        %v454 = vld [vmem:[%s191 + $0x668] sm:$0xff]
        %v455 = vld [vmem:[%s191 + $0x670] sm:$0xff]
        %v456 = vld [vmem:[%s191 + $0x678] sm:$0xff]
        %v457 = vld [vmem:[%s191 + $0x680] sm:$0xff]
        %v458 = vld [vmem:[%s191 + $0x688] sm:$0xff]
        %v459 = vld [vmem:[%s191 + $0x690] sm:$0xff]
        %v460 = vld [vmem:[%s191 + $0x698] sm:$0xff]
        %v461 = vld [vmem:[%s191 + $0x6a0] sm:$0xff]
        %v462 = vld [vmem:[%s191 + $0x6a8] sm:$0xff]
        %v463 = vld [vmem:[%s191 + $0x6b0] sm:$0xff]
        %v464 = vld [vmem:[%s191 + $0x6b8] sm:$0xff]
        %v465 = vld [vmem:[%s191 + $0x6c0] sm:$0xff]
        %v466 = vld [vmem:[%s191 + $0x6c8] sm:$0xff]
        %v467 = vld [vmem:[%s191 + $0x6d0] sm:$0xff]
        %v468 = vld [vmem:[%s191 + $0x6d8] sm:$0xff]
        %v469 = vld [vmem:[%s191 + $0x6e0] sm:$0xff]
        %v470 = vld [vmem:[%s191 + $0x6e8] sm:$0xff]
        %v471 = vld [vmem:[%s191 + $0x6f0] sm:$0xff]
        %v472 = vld [vmem:[%s191 + $0x6f8] sm:$0xff]
        %v473 = vld [vmem:[%s191 + $0x700] sm:$0xff]
        %v474 = vld [vmem:[%s191 + $0x708] sm:$0xff]
        %v475 = vld [vmem:[%s191 + $0x710] sm:$0xff]
        %v476 = vld [vmem:[%s191 + $0x718] sm:$0xff]
        %v477 = vld [vmem:[%s191 + $0x720] sm:$0xff]
        %v478 = vld [vmem:[%s191 + $0x728] sm:$0xff]
        %v479 = vld [vmem:[%s191 + $0x730] sm:$0xff]
        %v480 = vld [vmem:[%s191 + $0x738] sm:$0xff]
        %v481 = vld [vmem:[%s191 + $0x740] sm:$0xff]
        %v482 = vld [vmem:[%s191 + $0x748] sm:$0xff]
        %v483 = vld [vmem:[%s191 + $0x750] sm:$0xff]
        %v484 = vld [vmem:[%s191 + $0x758] sm:$0xff]
        %v485 = vld [vmem:[%s191 + $0x760] sm:$0xff]
        %v486 = vld [vmem:[%s191 + $0x768] sm:$0xff]
        %v487 = vld [vmem:[%s191 + $0x770] sm:$0xff]
        %v488 = vld [vmem:[%s191 + $0x778] sm:$0xff]
        %v489 = vld [vmem:[%s191 + $0x780] sm:$0xff]
        %v490 = vld [vmem:[%s191 + $0x788] sm:$0xff]
        %v491 = vld [vmem:[%s191 + $0x790] sm:$0xff]
        %v492 = vld [vmem:[%s191 + $0x798] sm:$0xff]
        %v493 = vld [vmem:[%s191 + $0x7a0] sm:$0xff]
        %v494 = vld [vmem:[%s191 + $0x7a8] sm:$0xff]
        %v495 = vld [vmem:[%s191 + $0x7b0] sm:$0xff]
        %v496 = vld [vmem:[%s191 + $0x7b8] sm:$0xff]
        %v497 = vld [vmem:[%s191 + $0x7c0] sm:$0xff]
        %v498 = vld [vmem:[%s191 + $0x7c8] sm:$0xff]
        %v499 = vld [vmem:[%s191 + $0x7d0] sm:$0xff]
        %v500 = vld [vmem:[%s191 + $0x7d8] sm:$0xff]
        %v501 = vld [vmem:[%s191 + $0x7e0] sm:$0xff]
        %v502 = vld [vmem:[%s191 + $0x7e8] sm:$0xff]
        %v503 = vld [vmem:[%s191 + $0x7f0] sm:$0xff]
        %v504 = vld [vmem:[%s191 + $0x7f8] sm:$0xff]
        %v505 = vld [vmem:[%s191 + $0x800] sm:$0xff]
        %v506 = vld [vmem:[%s191 + $0x808] sm:$0xff]
        %v507 = vld [vmem:[%s191 + $0x810] sm:$0xff]
        %v508 = vld [vmem:[%s191 + $0x818] sm:$0xff]
        %v509 = vld [vmem:[%s191 + $0x820] sm:$0xff]
        %v510 = vld [vmem:[%s191 + $0x828] sm:$0xff]
        %v511 = vld [vmem:[%s191 + $0x830] sm:$0xff]
        %v512 = vld [vmem:[%s191 + $0x838] sm:$0xff]
        %v513 = vld [vmem:[%s191 + $0x840] sm:$0xff]
        %v514 = vld [vmem:[%s191 + $0x848] sm:$0xff]
        %v515 = vld [vmem:[%s191 + $0x850] sm:$0xff]
        %v516 = vld [vmem:[%s191 + $0x858] sm:$0xff]
        %v517 = vld [vmem:[%s191 + $0x860] sm:$0xff]
        %v518 = vld [vmem:[%s191 + $0x868] sm:$0xff]
        %v519 = vld [vmem:[%s191 + $0x870] sm:$0xff]
        %v520 = vld [vmem:[%s191 + $0x878] sm:$0xff]
        %v521 = vld [vmem:[%s191 + $0x880] sm:$0xff]
        %v522 = vld [vmem:[%s191 + $0x888] sm:$0xff]
        %v523 = vld [vmem:[%s191 + $0x890] sm:$0xff]
        %v524 = vld [vmem:[%s191 + $0x898] sm:$0xff]
        %v525 = vld [vmem:[%s191 + $0x8a0] sm:$0xff]
        %v526 = vld [vmem:[%s191 + $0x8a8] sm:$0xff]
        %v527 = vld [vmem:[%s191 + $0x8b0] sm:$0xff]
        %v528 = vld [vmem:[%s191 + $0x8b8] sm:$0xff]
        %v529 = vld [vmem:[%s191 + $0x8c0] sm:$0xff]
        %v530 = vld [vmem:[%s191 + $0x8c8] sm:$0xff]
        %v531 = vld [vmem:[%s191 + $0x8d0] sm:$0xff]
        %v532 = vld [vmem:[%s191 + $0x8d8] sm:$0xff]
        %v533 = vld [vmem:[%s191 + $0x8e0] sm:$0xff]
        %v534 = vld [vmem:[%s191 + $0x8e8] sm:$0xff]
        %v535 = vld [vmem:[%s191 + $0x8f0] sm:$0xff]
        %v536 = vld [vmem:[%s191 + $0x8f8] sm:$0xff]
        %v537 = vld [vmem:[%s191 + $0x900] sm:$0xff]
        %v538 = vld [vmem:[%s191 + $0x908] sm:$0xff]
        %v539 = vld [vmem:[%s191 + $0x910] sm:$0xff]
        %v540 = vld [vmem:[%s191 + $0x918] sm:$0xff]
        %v541 = vld [vmem:[%s191 + $0x920] sm:$0xff]
        %v542 = vld [vmem:[%s191 + $0x928] sm:$0xff]
        %v543 = vld [vmem:[%s191 + $0x930] sm:$0xff]
        %v544 = vld [vmem:[%s191 + $0x938] sm:$0xff]
        %v545 = vld [vmem:[%s191 + $0x940] sm:$0xff]
        %v546 = vld [vmem:[%s191 + $0x948] sm:$0xff]
        %v547 = vld [vmem:[%s191 + $0x950] sm:$0xff]
        %v548 = vld [vmem:[%s191 + $0x958] sm:$0xff]
        %v549 = vld [vmem:[%s191 + $0x960] sm:$0xff]
        %v550 = vld [vmem:[%s191 + $0x968] sm:$0xff]
        %v551 = vld [vmem:[%s191 + $0x970] sm:$0xff]
        %v552 = vld [vmem:[%s191 + $0x978] sm:$0xff]
        %v553 = vld [vmem:[%s191 + $0x980] sm:$0xff]
        %v554 = vld [vmem:[%s191 + $0x988] sm:$0xff]
        %v555 = vld [vmem:[%s191 + $0x990] sm:$0xff]
        %v556 = vld [vmem:[%s191 + $0x998] sm:$0xff]
        %v557 = vld [vmem:[%s191 + $0x9a0] sm:$0xff]
        %v558 = vld [vmem:[%s191 + $0x9a8] sm:$0xff]
        %v559 = vld [vmem:[%s191 + $0x9b0] sm:$0xff]
        %v560 = vld [vmem:[%s191 + $0x9b8] sm:$0xff]
        %v561 = vld [vmem:[%s191 + $0x9c0] sm:$0xff]
        %v562 = vld [vmem:[%s191 + $0x9c8] sm:$0xff]
        %v563 = vld [vmem:[%s191 + $0x9d0] sm:$0xff]
        %v564 = vld [vmem:[%s191 + $0x9d8] sm:$0xff]
        %v565 = vld [vmem:[%s191 + $0x9e0] sm:$0xff]
        %v566 = vld [vmem:[%s191 + $0x9e8] sm:$0xff]
        %v567 = vld [vmem:[%s191 + $0x9f0] sm:$0xff]
        %v568 = vld [vmem:[%s191 + $0x9f8] sm:$0xff]
        %v569 = vld [vmem:[%s191 + $0xa00] sm:$0xff]
        %v570 = vld [vmem:[%s191 + $0xa08] sm:$0xff]
        %v571 = vld [vmem:[%s191 + $0xa10] sm:$0xff]
        %v572 = vld [vmem:[%s191 + $0xa18] sm:$0xff]
        %v573 = vld [vmem:[%s191 + $0xa20] sm:$0xff]
        %v574 = vld [vmem:[%s191 + $0xa28] sm:$0xff]
        %v575 = vld [vmem:[%s191 + $0xa30] sm:$0xff]
        %v576 = vld [vmem:[%s191 + $0xa38] sm:$0xff]
        %v577 = vld [vmem:[%s191 + $0xa40] sm:$0xff]
        %v578 = vld [vmem:[%s191 + $0xa48] sm:$0xff]
        %v579 = vld [vmem:[%s191 + $0xa50] sm:$0xff]
        %v580 = vld [vmem:[%s191 + $0xa58] sm:$0xff]
        %v581 = vld [vmem:[%s191 + $0xa60] sm:$0xff]
        %v582 = vld [vmem:[%s191 + $0xa68] sm:$0xff]
        %v583 = vld [vmem:[%s191 + $0xa70] sm:$0xff]
        %v584 = vld [vmem:[%s191 + $0xa78] sm:$0xff]
        %v585 = vld [vmem:[%s191 + $0xa80] sm:$0xff]
        %v586 = vld [vmem:[%s191 + $0xa88] sm:$0xff]
        %v587 = vld [vmem:[%s191 + $0xa90] sm:$0xff]
        %v588 = vld [vmem:[%s191 + $0xa98] sm:$0xff]
        %v589 = vld [vmem:[%s191 + $0xaa0] sm:$0xff]
        %v590 = vld [vmem:[%s191 + $0xaa8] sm:$0xff]
        %v591 = vld [vmem:[%s191 + $0xab0] sm:$0xff]
        %v592 = vld [vmem:[%s191 + $0xab8] sm:$0xff]
        %v593 = vld [vmem:[%s191 + $0xac0] sm:$0xff]
        %v594 = vld [vmem:[%s191 + $0xac8] sm:$0xff]
        %v595 = vld [vmem:[%s191 + $0xad0] sm:$0xff]
        %v596 = vld [vmem:[%s191 + $0xad8] sm:$0xff]
        %v597 = vld [vmem:[%s191 + $0xae0] sm:$0xff]
        %v598 = vld [vmem:[%s191 + $0xae8] sm:$0xff]
        %v599 = vld [vmem:[%s191 + $0xaf0] sm:$0xff]
        %v600 = vld [vmem:[%s191 + $0xaf8] sm:$0xff]
        %v601 = vld [vmem:[%s191 + $0xb00] sm:$0xff]
        %v602 = vld [vmem:[%s191 + $0xb08] sm:$0xff]
        %v603 = vld [vmem:[%s191 + $0xb10] sm:$0xff]
        %v604 = vld [vmem:[%s191 + $0xb18] sm:$0xff]
        %v605 = vld [vmem:[%s191 + $0xb20] sm:$0xff]
        %v606 = vld [vmem:[%s191 + $0xb28] sm:$0xff]
        %v607 = vld [vmem:[%s191 + $0xb30] sm:$0xff]
        %v608 = vld [vmem:[%s191 + $0xb38] sm:$0xff]
        %v609 = vld [vmem:[%s191 + $0xb40] sm:$0xff]
        %v610 = vld [vmem:[%s191 + $0xb48] sm:$0xff]
        %v611 = vld [vmem:[%s191 + $0xb50] sm:$0xff]
        %v612 = vld [vmem:[%s191 + $0xb58] sm:$0xff]
        %v613 = vld [vmem:[%s191 + $0xb60] sm:$0xff]
        %v614 = vld [vmem:[%s191 + $0xb68] sm:$0xff]
        %v615 = vld [vmem:[%s191 + $0xb70] sm:$0xff]
        %v616 = vld [vmem:[%s191 + $0xb78] sm:$0xff]
        %v617 = vld [vmem:[%s191 + $0xb80] sm:$0xff]
        %v618 = vld [vmem:[%s191 + $0xb88] sm:$0xff]
        %v619 = vld [vmem:[%s191 + $0xb90] sm:$0xff]
        %v620 = vld [vmem:[%s191 + $0xb98] sm:$0xff]
        %v621 = vld [vmem:[%s191 + $0xba0] sm:$0xff]
        %v622 = vld [vmem:[%s191 + $0xba8] sm:$0xff]
        %v623 = vld [vmem:[%s191 + $0xbb0] sm:$0xff]
        %v624 = vld [vmem:[%s191 + $0xbb8] sm:$0xff]
        %v625 = vld [vmem:[%s191 + $0xbc0] sm:$0xff]
        %v626 = vld [vmem:[%s191 + $0xbc8] sm:$0xff]
        %v627 = vld [vmem:[%s191 + $0xbd0] sm:$0xff]
        %v628 = vld [vmem:[%s191 + $0xbd8] sm:$0xff]
        %v629 = vld [vmem:[%s191 + $0xbe0] sm:$0xff]
        %v630 = vld [vmem:[%s191 + $0xbe8] sm:$0xff]
        %v631 = vld [vmem:[%s191 + $0xbf0] sm:$0xff]
        %v632 = vld [vmem:[%s191 + $0xbf8] sm:$0xff]
        %v633 = vld [vmem:[%s191 + $0xc00] sm:$0xff]
        %v634 = vld [vmem:[%s191 + $0xc08] sm:$0xff]
        %v635 = vld [vmem:[%s191 + $0xc10] sm:$0xff]
        %v636 = vld [vmem:[%s191 + $0xc18] sm:$0xff]
        %v637 = vld [vmem:[%s191 + $0xc20] sm:$0xff]
        %v638 = vld [vmem:[%s191 + $0xc28] sm:$0xff]
        %v639 = vld [vmem:[%s191 + $0xc30] sm:$0xff]
        %v640 = vld [vmem:[%s191 + $0xc38] sm:$0xff]
        %v641 = vld [vmem:[%s191 + $0xc40] sm:$0xff]
        %v642 = vld [vmem:[%s191 + $0xc48] sm:$0xff]
        %v643 = vld [vmem:[%s191 + $0xc50] sm:$0xff]
        %v644 = vld [vmem:[%s191 + $0xc58] sm:$0xff]
        %v645 = vld [vmem:[%s191 + $0xc60] sm:$0xff]
        %v646 = vld [vmem:[%s191 + $0xc68] sm:$0xff]
        %v647 = vld [vmem:[%s191 + $0xc70] sm:$0xff]
        %v648 = vld [vmem:[%s191 + $0xc78] sm:$0xff]
        %v649 = vld [vmem:[%s191 + $0xc80] sm:$0xff]
        %v650 = vld [vmem:[%s191 + $0xc88] sm:$0xff]
        %v651 = vld [vmem:[%s191 + $0xc90] sm:$0xff]
        %v652 = vld [vmem:[%s191 + $0xc98] sm:$0xff]
        %v653 = vld [vmem:[%s191 + $0xca0] sm:$0xff]
        %v654 = vld [vmem:[%s191 + $0xca8] sm:$0xff]
        %v655 = vld [vmem:[%s191 + $0xcb0] sm:$0xff]
        %v656 = vld [vmem:[%s191 + $0xcb8] sm:$0xff]
        %v657 = vld [vmem:[%s191 + $0xcc0] sm:$0xff]
        %v658 = vld [vmem:[%s191 + $0xcc8] sm:$0xff]
        %v659 = vld [vmem:[%s191 + $0xcd0] sm:$0xff]
        %v660 = vld [vmem:[%s191 + $0xcd8] sm:$0xff]
        %v661 = vld [vmem:[%s191 + $0xce0] sm:$0xff]
        %v662 = vld [vmem:[%s191 + $0xce8] sm:$0xff]
        %v663 = vld [vmem:[%s191 + $0xcf0] sm:$0xff]
        %v664 = vld [vmem:[%s191 + $0xcf8] sm:$0xff]
        %v665 = vld [vmem:[%s191 + $0xd00] sm:$0xff]
        %v666 = vld [vmem:[%s191 + $0xd08] sm:$0xff]
        %v667 = vld [vmem:[%s191 + $0xd10] sm:$0xff]
        %v668 = vld [vmem:[%s191 + $0xd18] sm:$0xff]
        %v669 = vld [vmem:[%s191 + $0xd20] sm:$0xff]
        %v670 = vld [vmem:[%s191 + $0xd28] sm:$0xff]
        %v671 = vld [vmem:[%s191 + $0xd30] sm:$0xff]
        %v672 = vld [vmem:[%s191 + $0xd38] sm:$0xff]
        %v673 = vld [vmem:[%s191 + $0xd40] sm:$0xff]
        %v674 = vld [vmem:[%s191 + $0xd48] sm:$0xff]
        %v675 = vld [vmem:[%s191 + $0xd50] sm:$0xff]
        %v676 = vld [vmem:[%s191 + $0xd58] sm:$0xff]
        %v677 = vld [vmem:[%s191 + $0xd60] sm:$0xff]
        %v678 = vld [vmem:[%s191 + $0xd68] sm:$0xff]
        %v679 = vld [vmem:[%s191 + $0xd70] sm:$0xff]
        %v680 = vld [vmem:[%s191 + $0xd78] sm:$0xff]
        %v681 = vld [vmem:[%s191 + $0xd80] sm:$0xff]
        %v682 = vld [vmem:[%s191 + $0xd88] sm:$0xff]
        %v683 = vld [vmem:[%s191 + $0xd90] sm:$0xff]
        %v684 = vld [vmem:[%s191 + $0xd98] sm:$0xff]
        %v685 = vld [vmem:[%s191 + $0xda0] sm:$0xff]
        %v686 = vld [vmem:[%s191 + $0xda8] sm:$0xff]
        %v687 = vld [vmem:[%s191 + $0xdb0] sm:$0xff]
        %v688 = vld [vmem:[%s191 + $0xdb8] sm:$0xff]
        %v689 = vld [vmem:[%s191 + $0xdc0] sm:$0xff]
        %v690 = vld [vmem:[%s191 + $0xdc8] sm:$0xff]
        %v691 = vld [vmem:[%s191 + $0xdd0] sm:$0xff]
        %v692 = vld [vmem:[%s191 + $0xdd8] sm:$0xff]
        %v693 = vld [vmem:[%s191 + $0xde0] sm:$0xff]
        %v694 = vld [vmem:[%s191 + $0xde8] sm:$0xff]
        %v695 = vld [vmem:[%s191 + $0xdf0] sm:$0xff]
        %v696 = vld [vmem:[%s191 + $0xdf8] sm:$0xff]
        %v697 = vld [vmem:[%s191 + $0xe00] sm:$0xff]
        %v698 = vld [vmem:[%s191 + $0xe08] sm:$0xff]
        %v699 = vld [vmem:[%s191 + $0xe10] sm:$0xff]
        %v700 = vld [vmem:[%s191 + $0xe18] sm:$0xff]
        %v701 = vld [vmem:[%s191 + $0xe20] sm:$0xff]
        %v702 = vld [vmem:[%s191 + $0xe28] sm:$0xff]
        %v703 = vld [vmem:[%s191 + $0xe30] sm:$0xff]
        %v704 = vld [vmem:[%s191 + $0xe38] sm:$0xff]
        %v705 = vld [vmem:[%s191 + $0xe40] sm:$0xff]
        %v706 = vld [vmem:[%s191 + $0xe48] sm:$0xff]
        %v707 = vld [vmem:[%s191 + $0xe50] sm:$0xff]
        %v708 = vld [vmem:[%s191 + $0xe58] sm:$0xff]
        %v709 = vld [vmem:[%s191 + $0xe60] sm:$0xff]
        %v710 = vld [vmem:[%s191 + $0xe68] sm:$0xff]
        %v711 = vld [vmem:[%s191 + $0xe70] sm:$0xff]
        %v712 = vld [vmem:[%s191 + $0xe78] sm:$0xff]
        %v713 = vld [vmem:[%s191 + $0xe80] sm:$0xff]
        %v714 = vld [vmem:[%s191 + $0xe88] sm:$0xff]
        %v715 = vld [vmem:[%s191 + $0xe90] sm:$0xff]
        %v716 = vld [vmem:[%s191 + $0xe98] sm:$0xff]
        %v717 = vld [vmem:[%s191 + $0xea0] sm:$0xff]
        %v718 = vld [vmem:[%s191 + $0xea8] sm:$0xff]
        %v719 = vld [vmem:[%s191 + $0xeb0] sm:$0xff]
        %v720 = vld [vmem:[%s191 + $0xeb8] sm:$0xff]
        %v721 = vld [vmem:[%s191 + $0xec0] sm:$0xff]
        %v722 = vld [vmem:[%s191 + $0xec8] sm:$0xff]
        %v723 = vld [vmem:[%s191 + $0xed0] sm:$0xff]
        %v724 = vld [vmem:[%s191 + $0xed8] sm:$0xff]
        %v725 = vld [vmem:[%s191 + $0xee0] sm:$0xff]
        %v726 = vld [vmem:[%s191 + $0xee8] sm:$0xff]
        %v727 = vld [vmem:[%s191 + $0xef0] sm:$0xff]
        %v728 = vld [vmem:[%s191 + $0xef8] sm:$0xff]
        %v729 = vld [vmem:[%s191 + $0xf00] sm:$0xff]
        %v730 = vld [vmem:[%s191 + $0xf08] sm:$0xff]
        %v731 = vld [vmem:[%s191 + $0xf10] sm:$0xff]
        %v732 = vld [vmem:[%s191 + $0xf18] sm:$0xff]
        %v733 = vld [vmem:[%s191 + $0xf20] sm:$0xff]
        %v734 = vld [vmem:[%s191 + $0xf28] sm:$0xff]
        %v735 = vld [vmem:[%s191 + $0xf30] sm:$0xff]
        %v736 = vld [vmem:[%s191 + $0xf38] sm:$0xff]
        %v737 = vld [vmem:[%s191 + $0xf40] sm:$0xff]
        %v738 = vld [vmem:[%s191 + $0xf48] sm:$0xff]
        %v739 = vld [vmem:[%s191 + $0xf50] sm:$0xff]
        %v740 = vld [vmem:[%s191 + $0xf58] sm:$0xff]
        %v741 = vld [vmem:[%s191 + $0xf60] sm:$0xff]
        %v742 = vld [vmem:[%s191 + $0xf68] sm:$0xff]
        %v743 = vld [vmem:[%s191 + $0xf70] sm:$0xff]
        %v744 = vld [vmem:[%s191 + $0xf78] sm:$0xff]
        %v745 = vld [vmem:[%s191 + $0xf80] sm:$0xff]
        %v746 = vld [vmem:[%s191 + $0xf88] sm:$0xff]
        %v747 = vld [vmem:[%s191 + $0xf90] sm:$0xff]
        %v748 = vld [vmem:[%s191 + $0xf98] sm:$0xff]
        %v749 = vld [vmem:[%s191 + $0xfa0] sm:$0xff]
        %v750 = vld [vmem:[%s191 + $0xfa8] sm:$0xff]
        %v751 = vld [vmem:[%s191 + $0xfb0] sm:$0xff]
        %v752 = vld [vmem:[%s191 + $0xfb8] sm:$0xff]
        %v753 = vld [vmem:[%s191 + $0xfc0] sm:$0xff]
        %v754 = vld [vmem:[%s191 + $0xfc8] sm:$0xff]
        %v755 = vld [vmem:[%s191 + $0xfd0] sm:$0xff]
        %v756 = vld [vmem:[%s191 + $0xfd8] sm:$0xff]
        %v757 = vld [vmem:[%s191 + $0xfe0] sm:$0xff]
        %v758 = vld [vmem:[%s191 + $0xfe8] sm:$0xff]
        %v759 = vld [vmem:[%s191 + $0xff0] sm:$0xff]
        %v760 = vld [vmem:[%s191 + $0xff8] sm:$0xff]
        %v761 = vld [vmem:[%s191 + $0x1000] sm:$0xff]
        %v762 = vld [vmem:[%s191 + $0x1008] sm:$0xff]
        %v763 = vld [vmem:[%s191 + $0x1010] sm:$0xff]
        %v764 = vld [vmem:[%s191 + $0x1018] sm:$0xff]
        %v765 = vld [vmem:[%s191 + $0x1020] sm:$0xff]
        %v766 = vld [vmem:[%s191 + $0x1028] sm:$0xff]
        %v767 = vld [vmem:[%s191 + $0x1030] sm:$0xff]
        %v768 = vld [vmem:[%s191 + $0x1038] sm:$0xff]
        %v769 = vld [vmem:[%s191 + $0x1040] sm:$0xff]
        %v770 = vld [vmem:[%s191 + $0x1048] sm:$0xff]
        %v771 = vld [vmem:[%s191 + $0x1050] sm:$0xff]
        %v772 = vld [vmem:[%s191 + $0x1058] sm:$0xff]
        %v773 = vld [vmem:[%s191 + $0x1060] sm:$0xff]
        %v774 = vld [vmem:[%s191 + $0x1068] sm:$0xff]
        %v775 = vld [vmem:[%s191 + $0x1070] sm:$0xff]
        %v776 = vld [vmem:[%s191 + $0x1078] sm:$0xff]
        %v777 = vld [vmem:[%s191 + $0x1080] sm:$0xff]
        %v778 = vld [vmem:[%s191 + $0x1088] sm:$0xff]
        %v779 = vld [vmem:[%s191 + $0x1090] sm:$0xff]
        %v780 = vld [vmem:[%s191 + $0x1098] sm:$0xff]
        %v781 = vld [vmem:[%s191 + $0x10a0] sm:$0xff]
        %v782 = vld [vmem:[%s191 + $0x10a8] sm:$0xff]
        %v783 = vld [vmem:[%s191 + $0x10b0] sm:$0xff]
        %v784 = vld [vmem:[%s191 + $0x10b8] sm:$0xff]
        %v785 = vld [vmem:[%s191 + $0x10c0] sm:$0xff]
        %v786 = vld [vmem:[%s191 + $0x10c8] sm:$0xff]
        %v787 = vld [vmem:[%s191 + $0x10d0] sm:$0xff]
        %v788 = vld [vmem:[%s191 + $0x10d8] sm:$0xff]
        %v789 = vld [vmem:[%s191 + $0x10e0] sm:$0xff]
        %v790 = vld [vmem:[%s191 + $0x10e8] sm:$0xff]
        %v791 = vld [vmem:[%s191 + $0x10f0] sm:$0xff]
        %v792 = vld [vmem:[%s191 + $0x10f8] sm:$0xff]
        %v793 = vld [vmem:[%s191 + $0x1100] sm:$0xff]
        %v794 = vld [vmem:[%s191 + $0x1108] sm:$0xff]
        %v795 = vld [vmem:[%s191 + $0x1110] sm:$0xff]
        %v796 = vld [vmem:[%s191 + $0x1118] sm:$0xff]
        %v797 = vld [vmem:[%s191 + $0x1120] sm:$0xff]
        %v798 = vld [vmem:[%s191 + $0x1128] sm:$0xff]
        %v799 = vld [vmem:[%s191 + $0x1130] sm:$0xff]
        %v800 = vld [vmem:[%s191 + $0x1138] sm:$0xff]
        %v801 = vld [vmem:[%s191 + $0x1140] sm:$0xff]
        %v802 = vld [vmem:[%s191 + $0x1148] sm:$0xff]
        %v803 = vld [vmem:[%s191 + $0x1150] sm:$0xff]
        %v804 = vld [vmem:[%s191 + $0x1158] sm:$0xff]
        %v805 = vld [vmem:[%s191 + $0x1160] sm:$0xff]
        %v806 = vld [vmem:[%s191 + $0x1168] sm:$0xff]
        %v807 = vld [vmem:[%s191 + $0x1170] sm:$0xff]
        %v808 = vld [vmem:[%s191 + $0x1178] sm:$0xff]
        %v809 = vld [vmem:[%s191 + $0x1180] sm:$0xff]
        %v810 = vld [vmem:[%s191 + $0x1188] sm:$0xff]
        %v811 = vld [vmem:[%s191 + $0x1190] sm:$0xff]
        %v812 = vld [vmem:[%s191 + $0x1198] sm:$0xff]
        %v813 = vld [vmem:[%s191 + $0x11a0] sm:$0xff]
        %v814 = vld [vmem:[%s191 + $0x11a8] sm:$0xff]
        %v815 = vld [vmem:[%s191 + $0x11b0] sm:$0xff]
        %v816 = vld [vmem:[%s191 + $0x11b8] sm:$0xff]
        %v817 = vld [vmem:[%s191 + $0x11c0] sm:$0xff]
        %v818 = vld [vmem:[%s191 + $0x11c8] sm:$0xff]
        %v819 = vld [vmem:[%s191 + $0x11d0] sm:$0xff]
        %v820 = vld [vmem:[%s191 + $0x11d8] sm:$0xff]
        %v821 = vld [vmem:[%s191 + $0x11e0] sm:$0xff]
        %v822 = vld [vmem:[%s191 + $0x11e8] sm:$0xff]
        %v823 = vld [vmem:[%s191 + $0x11f0] sm:$0xff]
        %v824 = vld [vmem:[%s191 + $0x11f8] sm:$0xff]
        %v825 = vld [vmem:[%s191 + $0x1200] sm:$0xff]
        %v826 = vld [vmem:[%s191 + $0x1208] sm:$0xff]
        %v827 = vld [vmem:[%s191 + $0x1210] sm:$0xff]
        %v828 = vld [vmem:[%s191 + $0x1218] sm:$0xff]
        %v829 = vld [vmem:[%s191 + $0x1220] sm:$0xff]
        %v830 = vld [vmem:[%s191 + $0x1228] sm:$0xff]
        %v831 = vld [vmem:[%s191 + $0x1230] sm:$0xff]
        %v832 = vld [vmem:[%s191 + $0x1238] sm:$0xff]
        %v833 = vld [vmem:[%s191 + $0x1240] sm:$0xff]
        %v834 = vld [vmem:[%s191 + $0x1248] sm:$0xff]
        %v835 = vld [vmem:[%s191 + $0x1250] sm:$0xff]
        %v836 = vld [vmem:[%s191 + $0x1258] sm:$0xff]
        %v837 = vld [vmem:[%s191 + $0x1260] sm:$0xff]
        %v838 = vld [vmem:[%s191 + $0x1268] sm:$0xff]
        %v839 = vld [vmem:[%s191 + $0x1270] sm:$0xff]
        %v840 = vld [vmem:[%s191 + $0x1278] sm:$0xff]
        %v841 = vld [vmem:[%s191 + $0x1280] sm:$0xff]
        %v842 = vld [vmem:[%s191 + $0x1288] sm:$0xff]
        %v843 = vld [vmem:[%s191 + $0x1290] sm:$0xff]
        %v844 = vld [vmem:[%s191 + $0x1298] sm:$0xff]
        %v845 = vld [vmem:[%s191 + $0x12a0] sm:$0xff]
        %v846 = vld [vmem:[%s191 + $0x12a8] sm:$0xff]
        %v847 = vld [vmem:[%s191 + $0x12b0] sm:$0xff]
        %v848 = vld [vmem:[%s191 + $0x12b8] sm:$0xff]
        %v849 = vld [vmem:[%s191 + $0x12c0] sm:$0xff]
        %v850 = vld [vmem:[%s191 + $0x12c8] sm:$0xff]
        %v851 = vld [vmem:[%s191 + $0x12d0] sm:$0xff]
        %v852 = vld [vmem:[%s191 + $0x12d8] sm:$0xff]
        %v853 = vld [vmem:[%s191 + $0x12e0] sm:$0xff]
        %v854 = vld [vmem:[%s191 + $0x12e8] sm:$0xff]
        %v855 = vld [vmem:[%s191 + $0x12f0] sm:$0xff]
        %v856 = vld [vmem:[%s191 + $0x12f8] sm:$0xff]
        %v857 = vld [vmem:[%s191 + $0x1300] sm:$0xff]
        %v858 = vld [vmem:[%s191 + $0x1308] sm:$0xff]
        %v859 = vld [vmem:[%s191 + $0x1310] sm:$0xff]
        %v860 = vld [vmem:[%s191 + $0x1318] sm:$0xff]
        %v861 = vld [vmem:[%s191 + $0x1320] sm:$0xff]
        %v862 = vld [vmem:[%s191 + $0x1328] sm:$0xff]
        %v863 = vld [vmem:[%s191 + $0x1330] sm:$0xff]
        %v864 = vld [vmem:[%s191 + $0x1338] sm:$0xff]
        %v865 = vld [vmem:[%s191 + $0x1340] sm:$0xff]
        %v866 = vld [vmem:[%s191 + $0x1348] sm:$0xff]
        %v867 = vld [vmem:[%s191 + $0x1350] sm:$0xff]
        %v868 = vld [vmem:[%s191 + $0x1358] sm:$0xff]
        %v869 = vld [vmem:[%s191 + $0x1360] sm:$0xff]
        %v870 = vld [vmem:[%s191 + $0x1368] sm:$0xff]
        %v871 = vld [vmem:[%s191 + $0x1370] sm:$0xff]
        %v872 = vld [vmem:[%s191 + $0x1378] sm:$0xff]
        %v873 = vld [vmem:[%s191 + $0x1380] sm:$0xff]
        %v874 = vld [vmem:[%s191 + $0x1388] sm:$0xff]
        %v875 = vld [vmem:[%s191 + $0x1390] sm:$0xff]
        %v876 = vld [vmem:[%s191 + $0x1398] sm:$0xff]
        %v877 = vld [vmem:[%s191 + $0x13a0] sm:$0xff]
        %v878 = vld [vmem:[%s191 + $0x13a8] sm:$0xff]
        %v879 = vld [vmem:[%s191 + $0x13b0] sm:$0xff]
        %v880 = vld [vmem:[%s191 + $0x13b8] sm:$0xff]
        %v881 = vld [vmem:[%s191 + $0x13c0] sm:$0xff]
        %v882 = vld [vmem:[%s191 + $0x13c8] sm:$0xff]
        %v883 = vld [vmem:[%s191 + $0x13d0] sm:$0xff]
        %v884 = vld [vmem:[%s191 + $0x13d8] sm:$0xff]
        %v885 = vld [vmem:[%s191 + $0x13e0] sm:$0xff]
        %v886 = vld [vmem:[%s191 + $0x13e8] sm:$0xff]
        %v887 = vld [vmem:[%s191 + $0x13f0] sm:$0xff]
        %v888 = vld [vmem:[%s191 + $0x13f8] sm:$0xff]
        %v889 = vld [vmem:[%s191 + $0x1400] sm:$0xff]
        %v890 = vld [vmem:[%s191 + $0x1408] sm:$0xff]
        %v891 = vld [vmem:[%s191 + $0x1410] sm:$0xff]
        %v892 = vld [vmem:[%s191 + $0x1418] sm:$0xff]
        %v893 = vld [vmem:[%s191 + $0x1420] sm:$0xff]
        %v894 = vld [vmem:[%s191 + $0x1428] sm:$0xff]
        %v895 = vld [vmem:[%s191 + $0x1430] sm:$0xff]
        %v896 = vld [vmem:[%s191 + $0x1438] sm:$0xff]
        %v897 = vld [vmem:[%s191 + $0x1440] sm:$0xff]
        %v898 = vld [vmem:[%s191 + $0x1448] sm:$0xff]
        %v899 = vld [vmem:[%s191 + $0x1450] sm:$0xff]
        %v900 = vld [vmem:[%s191 + $0x1458] sm:$0xff]
        %v901 = vld [vmem:[%s191 + $0x1460] sm:$0xff]
        %v902 = vld [vmem:[%s191 + $0x1468] sm:$0xff]
        %v903 = vld [vmem:[%s191 + $0x1470] sm:$0xff]
        %v904 = vld [vmem:[%s191 + $0x1478] sm:$0xff]
        %v905 = vld [vmem:[%s191 + $0x1480] sm:$0xff]
        %v906 = vld [vmem:[%s191 + $0x1488] sm:$0xff]
        %v907 = vld [vmem:[%s191 + $0x1490] sm:$0xff]
        %v908 = vld [vmem:[%s191 + $0x1498] sm:$0xff]
        %v909 = vld [vmem:[%s191 + $0x14a0] sm:$0xff]
        %v910 = vld [vmem:[%s191 + $0x14a8] sm:$0xff]
        %v911 = vld [vmem:[%s191 + $0x14b0] sm:$0xff]
        %v912 = vld [vmem:[%s191 + $0x14b8] sm:$0xff]
        %v913 = vld [vmem:[%s191 + $0x14c0] sm:$0xff]
        %v914 = vld [vmem:[%s191 + $0x14c8] sm:$0xff]
        %v915 = vld [vmem:[%s191 + $0x14d0] sm:$0xff]
        %v916 = vld [vmem:[%s191 + $0x14d8] sm:$0xff]
        %v917 = vld [vmem:[%s191 + $0x14e0] sm:$0xff]
        %v918 = vld [vmem:[%s191 + $0x14e8] sm:$0xff]
        %v919 = vld [vmem:[%s191 + $0x14f0] sm:$0xff]
        %v920 = vld [vmem:[%s191 + $0x14f8] sm:$0xff]
        %v921 = vld [vmem:[%s191 + $0x1500] sm:$0xff]
        %v922 = vld [vmem:[%s191 + $0x1508] sm:$0xff]
        %v923 = vld [vmem:[%s191 + $0x1510] sm:$0xff]
        %v924 = vld [vmem:[%s191 + $0x1518] sm:$0xff]
        %v925 = vld [vmem:[%s191 + $0x1520] sm:$0xff]
        %v926 = vld [vmem:[%s191 + $0x1528] sm:$0xff]
        %v927 = vld [vmem:[%s191 + $0x1530] sm:$0xff]
        %v928 = vld [vmem:[%s191 + $0x1538] sm:$0xff]
        %v929 = vld [vmem:[%s191 + $0x1540] sm:$0xff]
        %v930 = vld [vmem:[%s191 + $0x1548] sm:$0xff]
        %v931 = vld [vmem:[%s191 + $0x1550] sm:$0xff]
        %v932 = vld [vmem:[%s191 + $0x1558] sm:$0xff]
        %v933 = vld [vmem:[%s191 + $0x1560] sm:$0xff]
        %v934 = vld [vmem:[%s191 + $0x1568] sm:$0xff]
        %v935 = vld [vmem:[%s191 + $0x1570] sm:$0xff]
        %v936 = vld [vmem:[%s191 + $0x1578] sm:$0xff]
        %v937 = vld [vmem:[%s191 + $0x1580] sm:$0xff]
        %v938 = vld [vmem:[%s191 + $0x1588] sm:$0xff]
        %v939 = vld [vmem:[%s191 + $0x1590] sm:$0xff]
        %v940 = vld [vmem:[%s191 + $0x1598] sm:$0xff]
        %v941 = vld [vmem:[%s191 + $0x15a0] sm:$0xff]
        %v942 = vld [vmem:[%s191 + $0x15a8] sm:$0xff]
        %v943 = vld [vmem:[%s191 + $0x15b0] sm:$0xff]
        %v944 = vld [vmem:[%s191 + $0x15b8] sm:$0xff]
        %v945 = vld [vmem:[%s191 + $0x15c0] sm:$0xff]
        %v946 = vld [vmem:[%s191 + $0x15c8] sm:$0xff]
        %v947 = vld [vmem:[%s191 + $0x15d0] sm:$0xff]
        %v948 = vld [vmem:[%s191 + $0x15d8] sm:$0xff]
        %v949 = vld [vmem:[%s191 + $0x15e0] sm:$0xff]
        %v950 = vld [vmem:[%s191 + $0x15e8] sm:$0xff]
        %v951 = vld [vmem:[%s191 + $0x15f0] sm:$0xff]
        %v952 = vld [vmem:[%s191 + $0x15f8] sm:$0xff]
        %v953 = vld [vmem:[%s191 + $0x1600] sm:$0xff]
        %v954 = vld [vmem:[%s191 + $0x1608] sm:$0xff]
        %v955 = vld [vmem:[%s191 + $0x1610] sm:$0xff]
        %v956 = vld [vmem:[%s191 + $0x1618] sm:$0xff]
        %v957 = vld [vmem:[%s191 + $0x1620] sm:$0xff]
        %v958 = vld [vmem:[%s191 + $0x1628] sm:$0xff]
        %v959 = vld [vmem:[%s191 + $0x1630] sm:$0xff]
        %v960 = vld [vmem:[%s191 + $0x1638] sm:$0xff]
        %v961 = vld [vmem:[%s191 + $0x1640] sm:$0xff]
        %v962 = vld [vmem:[%s191 + $0x1648] sm:$0xff]
        %v963 = vld [vmem:[%s191 + $0x1650] sm:$0xff]
        %v964 = vld [vmem:[%s191 + $0x1658] sm:$0xff]
        %v965 = vld [vmem:[%s191 + $0x1660] sm:$0xff]
        %v966 = vld [vmem:[%s191 + $0x1668] sm:$0xff]
        %v967 = vld [vmem:[%s191 + $0x1670] sm:$0xff]
        %v968 = vld [vmem:[%s191 + $0x1678] sm:$0xff]
        %v969 = vld [vmem:[%s191 + $0x1680] sm:$0xff]
        %v970 = vld [vmem:[%s191 + $0x1688] sm:$0xff]
        %v971 = vld [vmem:[%s191 + $0x1690] sm:$0xff]
        %v972 = vld [vmem:[%s191 + $0x1698] sm:$0xff]
        %v973 = vld [vmem:[%s191 + $0x16a0] sm:$0xff]
        %v974 = vld [vmem:[%s191 + $0x16a8] sm:$0xff]
        %v975 = vld [vmem:[%s191 + $0x16b0] sm:$0xff]
        %v976 = vld [vmem:[%s191 + $0x16b8] sm:$0xff]
        %v977 = vld [vmem:[%s191 + $0x16c0] sm:$0xff]
        %v978 = vld [vmem:[%s191 + $0x16c8] sm:$0xff]
        %v979 = vld [vmem:[%s191 + $0x16d0] sm:$0xff]
        %v980 = vld [vmem:[%s191 + $0x16d8] sm:$0xff]
        %v981 = vld [vmem:[%s191 + $0x16e0] sm:$0xff]
        %v982 = vld [vmem:[%s191 + $0x16e8] sm:$0xff]
        %v983 = vld [vmem:[%s191 + $0x16f0] sm:$0xff]
        %v984 = vld [vmem:[%s191 + $0x16f8] sm:$0xff]
        %v985 = vld [vmem:[%s191 + $0x1700] sm:$0xff]
        %v986 = vld [vmem:[%s191 + $0x1708] sm:$0xff]
        %v987 = vld [vmem:[%s191 + $0x1710] sm:$0xff]
        %v988 = vld [vmem:[%s191 + $0x1718] sm:$0xff]
        %v989 = vld [vmem:[%s191 + $0x1720] sm:$0xff]
        %v990 = vld [vmem:[%s191 + $0x1728] sm:$0xff]
        %v991 = vld [vmem:[%s191 + $0x1730] sm:$0xff]
        %v992 = vld [vmem:[%s191 + $0x1738] sm:$0xff]
        %v993 = vld [vmem:[%s191 + $0x1740] sm:$0xff]
        %v994 = vld [vmem:[%s191 + $0x1748] sm:$0xff]
        %v995 = vld [vmem:[%s191 + $0x1750] sm:$0xff]
        %v996 = vld [vmem:[%s191 + $0x1758] sm:$0xff]
        %v997 = vld [vmem:[%s191 + $0x1760] sm:$0xff]
        %v998 = vld [vmem:[%s191 + $0x1768] sm:$0xff]
        %v999 = vld [vmem:[%s191 + $0x1770] sm:$0xff]
        %v1000 = vld [vmem:[%s191 + $0x1778] sm:$0xff]
        %v1001 = vld [vmem:[%s191 + $0x1780] sm:$0xff]
        %v1002 = vld [vmem:[%s191 + $0x1788] sm:$0xff]
        %v1003 = vld [vmem:[%s191 + $0x1790] sm:$0xff]
        %v1004 = vld [vmem:[%s191 + $0x1798] sm:$0xff]
        %v1005 = vld [vmem:[%s191 + $0x17a0] sm:$0xff]
        %v1006 = vld [vmem:[%s191 + $0x17a8] sm:$0xff]
        %v1007 = vld [vmem:[%s191 + $0x17b0] sm:$0xff]
        %v1008 = vld [vmem:[%s191 + $0x17b8] sm:$0xff]
        %v1009 = vld [vmem:[%s191 + $0x17c0] sm:$0xff]
        %v1010 = vld [vmem:[%s191 + $0x17c8] sm:$0xff]
        %v1011 = vld [vmem:[%s191 + $0x17d0] sm:$0xff]
        %v1012 = vld [vmem:[%s191 + $0x17d8] sm:$0xff]
        %v1013 = vld [vmem:[%s191 + $0x17e0] sm:$0xff]
        %v1014 = vld [vmem:[%s191 + $0x17e8] sm:$0xff]
        %v1015 = vld [vmem:[%s191 + $0x17f0] sm:$0xff]
        %v1016 = vld [vmem:[%s191 + $0x17f8] sm:$0xff]
        %v1017 = vld [vmem:[%s191 + $0x1800] sm:$0xff]
        %v1018 = vld [vmem:[%s191 + $0x1808] sm:$0xff]
        %v1019 = vld [vmem:[%s191 + $0x1810] sm:$0xff]
        %v1020 = vld [vmem:[%s191 + $0x1818] sm:$0xff]
        %v1021 = vld [vmem:[%s191 + $0x1820] sm:$0xff]
        %v1022 = vld [vmem:[%s191 + $0x1828] sm:$0xff]
        %v1023 = vld [vmem:[%s191 + $0x1830] sm:$0xff]
        %v1024 = vld [vmem:[%s191 + $0x1838] sm:$0xff]
        %v1025 = vld [vmem:[%s191 + $0x1840] sm:$0xff]
        %v1026 = vld [vmem:[%s191 + $0x1848] sm:$0xff]
        %v1027 = vld [vmem:[%s191 + $0x1850] sm:$0xff]
        %v1028 = vld [vmem:[%s191 + $0x1858] sm:$0xff]
        %v1029 = vld [vmem:[%s191 + $0x1860] sm:$0xff]
        %v1030 = vld [vmem:[%s191 + $0x1868] sm:$0xff]
        %v1031 = vld [vmem:[%s191 + $0x1870] sm:$0xff]
        %v1032 = vld [vmem:[%s191 + $0x1878] sm:$0xff]
        %v1033 = vld [vmem:[%s191 + $0x1880] sm:$0xff]
        %v1034 = vld [vmem:[%s191 + $0x1888] sm:$0xff]
        %v1035 = vld [vmem:[%s191 + $0x1890] sm:$0xff]
        %v1036 = vld [vmem:[%s191 + $0x1898] sm:$0xff]
        %v1037 = vld [vmem:[%s191 + $0x18a0] sm:$0xff]
        %v1038 = vld [vmem:[%s191 + $0x18a8] sm:$0xff]
        %v1039 = vld [vmem:[%s191 + $0x18b0] sm:$0xff]
        %v1040 = vld [vmem:[%s191 + $0x18b8] sm:$0xff]
        %v1041 = vld [vmem:[%s191 + $0x18c0] sm:$0xff]
        %v1042 = vld [vmem:[%s191 + $0x18c8] sm:$0xff]
        %v1043 = vld [vmem:[%s191 + $0x18d0] sm:$0xff]
        %v1044 = vld [vmem:[%s191 + $0x18d8] sm:$0xff]
        %v1045 = vld [vmem:[%s191 + $0x18e0] sm:$0xff]
        %v1046 = vld [vmem:[%s191 + $0x18e8] sm:$0xff]
        %v1047 = vld [vmem:[%s191 + $0x18f0] sm:$0xff]
        %v1048 = vld [vmem:[%s191 + $0x18f8] sm:$0xff]
        %v1049 = vld [vmem:[%s191 + $0x1900] sm:$0xff]
        %v1050 = vld [vmem:[%s191 + $0x1908] sm:$0xff]
        %v1051 = vld [vmem:[%s191 + $0x1910] sm:$0xff]
        %v1052 = vld [vmem:[%s191 + $0x1918] sm:$0xff]
        %v1053 = vld [vmem:[%s191 + $0x1920] sm:$0xff]
        %v1054 = vld [vmem:[%s191 + $0x1928] sm:$0xff]
        %v1055 = vld [vmem:[%s191 + $0x1930] sm:$0xff]
        %v1056 = vld [vmem:[%s191 + $0x1938] sm:$0xff]
        %v1057 = vld [vmem:[%s191 + $0x1940] sm:$0xff]
        %v1058 = vld [vmem:[%s191 + $0x1948] sm:$0xff]
        %v1059 = vld [vmem:[%s191 + $0x1950] sm:$0xff]
        %v1060 = vld [vmem:[%s191 + $0x1958] sm:$0xff]
        %v1061 = vld [vmem:[%s191 + $0x1960] sm:$0xff]
        %v1062 = vld [vmem:[%s191 + $0x1968] sm:$0xff]
        %v1063 = vld [vmem:[%s191 + $0x1970] sm:$0xff]
        %v1064 = vld [vmem:[%s191 + $0x1978] sm:$0xff]
        %v1065 = vld [vmem:[%s191 + $0x1980] sm:$0xff]
        %v1066 = vld [vmem:[%s191 + $0x1988] sm:$0xff]
        %v1067 = vld [vmem:[%s191 + $0x1990] sm:$0xff]
        %v1068 = vld [vmem:[%s191 + $0x1998] sm:$0xff]
        %v1069 = vld [vmem:[%s191 + $0x19a0] sm:$0xff]
        %v1070 = vld [vmem:[%s191 + $0x19a8] sm:$0xff]
        %v1071 = vld [vmem:[%s191 + $0x19b0] sm:$0xff]
        %v1072 = vld [vmem:[%s191 + $0x19b8] sm:$0xff]
        %v1073 = vld [vmem:[%s191 + $0x19c0] sm:$0xff]
        %v1074 = vld [vmem:[%s191 + $0x19c8] sm:$0xff]
        %v1075 = vld [vmem:[%s191 + $0x19d0] sm:$0xff]
        %v1076 = vld [vmem:[%s191 + $0x19d8] sm:$0xff]
        %v1077 = vld [vmem:[%s191 + $0x19e0] sm:$0xff]
        %v1078 = vld [vmem:[%s191 + $0x19e8] sm:$0xff]
        %v1079 = vld [vmem:[%s191 + $0x19f0] sm:$0xff]
        %v1080 = vld [vmem:[%s191 + $0x19f8] sm:$0xff]
        %v1081 = vld [vmem:[%s191 + $0x1a00] sm:$0xff]
        %v1082 = vld [vmem:[%s191 + $0x1a08] sm:$0xff]
        %v1083 = vld [vmem:[%s191 + $0x1a10] sm:$0xff]
        %v1084 = vld [vmem:[%s191 + $0x1a18] sm:$0xff]
        %v1085 = vld [vmem:[%s191 + $0x1a20] sm:$0xff]
        %v1086 = vld [vmem:[%s191 + $0x1a28] sm:$0xff]
        %v1087 = vld [vmem:[%s191 + $0x1a30] sm:$0xff]
        %v1088 = vld [vmem:[%s191 + $0x1a38] sm:$0xff]
        %v1089 = vld [vmem:[%s191 + $0x1a40] sm:$0xff]
        %v1090 = vld [vmem:[%s191 + $0x1a48] sm:$0xff]
        %v1091 = vld [vmem:[%s191 + $0x1a50] sm:$0xff]
        %v1092 = vld [vmem:[%s191 + $0x1a58] sm:$0xff]
        %v1093 = vld [vmem:[%s191 + $0x1a60] sm:$0xff]
        %v1094 = vld [vmem:[%s191 + $0x1a68] sm:$0xff]
        %v1095 = vld [vmem:[%s191 + $0x1a70] sm:$0xff]
        %v1096 = vld [vmem:[%s191 + $0x1a78] sm:$0xff]
        %v1097 = vld [vmem:[%s191 + $0x1a80] sm:$0xff]
        %v1098 = vld [vmem:[%s191 + $0x1a88] sm:$0xff]
        %v1099 = vld [vmem:[%s191 + $0x1a90] sm:$0xff]
        %v1100 = vld [vmem:[%s191 + $0x1a98] sm:$0xff]
        %v1101 = vld [vmem:[%s191 + $0x1aa0] sm:$0xff]
        %v1102 = vld [vmem:[%s191 + $0x1aa8] sm:$0xff]
        %v1103 = vld [vmem:[%s191 + $0x1ab0] sm:$0xff]
        %v1104 = vld [vmem:[%s191 + $0x1ab8] sm:$0xff]
        %v1105 = vld [vmem:[%s191 + $0x1ac0] sm:$0xff]
        %v1106 = vld [vmem:[%s191 + $0x1ac8] sm:$0xff]
        %v1107 = vld [vmem:[%s191 + $0x1ad0] sm:$0xff]
        %v1108 = vld [vmem:[%s191 + $0x1ad8] sm:$0xff]
        %v1109 = vld [vmem:[%s191 + $0x1ae0] sm:$0xff]
        %v1110 = vld [vmem:[%s191 + $0x1ae8] sm:$0xff]
        %v1111 = vld [vmem:[%s191 + $0x1af0] sm:$0xff]
        %v1112 = vld [vmem:[%s191 + $0x1af8] sm:$0xff]
        %v1113 = vld [vmem:[%s191 + $0x1b00] sm:$0xff]
        %v1114 = vld [vmem:[%s191 + $0x1b08] sm:$0xff]
        %v1115 = vld [vmem:[%s191 + $0x1b10] sm:$0xff]
        %v1116 = vld [vmem:[%s191 + $0x1b18] sm:$0xff]
        %v1117 = vld [vmem:[%s191 + $0x1b20] sm:$0xff]
        %v1118 = vld [vmem:[%s191 + $0x1b28] sm:$0xff]
        %v1119 = vld [vmem:[%s191 + $0x1b30] sm:$0xff]
        %v1120 = vld [vmem:[%s191 + $0x1b38] sm:$0xff]
        %v1121 = vld [vmem:[%s191 + $0x1b40] sm:$0xff]
        %v1122 = vld [vmem:[%s191 + $0x1b48] sm:$0xff]
        %v1123 = vld [vmem:[%s191 + $0x1b50] sm:$0xff]
        %v1124 = vld [vmem:[%s191 + $0x1b58] sm:$0xff]
        %v1125 = vld [vmem:[%s191 + $0x1b60] sm:$0xff]
        %v1126 = vld [vmem:[%s191 + $0x1b68] sm:$0xff]
        %v1127 = vld [vmem:[%s191 + $0x1b70] sm:$0xff]
        %v1128 = vld [vmem:[%s191 + $0x1b78] sm:$0xff]
        %v1129 = vld [vmem:[%s191 + $0x1b80] sm:$0xff]
        %v1130 = vld [vmem:[%s191 + $0x1b88] sm:$0xff]
        %v1131 = vld [vmem:[%s191 + $0x1b90] sm:$0xff]
        %v1132 = vld [vmem:[%s191 + $0x1b98] sm:$0xff]
        %v1133 = vld [vmem:[%s191 + $0x1ba0] sm:$0xff]
        %v1134 = vld [vmem:[%s191 + $0x1ba8] sm:$0xff]
        %v1135 = vld [vmem:[%s191 + $0x1bb0] sm:$0xff]
        %v1136 = vld [vmem:[%s191 + $0x1bb8] sm:$0xff]
        %v1137 = vld [vmem:[%s191 + $0x1bc0] sm:$0xff]
        %v1138 = vld [vmem:[%s191 + $0x1bc8] sm:$0xff]
        %v1139 = vld [vmem:[%s191 + $0x1bd0] sm:$0xff]
        %v1140 = vld [vmem:[%s191 + $0x1bd8] sm:$0xff]
        %v1141 = vld [vmem:[%s191 + $0x1be0] sm:$0xff]
        %v1142 = vld [vmem:[%s191 + $0x1be8] sm:$0xff]
        %v1143 = vld [vmem:[%s191 + $0x1bf0] sm:$0xff]
        %v1144 = vld [vmem:[%s191 + $0x1bf8] sm:$0xff]
        %v1145 = vld [vmem:[%s191 + $0x1c00] sm:$0xff]
        %v1146 = vld [vmem:[%s191 + $0x1c08] sm:$0xff]
        %v1147 = vld [vmem:[%s191 + $0x1c10] sm:$0xff]
        %v1148 = vld [vmem:[%s191 + $0x1c18] sm:$0xff]
        %v1149 = vld [vmem:[%s191 + $0x1c20] sm:$0xff]
        %v1150 = vld [vmem:[%s191 + $0x1c28] sm:$0xff]
        %v1151 = vld [vmem:[%s191 + $0x1c30] sm:$0xff]
        %v1152 = vld [vmem:[%s191 + $0x1c38] sm:$0xff]
        %v1153 = vld [vmem:[%s191 + $0x1c40] sm:$0xff]
        %v1154 = vld [vmem:[%s191 + $0x1c48] sm:$0xff]
        %v1155 = vld [vmem:[%s191 + $0x1c50] sm:$0xff]
        %v1156 = vld [vmem:[%s191 + $0x1c58] sm:$0xff]
        %v1157 = vld [vmem:[%s191 + $0x1c60] sm:$0xff]
        %v1158 = vld [vmem:[%s191 + $0x1c68] sm:$0xff]
        %v1159 = vld [vmem:[%s191 + $0x1c70] sm:$0xff]
        %v1160 = vld [vmem:[%s191 + $0x1c78] sm:$0xff]
        %v1161 = vld [vmem:[%s191 + $0x1c80] sm:$0xff]
        %v1162 = vld [vmem:[%s191 + $0x1c88] sm:$0xff]
        %v1163 = vld [vmem:[%s191 + $0x1c90] sm:$0xff]
        %v1164 = vld [vmem:[%s191 + $0x1c98] sm:$0xff]
        %v1165 = vld [vmem:[%s191 + $0x1ca0] sm:$0xff]
        %v1166 = vld [vmem:[%s191 + $0x1ca8] sm:$0xff]
        %v1167 = vld [vmem:[%s191 + $0x1cb0] sm:$0xff]
        %v1168 = vld [vmem:[%s191 + $0x1cb8] sm:$0xff]
        %v1169 = vld [vmem:[%s191 + $0x1cc0] sm:$0xff]
        %v1170 = vld [vmem:[%s191 + $0x1cc8] sm:$0xff]
        %v1171 = vld [vmem:[%s191 + $0x1cd0] sm:$0xff]
        %v1172 = vld [vmem:[%s191 + $0x1cd8] sm:$0xff]
        %v1173 = vld [vmem:[%s191 + $0x1ce0] sm:$0xff]
        %v1174 = vld [vmem:[%s191 + $0x1ce8] sm:$0xff]
        %v1175 = vld [vmem:[%s191 + $0x1cf0] sm:$0xff]
        %v1176 = vld [vmem:[%s191 + $0x1cf8] sm:$0xff]
        %v1177 = vld [vmem:[%s191 + $0x1d00] sm:$0xff]
        %v1178 = vld [vmem:[%s191 + $0x1d08] sm:$0xff]
        %v1179 = vld [vmem:[%s191 + $0x1d10] sm:$0xff]
        %v1180 = vld [vmem:[%s191 + $0x1d18] sm:$0xff]
        %v1181 = vld [vmem:[%s191 + $0x1d20] sm:$0xff]
        %v1182 = vld [vmem:[%s191 + $0x1d28] sm:$0xff]
        %v1183 = vld [vmem:[%s191 + $0x1d30] sm:$0xff]
        %v1184 = vld [vmem:[%s191 + $0x1d38] sm:$0xff]
        %v1185 = vld [vmem:[%s191 + $0x1d40] sm:$0xff]
        %v1186 = vld [vmem:[%s191 + $0x1d48] sm:$0xff]
        %v1187 = vld [vmem:[%s191 + $0x1d50] sm:$0xff]
        %v1188 = vld [vmem:[%s191 + $0x1d58] sm:$0xff]
        %v1189 = vld [vmem:[%s191 + $0x1d60] sm:$0xff]
        %v1190 = vld [vmem:[%s191 + $0x1d68] sm:$0xff]
        %v1191 = vld [vmem:[%s191 + $0x1d70] sm:$0xff]
        %v1192 = vld [vmem:[%s191 + $0x1d78] sm:$0xff]
        %v1193 = vld [vmem:[%s191 + $0x1d80] sm:$0xff]
        %v1194 = vld [vmem:[%s191 + $0x1d88] sm:$0xff]
        %v1195 = vld [vmem:[%s191 + $0x1d90] sm:$0xff]
        %v1196 = vld [vmem:[%s191 + $0x1d98] sm:$0xff]
        %v1197 = vld [vmem:[%s191 + $0x1da0] sm:$0xff]
        %v1198 = vld [vmem:[%s191 + $0x1da8] sm:$0xff]
        %v1199 = vld [vmem:[%s191 + $0x1db0] sm:$0xff]
        %v1200 = vld [vmem:[%s191 + $0x1db8] sm:$0xff]
        %v1201 = vld [vmem:[%s191 + $0x1dc0] sm:$0xff]
        %v1202 = vld [vmem:[%s191 + $0x1dc8] sm:$0xff]
        %v1203 = vld [vmem:[%s191 + $0x1dd0] sm:$0xff]
        %v1204 = vld [vmem:[%s191 + $0x1dd8] sm:$0xff]
        %v1205 = vld [vmem:[%s191 + $0x1de0] sm:$0xff]
        %v1206 = vld [vmem:[%s191 + $0x1de8] sm:$0xff]
        %v1207 = vld [vmem:[%s191 + $0x1df0] sm:$0xff]
        %v1208 = vld [vmem:[%s191 + $0x1df8] sm:$0xff]
        %v1209 = vld [vmem:[%s191 + $0x1e00] sm:$0xff]
        %v1210 = vld [vmem:[%s191 + $0x1e08] sm:$0xff]
        %v1211 = vld [vmem:[%s191 + $0x1e10] sm:$0xff]
        %v1212 = vld [vmem:[%s191 + $0x1e18] sm:$0xff]
        %v1213 = vld [vmem:[%s191 + $0x1e20] sm:$0xff]
        %v1214 = vld [vmem:[%s191 + $0x1e28] sm:$0xff]
        %v1215 = vld [vmem:[%s191 + $0x1e30] sm:$0xff]
        %v1216 = vld [vmem:[%s191 + $0x1e38] sm:$0xff]
        %v1217 = vld [vmem:[%s191 + $0x1e40] sm:$0xff]
        %v1218 = vld [vmem:[%s191 + $0x1e48] sm:$0xff]
        %v1219 = vld [vmem:[%s191 + $0x1e50] sm:$0xff]
        %v1220 = vld [vmem:[%s191 + $0x1e58] sm:$0xff]
        %v1221 = vld [vmem:[%s191 + $0x1e60] sm:$0xff]
        %v1222 = vld [vmem:[%s191 + $0x1e68] sm:$0xff]
        %v1223 = vld [vmem:[%s191 + $0x1e70] sm:$0xff]
        %v1224 = vld [vmem:[%s191 + $0x1e78] sm:$0xff]
        %v1225 = vld [vmem:[%s191 + $0x1e80] sm:$0xff]
        %v1226 = vld [vmem:[%s191 + $0x1e88] sm:$0xff]
        %v1227 = vld [vmem:[%s191 + $0x1e90] sm:$0xff]
        %v1228 = vld [vmem:[%s191 + $0x1e98] sm:$0xff]
        %v1229 = vld [vmem:[%s191 + $0x1ea0] sm:$0xff]
        %v1230 = vld [vmem:[%s191 + $0x1ea8] sm:$0xff]
        %v1231 = vld [vmem:[%s191 + $0x1eb0] sm:$0xff]
        %v1232 = vld [vmem:[%s191 + $0x1eb8] sm:$0xff]
        %v1233 = vld [vmem:[%s191 + $0x1ec0] sm:$0xff]
        %v1234 = vld [vmem:[%s191 + $0x1ec8] sm:$0xff]
        %v1235 = vld [vmem:[%s191 + $0x1ed0] sm:$0xff]
        %v1236 = vld [vmem:[%s191 + $0x1ed8] sm:$0xff]
        %v1237 = vld [vmem:[%s191 + $0x1ee0] sm:$0xff]
        %v1238 = vld [vmem:[%s191 + $0x1ee8] sm:$0xff]
        %v1239 = vld [vmem:[%s191 + $0x1ef0] sm:$0xff]
        %v1240 = vld [vmem:[%s191 + $0x1ef8] sm:$0xff]
        %v1241 = vld [vmem:[%s191 + $0x1f00] sm:$0xff]
        %v1242 = vld [vmem:[%s191 + $0x1f08] sm:$0xff]
        %v1243 = vld [vmem:[%s191 + $0x1f10] sm:$0xff]
        %v1244 = vld [vmem:[%s191 + $0x1f18] sm:$0xff]
        %v1245 = vld [vmem:[%s191 + $0x1f20] sm:$0xff]
        %v1246 = vld [vmem:[%s191 + $0x1f28] sm:$0xff]
        %v1247 = vld [vmem:[%s191 + $0x1f30] sm:$0xff]
        %v1248 = vld [vmem:[%s191 + $0x1f38] sm:$0xff]
        %v1249 = vld [vmem:[%s191 + $0x1f40] sm:$0xff]
        %v1250 = vld [vmem:[%s191 + $0x1f48] sm:$0xff]
        %v1251 = vld [vmem:[%s191 + $0x1f50] sm:$0xff]
        %v1252 = vld [vmem:[%s191 + $0x1f58] sm:$0xff]
        %v1253 = vld [vmem:[%s191 + $0x1f60] sm:$0xff]
        %v1254 = vld [vmem:[%s191 + $0x1f68] sm:$0xff]
        %v1255 = vld [vmem:[%s191 + $0x1f70] sm:$0xff]
        %v1256 = vld [vmem:[%s191 + $0x1f78] sm:$0xff]
        %v1257 = vld [vmem:[%s191 + $0x1f80] sm:$0xff]
        %v1258 = vld [vmem:[%s191 + $0x1f88] sm:$0xff]
        %v1259 = vld [vmem:[%s191 + $0x1f90] sm:$0xff]
        %v1260 = vld [vmem:[%s191 + $0x1f98] sm:$0xff]
        %v1261 = vld [vmem:[%s191 + $0x1fa0] sm:$0xff]
        %v1262 = vld [vmem:[%s191 + $0x1fa8] sm:$0xff]
        %v1263 = vld [vmem:[%s191 + $0x1fb0] sm:$0xff]
        %v1264 = vld [vmem:[%s191 + $0x1fb8] sm:$0xff]
        %v1265 = vld [vmem:[%s191 + $0x1fc0] sm:$0xff]
        %v1266 = vld [vmem:[%s191 + $0x1fc8] sm:$0xff]
        %v1267 = vld [vmem:[%s191 + $0x1fd0] sm:$0xff]
        %v1268 = vld [vmem:[%s191 + $0x1fd8] sm:$0xff]
        %v1269 = vld [vmem:[%s191 + $0x1fe0] sm:$0xff]
        %v1270 = vld [vmem:[%s191 + $0x1fe8] sm:$0xff]
        %v1271 = vld [vmem:[%s191 + $0x1ff0] sm:$0xff]
        %v1272 = vld [vmem:[%s191 + $0x1ff8] sm:$0xff]
        %v1273 = vld [vmem:[%s201] sm:$0xf]
        %v1275 = vperm.slane %v1273, 0
        %v1276 = vperm.slane %v1273, 1
        %v1277 = vperm.slane %v1273, 2
        %v1278 = vperm.slane %v1273, 3
        %1283 = vmatpush.msra.mxu0 %v309
        %1284 = vmatpush.msra.mxu0 %v305
        %1285 = vmatpush.msra.mxu0 %v301
        %1286 = vmatpush.msra.mxu0 %v297
        %1287 = vmatpush.msra.mxu0 %v293
        %1288 = vmatpush.msra.mxu0 %v289
        %1289 = vmatpush.msra.mxu0 %v285
        %1290 = vmatpush.msra.mxu0 %v281
        %1291 = vmatpush.msra.mxu0 %v277
        %1292 = vmatpush.msra.mxu0 %v273
        %1293 = vmatpush.msra.mxu0 %v269
        %1294 = vmatpush.msra.mxu0 %v265
        %1295 = vmatpush.msra.mxu0 %v261
        %1296 = vmatpush.msra.mxu0 %v257
        %1297 = vmatpush.msra.mxu0 %v253
        %1298 = vmatpush.msra.mxu0 %v249
        %1299 = vmatmul.f32.gmra.mxu0 %v233
        %v1300 = vpop.f32.mrf.mxu0
        %v1301 = vadd.f32 %v1275, %v1300
        %1302 = vdwg.mxu0
        %1303 = vmatpush.msra.mxu0 %v373
        %1304 = vmatpush.msra.mxu0 %v369
        %1305 = vmatpush.msra.mxu0 %v365
        %1306 = vmatpush.msra.mxu0 %v361
        %1307 = vmatpush.msra.mxu0 %v357
        %1308 = vmatpush.msra.mxu0 %v353
        %1309 = vmatpush.msra.mxu0 %v349
        %1310 = vmatpush.msra.mxu0 %v345
        %1311 = vmatpush.msra.mxu0 %v341
        %1312 = vmatpush.msra.mxu0 %v337
        %1313 = vmatpush.msra.mxu0 %v333
        %1314 = vmatpush.msra.mxu0 %v329
        %1315 = vmatpush.msra.mxu0 %v325
        %1316 = vmatpush.msra.mxu0 %v321
        %1317 = vmatpush.msra.mxu0 %v317
        %1318 = vmatpush.msra.mxu0 %v313
        %1319 = vmatmul.f32.gmra.mxu0 %v234
        %v1320 = vpop.f32.mrf.mxu0
        %v1321 = vadd.f32 %v1301, %v1320
        %1322 = vdwg.mxu0
        %1323 = vmatpush.msra.mxu0 %v437
        %1324 = vmatpush.msra.mxu0 %v433
        %1325 = vmatpush.msra.mxu0 %v429
        %1326 = vmatpush.msra.mxu0 %v425
        %1327 = vmatpush.msra.mxu0 %v421
        %1328 = vmatpush.msra.mxu0 %v417
        %1329 = vmatpush.msra.mxu0 %v413
        %1330 = vmatpush.msra.mxu0 %v409
        %1331 = vmatpush.msra.mxu0 %v405
        %1332 = vmatpush.msra.mxu0 %v401
        %1333 = vmatpush.msra.mxu0 %v397
        %1334 = vmatpush.msra.mxu0 %v393
        %1335 = vmatpush.msra.mxu0 %v389
        %1336 = vmatpush.msra.mxu0 %v385
        %1337 = vmatpush.msra.mxu0 %v381
        %1338 = vmatpush.msra.mxu0 %v377
        %1339 = vmatmul.f32.gmra.mxu0 %v235
        %v1340 = vpop.f32.mrf.mxu0
        %v1341 = vadd.f32 %v1321, %v1340
        %1342 = vdwg.mxu0
        %1343 = vmatpush.msra.mxu0 %v501
        %1344 = vmatpush.msra.mxu0 %v497
        %1345 = vmatpush.msra.mxu0 %v493
        %1346 = vmatpush.msra.mxu0 %v489
        %1347 = vmatpush.msra.mxu0 %v485
        %1348 = vmatpush.msra.mxu0 %v481
        %1349 = vmatpush.msra.mxu0 %v477
        %1350 = vmatpush.msra.mxu0 %v473
        %1351 = vmatpush.msra.mxu0 %v469
        %1352 = vmatpush.msra.mxu0 %v465
        %1353 = vmatpush.msra.mxu0 %v461
        %1354 = vmatpush.msra.mxu0 %v457
        %1355 = vmatpush.msra.mxu0 %v453
        %1356 = vmatpush.msra.mxu0 %v449
        %1357 = vmatpush.msra.mxu0 %v445
        %1358 = vmatpush.msra.mxu0 %v441
        %1359 = vmatmul.f32.gmra.mxu0 %v236
        %v1360 = vpop.f32.mrf.mxu0
        %v1361 = vadd.f32 %v1341, %v1360
        %1362 = vdwg.mxu0
        %1363 = vmatpush.msra.mxu0 %v565
        %1364 = vmatpush.msra.mxu0 %v561
        %1365 = vmatpush.msra.mxu0 %v557
        %1366 = vmatpush.msra.mxu0 %v553
        %1367 = vmatpush.msra.mxu0 %v549
        %1368 = vmatpush.msra.mxu0 %v545
        %1369 = vmatpush.msra.mxu0 %v541
        %1370 = vmatpush.msra.mxu0 %v537
        %1371 = vmatpush.msra.mxu0 %v533
        %1372 = vmatpush.msra.mxu0 %v529
        %1373 = vmatpush.msra.mxu0 %v525
        %1374 = vmatpush.msra.mxu0 %v521
        %1375 = vmatpush.msra.mxu0 %v517
        %1376 = vmatpush.msra.mxu0 %v513
        %1377 = vmatpush.msra.mxu0 %v509
        %1378 = vmatpush.msra.mxu0 %v505
        %1379 = vmatmul.f32.gmra.mxu0 %v237
        %v1380 = vpop.f32.mrf.mxu0
        %v1381 = vadd.f32 %v1361, %v1380
        %1382 = vdwg.mxu0
        %1383 = vmatpush.msra.mxu0 %v629
        %1384 = vmatpush.msra.mxu0 %v625
        %1385 = vmatpush.msra.mxu0 %v621
        %1386 = vmatpush.msra.mxu0 %v617
        %1387 = vmatpush.msra.mxu0 %v613
        %1388 = vmatpush.msra.mxu0 %v609
        %1389 = vmatpush.msra.mxu0 %v605
        %1390 = vmatpush.msra.mxu0 %v601
        %1391 = vmatpush.msra.mxu0 %v597
        %1392 = vmatpush.msra.mxu0 %v593
        %1393 = vmatpush.msra.mxu0 %v589
        %1394 = vmatpush.msra.mxu0 %v585
        %1395 = vmatpush.msra.mxu0 %v581
        %1396 = vmatpush.msra.mxu0 %v577
        %1397 = vmatpush.msra.mxu0 %v573
        %1398 = vmatpush.msra.mxu0 %v569
        %1399 = vmatmul.f32.gmra.mxu0 %v238
        %v1400 = vpop.f32.mrf.mxu0
        %v1401 = vadd.f32 %v1381, %v1400
        %1402 = vdwg.mxu0
        %1403 = vmatpush.msra.mxu0 %v693
        %1404 = vmatpush.msra.mxu0 %v689
        %1405 = vmatpush.msra.mxu0 %v685
        %1406 = vmatpush.msra.mxu0 %v681
        %1407 = vmatpush.msra.mxu0 %v677
        %1408 = vmatpush.msra.mxu0 %v673
        %1409 = vmatpush.msra.mxu0 %v669
        %1410 = vmatpush.msra.mxu0 %v665
        %1411 = vmatpush.msra.mxu0 %v661
        %1412 = vmatpush.msra.mxu0 %v657
        %1413 = vmatpush.msra.mxu0 %v653
        %1414 = vmatpush.msra.mxu0 %v649
        %1415 = vmatpush.msra.mxu0 %v645
        %1416 = vmatpush.msra.mxu0 %v641
        %1417 = vmatpush.msra.mxu0 %v637
        %1418 = vmatpush.msra.mxu0 %v633
        %1419 = vmatmul.f32.gmra.mxu0 %v239
        %v1420 = vpop.f32.mrf.mxu0
        %v1421 = vadd.f32 %v1401, %v1420
        %1422 = vdwg.mxu0
        %1423 = vmatpush.msra.mxu0 %v757
        %1424 = vmatpush.msra.mxu0 %v753
        %1425 = vmatpush.msra.mxu0 %v749
        %1426 = vmatpush.msra.mxu0 %v745
        %1427 = vmatpush.msra.mxu0 %v741
        %1428 = vmatpush.msra.mxu0 %v737
        %1429 = vmatpush.msra.mxu0 %v733
        %1430 = vmatpush.msra.mxu0 %v729
        %1431 = vmatpush.msra.mxu0 %v725
        %1432 = vmatpush.msra.mxu0 %v721
        %1433 = vmatpush.msra.mxu0 %v717
        %1434 = vmatpush.msra.mxu0 %v713
        %1435 = vmatpush.msra.mxu0 %v709
        %1436 = vmatpush.msra.mxu0 %v705
        %1437 = vmatpush.msra.mxu0 %v701
        %1438 = vmatpush.msra.mxu0 %v697
        %1439 = vmatmul.f32.gmra.mxu0 %v240
        %v1440 = vpop.f32.mrf.mxu0
        %v1441 = vadd.f32 %v1421, %v1440
        %1442 = vdwg.mxu0
        %1443 = vmatpush.msra.mxu0 %v821
        %1444 = vmatpush.msra.mxu0 %v817
        %1445 = vmatpush.msra.mxu0 %v813
        %1446 = vmatpush.msra.mxu0 %v809
        %1447 = vmatpush.msra.mxu0 %v805
        %1448 = vmatpush.msra.mxu0 %v801
        %1449 = vmatpush.msra.mxu0 %v797
        %1450 = vmatpush.msra.mxu0 %v793
        %1451 = vmatpush.msra.mxu0 %v789
        %1452 = vmatpush.msra.mxu0 %v785
        %1453 = vmatpush.msra.mxu0 %v781
        %1454 = vmatpush.msra.mxu0 %v777
        %1455 = vmatpush.msra.mxu0 %v773
        %1456 = vmatpush.msra.mxu0 %v769
        %1457 = vmatpush.msra.mxu0 %v765
        %1458 = vmatpush.msra.mxu0 %v761
        %1459 = vmatmul.f32.gmra.mxu0 %v241
        %v1460 = vpop.f32.mrf.mxu0
        %v1461 = vadd.f32 %v1441, %v1460
        %1462 = vdwg.mxu0
        %1463 = vmatpush.msra.mxu0 %v885
        %1464 = vmatpush.msra.mxu0 %v881
        %1465 = vmatpush.msra.mxu0 %v877
        %1466 = vmatpush.msra.mxu0 %v873
        %1467 = vmatpush.msra.mxu0 %v869
        %1468 = vmatpush.msra.mxu0 %v865
        %1469 = vmatpush.msra.mxu0 %v861
        %1470 = vmatpush.msra.mxu0 %v857
        %1471 = vmatpush.msra.mxu0 %v853
        %1472 = vmatpush.msra.mxu0 %v849
        %1473 = vmatpush.msra.mxu0 %v845
        %1474 = vmatpush.msra.mxu0 %v841
        %1475 = vmatpush.msra.mxu0 %v837
        %1476 = vmatpush.msra.mxu0 %v833
        %1477 = vmatpush.msra.mxu0 %v829
        %1478 = vmatpush.msra.mxu0 %v825
        %1479 = vmatmul.f32.gmra.mxu0 %v242
        %v1480 = vpop.f32.mrf.mxu0
        %v1481 = vadd.f32 %v1461, %v1480
        %1482 = vdwg.mxu0
        %1483 = vmatpush.msra.mxu0 %v949
        %1484 = vmatpush.msra.mxu0 %v945
        %1485 = vmatpush.msra.mxu0 %v941
        %1486 = vmatpush.msra.mxu0 %v937
        %1487 = vmatpush.msra.mxu0 %v933
        %1488 = vmatpush.msra.mxu0 %v929
        %1489 = vmatpush.msra.mxu0 %v925
        %1490 = vmatpush.msra.mxu0 %v921
        %1491 = vmatpush.msra.mxu0 %v917
        %1492 = vmatpush.msra.mxu0 %v913
        %1493 = vmatpush.msra.mxu0 %v909
        %1494 = vmatpush.msra.mxu0 %v905
        %1495 = vmatpush.msra.mxu0 %v901
        %1496 = vmatpush.msra.mxu0 %v897
        %1497 = vmatpush.msra.mxu0 %v893
        %1498 = vmatpush.msra.mxu0 %v889
        %1499 = vmatmul.f32.gmra.mxu0 %v243
        %v1500 = vpop.f32.mrf.mxu0
        %v1501 = vadd.f32 %v1481, %v1500
        %1502 = vdwg.mxu0
        %1503 = vmatpush.msra.mxu0 %v1013
        %1504 = vmatpush.msra.mxu0 %v1009
        %1505 = vmatpush.msra.mxu0 %v1005
        %1506 = vmatpush.msra.mxu0 %v1001
        %1507 = vmatpush.msra.mxu0 %v997
        %1508 = vmatpush.msra.mxu0 %v993
        %1509 = vmatpush.msra.mxu0 %v989
        %1510 = vmatpush.msra.mxu0 %v985
        %1511 = vmatpush.msra.mxu0 %v981
        %1512 = vmatpush.msra.mxu0 %v977
        %1513 = vmatpush.msra.mxu0 %v973
        %1514 = vmatpush.msra.mxu0 %v969
        %1515 = vmatpush.msra.mxu0 %v965
        %1516 = vmatpush.msra.mxu0 %v961
        %1517 = vmatpush.msra.mxu0 %v957
        %1518 = vmatpush.msra.mxu0 %v953
        %1519 = vmatmul.f32.gmra.mxu0 %v244
        %v1520 = vpop.f32.mrf.mxu0
        %v1521 = vadd.f32 %v1501, %v1520
        %1522 = vdwg.mxu0
        %1523 = vmatpush.msra.mxu0 %v1077
        %1524 = vmatpush.msra.mxu0 %v1073
        %1525 = vmatpush.msra.mxu0 %v1069
        %1526 = vmatpush.msra.mxu0 %v1065
        %1527 = vmatpush.msra.mxu0 %v1061
        %1528 = vmatpush.msra.mxu0 %v1057
        %1529 = vmatpush.msra.mxu0 %v1053
        %1530 = vmatpush.msra.mxu0 %v1049
        %1531 = vmatpush.msra.mxu0 %v1045
        %1532 = vmatpush.msra.mxu0 %v1041
        %1533 = vmatpush.msra.mxu0 %v1037
        %1534 = vmatpush.msra.mxu0 %v1033
        %1535 = vmatpush.msra.mxu0 %v1029
        %1536 = vmatpush.msra.mxu0 %v1025
        %1537 = vmatpush.msra.mxu0 %v1021
        %1538 = vmatpush.msra.mxu0 %v1017
        %1539 = vmatmul.f32.gmra.mxu0 %v245
        %v1540 = vpop.f32.mrf.mxu0
        %v1541 = vadd.f32 %v1521, %v1540
        %1542 = vdwg.mxu0
        %1543 = vmatpush.msra.mxu0 %v1141
        %1544 = vmatpush.msra.mxu0 %v1137
        %1545 = vmatpush.msra.mxu0 %v1133
        %1546 = vmatpush.msra.mxu0 %v1129
        %1547 = vmatpush.msra.mxu0 %v1125
        %1548 = vmatpush.msra.mxu0 %v1121
        %1549 = vmatpush.msra.mxu0 %v1117
        %1550 = vmatpush.msra.mxu0 %v1113
        %1551 = vmatpush.msra.mxu0 %v1109
        %1552 = vmatpush.msra.mxu0 %v1105
        %1553 = vmatpush.msra.mxu0 %v1101
        %1554 = vmatpush.msra.mxu0 %v1097
        %1555 = vmatpush.msra.mxu0 %v1093
        %1556 = vmatpush.msra.mxu0 %v1089
        %1557 = vmatpush.msra.mxu0 %v1085
        %1558 = vmatpush.msra.mxu0 %v1081
        %1559 = vmatmul.f32.gmra.mxu0 %v246
        %v1560 = vpop.f32.mrf.mxu0
        %v1561 = vadd.f32 %v1541, %v1560
        %1562 = vdwg.mxu0
        %1563 = vmatpush.msra.mxu0 %v1205
        %1564 = vmatpush.msra.mxu0 %v1201
        %1565 = vmatpush.msra.mxu0 %v1197
        %1566 = vmatpush.msra.mxu0 %v1193
        %1567 = vmatpush.msra.mxu0 %v1189
        %1568 = vmatpush.msra.mxu0 %v1185
        %1569 = vmatpush.msra.mxu0 %v1181
        %1570 = vmatpush.msra.mxu0 %v1177
        %1571 = vmatpush.msra.mxu0 %v1173
        %1572 = vmatpush.msra.mxu0 %v1169
        %1573 = vmatpush.msra.mxu0 %v1165
        %1574 = vmatpush.msra.mxu0 %v1161
        %1575 = vmatpush.msra.mxu0 %v1157
        %1576 = vmatpush.msra.mxu0 %v1153
        %1577 = vmatpush.msra.mxu0 %v1149
        %1578 = vmatpush.msra.mxu0 %v1145
        %1579 = vmatmul.f32.gmra.mxu0 %v247
        %v1580 = vpop.f32.mrf.mxu0
        %v1581 = vadd.f32 %v1561, %v1580
        %1582 = vdwg.mxu0
        %1583 = vmatpush.msra.mxu0 %v1269
        %1584 = vmatpush.msra.mxu0 %v1265
        %1585 = vmatpush.msra.mxu0 %v1261
        %1586 = vmatpush.msra.mxu0 %v1257
        %1587 = vmatpush.msra.mxu0 %v1253
        %1588 = vmatpush.msra.mxu0 %v1249
        %1589 = vmatpush.msra.mxu0 %v1245
        %1590 = vmatpush.msra.mxu0 %v1241
        %1591 = vmatpush.msra.mxu0 %v1237
        %1592 = vmatpush.msra.mxu0 %v1233
        %1593 = vmatpush.msra.mxu0 %v1229
        %1594 = vmatpush.msra.mxu0 %v1225
        %1595 = vmatpush.msra.mxu0 %v1221
        %1596 = vmatpush.msra.mxu0 %v1217
        %1597 = vmatpush.msra.mxu0 %v1213
        %1598 = vmatpush.msra.mxu0 %v1209
        %1599 = vmatmul.f32.gmra.mxu0 %v248
        %v1600 = vpop.f32.mrf.mxu0
        %v1601 = vadd.f32 %v1581, %v1600
        %1602 = vdwg.mxu0
        %1603 = vmatpush.msra.mxu0 %v310
        %1604 = vmatpush.msra.mxu0 %v306
        %1605 = vmatpush.msra.mxu0 %v302
        %1606 = vmatpush.msra.mxu0 %v298
        %1607 = vmatpush.msra.mxu0 %v294
        %1608 = vmatpush.msra.mxu0 %v290
        %1609 = vmatpush.msra.mxu0 %v286
        %1610 = vmatpush.msra.mxu0 %v282
        %1611 = vmatpush.msra.mxu0 %v278
        %1612 = vmatpush.msra.mxu0 %v274
        %1613 = vmatpush.msra.mxu0 %v270
        %1614 = vmatpush.msra.mxu0 %v266
        %1615 = vmatpush.msra.mxu0 %v262
        %1616 = vmatpush.msra.mxu0 %v258
        %1617 = vmatpush.msra.mxu0 %v254
        %1618 = vmatpush.msra.mxu0 %v250
        %1619 = vmatmul.f32.gmra.mxu0 %v233
        %v1620 = vpop.f32.mrf.mxu0
        %v1621 = vadd.f32 %v1276, %v1620
        %1622 = vdwg.mxu0
        %1623 = vmatpush.msra.mxu0 %v374
        %1624 = vmatpush.msra.mxu0 %v370
        %1625 = vmatpush.msra.mxu0 %v366
        %1626 = vmatpush.msra.mxu0 %v362
        %1627 = vmatpush.msra.mxu0 %v358
        %1628 = vmatpush.msra.mxu0 %v354
        %1629 = vmatpush.msra.mxu0 %v350
        %1630 = vmatpush.msra.mxu0 %v346
        %1631 = vmatpush.msra.mxu0 %v342
        %1632 = vmatpush.msra.mxu0 %v338
        %1633 = vmatpush.msra.mxu0 %v334
        %1634 = vmatpush.msra.mxu0 %v330
        %1635 = vmatpush.msra.mxu0 %v326
        %1636 = vmatpush.msra.mxu0 %v322
        %1637 = vmatpush.msra.mxu0 %v318
        %1638 = vmatpush.msra.mxu0 %v314
        %1639 = vmatmul.f32.gmra.mxu0 %v234
        %v1640 = vpop.f32.mrf.mxu0
        %v1641 = vadd.f32 %v1621, %v1640
        %1642 = vdwg.mxu0
        %1643 = vmatpush.msra.mxu0 %v438
        %1644 = vmatpush.msra.mxu0 %v434
        %1645 = vmatpush.msra.mxu0 %v430
        %1646 = vmatpush.msra.mxu0 %v426
        %1647 = vmatpush.msra.mxu0 %v422
        %1648 = vmatpush.msra.mxu0 %v418
        %1649 = vmatpush.msra.mxu0 %v414
        %1650 = vmatpush.msra.mxu0 %v410
        %1651 = vmatpush.msra.mxu0 %v406
        %1652 = vmatpush.msra.mxu0 %v402
        %1653 = vmatpush.msra.mxu0 %v398
        %1654 = vmatpush.msra.mxu0 %v394
        %1655 = vmatpush.msra.mxu0 %v390
        %1656 = vmatpush.msra.mxu0 %v386
        %1657 = vmatpush.msra.mxu0 %v382
        %1658 = vmatpush.msra.mxu0 %v378
        %1659 = vmatmul.f32.gmra.mxu0 %v235
        %v1660 = vpop.f32.mrf.mxu0
        %v1661 = vadd.f32 %v1641, %v1660
        %1662 = vdwg.mxu0
        %1663 = vmatpush.msra.mxu0 %v502
        %1664 = vmatpush.msra.mxu0 %v498
        %1665 = vmatpush.msra.mxu0 %v494
        %1666 = vmatpush.msra.mxu0 %v490
        %1667 = vmatpush.msra.mxu0 %v486
        %1668 = vmatpush.msra.mxu0 %v482
        %1669 = vmatpush.msra.mxu0 %v478
        %1670 = vmatpush.msra.mxu0 %v474
        %1671 = vmatpush.msra.mxu0 %v470
        %1672 = vmatpush.msra.mxu0 %v466
        %1673 = vmatpush.msra.mxu0 %v462
        %1674 = vmatpush.msra.mxu0 %v458
        %1675 = vmatpush.msra.mxu0 %v454
        %1676 = vmatpush.msra.mxu0 %v450
        %1677 = vmatpush.msra.mxu0 %v446
        %1678 = vmatpush.msra.mxu0 %v442
        %1679 = vmatmul.f32.gmra.mxu0 %v236
        %v1680 = vpop.f32.mrf.mxu0
        %v1681 = vadd.f32 %v1661, %v1680
        %1682 = vdwg.mxu0
        %1683 = vmatpush.msra.mxu0 %v566
        %1684 = vmatpush.msra.mxu0 %v562
        %1685 = vmatpush.msra.mxu0 %v558
        %1686 = vmatpush.msra.mxu0 %v554
        %1687 = vmatpush.msra.mxu0 %v550
        %1688 = vmatpush.msra.mxu0 %v546
        %1689 = vmatpush.msra.mxu0 %v542
        %1690 = vmatpush.msra.mxu0 %v538
        %1691 = vmatpush.msra.mxu0 %v534
        %1692 = vmatpush.msra.mxu0 %v530
        %1693 = vmatpush.msra.mxu0 %v526
        %1694 = vmatpush.msra.mxu0 %v522
        %1695 = vmatpush.msra.mxu0 %v518
        %1696 = vmatpush.msra.mxu0 %v514
        %1697 = vmatpush.msra.mxu0 %v510
        %1698 = vmatpush.msra.mxu0 %v506
        %1699 = vmatmul.f32.gmra.mxu0 %v237
        %v1700 = vpop.f32.mrf.mxu0
        %v1701 = vadd.f32 %v1681, %v1700
        %1702 = vdwg.mxu0
        %1703 = vmatpush.msra.mxu0 %v630
        %1704 = vmatpush.msra.mxu0 %v626
        %1705 = vmatpush.msra.mxu0 %v622
        %1706 = vmatpush.msra.mxu0 %v618
        %1707 = vmatpush.msra.mxu0 %v614
        %1708 = vmatpush.msra.mxu0 %v610
        %1709 = vmatpush.msra.mxu0 %v606
        %1710 = vmatpush.msra.mxu0 %v602
        %1711 = vmatpush.msra.mxu0 %v598
        %1712 = vmatpush.msra.mxu0 %v594
        %1713 = vmatpush.msra.mxu0 %v590
        %1714 = vmatpush.msra.mxu0 %v586
        %1715 = vmatpush.msra.mxu0 %v582
        %1716 = vmatpush.msra.mxu0 %v578
        %1717 = vmatpush.msra.mxu0 %v574
        %1718 = vmatpush.msra.mxu0 %v570
        %1719 = vmatmul.f32.gmra.mxu0 %v238
        %v1720 = vpop.f32.mrf.mxu0
        %v1721 = vadd.f32 %v1701, %v1720
        %1722 = vdwg.mxu0
        %1723 = vmatpush.msra.mxu0 %v694
        %1724 = vmatpush.msra.mxu0 %v690
        %1725 = vmatpush.msra.mxu0 %v686
        %1726 = vmatpush.msra.mxu0 %v682
        %1727 = vmatpush.msra.mxu0 %v678
        %1728 = vmatpush.msra.mxu0 %v674
        %1729 = vmatpush.msra.mxu0 %v670
        %1730 = vmatpush.msra.mxu0 %v666
        %1731 = vmatpush.msra.mxu0 %v662
        %1732 = vmatpush.msra.mxu0 %v658
        %1733 = vmatpush.msra.mxu0 %v654
        %1734 = vmatpush.msra.mxu0 %v650
        %1735 = vmatpush.msra.mxu0 %v646
        %1736 = vmatpush.msra.mxu0 %v642
        %1737 = vmatpush.msra.mxu0 %v638
        %1738 = vmatpush.msra.mxu0 %v634
        %1739 = vmatmul.f32.gmra.mxu0 %v239
        %v1740 = vpop.f32.mrf.mxu0
        %v1741 = vadd.f32 %v1721, %v1740
        %1742 = vdwg.mxu0
        %1743 = vmatpush.msra.mxu0 %v758
        %1744 = vmatpush.msra.mxu0 %v754
        %1745 = vmatpush.msra.mxu0 %v750
        %1746 = vmatpush.msra.mxu0 %v746
        %1747 = vmatpush.msra.mxu0 %v742
        %1748 = vmatpush.msra.mxu0 %v738
        %1749 = vmatpush.msra.mxu0 %v734
        %1750 = vmatpush.msra.mxu0 %v730
        %1751 = vmatpush.msra.mxu0 %v726
        %1752 = vmatpush.msra.mxu0 %v722
        %1753 = vmatpush.msra.mxu0 %v718
        %1754 = vmatpush.msra.mxu0 %v714
        %1755 = vmatpush.msra.mxu0 %v710
        %1756 = vmatpush.msra.mxu0 %v706
        %1757 = vmatpush.msra.mxu0 %v702
        %1758 = vmatpush.msra.mxu0 %v698
        %1759 = vmatmul.f32.gmra.mxu0 %v240
        %v1760 = vpop.f32.mrf.mxu0
        %v1761 = vadd.f32 %v1741, %v1760
        %1762 = vdwg.mxu0
        %1763 = vmatpush.msra.mxu0 %v822
        %1764 = vmatpush.msra.mxu0 %v818
        %1765 = vmatpush.msra.mxu0 %v814
        %1766 = vmatpush.msra.mxu0 %v810
        %1767 = vmatpush.msra.mxu0 %v806
        %1768 = vmatpush.msra.mxu0 %v802
        %1769 = vmatpush.msra.mxu0 %v798
        %1770 = vmatpush.msra.mxu0 %v794
        %1771 = vmatpush.msra.mxu0 %v790
        %1772 = vmatpush.msra.mxu0 %v786
        %1773 = vmatpush.msra.mxu0 %v782
        %1774 = vmatpush.msra.mxu0 %v778
        %1775 = vmatpush.msra.mxu0 %v774
        %1776 = vmatpush.msra.mxu0 %v770
        %1777 = vmatpush.msra.mxu0 %v766
        %1778 = vmatpush.msra.mxu0 %v762
        %1779 = vmatmul.f32.gmra.mxu0 %v241
        %v1780 = vpop.f32.mrf.mxu0
        %v1781 = vadd.f32 %v1761, %v1780
        %1782 = vdwg.mxu0
        %1783 = vmatpush.msra.mxu0 %v886
        %1784 = vmatpush.msra.mxu0 %v882
        %1785 = vmatpush.msra.mxu0 %v878
        %1786 = vmatpush.msra.mxu0 %v874
        %1787 = vmatpush.msra.mxu0 %v870
        %1788 = vmatpush.msra.mxu0 %v866
        %1789 = vmatpush.msra.mxu0 %v862
        %1790 = vmatpush.msra.mxu0 %v858
        %1791 = vmatpush.msra.mxu0 %v854
        %1792 = vmatpush.msra.mxu0 %v850
        %1793 = vmatpush.msra.mxu0 %v846
        %1794 = vmatpush.msra.mxu0 %v842
        %1795 = vmatpush.msra.mxu0 %v838
        %1796 = vmatpush.msra.mxu0 %v834
        %1797 = vmatpush.msra.mxu0 %v830
        %1798 = vmatpush.msra.mxu0 %v826
        %1799 = vmatmul.f32.gmra.mxu0 %v242
        %v1800 = vpop.f32.mrf.mxu0
        %v1801 = vadd.f32 %v1781, %v1800
        %1802 = vdwg.mxu0
        %1803 = vmatpush.msra.mxu0 %v950
        %1804 = vmatpush.msra.mxu0 %v946
        %1805 = vmatpush.msra.mxu0 %v942
        %1806 = vmatpush.msra.mxu0 %v938
        %1807 = vmatpush.msra.mxu0 %v934
        %1808 = vmatpush.msra.mxu0 %v930
        %1809 = vmatpush.msra.mxu0 %v926
        %1810 = vmatpush.msra.mxu0 %v922
        %1811 = vmatpush.msra.mxu0 %v918
        %1812 = vmatpush.msra.mxu0 %v914
        %1813 = vmatpush.msra.mxu0 %v910
        %1814 = vmatpush.msra.mxu0 %v906
        %1815 = vmatpush.msra.mxu0 %v902
        %1816 = vmatpush.msra.mxu0 %v898
        %1817 = vmatpush.msra.mxu0 %v894
        %1818 = vmatpush.msra.mxu0 %v890
        %1819 = vmatmul.f32.gmra.mxu0 %v243
        %v1820 = vpop.f32.mrf.mxu0
        %v1821 = vadd.f32 %v1801, %v1820
        %1822 = vdwg.mxu0
        %1823 = vmatpush.msra.mxu0 %v1014
        %1824 = vmatpush.msra.mxu0 %v1010
        %1825 = vmatpush.msra.mxu0 %v1006
        %1826 = vmatpush.msra.mxu0 %v1002
        %1827 = vmatpush.msra.mxu0 %v998
        %1828 = vmatpush.msra.mxu0 %v994
        %1829 = vmatpush.msra.mxu0 %v990
        %1830 = vmatpush.msra.mxu0 %v986
        %1831 = vmatpush.msra.mxu0 %v982
        %1832 = vmatpush.msra.mxu0 %v978
        %1833 = vmatpush.msra.mxu0 %v974
        %1834 = vmatpush.msra.mxu0 %v970
        %1835 = vmatpush.msra.mxu0 %v966
        %1836 = vmatpush.msra.mxu0 %v962
        %1837 = vmatpush.msra.mxu0 %v958
        %1838 = vmatpush.msra.mxu0 %v954
        %1839 = vmatmul.f32.gmra.mxu0 %v244
        %v1840 = vpop.f32.mrf.mxu0
        %v1841 = vadd.f32 %v1821, %v1840
        %1842 = vdwg.mxu0
        %1843 = vmatpush.msra.mxu0 %v1078
        %1844 = vmatpush.msra.mxu0 %v1074
        %1845 = vmatpush.msra.mxu0 %v1070
        %1846 = vmatpush.msra.mxu0 %v1066
        %1847 = vmatpush.msra.mxu0 %v1062
        %1848 = vmatpush.msra.mxu0 %v1058
        %1849 = vmatpush.msra.mxu0 %v1054
        %1850 = vmatpush.msra.mxu0 %v1050
        %1851 = vmatpush.msra.mxu0 %v1046
        %1852 = vmatpush.msra.mxu0 %v1042
        %1853 = vmatpush.msra.mxu0 %v1038
        %1854 = vmatpush.msra.mxu0 %v1034
        %1855 = vmatpush.msra.mxu0 %v1030
        %1856 = vmatpush.msra.mxu0 %v1026
        %1857 = vmatpush.msra.mxu0 %v1022
        %1858 = vmatpush.msra.mxu0 %v1018
        %1859 = vmatmul.f32.gmra.mxu0 %v245
        %v1860 = vpop.f32.mrf.mxu0
        %v1861 = vadd.f32 %v1841, %v1860
        %1862 = vdwg.mxu0
        %1863 = vmatpush.msra.mxu0 %v1142
        %1864 = vmatpush.msra.mxu0 %v1138
        %1865 = vmatpush.msra.mxu0 %v1134
        %1866 = vmatpush.msra.mxu0 %v1130
        %1867 = vmatpush.msra.mxu0 %v1126
        %1868 = vmatpush.msra.mxu0 %v1122
        %1869 = vmatpush.msra.mxu0 %v1118
        %1870 = vmatpush.msra.mxu0 %v1114
        %1871 = vmatpush.msra.mxu0 %v1110
        %1872 = vmatpush.msra.mxu0 %v1106
        %1873 = vmatpush.msra.mxu0 %v1102
        %1874 = vmatpush.msra.mxu0 %v1098
        %1875 = vmatpush.msra.mxu0 %v1094
        %1876 = vmatpush.msra.mxu0 %v1090
        %1877 = vmatpush.msra.mxu0 %v1086
        %1878 = vmatpush.msra.mxu0 %v1082
        %1879 = vmatmul.f32.gmra.mxu0 %v246
        %v1880 = vpop.f32.mrf.mxu0
        %v1881 = vadd.f32 %v1861, %v1880
        %1882 = vdwg.mxu0
        %1883 = vmatpush.msra.mxu0 %v1206
        %1884 = vmatpush.msra.mxu0 %v1202
        %1885 = vmatpush.msra.mxu0 %v1198
        %1886 = vmatpush.msra.mxu0 %v1194
        %1887 = vmatpush.msra.mxu0 %v1190
        %1888 = vmatpush.msra.mxu0 %v1186
        %1889 = vmatpush.msra.mxu0 %v1182
        %1890 = vmatpush.msra.mxu0 %v1178
        %1891 = vmatpush.msra.mxu0 %v1174
        %1892 = vmatpush.msra.mxu0 %v1170
        %1893 = vmatpush.msra.mxu0 %v1166
        %1894 = vmatpush.msra.mxu0 %v1162
        %1895 = vmatpush.msra.mxu0 %v1158
        %1896 = vmatpush.msra.mxu0 %v1154
        %1897 = vmatpush.msra.mxu0 %v1150
        %1898 = vmatpush.msra.mxu0 %v1146
        %1899 = vmatmul.f32.gmra.mxu0 %v247
        %v1900 = vpop.f32.mrf.mxu0
        %v1901 = vadd.f32 %v1881, %v1900
        %1902 = vdwg.mxu0
        %1903 = vmatpush.msra.mxu0 %v1270
        %1904 = vmatpush.msra.mxu0 %v1266
        %1905 = vmatpush.msra.mxu0 %v1262
        %1906 = vmatpush.msra.mxu0 %v1258
        %1907 = vmatpush.msra.mxu0 %v1254
        %1908 = vmatpush.msra.mxu0 %v1250
        %1909 = vmatpush.msra.mxu0 %v1246
        %1910 = vmatpush.msra.mxu0 %v1242
        %1911 = vmatpush.msra.mxu0 %v1238
        %1912 = vmatpush.msra.mxu0 %v1234
        %1913 = vmatpush.msra.mxu0 %v1230
        %1914 = vmatpush.msra.mxu0 %v1226
        %1915 = vmatpush.msra.mxu0 %v1222
        %1916 = vmatpush.msra.mxu0 %v1218
        %1917 = vmatpush.msra.mxu0 %v1214
        %1918 = vmatpush.msra.mxu0 %v1210
        %1919 = vmatmul.f32.gmra.mxu0 %v248
        %v1920 = vpop.f32.mrf.mxu0
        %v1921 = vadd.f32 %v1901, %v1920
        %1922 = vdwg.mxu0
        %1923 = vmatpush.msra.mxu0 %v311
        %1924 = vmatpush.msra.mxu0 %v307
        %1925 = vmatpush.msra.mxu0 %v303
        %1926 = vmatpush.msra.mxu0 %v299
        %1927 = vmatpush.msra.mxu0 %v295
        %1928 = vmatpush.msra.mxu0 %v291
        %1929 = vmatpush.msra.mxu0 %v287
        %1930 = vmatpush.msra.mxu0 %v283
        %1931 = vmatpush.msra.mxu0 %v279
        %1932 = vmatpush.msra.mxu0 %v275
        %1933 = vmatpush.msra.mxu0 %v271
        %1934 = vmatpush.msra.mxu0 %v267
        %1935 = vmatpush.msra.mxu0 %v263
        %1936 = vmatpush.msra.mxu0 %v259
        %1937 = vmatpush.msra.mxu0 %v255
        %1938 = vmatpush.msra.mxu0 %v251
        %1939 = vmatmul.f32.gmra.mxu0 %v233
        %v1940 = vpop.f32.mrf.mxu0
        %v1941 = vadd.f32 %v1277, %v1940
        %1942 = vdwg.mxu0
        %1943 = vmatpush.msra.mxu0 %v375
        %1944 = vmatpush.msra.mxu0 %v371
        %1945 = vmatpush.msra.mxu0 %v367
        %1946 = vmatpush.msra.mxu0 %v363
        %1947 = vmatpush.msra.mxu0 %v359
        %1948 = vmatpush.msra.mxu0 %v355
        %1949 = vmatpush.msra.mxu0 %v351
        %1950 = vmatpush.msra.mxu0 %v347
        %1951 = vmatpush.msra.mxu0 %v343
        %1952 = vmatpush.msra.mxu0 %v339
        %1953 = vmatpush.msra.mxu0 %v335
        %1954 = vmatpush.msra.mxu0 %v331
        %1955 = vmatpush.msra.mxu0 %v327
        %1956 = vmatpush.msra.mxu0 %v323
        %1957 = vmatpush.msra.mxu0 %v319
        %1958 = vmatpush.msra.mxu0 %v315
        %1959 = vmatmul.f32.gmra.mxu0 %v234
        %v1960 = vpop.f32.mrf.mxu0
        %v1961 = vadd.f32 %v1941, %v1960
        %1962 = vdwg.mxu0
        %1963 = vmatpush.msra.mxu0 %v439
        %1964 = vmatpush.msra.mxu0 %v435
        %1965 = vmatpush.msra.mxu0 %v431
        %1966 = vmatpush.msra.mxu0 %v427
        %1967 = vmatpush.msra.mxu0 %v423
        %1968 = vmatpush.msra.mxu0 %v419
        %1969 = vmatpush.msra.mxu0 %v415
        %1970 = vmatpush.msra.mxu0 %v411
        %1971 = vmatpush.msra.mxu0 %v407
        %1972 = vmatpush.msra.mxu0 %v403
        %1973 = vmatpush.msra.mxu0 %v399
        %1974 = vmatpush.msra.mxu0 %v395
        %1975 = vmatpush.msra.mxu0 %v391
        %1976 = vmatpush.msra.mxu0 %v387
        %1977 = vmatpush.msra.mxu0 %v383
        %1978 = vmatpush.msra.mxu0 %v379
        %1979 = vmatmul.f32.gmra.mxu0 %v235
        %v1980 = vpop.f32.mrf.mxu0
        %v1981 = vadd.f32 %v1961, %v1980
        %1982 = vdwg.mxu0
        %1983 = vmatpush.msra.mxu0 %v503
        %1984 = vmatpush.msra.mxu0 %v499
        %1985 = vmatpush.msra.mxu0 %v495
        %1986 = vmatpush.msra.mxu0 %v491
        %1987 = vmatpush.msra.mxu0 %v487
        %1988 = vmatpush.msra.mxu0 %v483
        %1989 = vmatpush.msra.mxu0 %v479
        %1990 = vmatpush.msra.mxu0 %v475
        %1991 = vmatpush.msra.mxu0 %v471
        %1992 = vmatpush.msra.mxu0 %v467
        %1993 = vmatpush.msra.mxu0 %v463
        %1994 = vmatpush.msra.mxu0 %v459
        %1995 = vmatpush.msra.mxu0 %v455
        %1996 = vmatpush.msra.mxu0 %v451
        %1997 = vmatpush.msra.mxu0 %v447
        %1998 = vmatpush.msra.mxu0 %v443
        %1999 = vmatmul.f32.gmra.mxu0 %v236
        %v2000 = vpop.f32.mrf.mxu0
        %v2001 = vadd.f32 %v1981, %v2000
        %2002 = vdwg.mxu0
        %2003 = vmatpush.msra.mxu0 %v567
        %2004 = vmatpush.msra.mxu0 %v563
        %2005 = vmatpush.msra.mxu0 %v559
        %2006 = vmatpush.msra.mxu0 %v555
        %2007 = vmatpush.msra.mxu0 %v551
        %2008 = vmatpush.msra.mxu0 %v547
        %2009 = vmatpush.msra.mxu0 %v543
        %2010 = vmatpush.msra.mxu0 %v539
        %2011 = vmatpush.msra.mxu0 %v535
        %2012 = vmatpush.msra.mxu0 %v531
        %2013 = vmatpush.msra.mxu0 %v527
        %2014 = vmatpush.msra.mxu0 %v523
        %2015 = vmatpush.msra.mxu0 %v519
        %2016 = vmatpush.msra.mxu0 %v515
        %2017 = vmatpush.msra.mxu0 %v511
        %2018 = vmatpush.msra.mxu0 %v507
        %2019 = vmatmul.f32.gmra.mxu0 %v237
        %v2020 = vpop.f32.mrf.mxu0
        %v2021 = vadd.f32 %v2001, %v2020
        %2022 = vdwg.mxu0
        %2023 = vmatpush.msra.mxu0 %v631
        %2024 = vmatpush.msra.mxu0 %v627
        %2025 = vmatpush.msra.mxu0 %v623
        %2026 = vmatpush.msra.mxu0 %v619
        %2027 = vmatpush.msra.mxu0 %v615
        %2028 = vmatpush.msra.mxu0 %v611
        %2029 = vmatpush.msra.mxu0 %v607
        %2030 = vmatpush.msra.mxu0 %v603
        %2031 = vmatpush.msra.mxu0 %v599
        %2032 = vmatpush.msra.mxu0 %v595
        %2033 = vmatpush.msra.mxu0 %v591
        %2034 = vmatpush.msra.mxu0 %v587
        %2035 = vmatpush.msra.mxu0 %v583
        %2036 = vmatpush.msra.mxu0 %v579
        %2037 = vmatpush.msra.mxu0 %v575
        %2038 = vmatpush.msra.mxu0 %v571
        %2039 = vmatmul.f32.gmra.mxu0 %v238
        %v2040 = vpop.f32.mrf.mxu0
        %v2041 = vadd.f32 %v2021, %v2040
        %2042 = vdwg.mxu0
        %2043 = vmatpush.msra.mxu0 %v695
        %2044 = vmatpush.msra.mxu0 %v691
        %2045 = vmatpush.msra.mxu0 %v687
        %2046 = vmatpush.msra.mxu0 %v683
        %2047 = vmatpush.msra.mxu0 %v679
        %2048 = vmatpush.msra.mxu0 %v675
        %2049 = vmatpush.msra.mxu0 %v671
        %2050 = vmatpush.msra.mxu0 %v667
        %2051 = vmatpush.msra.mxu0 %v663
        %2052 = vmatpush.msra.mxu0 %v659
        %2053 = vmatpush.msra.mxu0 %v655
        %2054 = vmatpush.msra.mxu0 %v651
        %2055 = vmatpush.msra.mxu0 %v647
        %2056 = vmatpush.msra.mxu0 %v643
        %2057 = vmatpush.msra.mxu0 %v639
        %2058 = vmatpush.msra.mxu0 %v635
        %2059 = vmatmul.f32.gmra.mxu0 %v239
        %v2060 = vpop.f32.mrf.mxu0
        %v2061 = vadd.f32 %v2041, %v2060
        %2062 = vdwg.mxu0
        %2063 = vmatpush.msra.mxu0 %v759
        %2064 = vmatpush.msra.mxu0 %v755
        %2065 = vmatpush.msra.mxu0 %v751
        %2066 = vmatpush.msra.mxu0 %v747
        %2067 = vmatpush.msra.mxu0 %v743
        %2068 = vmatpush.msra.mxu0 %v739
        %2069 = vmatpush.msra.mxu0 %v735
        %2070 = vmatpush.msra.mxu0 %v731
        %2071 = vmatpush.msra.mxu0 %v727
        %2072 = vmatpush.msra.mxu0 %v723
        %2073 = vmatpush.msra.mxu0 %v719
        %2074 = vmatpush.msra.mxu0 %v715
        %2075 = vmatpush.msra.mxu0 %v711
        %2076 = vmatpush.msra.mxu0 %v707
        %2077 = vmatpush.msra.mxu0 %v703
        %2078 = vmatpush.msra.mxu0 %v699
        %2079 = vmatmul.f32.gmra.mxu0 %v240
        %v2080 = vpop.f32.mrf.mxu0
        %v2081 = vadd.f32 %v2061, %v2080
        %2082 = vdwg.mxu0
        %2083 = vmatpush.msra.mxu0 %v823
        %2084 = vmatpush.msra.mxu0 %v819
        %2085 = vmatpush.msra.mxu0 %v815
        %2086 = vmatpush.msra.mxu0 %v811
        %2087 = vmatpush.msra.mxu0 %v807
        %2088 = vmatpush.msra.mxu0 %v803
        %2089 = vmatpush.msra.mxu0 %v799
        %2090 = vmatpush.msra.mxu0 %v795
        %2091 = vmatpush.msra.mxu0 %v791
        %2092 = vmatpush.msra.mxu0 %v787
        %2093 = vmatpush.msra.mxu0 %v783
        %2094 = vmatpush.msra.mxu0 %v779
        %2095 = vmatpush.msra.mxu0 %v775
        %2096 = vmatpush.msra.mxu0 %v771
        %2097 = vmatpush.msra.mxu0 %v767
        %2098 = vmatpush.msra.mxu0 %v763
        %2099 = vmatmul.f32.gmra.mxu0 %v241
        %v2100 = vpop.f32.mrf.mxu0
        %v2101 = vadd.f32 %v2081, %v2100
        %2102 = vdwg.mxu0
        %2103 = vmatpush.msra.mxu0 %v887
        %2104 = vmatpush.msra.mxu0 %v883
        %2105 = vmatpush.msra.mxu0 %v879
        %2106 = vmatpush.msra.mxu0 %v875
        %2107 = vmatpush.msra.mxu0 %v871
        %2108 = vmatpush.msra.mxu0 %v867
        %2109 = vmatpush.msra.mxu0 %v863
        %2110 = vmatpush.msra.mxu0 %v859
        %2111 = vmatpush.msra.mxu0 %v855
        %2112 = vmatpush.msra.mxu0 %v851
        %2113 = vmatpush.msra.mxu0 %v847
        %2114 = vmatpush.msra.mxu0 %v843
        %2115 = vmatpush.msra.mxu0 %v839
        %2116 = vmatpush.msra.mxu0 %v835
        %2117 = vmatpush.msra.mxu0 %v831
        %2118 = vmatpush.msra.mxu0 %v827
        %2119 = vmatmul.f32.gmra.mxu0 %v242
        %v2120 = vpop.f32.mrf.mxu0
        %v2121 = vadd.f32 %v2101, %v2120
        %2122 = vdwg.mxu0
        %2123 = vmatpush.msra.mxu0 %v951
        %2124 = vmatpush.msra.mxu0 %v947
        %2125 = vmatpush.msra.mxu0 %v943
        %2126 = vmatpush.msra.mxu0 %v939
        %2127 = vmatpush.msra.mxu0 %v935
        %2128 = vmatpush.msra.mxu0 %v931
        %2129 = vmatpush.msra.mxu0 %v927
        %2130 = vmatpush.msra.mxu0 %v923
        %2131 = vmatpush.msra.mxu0 %v919
        %2132 = vmatpush.msra.mxu0 %v915
        %2133 = vmatpush.msra.mxu0 %v911
        %2134 = vmatpush.msra.mxu0 %v907
        %2135 = vmatpush.msra.mxu0 %v903
        %2136 = vmatpush.msra.mxu0 %v899
        %2137 = vmatpush.msra.mxu0 %v895
        %2138 = vmatpush.msra.mxu0 %v891
        %2139 = vmatmul.f32.gmra.mxu0 %v243
        %v2140 = vpop.f32.mrf.mxu0
        %v2141 = vadd.f32 %v2121, %v2140
        %2142 = vdwg.mxu0
        %2143 = vmatpush.msra.mxu0 %v1015
        %2144 = vmatpush.msra.mxu0 %v1011
        %2145 = vmatpush.msra.mxu0 %v1007
        %2146 = vmatpush.msra.mxu0 %v1003
        %2147 = vmatpush.msra.mxu0 %v999
        %2148 = vmatpush.msra.mxu0 %v995
        %2149 = vmatpush.msra.mxu0 %v991
        %2150 = vmatpush.msra.mxu0 %v987
        %2151 = vmatpush.msra.mxu0 %v983
        %2152 = vmatpush.msra.mxu0 %v979
        %2153 = vmatpush.msra.mxu0 %v975
        %2154 = vmatpush.msra.mxu0 %v971
        %2155 = vmatpush.msra.mxu0 %v967
        %2156 = vmatpush.msra.mxu0 %v963
        %2157 = vmatpush.msra.mxu0 %v959
        %2158 = vmatpush.msra.mxu0 %v955
        %2159 = vmatmul.f32.gmra.mxu0 %v244
        %v2160 = vpop.f32.mrf.mxu0
        %v2161 = vadd.f32 %v2141, %v2160
        %2162 = vdwg.mxu0
        %2163 = vmatpush.msra.mxu0 %v1079
        %2164 = vmatpush.msra.mxu0 %v1075
        %2165 = vmatpush.msra.mxu0 %v1071
        %2166 = vmatpush.msra.mxu0 %v1067
        %2167 = vmatpush.msra.mxu0 %v1063
        %2168 = vmatpush.msra.mxu0 %v1059
        %2169 = vmatpush.msra.mxu0 %v1055
        %2170 = vmatpush.msra.mxu0 %v1051
        %2171 = vmatpush.msra.mxu0 %v1047
        %2172 = vmatpush.msra.mxu0 %v1043
        %2173 = vmatpush.msra.mxu0 %v1039
        %2174 = vmatpush.msra.mxu0 %v1035
        %2175 = vmatpush.msra.mxu0 %v1031
        %2176 = vmatpush.msra.mxu0 %v1027
        %2177 = vmatpush.msra.mxu0 %v1023
        %2178 = vmatpush.msra.mxu0 %v1019
        %2179 = vmatmul.f32.gmra.mxu0 %v245
        %v2180 = vpop.f32.mrf.mxu0
        %v2181 = vadd.f32 %v2161, %v2180
        %2182 = vdwg.mxu0
        %2183 = vmatpush.msra.mxu0 %v1143
        %2184 = vmatpush.msra.mxu0 %v1139
        %2185 = vmatpush.msra.mxu0 %v1135
        %2186 = vmatpush.msra.mxu0 %v1131
        %2187 = vmatpush.msra.mxu0 %v1127
        %2188 = vmatpush.msra.mxu0 %v1123
        %2189 = vmatpush.msra.mxu0 %v1119
        %2190 = vmatpush.msra.mxu0 %v1115
        %2191 = vmatpush.msra.mxu0 %v1111
        %2192 = vmatpush.msra.mxu0 %v1107
        %2193 = vmatpush.msra.mxu0 %v1103
        %2194 = vmatpush.msra.mxu0 %v1099
        %2195 = vmatpush.msra.mxu0 %v1095
        %2196 = vmatpush.msra.mxu0 %v1091
        %2197 = vmatpush.msra.mxu0 %v1087
        %2198 = vmatpush.msra.mxu0 %v1083
        %2199 = vmatmul.f32.gmra.mxu0 %v246
        %v2200 = vpop.f32.mrf.mxu0
        %v2201 = vadd.f32 %v2181, %v2200
        %2202 = vdwg.mxu0
        %2203 = vmatpush.msra.mxu0 %v1207
        %2204 = vmatpush.msra.mxu0 %v1203
        %2205 = vmatpush.msra.mxu0 %v1199
        %2206 = vmatpush.msra.mxu0 %v1195
        %2207 = vmatpush.msra.mxu0 %v1191
        %2208 = vmatpush.msra.mxu0 %v1187
        %2209 = vmatpush.msra.mxu0 %v1183
        %2210 = vmatpush.msra.mxu0 %v1179
        %2211 = vmatpush.msra.mxu0 %v1175
        %2212 = vmatpush.msra.mxu0 %v1171
        %2213 = vmatpush.msra.mxu0 %v1167
        %2214 = vmatpush.msra.mxu0 %v1163
        %2215 = vmatpush.msra.mxu0 %v1159
        %2216 = vmatpush.msra.mxu0 %v1155
        %2217 = vmatpush.msra.mxu0 %v1151
        %2218 = vmatpush.msra.mxu0 %v1147
        %2219 = vmatmul.f32.gmra.mxu0 %v247
        %v2220 = vpop.f32.mrf.mxu0
        %v2221 = vadd.f32 %v2201, %v2220
        %2222 = vdwg.mxu0
        %2223 = vmatpush.msra.mxu0 %v1271
        %2224 = vmatpush.msra.mxu0 %v1267
        %2225 = vmatpush.msra.mxu0 %v1263
        %2226 = vmatpush.msra.mxu0 %v1259
        %2227 = vmatpush.msra.mxu0 %v1255
        %2228 = vmatpush.msra.mxu0 %v1251
        %2229 = vmatpush.msra.mxu0 %v1247
        %2230 = vmatpush.msra.mxu0 %v1243
        %2231 = vmatpush.msra.mxu0 %v1239
        %2232 = vmatpush.msra.mxu0 %v1235
        %2233 = vmatpush.msra.mxu0 %v1231
        %2234 = vmatpush.msra.mxu0 %v1227
        %2235 = vmatpush.msra.mxu0 %v1223
        %2236 = vmatpush.msra.mxu0 %v1219
        %2237 = vmatpush.msra.mxu0 %v1215
        %2238 = vmatpush.msra.mxu0 %v1211
        %2239 = vmatmul.f32.gmra.mxu0 %v248
        %v2240 = vpop.f32.mrf.mxu0
        %v2241 = vadd.f32 %v2221, %v2240
        %2242 = vdwg.mxu0
        %2243 = vmatpush.msra.mxu0 %v312
        %2244 = vmatpush.msra.mxu0 %v308
        %2245 = vmatpush.msra.mxu0 %v304
        %2246 = vmatpush.msra.mxu0 %v300
        %2247 = vmatpush.msra.mxu0 %v296
        %2248 = vmatpush.msra.mxu0 %v292
        %2249 = vmatpush.msra.mxu0 %v288
        %2250 = vmatpush.msra.mxu0 %v284
        %2251 = vmatpush.msra.mxu0 %v280
        %2252 = vmatpush.msra.mxu0 %v276
        %2253 = vmatpush.msra.mxu0 %v272
        %2254 = vmatpush.msra.mxu0 %v268
        %2255 = vmatpush.msra.mxu0 %v264
        %2256 = vmatpush.msra.mxu0 %v260
        %2257 = vmatpush.msra.mxu0 %v256
        %2258 = vmatpush.msra.mxu0 %v252
        %2259 = vmatmul.f32.gmra.mxu0 %v233
        %v2260 = vpop.f32.mrf.mxu0
        %v2261 = vadd.f32 %v1278, %v2260
        %2262 = vdwg.mxu0
        %2263 = vmatpush.msra.mxu0 %v376
        %2264 = vmatpush.msra.mxu0 %v372
        %2265 = vmatpush.msra.mxu0 %v368
        %2266 = vmatpush.msra.mxu0 %v364
        %2267 = vmatpush.msra.mxu0 %v360
        %2268 = vmatpush.msra.mxu0 %v356
        %2269 = vmatpush.msra.mxu0 %v352
        %2270 = vmatpush.msra.mxu0 %v348
        %2271 = vmatpush.msra.mxu0 %v344
        %2272 = vmatpush.msra.mxu0 %v340
        %2273 = vmatpush.msra.mxu0 %v336
        %2274 = vmatpush.msra.mxu0 %v332
        %2275 = vmatpush.msra.mxu0 %v328
        %2276 = vmatpush.msra.mxu0 %v324
        %2277 = vmatpush.msra.mxu0 %v320
        %2278 = vmatpush.msra.mxu0 %v316
        %2279 = vmatmul.f32.gmra.mxu0 %v234
        %v2280 = vpop.f32.mrf.mxu0
        %v2281 = vadd.f32 %v2261, %v2280
        %2282 = vdwg.mxu0
        %2283 = vmatpush.msra.mxu0 %v440
        %2284 = vmatpush.msra.mxu0 %v436
        %2285 = vmatpush.msra.mxu0 %v432
        %2286 = vmatpush.msra.mxu0 %v428
        %2287 = vmatpush.msra.mxu0 %v424
        %2288 = vmatpush.msra.mxu0 %v420
        %2289 = vmatpush.msra.mxu0 %v416
        %2290 = vmatpush.msra.mxu0 %v412
        %2291 = vmatpush.msra.mxu0 %v408
        %2292 = vmatpush.msra.mxu0 %v404
        %2293 = vmatpush.msra.mxu0 %v400
        %2294 = vmatpush.msra.mxu0 %v396
        %2295 = vmatpush.msra.mxu0 %v392
        %2296 = vmatpush.msra.mxu0 %v388
        %2297 = vmatpush.msra.mxu0 %v384
        %2298 = vmatpush.msra.mxu0 %v380
        %2299 = vmatmul.f32.gmra.mxu0 %v235
        %v2300 = vpop.f32.mrf.mxu0
        %v2301 = vadd.f32 %v2281, %v2300
        %2302 = vdwg.mxu0
        %2303 = vmatpush.msra.mxu0 %v504
        %2304 = vmatpush.msra.mxu0 %v500
        %2305 = vmatpush.msra.mxu0 %v496
        %2306 = vmatpush.msra.mxu0 %v492
        %2307 = vmatpush.msra.mxu0 %v488
        %2308 = vmatpush.msra.mxu0 %v484
        %2309 = vmatpush.msra.mxu0 %v480
        %2310 = vmatpush.msra.mxu0 %v476
        %2311 = vmatpush.msra.mxu0 %v472
        %2312 = vmatpush.msra.mxu0 %v468
        %2313 = vmatpush.msra.mxu0 %v464
        %2314 = vmatpush.msra.mxu0 %v460
        %2315 = vmatpush.msra.mxu0 %v456
        %2316 = vmatpush.msra.mxu0 %v452
        %2317 = vmatpush.msra.mxu0 %v448
        %2318 = vmatpush.msra.mxu0 %v444
        %2319 = vmatmul.f32.gmra.mxu0 %v236
        %v2320 = vpop.f32.mrf.mxu0
        %v2321 = vadd.f32 %v2301, %v2320
        %2322 = vdwg.mxu0
        %2323 = vmatpush.msra.mxu0 %v568
        %2324 = vmatpush.msra.mxu0 %v564
        %2325 = vmatpush.msra.mxu0 %v560
        %2326 = vmatpush.msra.mxu0 %v556
        %2327 = vmatpush.msra.mxu0 %v552
        %2328 = vmatpush.msra.mxu0 %v548
        %2329 = vmatpush.msra.mxu0 %v544
        %2330 = vmatpush.msra.mxu0 %v540
        %2331 = vmatpush.msra.mxu0 %v536
        %2332 = vmatpush.msra.mxu0 %v532
        %2333 = vmatpush.msra.mxu0 %v528
        %2334 = vmatpush.msra.mxu0 %v524
        %2335 = vmatpush.msra.mxu0 %v520
        %2336 = vmatpush.msra.mxu0 %v516
        %2337 = vmatpush.msra.mxu0 %v512
        %2338 = vmatpush.msra.mxu0 %v508
        %2339 = vmatmul.f32.gmra.mxu0 %v237
        %v2340 = vpop.f32.mrf.mxu0
        %v2341 = vadd.f32 %v2321, %v2340
        %2342 = vdwg.mxu0
        %2343 = vmatpush.msra.mxu0 %v632
        %2344 = vmatpush.msra.mxu0 %v628
        %2345 = vmatpush.msra.mxu0 %v624
        %2346 = vmatpush.msra.mxu0 %v620
        %2347 = vmatpush.msra.mxu0 %v616
        %2348 = vmatpush.msra.mxu0 %v612
        %2349 = vmatpush.msra.mxu0 %v608
        %2350 = vmatpush.msra.mxu0 %v604
        %2351 = vmatpush.msra.mxu0 %v600
        %2352 = vmatpush.msra.mxu0 %v596
        %2353 = vmatpush.msra.mxu0 %v592
        %2354 = vmatpush.msra.mxu0 %v588
        %2355 = vmatpush.msra.mxu0 %v584
        %2356 = vmatpush.msra.mxu0 %v580
        %2357 = vmatpush.msra.mxu0 %v576
        %2358 = vmatpush.msra.mxu0 %v572
        %2359 = vmatmul.f32.gmra.mxu0 %v238
        %v2360 = vpop.f32.mrf.mxu0
        %v2361 = vadd.f32 %v2341, %v2360
        %2362 = vdwg.mxu0
        %2363 = vmatpush.msra.mxu0 %v696
        %2364 = vmatpush.msra.mxu0 %v692
        %2365 = vmatpush.msra.mxu0 %v688
        %2366 = vmatpush.msra.mxu0 %v684
        %2367 = vmatpush.msra.mxu0 %v680
        %2368 = vmatpush.msra.mxu0 %v676
        %2369 = vmatpush.msra.mxu0 %v672
        %2370 = vmatpush.msra.mxu0 %v668
        %2371 = vmatpush.msra.mxu0 %v664
        %2372 = vmatpush.msra.mxu0 %v660
        %2373 = vmatpush.msra.mxu0 %v656
        %2374 = vmatpush.msra.mxu0 %v652
        %2375 = vmatpush.msra.mxu0 %v648
        %2376 = vmatpush.msra.mxu0 %v644
        %2377 = vmatpush.msra.mxu0 %v640
        %2378 = vmatpush.msra.mxu0 %v636
        %2379 = vmatmul.f32.gmra.mxu0 %v239
        %v2380 = vpop.f32.mrf.mxu0
        %v2381 = vadd.f32 %v2361, %v2380
        %2382 = vdwg.mxu0
        %2383 = vmatpush.msra.mxu0 %v760
        %2384 = vmatpush.msra.mxu0 %v756
        %2385 = vmatpush.msra.mxu0 %v752
        %2386 = vmatpush.msra.mxu0 %v748
        %2387 = vmatpush.msra.mxu0 %v744
        %2388 = vmatpush.msra.mxu0 %v740
        %2389 = vmatpush.msra.mxu0 %v736
        %2390 = vmatpush.msra.mxu0 %v732
        %2391 = vmatpush.msra.mxu0 %v728
        %2392 = vmatpush.msra.mxu0 %v724
        %2393 = vmatpush.msra.mxu0 %v720
        %2394 = vmatpush.msra.mxu0 %v716
        %2395 = vmatpush.msra.mxu0 %v712
        %2396 = vmatpush.msra.mxu0 %v708
        %2397 = vmatpush.msra.mxu0 %v704
        %2398 = vmatpush.msra.mxu0 %v700
        %2399 = vmatmul.f32.gmra.mxu0 %v240
        %v2400 = vpop.f32.mrf.mxu0
        %v2401 = vadd.f32 %v2381, %v2400
        %2402 = vdwg.mxu0
        %2403 = vmatpush.msra.mxu0 %v824
        %2404 = vmatpush.msra.mxu0 %v820
        %2405 = vmatpush.msra.mxu0 %v816
        %2406 = vmatpush.msra.mxu0 %v812
        %2407 = vmatpush.msra.mxu0 %v808
        %2408 = vmatpush.msra.mxu0 %v804
        %2409 = vmatpush.msra.mxu0 %v800
        %2410 = vmatpush.msra.mxu0 %v796
        %2411 = vmatpush.msra.mxu0 %v792
        %2412 = vmatpush.msra.mxu0 %v788
        %2413 = vmatpush.msra.mxu0 %v784
        %2414 = vmatpush.msra.mxu0 %v780
        %2415 = vmatpush.msra.mxu0 %v776
        %2416 = vmatpush.msra.mxu0 %v772
        %2417 = vmatpush.msra.mxu0 %v768
        %2418 = vmatpush.msra.mxu0 %v764
        %2419 = vmatmul.f32.gmra.mxu0 %v241
        %v2420 = vpop.f32.mrf.mxu0
        %v2421 = vadd.f32 %v2401, %v2420
        %2422 = vdwg.mxu0
        %2423 = vmatpush.msra.mxu0 %v888
        %2424 = vmatpush.msra.mxu0 %v884
        %2425 = vmatpush.msra.mxu0 %v880
        %2426 = vmatpush.msra.mxu0 %v876
        %2427 = vmatpush.msra.mxu0 %v872
        %2428 = vmatpush.msra.mxu0 %v868
        %2429 = vmatpush.msra.mxu0 %v864
        %2430 = vmatpush.msra.mxu0 %v860
        %2431 = vmatpush.msra.mxu0 %v856
        %2432 = vmatpush.msra.mxu0 %v852
        %2433 = vmatpush.msra.mxu0 %v848
        %2434 = vmatpush.msra.mxu0 %v844
        %2435 = vmatpush.msra.mxu0 %v840
        %2436 = vmatpush.msra.mxu0 %v836
        %2437 = vmatpush.msra.mxu0 %v832
        %2438 = vmatpush.msra.mxu0 %v828
        %2439 = vmatmul.f32.gmra.mxu0 %v242
        %v2440 = vpop.f32.mrf.mxu0
        %v2441 = vadd.f32 %v2421, %v2440
        %2442 = vdwg.mxu0
        %2443 = vmatpush.msra.mxu0 %v952
        %2444 = vmatpush.msra.mxu0 %v948
        %2445 = vmatpush.msra.mxu0 %v944
        %2446 = vmatpush.msra.mxu0 %v940
        %2447 = vmatpush.msra.mxu0 %v936
        %2448 = vmatpush.msra.mxu0 %v932
        %2449 = vmatpush.msra.mxu0 %v928
        %2450 = vmatpush.msra.mxu0 %v924
        %2451 = vmatpush.msra.mxu0 %v920
        %2452 = vmatpush.msra.mxu0 %v916
        %2453 = vmatpush.msra.mxu0 %v912
        %2454 = vmatpush.msra.mxu0 %v908
        %2455 = vmatpush.msra.mxu0 %v904
        %2456 = vmatpush.msra.mxu0 %v900
        %2457 = vmatpush.msra.mxu0 %v896
        %2458 = vmatpush.msra.mxu0 %v892
        %2459 = vmatmul.f32.gmra.mxu0 %v243
        %v2460 = vpop.f32.mrf.mxu0
        %v2461 = vadd.f32 %v2441, %v2460
        %2462 = vdwg.mxu0
        %2463 = vmatpush.msra.mxu0 %v1016
        %2464 = vmatpush.msra.mxu0 %v1012
        %2465 = vmatpush.msra.mxu0 %v1008
        %2466 = vmatpush.msra.mxu0 %v1004
        %2467 = vmatpush.msra.mxu0 %v1000
        %2468 = vmatpush.msra.mxu0 %v996
        %2469 = vmatpush.msra.mxu0 %v992
        %2470 = vmatpush.msra.mxu0 %v988
        %2471 = vmatpush.msra.mxu0 %v984
        %2472 = vmatpush.msra.mxu0 %v980
        %2473 = vmatpush.msra.mxu0 %v976
        %2474 = vmatpush.msra.mxu0 %v972
        %2475 = vmatpush.msra.mxu0 %v968
        %2476 = vmatpush.msra.mxu0 %v964
        %2477 = vmatpush.msra.mxu0 %v960
        %2478 = vmatpush.msra.mxu0 %v956
        %2479 = vmatmul.f32.gmra.mxu0 %v244
        %v2480 = vpop.f32.mrf.mxu0
        %v2481 = vadd.f32 %v2461, %v2480
        %2482 = vdwg.mxu0
        %2483 = vmatpush.msra.mxu0 %v1080
        %2484 = vmatpush.msra.mxu0 %v1076
        %2485 = vmatpush.msra.mxu0 %v1072
        %2486 = vmatpush.msra.mxu0 %v1068
        %2487 = vmatpush.msra.mxu0 %v1064
        %2488 = vmatpush.msra.mxu0 %v1060
        %2489 = vmatpush.msra.mxu0 %v1056
        %2490 = vmatpush.msra.mxu0 %v1052
        %2491 = vmatpush.msra.mxu0 %v1048
        %2492 = vmatpush.msra.mxu0 %v1044
        %2493 = vmatpush.msra.mxu0 %v1040
        %2494 = vmatpush.msra.mxu0 %v1036
        %2495 = vmatpush.msra.mxu0 %v1032
        %2496 = vmatpush.msra.mxu0 %v1028
        %2497 = vmatpush.msra.mxu0 %v1024
        %2498 = vmatpush.msra.mxu0 %v1020
        %2499 = vmatmul.f32.gmra.mxu0 %v245
        %v2500 = vpop.f32.mrf.mxu0
        %v2501 = vadd.f32 %v2481, %v2500
        %2502 = vdwg.mxu0
        %2503 = vmatpush.msra.mxu0 %v1144
        %2504 = vmatpush.msra.mxu0 %v1140
        %2505 = vmatpush.msra.mxu0 %v1136
        %2506 = vmatpush.msra.mxu0 %v1132
        %2507 = vmatpush.msra.mxu0 %v1128
        %2508 = vmatpush.msra.mxu0 %v1124
        %2509 = vmatpush.msra.mxu0 %v1120
        %2510 = vmatpush.msra.mxu0 %v1116
        %2511 = vmatpush.msra.mxu0 %v1112
        %2512 = vmatpush.msra.mxu0 %v1108
        %2513 = vmatpush.msra.mxu0 %v1104
        %2514 = vmatpush.msra.mxu0 %v1100
        %2515 = vmatpush.msra.mxu0 %v1096
        %2516 = vmatpush.msra.mxu0 %v1092
        %2517 = vmatpush.msra.mxu0 %v1088
        %2518 = vmatpush.msra.mxu0 %v1084
        %2519 = vmatmul.f32.gmra.mxu0 %v246
        %v2520 = vpop.f32.mrf.mxu0
        %v2521 = vadd.f32 %v2501, %v2520
        %2522 = vdwg.mxu0
        %2523 = vmatpush.msra.mxu0 %v1208
        %2524 = vmatpush.msra.mxu0 %v1204
        %2525 = vmatpush.msra.mxu0 %v1200
        %2526 = vmatpush.msra.mxu0 %v1196
        %2527 = vmatpush.msra.mxu0 %v1192
        %2528 = vmatpush.msra.mxu0 %v1188
        %2529 = vmatpush.msra.mxu0 %v1184
        %2530 = vmatpush.msra.mxu0 %v1180
        %2531 = vmatpush.msra.mxu0 %v1176
        %2532 = vmatpush.msra.mxu0 %v1172
        %2533 = vmatpush.msra.mxu0 %v1168
        %2534 = vmatpush.msra.mxu0 %v1164
        %2535 = vmatpush.msra.mxu0 %v1160
        %2536 = vmatpush.msra.mxu0 %v1156
        %2537 = vmatpush.msra.mxu0 %v1152
        %2538 = vmatpush.msra.mxu0 %v1148
        %2539 = vmatmul.f32.gmra.mxu0 %v247
        %v2540 = vpop.f32.mrf.mxu0
        %v2541 = vadd.f32 %v2521, %v2540
        %2542 = vdwg.mxu0
        %2543 = vmatpush.msra.mxu0 %v1272
        %2544 = vmatpush.msra.mxu0 %v1268
        %2545 = vmatpush.msra.mxu0 %v1264
        %2546 = vmatpush.msra.mxu0 %v1260
        %2547 = vmatpush.msra.mxu0 %v1256
        %2548 = vmatpush.msra.mxu0 %v1252
        %2549 = vmatpush.msra.mxu0 %v1248
        %2550 = vmatpush.msra.mxu0 %v1244
        %2551 = vmatpush.msra.mxu0 %v1240
        %2552 = vmatpush.msra.mxu0 %v1236
        %2553 = vmatpush.msra.mxu0 %v1232
        %2554 = vmatpush.msra.mxu0 %v1228
        %2555 = vmatpush.msra.mxu0 %v1224
        %2556 = vmatpush.msra.mxu0 %v1220
        %2557 = vmatpush.msra.mxu0 %v1216
        %2558 = vmatpush.msra.mxu0 %v1212
        %2559 = vmatmul.f32.gmra.mxu0 %v248
        %v2560 = vpop.f32.mrf.mxu0
        %v2561 = vadd.f32 %v2541, %v2560
        %2562 = vdwg.mxu0
        %2563 = vst [vmem:[%s229] sm:$0xff] %v1601
        %2564 = vst [vmem:[%s229 + $0x8] sm:$0xff] %v1921
        %2565 = vst [vmem:[%s229 + $0x10] sm:$0xff] %v2241
        %2566 = vst [vmem:[%s229 + $0x18] sm:$0xff] %v2561
        %s2567 = sand.u32 %s104, 1
        %s2568 = scalar_lea.sflag [#allocation4], %s2567
        %s2569 = sand.u32 %s104, 1
        %s2570 = smul.addr %s2569, 32
        %s2571 = scalar_lea.vmem [#allocation7], %s2570
        // Predicated region
        $region41: #{gen_high_fc_forward.3} parent=31 // pred_check
          %p2572 = pneg %p114
        $region42: #{gen_high_fc_forward.3} parent=31 // pred_check_branch
          %2574 = sbr.rel (%p2572) target = $region44
        $region43: #{gen_high_fc_forward.3} parent=31 // pred_region
          %s2575 = smul.u32 4, %s23
          %2577 = vsyncadd %s2568, 0
          %s2578 = smul.addr %s2575, 8
          %s2579 = scalar_lea.hbm %s3, %s2578
          %s2581 = sshll.u32 %s2571, 4
          %s2582 = int_to_ptr.vmem [resolvable:$true] %s2581
          %s2583 = sshll.u32 %s2579, 4
          %s2584 = int_to_ptr.hbm [resolvable:$true] %s2583
          %2586 = dma.vmem_to_hbm [thread:$0]  %s2582, 512, %s2584, %s2568
        $region44: #{gen_high_fc_forward.3} parent=31 // pred_fallthru
          _
      $region32: #{gen_high_fc_forward.3} parent=5 // pred_fallthru
        _
      %p2587 = scmp.le.s32.totalorder 2, %s18
      // Predicated region
      $region45: #{gen_high_fc_forward.3} parent=5 // pred_check
        %p2588 = pneg %p2587
      $region46: #{gen_high_fc_forward.3} parent=5 // pred_check_branch
        %2590 = sbr.rel (%p2588) target = $region48
      $region47: #{gen_high_fc_forward.3} parent=5 // pred_region
        %s2591 = ssub.s32 %s18, 2
        // Predicated region
        $region49: #{gen_high_fc_forward.3} parent=47 // pred_check
          %p2592 = pneg %p120
        $region50: #{gen_high_fc_forward.3} parent=47 // pred_check_branch
          %2594 = sbr.rel (%p2592) target = $region52
        $region51: #{gen_high_fc_forward.3} parent=47 // pred_region
          %s2595 = sand.u32 %s105, 1
          %s2596 = scalar_lea.sflag [#allocation4], %s2595
          %s2597 = sand.u32 %s105, 1
          %s2598 = smul.addr %s2597, 32
          %s2599 = scalar_lea.vmem [#allocation7], %s2598
          %2601 = dma.done %s2596, 512
        $region52: #{gen_high_fc_forward.3} parent=47 // pred_fallthru
          _
      $region48: #{gen_high_fc_forward.3} parent=5 // pred_fallthru
        _
    $region6: #{gen_high_fc_forward.3} parent=1 // loop_footer
      %s22 = sadd.s32 1, %s18
    $region7: #{gen_high_fc_forward.3} parent=1 // loop_footer_branch
      %17 = sbr.rel target = $region3
    $region8: #{gen_high_fc_forward.3} parent=1 // loop_exit
      _
    %2602 = vsyncpa [#allocation3], 1
    %s2603 = scalar_lea.sflag [#allocation3], 1
    %2604 = vsyncpa %s2603, 1
    %2605 = vsyncpa [#allocation6], 1
    %s2606 = scalar_lea.sflag [#allocation6], 1
    %2607 = vsyncpa %s2606, 1
    %2608 = vsyncpa [#allocation4], 1
    %s2609 = scalar_lea.sflag [#allocation4], 1
    %2610 = vsyncpa %s2609, 1

</llo_original>
